<compile_context>
chip_gen: v7x
topology: tpu7x:2x2x1
jax: 0.10.0
libtpu: 0.0.40
codegen_flags: <defaults>
</compile_context>

<pallas_src>
import functools

import jax
import jax.numpy as jnp
from jax import lax
from jax.experimental import pallas as pl
from jax.experimental.pallas import tpu as pltpu

ACTION_SIZE = 6
HIDDEN = 128          # LSTM hidden size
CONV_OUT_CH = 24
CONV_IN_CH = 15
KH = KW = 4
STRIDE = 2
PAD = 1
IN_H, IN_W = 36, 18
OUT_H = (IN_H + 2 * PAD - KH) // STRIDE + 1   # 18
OUT_W = (IN_W + 2 * PAD - KW) // STRIDE + 1   # 9
FC1_IN = CONV_OUT_CH * OUT_H * OUT_W          # 3888
FC1_OUT = 512

_VMEM_LIMIT = 48 << 20    # <= 64 MiB physical VMEM on v7x; plenty everywhere


# ----------------------------- Pallas kernels ------------------------------

def _conv_kernel(p_ref, w_ref, b_ref, o_ref):
    # (M, 240) @ (240, 24); bf16 MXU operands, f32 accumulate, bf16 store.
    y = jnp.dot(p_ref[...], w_ref[...], preferred_element_type=jnp.float32)
    o_ref[...] = jnp.maximum(y + b_ref[...], 0.0).astype(o_ref.dtype)


def pallas_conv(patches, w, b):
    """relu(patches @ w + b); patches:(M,240) bf16, w:(240,24) bf16 -> bf16."""
    M, K = patches.shape
    N = w.shape[1]
    return pl.pallas_call(
        _conv_kernel,
        out_shape=jax.ShapeDtypeStruct((M, N), jnp.bfloat16),
        grid=(1,),
        in_specs=[
            pl.BlockSpec((M, K), lambda i: (0, 0)),
            pl.BlockSpec((K, N), lambda i: (0, 0)),
            pl.BlockSpec((1, N), lambda i: (0, 0)),
        ],
        out_specs=pl.BlockSpec((M, N), lambda i: (0, 0)),
        compiler_params=pltpu.CompilerParams(
            dimension_semantics=("arbitrary",),
            vmem_limit_bytes=_VMEM_LIMIT,
        ),
    )(patches, w, b.reshape(1, N))


def _fused_kernel(x_ref, h0_ref, c0_ref,
                  fc1_w_ref, fc1_b_ref,
                  wih_ref, whh_ref, blstm_ref,
                  h1_w_ref, h1_b_ref, h2_w_ref, h2_b_ref,
                  q_ref, hn_ref, cn_ref,
                  gx_scr, h_scr, *, seq_len, batch):
    """Fused fc1 + LSTM + head1 + head2, everything VMEM-resident."""
    H = HIDDEN

    # ---- hoisted, batched over all T*B rows (out of the recurrence) ----
    fc1 = jnp.dot(x_ref[...], fc1_w_ref[...],
                  preferred_element_type=jnp.float32)
    fc1 = jnp.maximum(fc1 + fc1_b_ref[...], 0.0)                # (T*B, 512) f32
    # LSTM input projection (includes combined bias b_ih + b_hh), staged into
    # a tile-aligned (T, B, 4H) scratch so the recurrence uses free leading-
    # axis ref reads instead of sublane-misaligned value slices.
    gx = jnp.dot(fc1.astype(jnp.bfloat16), wih_ref[...],
                 preferred_element_type=jnp.float32) + blstm_ref[...]
    gx_scr[...] = gx.reshape(seq_len, batch, 4 * H)

    whh = whh_ref[...]

    # ---- serial recurrence: only h @ W_hh + elementwise gates per step ----
    def step(t, carry):
        h, c = carry
        gates = gx_scr[t] + jnp.dot(h.astype(jnp.bfloat16), whh,
                                    preferred_element_type=jnp.float32)
        # Gate columns repacked offline to (i, f, o, g):
        sig = jax.nn.sigmoid(gates[:, :3 * H])                  # one EUP slab
        i_g = sig[:, 0 * H:1 * H]
        f_g = sig[:, 1 * H:2 * H]
        o_g = sig[:, 2 * H:3 * H]
        g_g = jnp.tanh(gates[:, 3 * H:4 * H])
        c = f_g * c + i_g * g_g
        h = o_g * jnp.tanh(c)
        h_scr[t] = h
        return h, c

    h_fin, c_fin = lax.fori_loop(0, seq_len, step,
                                 (h0_ref[...], c0_ref[...]), unroll=True)
    hn_ref[...] = h_fin
    cn_ref[...] = c_fin

    # ---- heads, batched over all T*B rows (hoisted out of the t-loop) ----
    h_all = h_scr[...].reshape(seq_len * batch, H).astype(jnp.bfloat16)
    h1 = jnp.maximum(
        jnp.dot(h_all, h1_w_ref[...],
                preferred_element_type=jnp.float32) + h1_b_ref[...], 0.0)
    q = jnp.dot(h1.astype(jnp.bfloat16), h2_w_ref[...],
                preferred_element_type=jnp.float32) + h2_b_ref[...]
    q_ref[...] = q.reshape(seq_len, batch, q_ref.shape[-1])


def pallas_fused(x, h0, c0, params, seq_len, batch):
    """x:(T*B, 3888) bf16, h0/c0:(B,H) f32.  Returns q:(T,B,A), h_n, c_n."""
    NB, K = x.shape
    H = HIDDEN
    A = params["h2_b"].shape[0]

    def full(shape):
        nd = len(shape)
        return pl.BlockSpec(shape, lambda i, _n=nd: (0,) * _n)

    kernel = functools.partial(_fused_kernel, seq_len=seq_len, batch=batch)
    return pl.pallas_call(
        kernel,
        out_shape=(jax.ShapeDtypeStruct((seq_len, batch, A), jnp.float32),
                   jax.ShapeDtypeStruct((batch, H), jnp.float32),
                   jax.ShapeDtypeStruct((batch, H), jnp.float32)),
        grid=(1,),
        in_specs=[
            full((NB, K)),
            full((batch, H)), full((batch, H)),
            full((K, FC1_OUT)), full((1, FC1_OUT)),
            full((FC1_OUT, 4 * H)), full((H, 4 * H)), full((1, 4 * H)),
            full((H, 64)), full((1, 64)),
            full((64, A)), full((1, A)),
        ],
        out_specs=(full((seq_len, batch, A)),
                   full((batch, H)),
                   full((batch, H))),
        scratch_shapes=[
            pltpu.VMEM((seq_len, batch, 4 * H), jnp.float32),   # gx staging
            pltpu.VMEM((seq_len, batch, H), jnp.float32),       # h_t history
        ],
        compiler_params=pltpu.CompilerParams(
            dimension_semantics=("arbitrary",),
            vmem_limit_bytes=_VMEM_LIMIT,
        ),
    )(x, h0, c0,
      params["fc1_w"], params["fc1_b"].reshape(1, FC1_OUT),
      params["wih"], params["whh"], params["blstm"].reshape(1, 4 * H),
      params["h1_w"], params["h1_b"].reshape(1, 64),
      params["h2_w"], params["h2_b"].reshape(1, A))


# ------------------------------- glue (JAX) ---------------------------------

def im2col(x):
    """x: (N, C, H, W) -> patches (N*Ho*Wo, C*KH*KW) with (C, kh, kw) ordering
    matching PyTorch conv-weight layout; also returns (Ho, Wo)."""
    N, C, H, W = x.shape
    xp = jnp.pad(x, ((0, 0), (0, 0), (PAD, PAD), (PAD, PAD)))
    Ho = (H + 2 * PAD - KH) // STRIDE + 1
    Wo = (W + 2 * PAD - KW) // STRIDE + 1
    patches = []
    for i in range(KH):
        for j in range(KW):
            patches.append(
                xp[:, :, i:i + STRIDE * Ho:STRIDE, j:j + STRIDE * Wo:STRIDE])
    p = jnp.stack(patches, axis=2)                 # (N, C, KH*KW, Ho, Wo)
    p = p.reshape(N, C, KH, KW, Ho, Wo)
    p = p.transpose(0, 4, 5, 1, 2, 3)              # (N, Ho, Wo, C, KH, KW)
    return p.reshape(N * Ho * Wo, C * KH * KW), Ho, Wo


def forward(state, h0, c0, params):
    """state: (T, B, 15, 36, 18) float; h0, c0: (B, 128).
    Returns (q_values (T, B, action_size), (h_T, c_T))."""
    state = state.astype(jnp.float32)
    T, B, C, H, W = state.shape
    N = T * B

    # Conv2d(15, 24, k=4, s=2, p=1) + ReLU  -> im2col + Pallas matmul.
    # Activations cross HBM in bf16 (kernels compute in bf16 anyway).
    patches, Ho, Wo = im2col(state.reshape(N, C, H, W))     # (N*Ho*Wo, 240)
    conv = pallas_conv(patches.astype(jnp.bfloat16),
                       params["conv_w"], params["conv_b"])  # bf16
    # fc1_w rows were permuted offline to (ho, wo, c) order, so a contiguous
    # reshape replaces the NCHW transpose entirely.
    x = conv.reshape(N, Ho * Wo * CONV_OUT_CH)               # (N, 3888) bf16

    # Fused Linear(3888,512)+ReLU + LSTM(512,128) + Linear(128,64)+ReLU
    # + Linear(64, A), single pallas_call, VMEM-resident.
    q, h_n, c_n = pallas_fused(x, h0, c0, params, T, B)
    return q, (h_n, c_n)


def _reorder_gate_cols(w4h):
    """Last dim (4H,) in PyTorch gate order (i,f,g,o) -> kernel order (i,f,o,g)."""
    H = HIDDEN
    i, f, g, o = (w4h[..., k * H:(k + 1) * H] for k in range(4))
    return jnp.concatenate([i, f, o, g], axis=-1)


def init_params(key, action_size=ACTION_SIZE):
    """Random params, generated in PyTorch layouts and then repacked offline
    into the kernel-friendly layouts (zero runtime cost)."""
    ks = jax.random.split(key, 11)

    def w(k, shape, scale=0.05):
        return (scale * jax.random.normal(k, shape)).astype(jnp.float32)

    bf = jnp.bfloat16

    # Conv2d weight, PyTorch layout (24, 15, 4, 4) -> (C_in*KH*KW, C_out).
    conv_w_pt = w(ks[0], (CONV_OUT_CH, CONV_IN_CH, KH, KW))
    conv_w = conv_w_pt.reshape(CONV_OUT_CH, CONV_IN_CH * KH * KW).T

    # Linear(3888, 512): PyTorch weight (512, 3888); W^T rows are in NCHW
    # (c, ho, wo) order -> permute rows to (ho, wo, c) order.
    fc1_w_pt = w(ks[2], (FC1_OUT, FC1_IN), 0.02)
    fc1_w = (fc1_w_pt.T.reshape(CONV_OUT_CH, OUT_H, OUT_W, FC1_OUT)
             .transpose(1, 2, 0, 3).reshape(FC1_IN, FC1_OUT))

    # LSTM(512, 128): PyTorch W_ih (4H, 512), W_hh (4H, 128), b_ih + b_hh.
    # NOTE: real checkpoints must supply b_ih + b_hh pre-summed as `blstm`.
    wih_pt = w(ks[4], (4 * HIDDEN, FC1_OUT), 0.02)
    whh_pt = w(ks[5], (4 * HIDDEN, HIDDEN), 0.02)
    b_pt = w(ks[6], (4 * HIDDEN,))
    wih = _reorder_gate_cols(wih_pt.T)        # (512, 4H), cols (i,f,o,g)
    whh = _reorder_gate_cols(whh_pt.T)        # (128, 4H)
    blstm = _reorder_gate_cols(b_pt)          # (4H,)

    # Heads: PyTorch (64, 128) and (A, 64) -> transposed.
    h1_w = w(ks[7], (64, HIDDEN)).T           # (128, 64)
    h2_w = w(ks[9], (action_size, 64)).T      # (64, A)

    return dict(
        conv_w=conv_w.astype(bf), conv_b=w(ks[1], (CONV_OUT_CH,)),
        fc1_w=fc1_w.astype(bf), fc1_b=w(ks[3], (FC1_OUT,)),
        wih=wih.astype(bf), whh=whh.astype(bf), blstm=blstm,
        h1_w=h1_w.astype(bf), h1_b=w(ks[8], (64,)),
        h2_w=h2_w.astype(bf), h2_b=w(ks[10], (action_size,)),
    )


if __name__ == "__main__":
    key = jax.random.PRNGKey(0)
    k_param, k_state = jax.random.split(key)

    T, B = 4, 2
    # Spatial 36x18 so that 24 * 18 * 9 = 3888 matches Linear(3888, 512).
    state = jax.random.normal(k_state, (T, B, CONV_IN_CH, IN_H, IN_W),
                              dtype=jnp.float32)
    h0 = jnp.zeros((B, HIDDEN), jnp.float32)
    c0 = jnp.zeros((B, HIDDEN), jnp.float32)

    params = init_params(k_param)
    fwd = jax.jit(forward)
    q, (h_n, c_n) = fwd(state, h0, c0, params)
    jax.block_until_ready((q, h_n, c_n))

    assert q.shape == (T, B, ACTION_SIZE)
    assert h_n.shape == (B, HIDDEN) and c_n.shape == (B, HIDDEN)
    print("KERNEL_OK")
</pallas_src>

<mosaic_0001>
module attributes {stable_mosaic.version = 11 : i64} {
  func.func @_conv_kernel(%arg0: i32, %arg1: memref<1296x240xbf16, #tpu.memory_space<vmem>>, %arg2: memref<240x24xbf16, #tpu.memory_space<vmem>>, %arg3: memref<1x24xf32, #tpu.memory_space<vmem>>, %arg4: memref<1296x24xbf16, #tpu.memory_space<vmem>>) attributes {dimension_semantics = [#tpu.dimension_semantics<arbitrary>], iteration_bounds = array<i64: 1>, scalar_prefetch = 0 : i64, scratch_operands = 0 : i64, tpu.core_type = #tpu.core_type<tc>, window_params = [{pipeline_mode = #tpu.pipeline_mode<synchronous>, transform_indices = @transform_0, window_bounds = array<i64: 1296, 240>}, {pipeline_mode = #tpu.pipeline_mode<synchronous>, transform_indices = @transform_1, window_bounds = array<i64: 240, 24>}, {pipeline_mode = #tpu.pipeline_mode<synchronous>, transform_indices = @transform_2, window_bounds = array<i64: 1, 24>}, {pipeline_mode = #tpu.pipeline_mode<synchronous>, transform_indices = @transform_3, window_bounds = array<i64: 1296, 24>}]} {
    %c0 = arith.constant 0 : index
    %c0_0 = arith.constant 0 : index
    %0 = vector.load %arg1[%c0, %c0_0] : memref<1296x240xbf16, #tpu.memory_space<vmem>>, vector<1296x240xbf16>
    %c0_1 = arith.constant 0 : index
    %c0_2 = arith.constant 0 : index
    %1 = vector.load %arg2[%c0_1, %c0_2] : memref<240x24xbf16, #tpu.memory_space<vmem>>, vector<240x24xbf16>
    %cst = arith.constant dense<0.000000e+00> : vector<1296x24xf32>
    %2 = tpu.matmul %0, %1, %cst {dimension_numbers = #tpu.dot_dimension_numbers<[1], [0], [0], [1], [0, 0, 1, 1], [], []>} : vector<1296x240xbf16>, vector<240x24xbf16>, vector<1296x24xf32> -> vector<1296x24xf32>
    %c0_3 = arith.constant 0 : index
    %c0_4 = arith.constant 0 : index
    %3 = vector.load %arg3[%c0_3, %c0_4] : memref<1x24xf32, #tpu.memory_space<vmem>>, vector<1x24xf32>
    %4 = vector.broadcast %3 : vector<1x24xf32> to vector<1296x24xf32>
    %5 = arith.addf %2, %4 : vector<1296x24xf32>
    %cst_5 = arith.constant 0.000000e+00 : f32
    %6 = vector.broadcast %cst_5 : f32 to vector<1296x24xf32>
    %7 = arith.maximumf %5, %6 : vector<1296x24xf32>
    %8 = arith.truncf %7 : vector<1296x24xf32> to vector<1296x24xbf16>
    %c0_6 = arith.constant 0 : index
    %c0_7 = arith.constant 0 : index
    %9 = vector.load %arg4[%c0_6, %c0_7] : memref<1296x24xbf16, #tpu.memory_space<vmem>>, vector<1296x24xbf16>
    tpu.vector_store %arg4[%c0_6, %c0_7], %8 {strides = array<i32>} : memref<1296x24xbf16, #tpu.memory_space<vmem>>, vector<1296x24xbf16>,
    return
  }
  func.func @transform_0(%arg0: i32) -> (i32, i32) {
    %c0_i32 = arith.constant 0 : i32
    %c0_i32_0 = arith.constant 0 : i32
    %c0_i32_1 = arith.constant 0 : i32
    return %c0_i32, %c0_i32_0 : i32, i32
  }
  func.func @transform_1(%arg0: i32) -> (i32, i32) {
    %c0_i32 = arith.constant 0 : i32
    %c0_i32_0 = arith.constant 0 : i32
    %c0_i32_1 = arith.constant 0 : i32
    return %c0_i32, %c0_i32_0 : i32, i32
  }
  func.func @transform_2(%arg0: i32) -> (i32, i32) {
    %c0_i32 = arith.constant 0 : i32
    %c0_i32_0 = arith.constant 0 : i32
    %c0_i32_1 = arith.constant 0 : i32
    return %c0_i32, %c0_i32_0 : i32, i32
  }
  func.func @transform_3(%arg0: i32) -> (i32, i32) {
    %c0_i32 = arith.constant 0 : i32
    %c0_i32_0 = arith.constant 0 : i32
    %c0_i32_1 = arith.constant 0 : i32
    return %c0_i32, %c0_i32_0 : i32, i32
  }
}

module attributes {stable_mosaic.version = 11 : i64} {
  func.func @_fused_kernel(%arg0: i32, %arg1: memref<8x3888xbf16, #tpu.memory_space<vmem>>, %arg2: memref<2x128xf32, #tpu.memory_space<vmem>>, %arg3: memref<2x128xf32, #tpu.memory_space<vmem>>, %arg4: memref<3888x512xbf16, #tpu.memory_space<vmem>>, %arg5: memref<1x512xf32, #tpu.memory_space<vmem>>, %arg6: memref<512x512xbf16, #tpu.memory_space<vmem>>, %arg7: memref<128x512xbf16, #tpu.memory_space<vmem>>, %arg8: memref<1x512xf32, #tpu.memory_space<vmem>>, %arg9: memref<128x64xbf16, #tpu.memory_space<vmem>>, %arg10: memref<1x64xf32, #tpu.memory_space<vmem>>, %arg11: memref<64x6xbf16, #tpu.memory_space<vmem>>, %arg12: memref<1x6xf32, #tpu.memory_space<vmem>>, %arg13: memref<4x2x6xf32, #tpu.memory_space<vmem>>, %arg14: memref<2x128xf32, #tpu.memory_space<vmem>>, %arg15: memref<2x128xf32, #tpu.memory_space<vmem>>, %arg16: memref<4x2x512xf32, #tpu.memory_space<vmem>>, %arg17: memref<4x2x128xf32, #tpu.memory_space<vmem>>) attributes {dimension_semantics = [#tpu.dimension_semantics<arbitrary>], iteration_bounds = array<i64: 1>, scalar_prefetch = 0 : i64, scratch_operands = 2 : i64, tpu.core_type = #tpu.core_type<tc>, window_params = [{pipeline_mode = #tpu.pipeline_mode<synchronous>, transform_indices = @transform_0, window_bounds = array<i64: 8, 3888>}, {pipeline_mode = #tpu.pipeline_mode<synchronous>, transform_indices = @transform_1, window_bounds = array<i64: 2, 128>}, {pipeline_mode = #tpu.pipeline_mode<synchronous>, transform_indices = @transform_2, window_bounds = array<i64: 2, 128>}, {pipeline_mode = #tpu.pipeline_mode<synchronous>, transform_indices = @transform_3, window_bounds = array<i64: 3888, 512>}, {pipeline_mode = #tpu.pipeline_mode<synchronous>, transform_indices = @transform_4, window_bounds = array<i64: 1, 512>}, {pipeline_mode = #tpu.pipeline_mode<synchronous>, transform_indices = @transform_5, window_bounds = array<i64: 512, 512>}, {pipeline_mode = #tpu.pipeline_mode<synchronous>, transform_indices = @transform_6, window_bounds = array<i64: 128, 512>}, {pipeline_mode = #tpu.pipeline_mode<synchronous>, transform_indices = @transform_7, window_bounds = array<i64: 1, 512>}, {pipeline_mode = #tpu.pipeline_mode<synchronous>, transform_indices = @transform_8, window_bounds = array<i64: 128, 64>}, {pipeline_mode = #tpu.pipeline_mode<synchronous>, transform_indices = @transform_9, window_bounds = array<i64: 1, 64>}, {pipeline_mode = #tpu.pipeline_mode<synchronous>, transform_indices = @transform_10, window_bounds = array<i64: 64, 6>}, {pipeline_mode = #tpu.pipeline_mode<synchronous>, transform_indices = @transform_11, window_bounds = array<i64: 1, 6>}, {pipeline_mode = #tpu.pipeline_mode<synchronous>, transform_indices = @transform_12, window_bounds = array<i64: 4, 2, 6>}, {pipeline_mode = #tpu.pipeline_mode<synchronous>, transform_indices = @transform_13, window_bounds = array<i64: 2, 128>}, {pipeline_mode = #tpu.pipeline_mode<synchronous>, transform_indices = @transform_14, window_bounds = array<i64: 2, 128>}]} {
    %c0 = arith.constant 0 : index
    %c0_0 = arith.constant 0 : index
    %0 = vector.load %arg1[%c0, %c0_0] : memref<8x3888xbf16, #tpu.memory_space<vmem>>, vector<8x3888xbf16>
    %c0_1 = arith.constant 0 : index
    %c0_2 = arith.constant 0 : index
    %1 = vector.load %arg4[%c0_1, %c0_2] : memref<3888x512xbf16, #tpu.memory_space<vmem>>, vector<3888x512xbf16>
    %cst = arith.constant dense<0.000000e+00> : vector<8x512xf32>
    %2 = tpu.matmul %0, %1, %cst {dimension_numbers = #tpu.dot_dimension_numbers<[1], [0], [0], [1], [0, 0, 1, 1], [], []>} : vector<8x3888xbf16>, vector<3888x512xbf16>, vector<8x512xf32> -> vector<8x512xf32>
    %c0_3 = arith.constant 0 : index
    %c0_4 = arith.constant 0 : index
    %3 = vector.load %arg5[%c0_3, %c0_4] : memref<1x512xf32, #tpu.memory_space<vmem>>, vector<1x512xf32>
    %4 = vector.broadcast %3 : vector<1x512xf32> to vector<8x512xf32>
    %5 = arith.addf %2, %4 : vector<8x512xf32>
    %cst_5 = arith.constant 0.000000e+00 : f32
    %6 = vector.broadcast %cst_5 : f32 to vector<8x512xf32>
    %7 = arith.maximumf %5, %6 : vector<8x512xf32>
    %8 = arith.truncf %7 : vector<8x512xf32> to vector<8x512xbf16>
    %c0_6 = arith.constant 0 : index
    %c0_7 = arith.constant 0 : index
    %9 = vector.load %arg6[%c0_6, %c0_7] : memref<512x512xbf16, #tpu.memory_space<vmem>>, vector<512x512xbf16>
    %cst_8 = arith.constant dense<0.000000e+00> : vector<8x512xf32>
    %10 = tpu.matmul %8, %9, %cst_8 {dimension_numbers = #tpu.dot_dimension_numbers<[1], [0], [0], [1], [0, 0, 1, 1], [], []>} : vector<8x512xbf16>, vector<512x512xbf16>, vector<8x512xf32> -> vector<8x512xf32>
    %c0_9 = arith.constant 0 : index
    %c0_10 = arith.constant 0 : index
    %11 = vector.load %arg8[%c0_9, %c0_10] : memref<1x512xf32, #tpu.memory_space<vmem>>, vector<1x512xf32>
    %12 = vector.broadcast %11 : vector<1x512xf32> to vector<8x512xf32>
    %13 = arith.addf %10, %12 : vector<8x512xf32>
    %14 = vector.shape_cast %13 : vector<8x512xf32> to vector<4x2x512xf32>
    %c0_11 = arith.constant 0 : index
    %c0_12 = arith.constant 0 : index
    %c0_13 = arith.constant 0 : index
    %15 = vector.load %arg16[%c0_11, %c0_12, %c0_13] : memref<4x2x512xf32, #tpu.memory_space<vmem>>, vector<4x2x512xf32>
    tpu.vector_store %arg16[%c0_11, %c0_12, %c0_13], %14 {strides = array<i32>} : memref<4x2x512xf32, #tpu.memory_space<vmem>>, vector<4x2x512xf32>,
    %c0_14 = arith.constant 0 : index
    %c0_15 = arith.constant 0 : index
    %16 = vector.load %arg7[%c0_14, %c0_15] : memref<128x512xbf16, #tpu.memory_space<vmem>>, vector<128x512xbf16>
    %c0_16 = arith.constant 0 : index
    %c0_17 = arith.constant 0 : index
    %17 = vector.load %arg2[%c0_16, %c0_17] : memref<2x128xf32, #tpu.memory_space<vmem>>, vector<2x128xf32>
    %c0_18 = arith.constant 0 : index
    %c0_19 = arith.constant 0 : index
    %18 = vector.load %arg3[%c0_18, %c0_19] : memref<2x128xf32, #tpu.memory_space<vmem>>, vector<2x128xf32>
    %c0_i32 = arith.constant 0 : i32
    %19 = arith.index_cast %c0_i32 : i32 to index
    %c0_20 = arith.constant 0 : index
    %c0_21 = arith.constant 0 : index
    %20 = vector.load %arg16[%19, %c0_20, %c0_21] : memref<4x2x512xf32, #tpu.memory_space<vmem>>, vector<1x2x512xf32>
    %21 = vector.shape_cast %20 : vector<1x2x512xf32> to vector<2x512xf32>
    %22 = arith.truncf %17 : vector<2x128xf32> to vector<2x128xbf16>
    %cst_22 = arith.constant dense<0.000000e+00> : vector<2x512xf32>
    %23 = tpu.matmul %22, %16, %cst_22 {dimension_numbers = #tpu.dot_dimension_numbers<[1], [0], [0], [1], [0, 0, 1, 1], [], []>} : vector<2x128xbf16>, vector<128x512xbf16>, vector<2x512xf32> -> vector<2x512xf32>
    %24 = arith.addf %21, %23 : vector<2x512xf32>
    %25 = vector.extract_strided_slice %24 {offsets = [0, 0], sizes = [2, 384], strides = [1, 1]} : vector<2x512xf32> to vector<2x384xf32>
    %26 = arith.negf %25 : vector<2x384xf32>
    %27 = math.exp %26 : vector<2x384xf32>
    %cst_23 = arith.constant 1.000000e+00 : f32
    %28 = vector.broadcast %cst_23 : f32 to vector<2x384xf32>
    %29 = arith.addf %28, %27 : vector<2x384xf32>
    %30 = arith.divf %28, %29 : vector<2x384xf32>
    %31 = vector.extract_strided_slice %30 {offsets = [0, 0], sizes = [2, 128], strides = [1, 1]} : vector<2x384xf32> to vector<2x128xf32>
    %32 = vector.extract_strided_slice %30 {offsets = [0, 128], sizes = [2, 128], strides = [1, 1]} : vector<2x384xf32> to vector<2x128xf32>
    %33 = vector.extract_strided_slice %30 {offsets = [0, 256], sizes = [2, 128], strides = [1, 1]} : vector<2x384xf32> to vector<2x128xf32>
    %34 = vector.extract_strided_slice %24 {offsets = [0, 384], sizes = [2, 128], strides = [1, 1]} : vector<2x512xf32> to vector<2x128xf32>
    %35 = math.tanh %34 : vector<2x128xf32>
    %36 = arith.mulf %32, %18 : vector<2x128xf32>
    %37 = arith.mulf %31, %35 : vector<2x128xf32>
    %38 = arith.addf %36, %37 : vector<2x128xf32>
    %39 = math.tanh %38 : vector<2x128xf32>
    %40 = arith.mulf %33, %39 : vector<2x128xf32>
    %41 = arith.index_cast %c0_i32 : i32 to index
    %c0_24 = arith.constant 0 : index
    %c0_25 = arith.constant 0 : index
    %42 = vector.load %arg17[%41, %c0_24, %c0_25] : memref<4x2x128xf32, #tpu.memory_space<vmem>>, vector<1x2x128xf32>
    %43 = vector.shape_cast %42 : vector<1x2x128xf32> to vector<2x128xf32>
    %44 = vector.shape_cast %40 : vector<2x128xf32> to vector<1x2x128xf32>
    tpu.vector_store %arg17[%41, %c0_24, %c0_25], %44 {strides = array<i32>} : memref<4x2x128xf32, #tpu.memory_space<vmem>>, vector<1x2x128xf32>,
    %c1_i32 = arith.constant 1 : i32
    %45 = arith.index_cast %c1_i32 : i32 to index
    %c0_26 = arith.constant 0 : index
    %c0_27 = arith.constant 0 : index
    %46 = vector.load %arg16[%45, %c0_26, %c0_27] : memref<4x2x512xf32, #tpu.memory_space<vmem>>, vector<1x2x512xf32>
    %47 = vector.shape_cast %46 : vector<1x2x512xf32> to vector<2x512xf32>
    %48 = arith.truncf %40 : vector<2x128xf32> to vector<2x128xbf16>
    %cst_28 = arith.constant dense<0.000000e+00> : vector<2x512xf32>
    %49 = tpu.matmul %48, %16, %cst_28 {dimension_numbers = #tpu.dot_dimension_numbers<[1], [0], [0], [1], [0, 0, 1, 1], [], []>} : vector<2x128xbf16>, vector<128x512xbf16>, vector<2x512xf32> -> vector<2x512xf32>
    %50 = arith.addf %47, %49 : vector<2x512xf32>
    %51 = vector.extract_strided_slice %50 {offsets = [0, 0], sizes = [2, 384], strides = [1, 1]} : vector<2x512xf32> to vector<2x384xf32>
    %52 = arith.negf %51 : vector<2x384xf32>
    %53 = math.exp %52 : vector<2x384xf32>
    %cst_29 = arith.constant 1.000000e+00 : f32
    %54 = vector.broadcast %cst_29 : f32 to vector<2x384xf32>
    %55 = arith.addf %54, %53 : vector<2x384xf32>
    %56 = arith.divf %54, %55 : vector<2x384xf32>
    %57 = vector.extract_strided_slice %56 {offsets = [0, 0], sizes = [2, 128], strides = [1, 1]} : vector<2x384xf32> to vector<2x128xf32>
    %58 = vector.extract_strided_slice %56 {offsets = [0, 128], sizes = [2, 128], strides = [1, 1]} : vector<2x384xf32> to vector<2x128xf32>
    %59 = vector.extract_strided_slice %56 {offsets = [0, 256], sizes = [2, 128], strides = [1, 1]} : vector<2x384xf32> to vector<2x128xf32>
    %60 = vector.extract_strided_slice %50 {offsets = [0, 384], sizes = [2, 128], strides = [1, 1]} : vector<2x512xf32> to vector<2x128xf32>
    %61 = math.tanh %60 : vector<2x128xf32>
    %62 = arith.mulf %58, %38 : vector<2x128xf32>
    %63 = arith.mulf %57, %61 : vector<2x128xf32>
    %64 = arith.addf %62, %63 : vector<2x128xf32>
    %65 = math.tanh %64 : vector<2x128xf32>
    %66 = arith.mulf %59, %65 : vector<2x128xf32>
    %67 = arith.index_cast %c1_i32 : i32 to index
    %c0_30 = arith.constant 0 : index
    %c0_31 = arith.constant 0 : index
    %68 = vector.load %arg17[%67, %c0_30, %c0_31] : memref<4x2x128xf32, #tpu.memory_space<vmem>>, vector<1x2x128xf32>
    %69 = vector.shape_cast %68 : vector<1x2x128xf32> to vector<2x128xf32>
    %70 = vector.shape_cast %66 : vector<2x128xf32> to vector<1x2x128xf32>
    tpu.vector_store %arg17[%67, %c0_30, %c0_31], %70 {strides = array<i32>} : memref<4x2x128xf32, #tpu.memory_space<vmem>>, vector<1x2x128xf32>,
    %c2_i32 = arith.constant 2 : i32
    %71 = arith.index_cast %c2_i32 : i32 to index
    %c0_32 = arith.constant 0 : index
    %c0_33 = arith.constant 0 : index
    %72 = vector.load %arg16[%71, %c0_32, %c0_33] : memref<4x2x512xf32, #tpu.memory_space<vmem>>, vector<1x2x512xf32>
    %73 = vector.shape_cast %72 : vector<1x2x512xf32> to vector<2x512xf32>
    %74 = arith.truncf %66 : vector<2x128xf32> to vector<2x128xbf16>
    %cst_34 = arith.constant dense<0.000000e+00> : vector<2x512xf32>
    %75 = tpu.matmul %74, %16, %cst_34 {dimension_numbers = #tpu.dot_dimension_numbers<[1], [0], [0], [1], [0, 0, 1, 1], [], []>} : vector<2x128xbf16>, vector<128x512xbf16>, vector<2x512xf32> -> vector<2x512xf32>
    %76 = arith.addf %73, %75 : vector<2x512xf32>
    %77 = vector.extract_strided_slice %76 {offsets = [0, 0], sizes = [2, 384], strides = [1, 1]} : vector<2x512xf32> to vector<2x384xf32>
    %78 = arith.negf %77 : vector<2x384xf32>
    %79 = math.exp %78 : vector<2x384xf32>
    %cst_35 = arith.constant 1.000000e+00 : f32
    %80 = vector.broadcast %cst_35 : f32 to vector<2x384xf32>
    %81 = arith.addf %80, %79 : vector<2x384xf32>
    %82 = arith.divf %80, %81 : vector<2x384xf32>
    %83 = vector.extract_strided_slice %82 {offsets = [0, 0], sizes = [2, 128], strides = [1, 1]} : vector<2x384xf32> to vector<2x128xf32>
    %84 = vector.extract_strided_slice %82 {offsets = [0, 128], sizes = [2, 128], strides = [1, 1]} : vector<2x384xf32> to vector<2x128xf32>
    %85 = vector.extract_strided_slice %82 {offsets = [0, 256], sizes = [2, 128], strides = [1, 1]} : vector<2x384xf32> to vector<2x128xf32>
    %86 = vector.extract_strided_slice %76 {offsets = [0, 384], sizes = [2, 128], strides = [1, 1]} : vector<2x512xf32> to vector<2x128xf32>
    %87 = math.tanh %86 : vector<2x128xf32>
    %88 = arith.mulf %84, %64 : vector<2x128xf32>
    %89 = arith.mulf %83, %87 : vector<2x128xf32>
    %90 = arith.addf %88, %89 : vector<2x128xf32>
    %91 = math.tanh %90 : vector<2x128xf32>
    %92 = arith.mulf %85, %91 : vector<2x128xf32>
    %93 = arith.index_cast %c2_i32 : i32 to index
    %c0_36 = arith.constant 0 : index
    %c0_37 = arith.constant 0 : index
    %94 = vector.load %arg17[%93, %c0_36, %c0_37] : memref<4x2x128xf32, #tpu.memory_space<vmem>>, vector<1x2x128xf32>
    %95 = vector.shape_cast %94 : vector<1x2x128xf32> to vector<2x128xf32>
    %96 = vector.shape_cast %92 : vector<2x128xf32> to vector<1x2x128xf32>
    tpu.vector_store %arg17[%93, %c0_36, %c0_37], %96 {strides = array<i32>} : memref<4x2x128xf32, #tpu.memory_space<vmem>>, vector<1x2x128xf32>,
    %c3_i32 = arith.constant 3 : i32
    %97 = arith.index_cast %c3_i32 : i32 to index
    %c0_38 = arith.constant 0 : index
    %c0_39 = arith.constant 0 : index
    %98 = vector.load %arg16[%97, %c0_38, %c0_39] : memref<4x2x512xf32, #tpu.memory_space<vmem>>, vector<1x2x512xf32>
    %99 = vector.shape_cast %98 : vector<1x2x512xf32> to vector<2x512xf32>
    %100 = arith.truncf %92 : vector<2x128xf32> to vector<2x128xbf16>
    %cst_40 = arith.constant dense<0.000000e+00> : vector<2x512xf32>
    %101 = tpu.matmul %100, %16, %cst_40 {dimension_numbers = #tpu.dot_dimension_numbers<[1], [0], [0], [1], [0, 0, 1, 1], [], []>} : vector<2x128xbf16>, vector<128x512xbf16>, vector<2x512xf32> -> vector<2x512xf32>
    %102 = arith.addf %99, %101 : vector<2x512xf32>
    %103 = vector.extract_strided_slice %102 {offsets = [0, 0], sizes = [2, 384], strides = [1, 1]} : vector<2x512xf32> to vector<2x384xf32>
    %104 = arith.negf %103 : vector<2x384xf32>
    %105 = math.exp %104 : vector<2x384xf32>
    %cst_41 = arith.constant 1.000000e+00 : f32
    %106 = vector.broadcast %cst_41 : f32 to vector<2x384xf32>
    %107 = arith.addf %106, %105 : vector<2x384xf32>
    %108 = arith.divf %106, %107 : vector<2x384xf32>
    %109 = vector.extract_strided_slice %108 {offsets = [0, 0], sizes = [2, 128], strides = [1, 1]} : vector<2x384xf32> to vector<2x128xf32>
    %110 = vector.extract_strided_slice %108 {offsets = [0, 128], sizes = [2, 128], strides = [1, 1]} : vector<2x384xf32> to vector<2x128xf32>
    %111 = vector.extract_strided_slice %108 {offsets = [0, 256], sizes = [2, 128], strides = [1, 1]} : vector<2x384xf32> to vector<2x128xf32>
    %112 = vector.extract_strided_slice %102 {offsets = [0, 384], sizes = [2, 128], strides = [1, 1]} : vector<2x512xf32> to vector<2x128xf32>
    %113 = math.tanh %112 : vector<2x128xf32>
    %114 = arith.mulf %110, %90 : vector<2x128xf32>
    %115 = arith.mulf %109, %113 : vector<2x128xf32>
    %116 = arith.addf %114, %115 : vector<2x128xf32>
    %117 = math.tanh %116 : vector<2x128xf32>
    %118 = arith.mulf %111, %117 : vector<2x128xf32>
    %119 = arith.index_cast %c3_i32 : i32 to index
    %c0_42 = arith.constant 0 : index
    %c0_43 = arith.constant 0 : index
    %120 = vector.load %arg17[%119, %c0_42, %c0_43] : memref<4x2x128xf32, #tpu.memory_space<vmem>>, vector<1x2x128xf32>
    %121 = vector.shape_cast %120 : vector<1x2x128xf32> to vector<2x128xf32>
    %122 = vector.shape_cast %118 : vector<2x128xf32> to vector<1x2x128xf32>
    tpu.vector_store %arg17[%119, %c0_42, %c0_43], %122 {strides = array<i32>} : memref<4x2x128xf32, #tpu.memory_space<vmem>>, vector<1x2x128xf32>,
    %c4_i32 = arith.constant 4 : i32
    %c0_44 = arith.constant 0 : index
    %c0_45 = arith.constant 0 : index
    %123 = vector.load %arg14[%c0_44, %c0_45] : memref<2x128xf32, #tpu.memory_space<vmem>>, vector<2x128xf32>
    tpu.vector_store %arg14[%c0_44, %c0_45], %118 {strides = array<i32>} : memref<2x128xf32, #tpu.memory_space<vmem>>, vector<2x128xf32>,
    %c0_46 = arith.constant 0 : index
    %c0_47 = arith.constant 0 : index
    %124 = vector.load %arg15[%c0_46, %c0_47] : memref<2x128xf32, #tpu.memory_space<vmem>>, vector<2x128xf32>
    tpu.vector_store %arg15[%c0_46, %c0_47], %116 {strides = array<i32>} : memref<2x128xf32, #tpu.memory_space<vmem>>, vector<2x128xf32>,
    %c0_48 = arith.constant 0 : index
    %c0_49 = arith.constant 0 : index
    %c0_50 = arith.constant 0 : index
    %125 = vector.load %arg17[%c0_48, %c0_49, %c0_50] : memref<4x2x128xf32, #tpu.memory_space<vmem>>, vector<4x2x128xf32>
    %126 = vector.shape_cast %125 : vector<4x2x128xf32> to vector<8x128xf32>
    %127 = arith.truncf %126 : vector<8x128xf32> to vector<8x128xbf16>
    %c0_51 = arith.constant 0 : index
    %c0_52 = arith.constant 0 : index
    %128 = vector.load %arg9[%c0_51, %c0_52] : memref<128x64xbf16, #tpu.memory_space<vmem>>, vector<128x64xbf16>
    %cst_53 = arith.constant dense<0.000000e+00> : vector<8x64xf32>
    %129 = tpu.matmul %127, %128, %cst_53 {dimension_numbers = #tpu.dot_dimension_numbers<[1], [0], [0], [1], [0, 0, 1, 1], [], []>} : vector<8x128xbf16>, vector<128x64xbf16>, vector<8x64xf32> -> vector<8x64xf32>
    %c0_54 = arith.constant 0 : index
    %c0_55 = arith.constant 0 : index
    %130 = vector.load %arg10[%c0_54, %c0_55] : memref<1x64xf32, #tpu.memory_space<vmem>>, vector<1x64xf32>
    %131 = vector.broadcast %130 : vector<1x64xf32> to vector<8x64xf32>
    %132 = arith.addf %129, %131 : vector<8x64xf32>
    %cst_56 = arith.constant 0.000000e+00 : f32
    %133 = vector.broadcast %cst_56 : f32 to vector<8x64xf32>
    %134 = arith.maximumf %132, %133 : vector<8x64xf32>
    %135 = arith.truncf %134 : vector<8x64xf32> to vector<8x64xbf16>
    %c0_57 = arith.constant 0 : index
    %c0_58 = arith.constant 0 : index
    %136 = vector.load %arg11[%c0_57, %c0_58] : memref<64x6xbf16, #tpu.memory_space<vmem>>, vector<64x6xbf16>
    %cst_59 = arith.constant dense<0.000000e+00> : vector<8x6xf32>
    %137 = tpu.matmul %135, %136, %cst_59 {dimension_numbers = #tpu.dot_dimension_numbers<[1], [0], [0], [1], [0, 0, 1, 1], [], []>} : vector<8x64xbf16>, vector<64x6xbf16>, vector<8x6xf32> -> vector<8x6xf32>
    %c0_60 = arith.constant 0 : index
    %c0_61 = arith.constant 0 : index
    %138 = vector.load %arg12[%c0_60, %c0_61] : memref<1x6xf32, #tpu.memory_space<vmem>>, vector<1x6xf32>
    %139 = vector.broadcast %138 : vector<1x6xf32> to vector<8x6xf32>
    %140 = arith.addf %137, %139 : vector<8x6xf32>
    %141 = vector.shape_cast %140 : vector<8x6xf32> to vector<4x2x6xf32>
    %c0_62 = arith.constant 0 : index
    %c0_63 = arith.constant 0 : index
    %c0_64 = arith.constant 0 : index
    %142 = vector.load %arg13[%c0_62, %c0_63, %c0_64] : memref<4x2x6xf32, #tpu.memory_space<vmem>>, vector<4x2x6xf32>
    tpu.vector_store %arg13[%c0_62, %c0_63, %c0_64], %141 {strides = array<i32>} : memref<4x2x6xf32, #tpu.memory_space<vmem>>, vector<4x2x6xf32>,
    return
  }
  func.func @transform_0(%arg0: i32) -> (i32, i32) {
    %c0_i32 = arith.constant 0 : i32
    %c0_i32_0 = arith.constant 0 : i32
    %c0_i32_1 = arith.constant 0 : i32
    return %c0_i32, %c0_i32_0 : i32, i32
  }
  func.func @transform_1(%arg0: i32) -> (i32, i32) {
    %c0_i32 = arith.constant 0 : i32
    %c0_i32_0 = arith.constant 0 : i32
    %c0_i32_1 = arith.constant 0 : i32
    return %c0_i32, %c0_i32_0 : i32, i32
  }
  func.func @transform_2(%arg0: i32) -> (i32, i32) {
    %c0_i32 = arith.constant 0 : i32
    %c0_i32_0 = arith.constant 0 : i32
    %c0_i32_1 = arith.constant 0 : i32
    return %c0_i32, %c0_i32_0 : i32, i32
  }
  func.func @transform_3(%arg0: i32) -> (i32, i32) {
    %c0_i32 = arith.constant 0 : i32
    %c0_i32_0 = arith.constant 0 : i32
    %c0_i32_1 = arith.constant 0 : i32
    return %c0_i32, %c0_i32_0 : i32, i32
  }
  func.func @transform_4(%arg0: i32) -> (i32, i32) {
    %c0_i32 = arith.constant 0 : i32
    %c0_i32_0 = arith.constant 0 : i32
    %c0_i32_1 = arith.constant 0 : i32
    return %c0_i32, %c0_i32_0 : i32, i32
  }
  func.func @transform_5(%arg0: i32) -> (i32, i32) {
    %c0_i32 = arith.constant 0 : i32
    %c0_i32_0 = arith.constant 0 : i32
    %c0_i32_1 = arith.constant 0 : i32
    return %c0_i32, %c0_i32_0 : i32, i32
  }
  func.func @transform_6(%arg0: i32) -> (i32, i32) {
    %c0_i32 = arith.constant 0 : i32
    %c0_i32_0 = arith.constant 0 : i32
    %c0_i32_1 = arith.constant 0 : i32
    return %c0_i32, %c0_i32_0 : i32, i32
  }
  func.func @transform_7(%arg0: i32) -> (i32, i32) {
    %c0_i32 = arith.constant 0 : i32
    %c0_i32_0 = arith.constant 0 : i32
    %c0_i32_1 = arith.constant 0 : i32
    return %c0_i32, %c0_i32_0 : i32, i32
  }
  func.func @transform_8(%arg0: i32) -> (i32, i32) {
    %c0_i32 = arith.constant 0 : i32
    %c0_i32_0 = arith.constant 0 : i32
    %c0_i32_1 = arith.constant 0 : i32
    return %c0_i32, %c0_i32_0 : i32, i32
  }
  func.func @transform_9(%arg0: i32) -> (i32, i32) {
    %c0_i32 = arith.constant 0 : i32
    %c0_i32_0 = arith.constant 0 : i32
    %c0_i32_1 = arith.constant 0 : i32
    return %c0_i32, %c0_i32_0 : i32, i32
  }
  func.func @transform_10(%arg0: i32) -> (i32, i32) {
    %c0_i32 = arith.constant 0 : i32
    %c0_i32_0 = arith.constant 0 : i32
    %c0_i32_1 = arith.constant 0 : i32
    return %c0_i32, %c0_i32_0 : i32, i32
  }
  func.func @transform_11(%arg0: i32) -> (i32, i32) {
    %c0_i32 = arith.constant 0 : i32
    %c0_i32_0 = arith.constant 0 : i32
    %c0_i32_1 = arith.constant 0 : i32
    return %c0_i32, %c0_i32_0 : i32, i32
  }
  func.func @transform_12(%arg0: i32) -> (i32, i32, i32) {
    %c0_i32 = arith.constant 0 : i32
    %c0_i32_0 = arith.constant 0 : i32
    %c0_i32_1 = arith.constant 0 : i32
    %c0_i32_2 = arith.constant 0 : i32
    return %c0_i32, %c0_i32_0, %c0_i32_1 : i32, i32, i32
  }
  func.func @transform_13(%arg0: i32) -> (i32, i32) {
    %c0_i32 = arith.constant 0 : i32
    %c0_i32_0 = arith.constant 0 : i32
    %c0_i32_1 = arith.constant 0 : i32
    return %c0_i32, %c0_i32_0 : i32, i32
  }
  func.func @transform_14(%arg0: i32) -> (i32, i32) {
    %c0_i32 = arith.constant 0 : i32
    %c0_i32_0 = arith.constant 0 : i32
    %c0_i32_1 = arith.constant 0 : i32
    return %c0_i32, %c0_i32_0 : i32, i32
  }
}

</mosaic_0001>

<llo_original>
// kernel: forward.2
$region0: #{forward.2}
  #allocation0 [shape = 'u32[]', space=smem, size = 0x4, offset = 0x4, fixed_abs, tag = 'smem constant byte address 0x4 - core index']
  #allocation1 [shape = 'u32[144,128]{1,0:T(1,128)}', space=vmem, size = 0x12000, scoped, tag = 'internal scratch']
  %s0 = inlined_call_operand.vmem [shape: bf16[1296,240], index: 0, kind: input, shape index: {}]
  %s1 = inlined_call_operand.vmem [shape: bf16[240,24], index: 1, kind: input, shape index: {}]
  %s2 = inlined_call_operand.vmem [shape: f32[1,24], index: 2, kind: input, shape index: {}]
  %s3 = inlined_call_operand.vmem [shape: bf16[1296,24], index: 3, kind: output, shape index: {}]
  %s4 = sld [smem:[#allocation0]]
  $region22: #{forward.2} parent=0
    _
  %s6 = ssub.s32 1, %s4
  %s7 = scalar_select 0, %s6, %s4
  // Predicated region
  $region2: #{forward.2} parent=0 // pred_check
    _
  $region3: #{forward.2} parent=0 // pred_check_branch
    %9 = sbr.rel (0) target = $region5
  $region4: #{forward.2} parent=0 // pred_region
    _
  $region5: #{forward.2} parent=0 // pred_fallthru
    _
  // Predicated region
  $region6: #{forward.2} parent=0 // pred_check
    _
  $region7: #{forward.2} parent=0 // pred_check_branch
    %11 = sbr.rel (0) target = $region9
  $region8: #{forward.2} parent=0 // pred_region
    _
  $region9: #{forward.2} parent=0 // pred_fallthru
    _
  // Predicated region
  $region10: #{forward.2} parent=0 // pred_check
    _
  $region11: #{forward.2} parent=0 // pred_check_branch
    %13 = sbr.rel (0) target = $region13
  $region12: #{forward.2} parent=0 // pred_region
    _
  $region13: #{forward.2} parent=0 // pred_fallthru
    _
  %v15 = vld [vmem:[%s0] sm:$0xff]
  %v16 = vld [vmem:[%s0 + $0x8] sm:$0xff]
  %v17 = vld [vmem:[%s0 + $0x10] sm:$0xff]
  %v18 = vld [vmem:[%s0 + $0x18] sm:$0xff]
  %v19 = vld [vmem:[%s0 + $0x20] sm:$0xff]
  %v20 = vld [vmem:[%s0 + $0x28] sm:$0xff]
  %v21 = vld [vmem:[%s0 + $0x30] sm:$0xff]
  %v22 = vld [vmem:[%s0 + $0x38] sm:$0xff]
  %v23 = vld [vmem:[%s0 + $0x40] sm:$0xff]
  %v24 = vld [vmem:[%s0 + $0x48] sm:$0xff]
  %v25 = vld [vmem:[%s0 + $0x50] sm:$0xff]
  %v26 = vld [vmem:[%s0 + $0x58] sm:$0xff]
  %v27 = vld [vmem:[%s0 + $0x60] sm:$0xff]
  %v28 = vld [vmem:[%s0 + $0x68] sm:$0xff]
  %v29 = vld [vmem:[%s0 + $0x70] sm:$0xff]
  %v30 = vld [vmem:[%s0 + $0x78] sm:$0xff]
  %v31 = vld [vmem:[%s0 + $0x80] sm:$0xff]
  %v32 = vld [vmem:[%s0 + $0x88] sm:$0xff]
  %v33 = vld [vmem:[%s0 + $0x90] sm:$0xff]
  %v34 = vld [vmem:[%s0 + $0x98] sm:$0xff]
  %v35 = vld [vmem:[%s0 + $0xa0] sm:$0xff]
  %v36 = vld [vmem:[%s0 + $0xa8] sm:$0xff]
  %v37 = vld [vmem:[%s0 + $0xb0] sm:$0xff]
  %v38 = vld [vmem:[%s0 + $0xb8] sm:$0xff]
  %v39 = vld [vmem:[%s0 + $0xc0] sm:$0xff]
  %v40 = vld [vmem:[%s0 + $0xc8] sm:$0xff]
  %v41 = vld [vmem:[%s0 + $0xd0] sm:$0xff]
  %v42 = vld [vmem:[%s0 + $0xd8] sm:$0xff]
  %v43 = vld [vmem:[%s0 + $0xe0] sm:$0xff]
  %v44 = vld [vmem:[%s0 + $0xe8] sm:$0xff]
  %v45 = vld [vmem:[%s0 + $0xf0] sm:$0xff]
  %v46 = vld [vmem:[%s0 + $0xf8] sm:$0xff]
  %v47 = vld [vmem:[%s0 + $0x100] sm:$0xff]
  %v48 = vld [vmem:[%s0 + $0x108] sm:$0xff]
  %v49 = vld [vmem:[%s0 + $0x110] sm:$0xff]
  %v50 = vld [vmem:[%s0 + $0x118] sm:$0xff]
  %v51 = vld [vmem:[%s0 + $0x120] sm:$0xff]
  %v52 = vld [vmem:[%s0 + $0x128] sm:$0xff]
  %v53 = vld [vmem:[%s0 + $0x130] sm:$0xff]
  %v54 = vld [vmem:[%s0 + $0x138] sm:$0xff]
  %v55 = vld [vmem:[%s0 + $0x140] sm:$0xff]
  %v56 = vld [vmem:[%s0 + $0x148] sm:$0xff]
  %v57 = vld [vmem:[%s0 + $0x150] sm:$0xff]
  %v58 = vld [vmem:[%s0 + $0x158] sm:$0xff]
  %v59 = vld [vmem:[%s0 + $0x160] sm:$0xff]
  %v60 = vld [vmem:[%s0 + $0x168] sm:$0xff]
  %v61 = vld [vmem:[%s0 + $0x170] sm:$0xff]
  %v62 = vld [vmem:[%s0 + $0x178] sm:$0xff]
  %v63 = vld [vmem:[%s0 + $0x180] sm:$0xff]
  %v64 = vld [vmem:[%s0 + $0x188] sm:$0xff]
  %v65 = vld [vmem:[%s0 + $0x190] sm:$0xff]
  %v66 = vld [vmem:[%s0 + $0x198] sm:$0xff]
  %v67 = vld [vmem:[%s0 + $0x1a0] sm:$0xff]
  %v68 = vld [vmem:[%s0 + $0x1a8] sm:$0xff]
  %v69 = vld [vmem:[%s0 + $0x1b0] sm:$0xff]
  %v70 = vld [vmem:[%s0 + $0x1b8] sm:$0xff]
  %v71 = vld [vmem:[%s0 + $0x1c0] sm:$0xff]
  %v72 = vld [vmem:[%s0 + $0x1c8] sm:$0xff]
  %v73 = vld [vmem:[%s0 + $0x1d0] sm:$0xff]
  %v74 = vld [vmem:[%s0 + $0x1d8] sm:$0xff]
  %v75 = vld [vmem:[%s0 + $0x1e0] sm:$0xff]
  %v76 = vld [vmem:[%s0 + $0x1e8] sm:$0xff]
  %v77 = vld [vmem:[%s0 + $0x1f0] sm:$0xff]
  %v78 = vld [vmem:[%s0 + $0x1f8] sm:$0xff]
  %v79 = vld [vmem:[%s0 + $0x200] sm:$0xff]
  %v80 = vld [vmem:[%s0 + $0x208] sm:$0xff]
  %v81 = vld [vmem:[%s0 + $0x210] sm:$0xff]
  %v82 = vld [vmem:[%s0 + $0x218] sm:$0xff]
  %v83 = vld [vmem:[%s0 + $0x220] sm:$0xff]
  %v84 = vld [vmem:[%s0 + $0x228] sm:$0xff]
  %v85 = vld [vmem:[%s0 + $0x230] sm:$0xff]
  %v86 = vld [vmem:[%s0 + $0x238] sm:$0xff]
  %v87 = vld [vmem:[%s0 + $0x240] sm:$0xff]
  %v88 = vld [vmem:[%s0 + $0x248] sm:$0xff]
  %v89 = vld [vmem:[%s0 + $0x250] sm:$0xff]
  %v90 = vld [vmem:[%s0 + $0x258] sm:$0xff]
  %v91 = vld [vmem:[%s0 + $0x260] sm:$0xff]
  %v92 = vld [vmem:[%s0 + $0x268] sm:$0xff]
  %v93 = vld [vmem:[%s0 + $0x270] sm:$0xff]
  %v94 = vld [vmem:[%s0 + $0x278] sm:$0xff]
  %v95 = vld [vmem:[%s0 + $0x280] sm:$0xff]
  %v96 = vld [vmem:[%s0 + $0x288] sm:$0xff]
  %v97 = vld [vmem:[%s0 + $0x290] sm:$0xff]
  %v98 = vld [vmem:[%s0 + $0x298] sm:$0xff]
  %v99 = vld [vmem:[%s0 + $0x2a0] sm:$0xff]
  %v100 = vld [vmem:[%s0 + $0x2a8] sm:$0xff]
  %v101 = vld [vmem:[%s0 + $0x2b0] sm:$0xff]
  %v102 = vld [vmem:[%s0 + $0x2b8] sm:$0xff]
  %v103 = vld [vmem:[%s0 + $0x2c0] sm:$0xff]
  %v104 = vld [vmem:[%s0 + $0x2c8] sm:$0xff]
  %v105 = vld [vmem:[%s0 + $0x2d0] sm:$0xff]
  %v106 = vld [vmem:[%s0 + $0x2d8] sm:$0xff]
  %v107 = vld [vmem:[%s0 + $0x2e0] sm:$0xff]
  %v108 = vld [vmem:[%s0 + $0x2e8] sm:$0xff]
  %v109 = vld [vmem:[%s0 + $0x2f0] sm:$0xff]
  %v110 = vld [vmem:[%s0 + $0x2f8] sm:$0xff]
  %v111 = vld [vmem:[%s0 + $0x300] sm:$0xff]
  %v112 = vld [vmem:[%s0 + $0x308] sm:$0xff]
  %v113 = vld [vmem:[%s0 + $0x310] sm:$0xff]
  %v114 = vld [vmem:[%s0 + $0x318] sm:$0xff]
  %v115 = vld [vmem:[%s0 + $0x320] sm:$0xff]
  %v116 = vld [vmem:[%s0 + $0x328] sm:$0xff]
  %v117 = vld [vmem:[%s0 + $0x330] sm:$0xff]
  %v118 = vld [vmem:[%s0 + $0x338] sm:$0xff]
  %v119 = vld [vmem:[%s0 + $0x340] sm:$0xff]
  %v120 = vld [vmem:[%s0 + $0x348] sm:$0xff]
  %v121 = vld [vmem:[%s0 + $0x350] sm:$0xff]
  %v122 = vld [vmem:[%s0 + $0x358] sm:$0xff]
  %v123 = vld [vmem:[%s0 + $0x360] sm:$0xff]
  %v124 = vld [vmem:[%s0 + $0x368] sm:$0xff]
  %v125 = vld [vmem:[%s0 + $0x370] sm:$0xff]
  %v126 = vld [vmem:[%s0 + $0x378] sm:$0xff]
  %v127 = vld [vmem:[%s0 + $0x380] sm:$0xff]
  %v128 = vld [vmem:[%s0 + $0x388] sm:$0xff]
  %v129 = vld [vmem:[%s0 + $0x390] sm:$0xff]
  %v130 = vld [vmem:[%s0 + $0x398] sm:$0xff]
  %v131 = vld [vmem:[%s0 + $0x3a0] sm:$0xff]
  %v132 = vld [vmem:[%s0 + $0x3a8] sm:$0xff]
  %v133 = vld [vmem:[%s0 + $0x3b0] sm:$0xff]
  %v134 = vld [vmem:[%s0 + $0x3b8] sm:$0xff]
  %v135 = vld [vmem:[%s0 + $0x3c0] sm:$0xff]
  %v136 = vld [vmem:[%s0 + $0x3c8] sm:$0xff]
  %v137 = vld [vmem:[%s0 + $0x3d0] sm:$0xff]
  %v138 = vld [vmem:[%s0 + $0x3d8] sm:$0xff]
  %v139 = vld [vmem:[%s0 + $0x3e0] sm:$0xff]
  %v140 = vld [vmem:[%s0 + $0x3e8] sm:$0xff]
  %v141 = vld [vmem:[%s0 + $0x3f0] sm:$0xff]
  %v142 = vld [vmem:[%s0 + $0x3f8] sm:$0xff]
  %v143 = vld [vmem:[%s0 + $0x400] sm:$0xff]
  %v144 = vld [vmem:[%s0 + $0x408] sm:$0xff]
  %v145 = vld [vmem:[%s0 + $0x410] sm:$0xff]
  %v146 = vld [vmem:[%s0 + $0x418] sm:$0xff]
  %v147 = vld [vmem:[%s0 + $0x420] sm:$0xff]
  %v148 = vld [vmem:[%s0 + $0x428] sm:$0xff]
  %v149 = vld [vmem:[%s0 + $0x430] sm:$0xff]
  %v150 = vld [vmem:[%s0 + $0x438] sm:$0xff]
  %v151 = vld [vmem:[%s0 + $0x440] sm:$0xff]
  %v152 = vld [vmem:[%s0 + $0x448] sm:$0xff]
  %v153 = vld [vmem:[%s0 + $0x450] sm:$0xff]
  %v154 = vld [vmem:[%s0 + $0x458] sm:$0xff]
  %v155 = vld [vmem:[%s0 + $0x460] sm:$0xff]
  %v156 = vld [vmem:[%s0 + $0x468] sm:$0xff]
  %v157 = vld [vmem:[%s0 + $0x470] sm:$0xff]
  %v158 = vld [vmem:[%s0 + $0x478] sm:$0xff]
  %v159 = vld [vmem:[%s0 + $0x480] sm:$0xff]
  %v160 = vld [vmem:[%s0 + $0x488] sm:$0xff]
  %v161 = vld [vmem:[%s0 + $0x490] sm:$0xff]
  %v162 = vld [vmem:[%s0 + $0x498] sm:$0xff]
  %v163 = vld [vmem:[%s0 + $0x4a0] sm:$0xff]
  %v164 = vld [vmem:[%s0 + $0x4a8] sm:$0xff]
  %v165 = vld [vmem:[%s0 + $0x4b0] sm:$0xff]
  %v166 = vld [vmem:[%s0 + $0x4b8] sm:$0xff]
  %v167 = vld [vmem:[%s0 + $0x4c0] sm:$0xff]
  %v168 = vld [vmem:[%s0 + $0x4c8] sm:$0xff]
  %v169 = vld [vmem:[%s0 + $0x4d0] sm:$0xff]
  %v170 = vld [vmem:[%s0 + $0x4d8] sm:$0xff]
  %v171 = vld [vmem:[%s0 + $0x4e0] sm:$0xff]
  %v172 = vld [vmem:[%s0 + $0x4e8] sm:$0xff]
  %v173 = vld [vmem:[%s0 + $0x4f0] sm:$0xff]
  %v174 = vld [vmem:[%s0 + $0x4f8] sm:$0xff]
  %v175 = vld [vmem:[%s0 + $0x500] sm:$0xff]
  %v176 = vld [vmem:[%s0 + $0x508] sm:$0xff]
  %v177 = vld [vmem:[%s1] sm:$0xf]
  %v178 = vld [vmem:[%s1 + $0x4] sm:$0xf]
  %v179 = vld [vmem:[%s1 + $0x8] sm:$0xf]
  %v180 = vld [vmem:[%s1 + $0xc] sm:$0xf]
  %v181 = vld [vmem:[%s1 + $0x10] sm:$0xf]
  %v182 = vld [vmem:[%s1 + $0x14] sm:$0xf]
  %v183 = vld [vmem:[%s1 + $0x18] sm:$0xf]
  %v184 = vld [vmem:[%s1 + $0x1c] sm:$0xf]
  %v185 = vld [vmem:[%s1 + $0x20] sm:$0xf]
  %v186 = vld [vmem:[%s1 + $0x24] sm:$0xf]
  %v187 = vld [vmem:[%s1 + $0x28] sm:$0xf]
  %v188 = vld [vmem:[%s1 + $0x2c] sm:$0xf]
  %v189 = vld [vmem:[%s1 + $0x30] sm:$0xf]
  %v190 = vld [vmem:[%s1 + $0x34] sm:$0xf]
  %v191 = vld [vmem:[%s1 + $0x38] sm:$0xf]
  %v192 = vld [vmem:[%s1 + $0x3c] sm:$0xf]
  %v193 = vld [vmem:[%s1 + $0x40] sm:$0xf]
  %v194 = vld [vmem:[%s1 + $0x44] sm:$0xf]
  %v195 = vld [vmem:[%s1 + $0x48] sm:$0xf]
  %v196 = vld [vmem:[%s1 + $0x4c] sm:$0xf]
  %v197 = vld [vmem:[%s1 + $0x50] sm:$0xf]
  %v198 = vld [vmem:[%s1 + $0x54] sm:$0xf]
  %v199 = vld [vmem:[%s1 + $0x58] sm:$0xf]
  %v200 = vld [vmem:[%s1 + $0x5c] sm:$0xf]
  %v201 = vld [vmem:[%s1 + $0x60] sm:$0xf]
  %v202 = vld [vmem:[%s1 + $0x64] sm:$0xf]
  %v203 = vld [vmem:[%s1 + $0x68] sm:$0xf]
  %v204 = vld [vmem:[%s1 + $0x6c] sm:$0xf]
  %v205 = vld [vmem:[%s1 + $0x70] sm:$0xf]
  %v206 = vld [vmem:[%s1 + $0x74] sm:$0xf]
  %v207 = vld [vmem:[%s2] sm:$0x1]
  %v209 = vlaneseq
  %v210 = vshrl.u32 %v209, 7
  %v211 = vsub.s32 0, %v210
  %v212 = vrot.slane %v207, %v211
  %v376 = vunpack.c.l.b16 %v15
  %v377 = vunpack.c.h.b16 %v15
  %v378 = vunpack.c.l.b16 %v16
  %v379 = vunpack.c.h.b16 %v16
  %v380 = vunpack.c.l.b16 %v17
  %v381 = vunpack.c.h.b16 %v17
  %v382 = vunpack.c.l.b16 %v18
  %v383 = vunpack.c.h.b16 %v18
  %v384 = vunpack.c.l.b16 %v19
  %v385 = vunpack.c.h.b16 %v19
  %v386 = vunpack.c.l.b16 %v20
  %v387 = vunpack.c.h.b16 %v20
  %v388 = vunpack.c.l.b16 %v21
  %v389 = vunpack.c.h.b16 %v21
  %v390 = vunpack.c.l.b16 %v22
  %v391 = vunpack.c.h.b16 %v22
  %v392 = vunpack.c.l.b16 %v23
  %v393 = vunpack.c.h.b16 %v23
  %v394 = vunpack.c.l.b16 %v24
  %v395 = vunpack.c.h.b16 %v24
  %v396 = vunpack.c.l.b16 %v25
  %v397 = vunpack.c.h.b16 %v25
  %v398 = vunpack.c.l.b16 %v26
  %v399 = vunpack.c.h.b16 %v26
  %v400 = vunpack.c.l.b16 %v27
  %v401 = vunpack.c.h.b16 %v27
  %v402 = vunpack.c.l.b16 %v28
  %v403 = vunpack.c.h.b16 %v28
  %v404 = vunpack.c.l.b16 %v29
  %v405 = vunpack.c.h.b16 %v29
  %v406 = vunpack.c.l.b16 %v30
  %v407 = vunpack.c.h.b16 %v30
  %v408 = vunpack.c.l.b16 %v31
  %v409 = vunpack.c.h.b16 %v31
  %v410 = vunpack.c.l.b16 %v32
  %v411 = vunpack.c.h.b16 %v32
  %v412 = vunpack.c.l.b16 %v33
  %v413 = vunpack.c.h.b16 %v33
  %v414 = vunpack.c.l.b16 %v34
  %v415 = vunpack.c.h.b16 %v34
  %v416 = vunpack.c.l.b16 %v35
  %v417 = vunpack.c.h.b16 %v35
  %v418 = vunpack.c.l.b16 %v36
  %v419 = vunpack.c.h.b16 %v36
  %v420 = vunpack.c.l.b16 %v37
  %v421 = vunpack.c.h.b16 %v37
  %v422 = vunpack.c.l.b16 %v38
  %v423 = vunpack.c.h.b16 %v38
  %v424 = vunpack.c.l.b16 %v39
  %v425 = vunpack.c.h.b16 %v39
  %v426 = vunpack.c.l.b16 %v40
  %v427 = vunpack.c.h.b16 %v40
  %v428 = vunpack.c.l.b16 %v41
  %v429 = vunpack.c.h.b16 %v41
  %v430 = vunpack.c.l.b16 %v42
  %v431 = vunpack.c.h.b16 %v42
  %v432 = vunpack.c.l.b16 %v43
  %v433 = vunpack.c.h.b16 %v43
  %v434 = vunpack.c.l.b16 %v44
  %v435 = vunpack.c.h.b16 %v44
  %v436 = vunpack.c.l.b16 %v45
  %v437 = vunpack.c.h.b16 %v45
  %v438 = vunpack.c.l.b16 %v46
  %v439 = vunpack.c.h.b16 %v46
  %v440 = vunpack.c.l.b16 %v47
  %v441 = vunpack.c.h.b16 %v47
  %v442 = vunpack.c.l.b16 %v48
  %v443 = vunpack.c.h.b16 %v48
  %v444 = vunpack.c.l.b16 %v49
  %v445 = vunpack.c.h.b16 %v49
  %v446 = vunpack.c.l.b16 %v50
  %v447 = vunpack.c.h.b16 %v50
  %v448 = vunpack.c.l.b16 %v51
  %v449 = vunpack.c.h.b16 %v51
  %v450 = vunpack.c.l.b16 %v52
  %v451 = vunpack.c.h.b16 %v52
  %v452 = vunpack.c.l.b16 %v53
  %v453 = vunpack.c.h.b16 %v53
  %v454 = vunpack.c.l.b16 %v54
  %v455 = vunpack.c.h.b16 %v54
  %v456 = vunpack.c.l.b16 %v55
  %v457 = vunpack.c.h.b16 %v55
  %v458 = vunpack.c.l.b16 %v56
  %v459 = vunpack.c.h.b16 %v56
  %v460 = vunpack.c.l.b16 %v57
  %v461 = vunpack.c.h.b16 %v57
  %v462 = vunpack.c.l.b16 %v58
  %v463 = vunpack.c.h.b16 %v58
  %v464 = vunpack.c.l.b16 %v59
  %v465 = vunpack.c.h.b16 %v59
  %v466 = vunpack.c.l.b16 %v60
  %v467 = vunpack.c.h.b16 %v60
  %v468 = vunpack.c.l.b16 %v61
  %v469 = vunpack.c.h.b16 %v61
  %v470 = vunpack.c.l.b16 %v62
  %v471 = vunpack.c.h.b16 %v62
  %v472 = vunpack.c.l.b16 %v63
  %v473 = vunpack.c.h.b16 %v63
  %v474 = vunpack.c.l.b16 %v64
  %v475 = vunpack.c.h.b16 %v64
  %v476 = vunpack.c.l.b16 %v65
  %v477 = vunpack.c.h.b16 %v65
  %v478 = vunpack.c.l.b16 %v66
  %v479 = vunpack.c.h.b16 %v66
  %v480 = vunpack.c.l.b16 %v67
  %v481 = vunpack.c.h.b16 %v67
  %v482 = vunpack.c.l.b16 %v68
  %v483 = vunpack.c.h.b16 %v68
  %v484 = vunpack.c.l.b16 %v69
  %v485 = vunpack.c.h.b16 %v69
  %v486 = vunpack.c.l.b16 %v70
  %v487 = vunpack.c.h.b16 %v70
  %v488 = vunpack.c.l.b16 %v71
  %v489 = vunpack.c.h.b16 %v71
  %v490 = vunpack.c.l.b16 %v72
  %v491 = vunpack.c.h.b16 %v72
  %v492 = vunpack.c.l.b16 %v73
  %v493 = vunpack.c.h.b16 %v73
  %v494 = vunpack.c.l.b16 %v74
  %v495 = vunpack.c.h.b16 %v74
  %v496 = vunpack.c.l.b16 %v75
  %v497 = vunpack.c.h.b16 %v75
  %v498 = vunpack.c.l.b16 %v76
  %v499 = vunpack.c.h.b16 %v76
  %v500 = vunpack.c.l.b16 %v77
  %v501 = vunpack.c.h.b16 %v77
  %v502 = vunpack.c.l.b16 %v78
  %v503 = vunpack.c.h.b16 %v78
  %v504 = vunpack.c.l.b16 %v79
  %v505 = vunpack.c.h.b16 %v79
  %v506 = vunpack.c.l.b16 %v80
  %v507 = vunpack.c.h.b16 %v80
  %v508 = vunpack.c.l.b16 %v81
  %v509 = vunpack.c.h.b16 %v81
  %v510 = vunpack.c.l.b16 %v82
  %v511 = vunpack.c.h.b16 %v82
  %v512 = vunpack.c.l.b16 %v83
  %v513 = vunpack.c.h.b16 %v83
  %v514 = vunpack.c.l.b16 %v84
  %v515 = vunpack.c.h.b16 %v84
  %v516 = vunpack.c.l.b16 %v85
  %v517 = vunpack.c.h.b16 %v85
  %v518 = vunpack.c.l.b16 %v86
  %v519 = vunpack.c.h.b16 %v86
  %v520 = vunpack.c.l.b16 %v87
  %v521 = vunpack.c.h.b16 %v87
  %v522 = vunpack.c.l.b16 %v88
  %v523 = vunpack.c.h.b16 %v88
  %v524 = vunpack.c.l.b16 %v89
  %v525 = vunpack.c.h.b16 %v89
  %v526 = vunpack.c.l.b16 %v90
  %v527 = vunpack.c.h.b16 %v90
  %v528 = vunpack.c.l.b16 %v91
  %v529 = vunpack.c.h.b16 %v91
  %v530 = vunpack.c.l.b16 %v92
  %v531 = vunpack.c.h.b16 %v92
  %v532 = vunpack.c.l.b16 %v93
  %v533 = vunpack.c.h.b16 %v93
  %v534 = vunpack.c.l.b16 %v94
  %v535 = vunpack.c.h.b16 %v94
  %v536 = vunpack.c.l.b16 %v95
  %v537 = vunpack.c.h.b16 %v95
  %v538 = vunpack.c.l.b16 %v96
  %v539 = vunpack.c.h.b16 %v96
  %v540 = vunpack.c.l.b16 %v97
  %v541 = vunpack.c.h.b16 %v97
  %v542 = vunpack.c.l.b16 %v98
  %v543 = vunpack.c.h.b16 %v98
  %v544 = vunpack.c.l.b16 %v99
  %v545 = vunpack.c.h.b16 %v99
  %v546 = vunpack.c.l.b16 %v100
  %v547 = vunpack.c.h.b16 %v100
  %v548 = vunpack.c.l.b16 %v101
  %v549 = vunpack.c.h.b16 %v101
  %v550 = vunpack.c.l.b16 %v102
  %v551 = vunpack.c.h.b16 %v102
  %v552 = vunpack.c.l.b16 %v103
  %v553 = vunpack.c.h.b16 %v103
  %v554 = vunpack.c.l.b16 %v104
  %v555 = vunpack.c.h.b16 %v104
  %v556 = vunpack.c.l.b16 %v105
  %v557 = vunpack.c.h.b16 %v105
  %v558 = vunpack.c.l.b16 %v106
  %v559 = vunpack.c.h.b16 %v106
  %v560 = vunpack.c.l.b16 %v107
  %v561 = vunpack.c.h.b16 %v107
  %v562 = vunpack.c.l.b16 %v108
  %v563 = vunpack.c.h.b16 %v108
  %v564 = vunpack.c.l.b16 %v109
  %v565 = vunpack.c.h.b16 %v109
  %v566 = vunpack.c.l.b16 %v110
  %v567 = vunpack.c.h.b16 %v110
  %v568 = vunpack.c.l.b16 %v111
  %v569 = vunpack.c.h.b16 %v111
  %v570 = vunpack.c.l.b16 %v112
  %v571 = vunpack.c.h.b16 %v112
  %v572 = vunpack.c.l.b16 %v113
  %v573 = vunpack.c.h.b16 %v113
  %v574 = vunpack.c.l.b16 %v114
  %v575 = vunpack.c.h.b16 %v114
  %v576 = vunpack.c.l.b16 %v115
  %v577 = vunpack.c.h.b16 %v115
  %v578 = vunpack.c.l.b16 %v116
  %v579 = vunpack.c.h.b16 %v116
  %v580 = vunpack.c.l.b16 %v117
  %v581 = vunpack.c.h.b16 %v117
  %v582 = vunpack.c.l.b16 %v118
  %v583 = vunpack.c.h.b16 %v118
  %v584 = vunpack.c.l.b16 %v119
  %v585 = vunpack.c.h.b16 %v119
  %v586 = vunpack.c.l.b16 %v120
  %v587 = vunpack.c.h.b16 %v120
  %v588 = vunpack.c.l.b16 %v121
  %v589 = vunpack.c.h.b16 %v121
  %v590 = vunpack.c.l.b16 %v122
  %v591 = vunpack.c.h.b16 %v122
  %v592 = vunpack.c.l.b16 %v123
  %v593 = vunpack.c.h.b16 %v123
  %v594 = vunpack.c.l.b16 %v124
  %v595 = vunpack.c.h.b16 %v124
  %v596 = vunpack.c.l.b16 %v125
  %v597 = vunpack.c.h.b16 %v125
  %v598 = vunpack.c.l.b16 %v126
  %v599 = vunpack.c.h.b16 %v126
  %v600 = vunpack.c.l.b16 %v127
  %v601 = vunpack.c.h.b16 %v127
  %v602 = vunpack.c.l.b16 %v128
  %v603 = vunpack.c.h.b16 %v128
  %v604 = vunpack.c.l.b16 %v129
  %v605 = vunpack.c.h.b16 %v129
  %v606 = vunpack.c.l.b16 %v130
  %v607 = vunpack.c.h.b16 %v130
  %v608 = vunpack.c.l.b16 %v131
  %v609 = vunpack.c.h.b16 %v131
  %v610 = vunpack.c.l.b16 %v132
  %v611 = vunpack.c.h.b16 %v132
  %v612 = vunpack.c.l.b16 %v133
  %v613 = vunpack.c.h.b16 %v133
  %v614 = vunpack.c.l.b16 %v134
  %v615 = vunpack.c.h.b16 %v134
  %v616 = vunpack.c.l.b16 %v135
  %v617 = vunpack.c.h.b16 %v135
  %v618 = vunpack.c.l.b16 %v136
  %v619 = vunpack.c.h.b16 %v136
  %v620 = vunpack.c.l.b16 %v137
  %v621 = vunpack.c.h.b16 %v137
  %v622 = vunpack.c.l.b16 %v138
  %v623 = vunpack.c.h.b16 %v138
  %v624 = vunpack.c.l.b16 %v139
  %v625 = vunpack.c.h.b16 %v139
  %v626 = vunpack.c.l.b16 %v140
  %v627 = vunpack.c.h.b16 %v140
  %v628 = vunpack.c.l.b16 %v141
  %v629 = vunpack.c.h.b16 %v141
  %v630 = vunpack.c.l.b16 %v142
  %v631 = vunpack.c.h.b16 %v142
  %v632 = vunpack.c.l.b16 %v143
  %v633 = vunpack.c.h.b16 %v143
  %v634 = vunpack.c.l.b16 %v144
  %v635 = vunpack.c.h.b16 %v144
  %v636 = vunpack.c.l.b16 %v145
  %v637 = vunpack.c.h.b16 %v145
  %v638 = vunpack.c.l.b16 %v146
  %v639 = vunpack.c.h.b16 %v146
  %v640 = vunpack.c.l.b16 %v147
  %v641 = vunpack.c.h.b16 %v147
  %v642 = vunpack.c.l.b16 %v148
  %v643 = vunpack.c.h.b16 %v148
  %v644 = vunpack.c.l.b16 %v149
  %v645 = vunpack.c.h.b16 %v149
  %v646 = vunpack.c.l.b16 %v150
  %v647 = vunpack.c.h.b16 %v150
  %v648 = vunpack.c.l.b16 %v151
  %v649 = vunpack.c.h.b16 %v151
  %v650 = vunpack.c.l.b16 %v152
  %v651 = vunpack.c.h.b16 %v152
  %v652 = vunpack.c.l.b16 %v153
  %v653 = vunpack.c.h.b16 %v153
  %v654 = vunpack.c.l.b16 %v154
  %v655 = vunpack.c.h.b16 %v154
  %v656 = vunpack.c.l.b16 %v155
  %v657 = vunpack.c.h.b16 %v155
  %v658 = vunpack.c.l.b16 %v156
  %v659 = vunpack.c.h.b16 %v156
  %v660 = vunpack.c.l.b16 %v157
  %v661 = vunpack.c.h.b16 %v157
  %v662 = vunpack.c.l.b16 %v158
  %v663 = vunpack.c.h.b16 %v158
  %v664 = vunpack.c.l.b16 %v159
  %v665 = vunpack.c.h.b16 %v159
  %v666 = vunpack.c.l.b16 %v160
  %v667 = vunpack.c.h.b16 %v160
  %v668 = vunpack.c.l.b16 %v161
  %v669 = vunpack.c.h.b16 %v161
  %v670 = vunpack.c.l.b16 %v162
  %v671 = vunpack.c.h.b16 %v162
  %v672 = vunpack.c.l.b16 %v163
  %v673 = vunpack.c.h.b16 %v163
  %v674 = vunpack.c.l.b16 %v164
  %v675 = vunpack.c.h.b16 %v164
  %v676 = vunpack.c.l.b16 %v165
  %v677 = vunpack.c.h.b16 %v165
  %v678 = vunpack.c.l.b16 %v166
  %v679 = vunpack.c.h.b16 %v166
  %v680 = vunpack.c.l.b16 %v167
  %v681 = vunpack.c.h.b16 %v167
  %v682 = vunpack.c.l.b16 %v168
  %v683 = vunpack.c.h.b16 %v168
  %v684 = vunpack.c.l.b16 %v169
  %v685 = vunpack.c.h.b16 %v169
  %v686 = vunpack.c.l.b16 %v170
  %v687 = vunpack.c.h.b16 %v170
  %v688 = vunpack.c.l.b16 %v171
  %v689 = vunpack.c.h.b16 %v171
  %v690 = vunpack.c.l.b16 %v172
  %v691 = vunpack.c.h.b16 %v172
  %v692 = vunpack.c.l.b16 %v173
  %v693 = vunpack.c.h.b16 %v173
  %v694 = vunpack.c.l.b16 %v174
  %v695 = vunpack.c.h.b16 %v174
  %v696 = vunpack.c.l.b16 %v175
  %v697 = vunpack.c.h.b16 %v175
  %v698 = vunpack.c.l.b16 %v176
  %v699 = vunpack.c.h.b16 %v176
  %v700 = vpack.c.b16 %v378, %v376
  %v701 = vpack.c.b16 %v379, %v377
  %v702 = vpack.c.b16 %v382, %v380
  %v703 = vpack.c.b16 %v383, %v381
  %v704 = vpack.c.b16 %v386, %v384
  %v705 = vpack.c.b16 %v387, %v385
  %v706 = vpack.c.b16 %v390, %v388
  %v707 = vpack.c.b16 %v391, %v389
  %v708 = vpack.c.b16 %v394, %v392
  %v709 = vpack.c.b16 %v395, %v393
  %v710 = vpack.c.b16 %v398, %v396
  %v711 = vpack.c.b16 %v399, %v397
  %v712 = vpack.c.b16 %v402, %v400
  %v713 = vpack.c.b16 %v403, %v401
  %v714 = vpack.c.b16 %v406, %v404
  %v715 = vpack.c.b16 %v407, %v405
  %v716 = vpack.c.b16 %v410, %v408
  %v717 = vpack.c.b16 %v411, %v409
  %v718 = vpack.c.b16 %v414, %v412
  %v719 = vpack.c.b16 %v415, %v413
  %v720 = vpack.c.b16 %v418, %v416
  %v721 = vpack.c.b16 %v419, %v417
  %v722 = vpack.c.b16 %v422, %v420
  %v723 = vpack.c.b16 %v423, %v421
  %v724 = vpack.c.b16 %v426, %v424
  %v725 = vpack.c.b16 %v427, %v425
  %v726 = vpack.c.b16 %v430, %v428
  %v727 = vpack.c.b16 %v431, %v429
  %v728 = vpack.c.b16 %v434, %v432
  %v729 = vpack.c.b16 %v435, %v433
  %v730 = vpack.c.b16 %v438, %v436
  %v731 = vpack.c.b16 %v439, %v437
  %v732 = vpack.c.b16 %v442, %v440
  %v733 = vpack.c.b16 %v443, %v441
  %v734 = vpack.c.b16 %v446, %v444
  %v735 = vpack.c.b16 %v447, %v445
  %v736 = vpack.c.b16 %v450, %v448
  %v737 = vpack.c.b16 %v451, %v449
  %v738 = vpack.c.b16 %v454, %v452
  %v739 = vpack.c.b16 %v455, %v453
  %v740 = vpack.c.b16 %v458, %v456
  %v741 = vpack.c.b16 %v459, %v457
  %v742 = vpack.c.b16 %v462, %v460
  %v743 = vpack.c.b16 %v463, %v461
  %v744 = vpack.c.b16 %v466, %v464
  %v745 = vpack.c.b16 %v467, %v465
  %v746 = vpack.c.b16 %v470, %v468
  %v747 = vpack.c.b16 %v471, %v469
  %v748 = vpack.c.b16 %v474, %v472
  %v749 = vpack.c.b16 %v475, %v473
  %v750 = vpack.c.b16 %v478, %v476
  %v751 = vpack.c.b16 %v479, %v477
  %v752 = vpack.c.b16 %v482, %v480
  %v753 = vpack.c.b16 %v483, %v481
  %v754 = vpack.c.b16 %v486, %v484
  %v755 = vpack.c.b16 %v487, %v485
  %v756 = vpack.c.b16 %v490, %v488
  %v757 = vpack.c.b16 %v491, %v489
  %v758 = vpack.c.b16 %v494, %v492
  %v759 = vpack.c.b16 %v495, %v493
  %v760 = vpack.c.b16 %v498, %v496
  %v761 = vpack.c.b16 %v499, %v497
  %v762 = vpack.c.b16 %v502, %v500
  %v763 = vpack.c.b16 %v503, %v501
  %v764 = vpack.c.b16 %v506, %v504
  %v765 = vpack.c.b16 %v507, %v505
  %v766 = vpack.c.b16 %v510, %v508
  %v767 = vpack.c.b16 %v511, %v509
  %v768 = vpack.c.b16 %v514, %v512
  %v769 = vpack.c.b16 %v515, %v513
  %v770 = vpack.c.b16 %v518, %v516
  %v771 = vpack.c.b16 %v519, %v517
  %v772 = vpack.c.b16 %v522, %v520
  %v773 = vpack.c.b16 %v523, %v521
  %v774 = vpack.c.b16 %v526, %v524
  %v775 = vpack.c.b16 %v527, %v525
  %v776 = vpack.c.b16 %v530, %v528
  %v777 = vpack.c.b16 %v531, %v529
  %v778 = vpack.c.b16 %v534, %v532
  %v779 = vpack.c.b16 %v535, %v533
  %v780 = vpack.c.b16 %v538, %v536
  %v781 = vpack.c.b16 %v539, %v537
  %v782 = vpack.c.b16 %v542, %v540
  %v783 = vpack.c.b16 %v543, %v541
  %v784 = vpack.c.b16 %v546, %v544
  %v785 = vpack.c.b16 %v547, %v545
  %v786 = vpack.c.b16 %v550, %v548
  %v787 = vpack.c.b16 %v551, %v549
  %v788 = vpack.c.b16 %v554, %v552
  %v789 = vpack.c.b16 %v555, %v553
  %v790 = vpack.c.b16 %v558, %v556
  %v791 = vpack.c.b16 %v559, %v557
  %v792 = vpack.c.b16 %v562, %v560
  %v793 = vpack.c.b16 %v563, %v561
  %v794 = vpack.c.b16 %v566, %v564
  %v795 = vpack.c.b16 %v567, %v565
  %v796 = vpack.c.b16 %v570, %v568
  %v797 = vpack.c.b16 %v571, %v569
  %v798 = vpack.c.b16 %v574, %v572
  %v799 = vpack.c.b16 %v575, %v573
  %v800 = vpack.c.b16 %v578, %v576
  %v801 = vpack.c.b16 %v579, %v577
  %v802 = vpack.c.b16 %v582, %v580
  %v803 = vpack.c.b16 %v583, %v581
  %v804 = vpack.c.b16 %v586, %v584
  %v805 = vpack.c.b16 %v587, %v585
  %v806 = vpack.c.b16 %v590, %v588
  %v807 = vpack.c.b16 %v591, %v589
  %v808 = vpack.c.b16 %v594, %v592
  %v809 = vpack.c.b16 %v595, %v593
  %v810 = vpack.c.b16 %v598, %v596
  %v811 = vpack.c.b16 %v599, %v597
  %v812 = vpack.c.b16 %v602, %v600
  %v813 = vpack.c.b16 %v603, %v601
  %v814 = vpack.c.b16 %v606, %v604
  %v815 = vpack.c.b16 %v607, %v605
  %v816 = vpack.c.b16 %v610, %v608
  %v817 = vpack.c.b16 %v611, %v609
  %v818 = vpack.c.b16 %v614, %v612
  %v819 = vpack.c.b16 %v615, %v613
  %v820 = vpack.c.b16 %v618, %v616
  %v821 = vpack.c.b16 %v619, %v617
  %v822 = vpack.c.b16 %v622, %v620
  %v823 = vpack.c.b16 %v623, %v621
  %v824 = vpack.c.b16 %v626, %v624
  %v825 = vpack.c.b16 %v627, %v625
  %v826 = vpack.c.b16 %v630, %v628
  %v827 = vpack.c.b16 %v631, %v629
  %v828 = vpack.c.b16 %v634, %v632
  %v829 = vpack.c.b16 %v635, %v633
  %v830 = vpack.c.b16 %v638, %v636
  %v831 = vpack.c.b16 %v639, %v637
  %v832 = vpack.c.b16 %v642, %v640
  %v833 = vpack.c.b16 %v643, %v641
  %v834 = vpack.c.b16 %v646, %v644
  %v835 = vpack.c.b16 %v647, %v645
  %v836 = vpack.c.b16 %v650, %v648
  %v837 = vpack.c.b16 %v651, %v649
  %v838 = vpack.c.b16 %v654, %v652
  %v839 = vpack.c.b16 %v655, %v653
  %v840 = vpack.c.b16 %v658, %v656
  %v841 = vpack.c.b16 %v659, %v657
  %v842 = vpack.c.b16 %v662, %v660
  %v843 = vpack.c.b16 %v663, %v661
  %v844 = vpack.c.b16 %v666, %v664
  %v845 = vpack.c.b16 %v667, %v665
  %v846 = vpack.c.b16 %v670, %v668
  %v847 = vpack.c.b16 %v671, %v669
  %v848 = vpack.c.b16 %v674, %v672
  %v849 = vpack.c.b16 %v675, %v673
  %v850 = vpack.c.b16 %v678, %v676
  %v851 = vpack.c.b16 %v679, %v677
  %v852 = vpack.c.b16 %v682, %v680
  %v853 = vpack.c.b16 %v683, %v681
  %v854 = vpack.c.b16 %v686, %v684
  %v855 = vpack.c.b16 %v687, %v685
  %v856 = vpack.c.b16 %v690, %v688
  %v857 = vpack.c.b16 %v691, %v689
  %v858 = vpack.c.b16 %v694, %v692
  %v859 = vpack.c.b16 %v695, %v693
  %v860 = vpack.c.b16 %v698, %v696
  %v861 = vpack.c.b16 %v699, %v697
  %v973 = vunpack.c.l.b16 %v177
  %v974 = vunpack.c.l.b16 %v178
  %v975 = vunpack.c.l.b16 %v179
  %v976 = vunpack.c.l.b16 %v180
  %v977 = vunpack.c.l.b16 %v181
  %v978 = vunpack.c.l.b16 %v182
  %v979 = vunpack.c.l.b16 %v183
  %v980 = vunpack.c.l.b16 %v184
  %v981 = vunpack.c.l.b16 %v185
  %v982 = vunpack.c.l.b16 %v186
  %v983 = vunpack.c.l.b16 %v187
  %v984 = vunpack.c.l.b16 %v188
  %v985 = vunpack.c.l.b16 %v189
  %v986 = vunpack.c.l.b16 %v190
  %v987 = vunpack.c.l.b16 %v191
  %v988 = vunpack.c.l.b16 %v192
  %v989 = vunpack.c.l.b16 %v193
  %v990 = vunpack.c.l.b16 %v194
  %v991 = vunpack.c.l.b16 %v195
  %v992 = vunpack.c.l.b16 %v196
  %v993 = vunpack.c.l.b16 %v197
  %v994 = vunpack.c.l.b16 %v198
  %v995 = vunpack.c.l.b16 %v199
  %v996 = vunpack.c.l.b16 %v200
  %v997 = vunpack.c.l.b16 %v201
  %v998 = vunpack.c.l.b16 %v202
  %v999 = vunpack.c.l.b16 %v203
  %v1000 = vunpack.c.l.b16 %v204
  %v1001 = vunpack.c.l.b16 %v205
  %v1002 = vunpack.c.l.b16 %v206
  %v1003 = vpack.c.b16 %v974, %v973
  %v1004 = vpack.c.b16 %v976, %v975
  %v1005 = vpack.c.b16 %v978, %v977
  %v1006 = vpack.c.b16 %v980, %v979
  %v1007 = vpack.c.b16 %v982, %v981
  %v1008 = vpack.c.b16 %v984, %v983
  %v1009 = vpack.c.b16 %v986, %v985
  %v1010 = vpack.c.b16 %v988, %v987
  %v1011 = vpack.c.b16 %v990, %v989
  %v1012 = vpack.c.b16 %v992, %v991
  %v1013 = vpack.c.b16 %v994, %v993
  %v1014 = vpack.c.b16 %v996, %v995
  %v1015 = vpack.c.b16 %v998, %v997
  %v1016 = vpack.c.b16 %v1000, %v999
  %v1017 = vpack.c.b16 %v1002, %v1001
  %vm1033 = vcmask 916480
  %v1035 = vsel %vm1033, %v701, 0
  %v1038 = vsel %vm1033, %v703, 0
  %v1041 = vsel %vm1033, %v705, 0
  %v1044 = vsel %vm1033, %v707, 0
  %v1047 = vsel %vm1033, %v709, 0
  %v1050 = vsel %vm1033, %v711, 0
  %v1053 = vsel %vm1033, %v713, 0
  %v1056 = vsel %vm1033, %v715, 0
  %v1059 = vsel %vm1033, %v717, 0
  %v1062 = vsel %vm1033, %v719, 0
  %v1065 = vsel %vm1033, %v721, 0
  %v1068 = vsel %vm1033, %v723, 0
  %v1071 = vsel %vm1033, %v725, 0
  %v1074 = vsel %vm1033, %v727, 0
  %v1077 = vsel %vm1033, %v729, 0
  %v1080 = vsel %vm1033, %v731, 0
  %v1083 = vsel %vm1033, %v733, 0
  %v1086 = vsel %vm1033, %v735, 0
  %v1089 = vsel %vm1033, %v737, 0
  %v1092 = vsel %vm1033, %v739, 0
  %v1095 = vsel %vm1033, %v741, 0
  %v1098 = vsel %vm1033, %v743, 0
  %v1101 = vsel %vm1033, %v745, 0
  %v1104 = vsel %vm1033, %v747, 0
  %v1107 = vsel %vm1033, %v749, 0
  %v1110 = vsel %vm1033, %v751, 0
  %v1113 = vsel %vm1033, %v753, 0
  %v1116 = vsel %vm1033, %v755, 0
  %v1119 = vsel %vm1033, %v757, 0
  %v1122 = vsel %vm1033, %v759, 0
  %v1125 = vsel %vm1033, %v761, 0
  %v1128 = vsel %vm1033, %v763, 0
  %v1131 = vsel %vm1033, %v765, 0
  %v1134 = vsel %vm1033, %v767, 0
  %v1137 = vsel %vm1033, %v769, 0
  %v1140 = vsel %vm1033, %v771, 0
  %v1143 = vsel %vm1033, %v773, 0
  %v1146 = vsel %vm1033, %v775, 0
  %v1149 = vsel %vm1033, %v777, 0
  %v1152 = vsel %vm1033, %v779, 0
  %v1155 = vsel %vm1033, %v781, 0
  %v1158 = vsel %vm1033, %v783, 0
  %v1161 = vsel %vm1033, %v785, 0
  %v1164 = vsel %vm1033, %v787, 0
  %v1167 = vsel %vm1033, %v789, 0
  %v1170 = vsel %vm1033, %v791, 0
  %v1173 = vsel %vm1033, %v793, 0
  %v1176 = vsel %vm1033, %v795, 0
  %v1179 = vsel %vm1033, %v797, 0
  %v1182 = vsel %vm1033, %v799, 0
  %v1185 = vsel %vm1033, %v801, 0
  %v1188 = vsel %vm1033, %v803, 0
  %v1191 = vsel %vm1033, %v805, 0
  %v1194 = vsel %vm1033, %v807, 0
  %v1197 = vsel %vm1033, %v809, 0
  %v1200 = vsel %vm1033, %v811, 0
  %v1203 = vsel %vm1033, %v813, 0
  %v1206 = vsel %vm1033, %v815, 0
  %v1209 = vsel %vm1033, %v817, 0
  %v1212 = vsel %vm1033, %v819, 0
  %v1215 = vsel %vm1033, %v821, 0
  %v1218 = vsel %vm1033, %v823, 0
  %v1221 = vsel %vm1033, %v825, 0
  %v1224 = vsel %vm1033, %v827, 0
  %v1227 = vsel %vm1033, %v829, 0
  %v1230 = vsel %vm1033, %v831, 0
  %v1233 = vsel %vm1033, %v833, 0
  %v1236 = vsel %vm1033, %v835, 0
  %v1239 = vsel %vm1033, %v837, 0
  %v1242 = vsel %vm1033, %v839, 0
  %v1245 = vsel %vm1033, %v841, 0
  %v1248 = vsel %vm1033, %v843, 0
  %v1251 = vsel %vm1033, %v845, 0
  %v1254 = vsel %vm1033, %v847, 0
  %v1257 = vsel %vm1033, %v849, 0
  %v1260 = vsel %vm1033, %v851, 0
  %v1263 = vsel %vm1033, %v853, 0
  %v1266 = vsel %vm1033, %v855, 0
  %v1269 = vsel %vm1033, %v857, 0
  %v1272 = vsel %vm1033, %v859, 0
  %v1275 = vsel %vm1033, %v861, 0
  %1277 = vmatprep.subr.bf16.mxu0 0
  %1278 = vmatpush1.bf16.msra.mxu0 %v1003
  %1279 = vmatprep.subr.bf16.mxu0 0
  %1280 = vmatpush1.bf16.msra.mxu0 %v1004
  %1281 = vmatprep.subr.bf16.mxu0 0
  %1282 = vmatpush1.bf16.msra.mxu0 %v1005
  %1283 = vmatprep.subr.bf16.mxu0 0
  %1284 = vmatpush1.bf16.msra.mxu0 %v1006
  %1285 = vmatprep.subr.bf16.mxu0 0
  %1286 = vmatpush1.bf16.msra.mxu0 %v1007
  %1287 = vmatprep.subr.bf16.mxu0 0
  %1288 = vmatpush1.bf16.msra.mxu0 %v1008
  %1289 = vmatprep.subr.bf16.mxu0 0
  %1290 = vmatpush1.bf16.msra.mxu0 %v1009
  %1291 = vmatprep.subr.bf16.mxu0 0
  %1292 = vmatpush1.bf16.msra.mxu0 %v1010
  %1293 = vmatprep.subr.bf16.mxu0 0
  %1294 = vmatpush1.bf16.msra.mxu0 %v1011
  %1295 = vmatprep.subr.bf16.mxu0 0
  %1296 = vmatpush1.bf16.msra.mxu0 %v1012
  %1297 = vmatprep.subr.bf16.mxu0 0
  %1298 = vmatpush1.bf16.msra.mxu0 %v1013
  %1299 = vmatprep.subr.bf16.mxu0 0
  %1300 = vmatpush1.bf16.msra.mxu0 %v1014
  %1301 = vmatprep.subr.bf16.mxu0 0
  %1302 = vmatpush1.bf16.msra.mxu0 %v1015
  %1303 = vmatprep.subr.bf16.mxu0 0
  %1304 = vmatpush1.bf16.msra.mxu0 %v1016
  %1305 = vmatprep.subr.bf16.mxu0 0
  %1306 = vmatpush1.bf16.msra.mxu0 %v1017
  %1307 = vmatprep.subr.bf16.mxu0 0
  %1308 = vmatpush1.bf16.msra.mxu0 0
  %1309 = vmatprep.mubr.bf16.mxu0 %v1035
  %1310 = vmatmul.mubr.bf16.gmra.mrb[0].mxu0 %v700
  %v1311 = vpop.f32.mrb[0].mxu0
  %v1312 = vadd.f32 %v212, %v1311
  %v1313 = vpop.f32.mrb[0].mxu0
  %v1314 = vpop.f32.mrb[0].mxu0
  %v1315 = vadd.f32 %v212, %v1314
  %v1316 = vpop.f32.mrb[0].mxu0
  %1317 = vmatprep.mubr.bf16.mxu0 %v1038
  %1318 = vmatmul.mubr.bf16.gmra.mrb[0].mxu0 %v702
  %v1319 = vpop.f32.mrb[0].mxu0
  %v1320 = vadd.f32 %v212, %v1319
  %v1321 = vpop.f32.mrb[0].mxu0
  %v1322 = vpop.f32.mrb[0].mxu0
  %v1323 = vadd.f32 %v212, %v1322
  %v1324 = vpop.f32.mrb[0].mxu0
  %1325 = vmatprep.mubr.bf16.mxu0 %v1041
  %1326 = vmatmul.mubr.bf16.gmra.mrb[0].mxu0 %v704
  %v1327 = vpop.f32.mrb[0].mxu0
  %v1328 = vadd.f32 %v212, %v1327
  %v1329 = vpop.f32.mrb[0].mxu0
  %v1330 = vpop.f32.mrb[0].mxu0
  %v1331 = vadd.f32 %v212, %v1330
  %v1332 = vpop.f32.mrb[0].mxu0
  %1333 = vmatprep.mubr.bf16.mxu0 %v1044
  %1334 = vmatmul.mubr.bf16.gmra.mrb[0].mxu0 %v706
  %v1335 = vpop.f32.mrb[0].mxu0
  %v1336 = vadd.f32 %v212, %v1335
  %v1337 = vpop.f32.mrb[0].mxu0
  %v1338 = vpop.f32.mrb[0].mxu0
  %v1339 = vadd.f32 %v212, %v1338
  %v1340 = vpop.f32.mrb[0].mxu0
  %1341 = vmatprep.mubr.bf16.mxu0 %v1047
  %1342 = vmatmul.mubr.bf16.gmra.mrb[0].mxu0 %v708
  %v1343 = vpop.f32.mrb[0].mxu0
  %v1344 = vadd.f32 %v212, %v1343
  %v1345 = vpop.f32.mrb[0].mxu0
  %v1346 = vpop.f32.mrb[0].mxu0
  %v1347 = vadd.f32 %v212, %v1346
  %v1348 = vpop.f32.mrb[0].mxu0
  %1349 = vmatprep.mubr.bf16.mxu0 %v1050
  %1350 = vmatmul.mubr.bf16.gmra.mrb[0].mxu0 %v710
  %v1351 = vpop.f32.mrb[0].mxu0
  %v1352 = vadd.f32 %v212, %v1351
  %v1353 = vpop.f32.mrb[0].mxu0
  %v1354 = vpop.f32.mrb[0].mxu0
  %v1355 = vadd.f32 %v212, %v1354
  %v1356 = vpop.f32.mrb[0].mxu0
  %1357 = vmatprep.mubr.bf16.mxu0 %v1053
  %1358 = vmatmul.mubr.bf16.gmra.mrb[0].mxu0 %v712
  %v1359 = vpop.f32.mrb[0].mxu0
  %v1360 = vadd.f32 %v212, %v1359
  %v1361 = vpop.f32.mrb[0].mxu0
  %v1362 = vpop.f32.mrb[0].mxu0
  %v1363 = vadd.f32 %v212, %v1362
  %v1364 = vpop.f32.mrb[0].mxu0
  %1365 = vmatprep.mubr.bf16.mxu0 %v1056
  %1366 = vmatmul.mubr.bf16.gmra.mrb[0].mxu0 %v714
  %v1367 = vpop.f32.mrb[0].mxu0
  %v1368 = vadd.f32 %v212, %v1367
  %v1369 = vpop.f32.mrb[0].mxu0
  %v1370 = vpop.f32.mrb[0].mxu0
  %v1371 = vadd.f32 %v212, %v1370
  %v1372 = vpop.f32.mrb[0].mxu0
  %1373 = vmatprep.mubr.bf16.mxu0 %v1059
  %1374 = vmatmul.mubr.bf16.gmra.mrb[0].mxu0 %v716
  %v1375 = vpop.f32.mrb[0].mxu0
  %v1376 = vadd.f32 %v212, %v1375
  %v1377 = vpop.f32.mrb[0].mxu0
  %v1378 = vpop.f32.mrb[0].mxu0
  %v1379 = vadd.f32 %v212, %v1378
  %v1380 = vpop.f32.mrb[0].mxu0
  %1381 = vmatprep.mubr.bf16.mxu0 %v1062
  %1382 = vmatmul.mubr.bf16.gmra.mrb[0].mxu0 %v718
  %v1383 = vpop.f32.mrb[0].mxu0
  %v1384 = vadd.f32 %v212, %v1383
  %v1385 = vpop.f32.mrb[0].mxu0
  %v1386 = vpop.f32.mrb[0].mxu0
  %v1387 = vadd.f32 %v212, %v1386
  %v1388 = vpop.f32.mrb[0].mxu0
  %1389 = vmatprep.mubr.bf16.mxu0 %v1065
  %1390 = vmatmul.mubr.bf16.gmra.mrb[0].mxu0 %v720
  %v1391 = vpop.f32.mrb[0].mxu0
  %v1392 = vadd.f32 %v212, %v1391
  %v1393 = vpop.f32.mrb[0].mxu0
  %v1394 = vpop.f32.mrb[0].mxu0
  %v1395 = vadd.f32 %v212, %v1394
  %v1396 = vpop.f32.mrb[0].mxu0
  %1397 = vmatprep.mubr.bf16.mxu0 %v1068
  %1398 = vmatmul.mubr.bf16.gmra.mrb[0].mxu0 %v722
  %v1399 = vpop.f32.mrb[0].mxu0
  %v1400 = vadd.f32 %v212, %v1399
  %v1401 = vpop.f32.mrb[0].mxu0
  %v1402 = vpop.f32.mrb[0].mxu0
  %v1403 = vadd.f32 %v212, %v1402
  %v1404 = vpop.f32.mrb[0].mxu0
  %1405 = vmatprep.mubr.bf16.mxu0 %v1071
  %1406 = vmatmul.mubr.bf16.gmra.mrb[0].mxu0 %v724
  %v1407 = vpop.f32.mrb[0].mxu0
  %v1408 = vadd.f32 %v212, %v1407
  %v1409 = vpop.f32.mrb[0].mxu0
  %v1410 = vpop.f32.mrb[0].mxu0
  %v1411 = vadd.f32 %v212, %v1410
  %v1412 = vpop.f32.mrb[0].mxu0
  %1413 = vmatprep.mubr.bf16.mxu0 %v1074
  %1414 = vmatmul.mubr.bf16.gmra.mrb[0].mxu0 %v726
  %v1415 = vpop.f32.mrb[0].mxu0
  %v1416 = vadd.f32 %v212, %v1415
  %v1417 = vpop.f32.mrb[0].mxu0
  %v1418 = vpop.f32.mrb[0].mxu0
  %v1419 = vadd.f32 %v212, %v1418
  %v1420 = vpop.f32.mrb[0].mxu0
  %1421 = vmatprep.mubr.bf16.mxu0 %v1077
  %1422 = vmatmul.mubr.bf16.gmra.mrb[0].mxu0 %v728
  %v1423 = vpop.f32.mrb[0].mxu0
  %v1424 = vadd.f32 %v212, %v1423
  %v1425 = vpop.f32.mrb[0].mxu0
  %v1426 = vpop.f32.mrb[0].mxu0
  %v1427 = vadd.f32 %v212, %v1426
  %v1428 = vpop.f32.mrb[0].mxu0
  %1429 = vmatprep.mubr.bf16.mxu0 %v1080
  %1430 = vmatmul.mubr.bf16.gmra.mrb[0].mxu0 %v730
  %v1431 = vpop.f32.mrb[0].mxu0
  %v1432 = vadd.f32 %v212, %v1431
  %v1433 = vpop.f32.mrb[0].mxu0
  %v1434 = vpop.f32.mrb[0].mxu0
  %v1435 = vadd.f32 %v212, %v1434
  %v1436 = vpop.f32.mrb[0].mxu0
  %1437 = vmatprep.mubr.bf16.mxu0 %v1083
  %1438 = vmatmul.mubr.bf16.gmra.mrb[0].mxu0 %v732
  %v1439 = vpop.f32.mrb[0].mxu0
  %v1440 = vadd.f32 %v212, %v1439
  %v1441 = vpop.f32.mrb[0].mxu0
  %v1442 = vpop.f32.mrb[0].mxu0
  %v1443 = vadd.f32 %v212, %v1442
  %v1444 = vpop.f32.mrb[0].mxu0
  %1445 = vmatprep.mubr.bf16.mxu0 %v1086
  %1446 = vmatmul.mubr.bf16.gmra.mrb[0].mxu0 %v734
  %v1447 = vpop.f32.mrb[0].mxu0
  %v1448 = vadd.f32 %v212, %v1447
  %v1449 = vpop.f32.mrb[0].mxu0
  %v1450 = vpop.f32.mrb[0].mxu0
  %v1451 = vadd.f32 %v212, %v1450
  %v1452 = vpop.f32.mrb[0].mxu0
  %1453 = vmatprep.mubr.bf16.mxu0 %v1089
  %1454 = vmatmul.mubr.bf16.gmra.mrb[0].mxu0 %v736
  %v1455 = vpop.f32.mrb[0].mxu0
  %v1456 = vadd.f32 %v212, %v1455
  %v1457 = vpop.f32.mrb[0].mxu0
  %v1458 = vpop.f32.mrb[0].mxu0
  %v1459 = vadd.f32 %v212, %v1458
  %v1460 = vpop.f32.mrb[0].mxu0
  %1461 = vmatprep.mubr.bf16.mxu0 %v1092
  %1462 = vmatmul.mubr.bf16.gmra.mrb[0].mxu0 %v738
  %v1463 = vpop.f32.mrb[0].mxu0
  %v1464 = vadd.f32 %v212, %v1463
  %v1465 = vpop.f32.mrb[0].mxu0
  %v1466 = vpop.f32.mrb[0].mxu0
  %v1467 = vadd.f32 %v212, %v1466
  %v1468 = vpop.f32.mrb[0].mxu0
  %1469 = vmatprep.mubr.bf16.mxu0 %v1095
  %1470 = vmatmul.mubr.bf16.gmra.mrb[0].mxu0 %v740
  %v1471 = vpop.f32.mrb[0].mxu0
  %v1472 = vadd.f32 %v212, %v1471
  %v1473 = vpop.f32.mrb[0].mxu0
  %v1474 = vpop.f32.mrb[0].mxu0
  %v1475 = vadd.f32 %v212, %v1474
  %v1476 = vpop.f32.mrb[0].mxu0
  %1477 = vmatprep.mubr.bf16.mxu0 %v1098
  %1478 = vmatmul.mubr.bf16.gmra.mrb[0].mxu0 %v742
  %v1479 = vpop.f32.mrb[0].mxu0
  %v1480 = vadd.f32 %v212, %v1479
  %v1481 = vpop.f32.mrb[0].mxu0
  %v1482 = vpop.f32.mrb[0].mxu0
  %v1483 = vadd.f32 %v212, %v1482
  %v1484 = vpop.f32.mrb[0].mxu0
  %1485 = vmatprep.mubr.bf16.mxu0 %v1101
  %1486 = vmatmul.mubr.bf16.gmra.mrb[0].mxu0 %v744
  %v1487 = vpop.f32.mrb[0].mxu0
  %v1488 = vadd.f32 %v212, %v1487
  %v1489 = vpop.f32.mrb[0].mxu0
  %v1490 = vpop.f32.mrb[0].mxu0
  %v1491 = vadd.f32 %v212, %v1490
  %v1492 = vpop.f32.mrb[0].mxu0
  %1493 = vmatprep.mubr.bf16.mxu0 %v1104
  %1494 = vmatmul.mubr.bf16.gmra.mrb[0].mxu0 %v746
  %v1495 = vpop.f32.mrb[0].mxu0
  %v1496 = vadd.f32 %v212, %v1495
  %v1497 = vpop.f32.mrb[0].mxu0
  %v1498 = vpop.f32.mrb[0].mxu0
  %v1499 = vadd.f32 %v212, %v1498
  %v1500 = vpop.f32.mrb[0].mxu0
  %1501 = vmatprep.mubr.bf16.mxu0 %v1107
  %1502 = vmatmul.mubr.bf16.gmra.mrb[0].mxu0 %v748
  %v1503 = vpop.f32.mrb[0].mxu0
  %v1504 = vadd.f32 %v212, %v1503
  %v1505 = vpop.f32.mrb[0].mxu0
  %v1506 = vpop.f32.mrb[0].mxu0
  %v1507 = vadd.f32 %v212, %v1506
  %v1508 = vpop.f32.mrb[0].mxu0
  %1509 = vmatprep.mubr.bf16.mxu0 %v1110
  %1510 = vmatmul.mubr.bf16.gmra.mrb[0].mxu0 %v750
  %v1511 = vpop.f32.mrb[0].mxu0
  %v1512 = vadd.f32 %v212, %v1511
  %v1513 = vpop.f32.mrb[0].mxu0
  %v1514 = vpop.f32.mrb[0].mxu0
  %v1515 = vadd.f32 %v212, %v1514
  %v1516 = vpop.f32.mrb[0].mxu0
  %1517 = vmatprep.mubr.bf16.mxu0 %v1113
  %1518 = vmatmul.mubr.bf16.gmra.mrb[0].mxu0 %v752
  %v1519 = vpop.f32.mrb[0].mxu0
  %v1520 = vadd.f32 %v212, %v1519
  %v1521 = vpop.f32.mrb[0].mxu0
  %v1522 = vpop.f32.mrb[0].mxu0
  %v1523 = vadd.f32 %v212, %v1522
  %v1524 = vpop.f32.mrb[0].mxu0
  %1525 = vmatprep.mubr.bf16.mxu0 %v1116
  %1526 = vmatmul.mubr.bf16.gmra.mrb[0].mxu0 %v754
  %v1527 = vpop.f32.mrb[0].mxu0
  %v1528 = vadd.f32 %v212, %v1527
  %v1529 = vpop.f32.mrb[0].mxu0
  %v1530 = vpop.f32.mrb[0].mxu0
  %v1531 = vadd.f32 %v212, %v1530
  %v1532 = vpop.f32.mrb[0].mxu0
  %1533 = vmatprep.mubr.bf16.mxu0 %v1119
  %1534 = vmatmul.mubr.bf16.gmra.mrb[0].mxu0 %v756
  %v1535 = vpop.f32.mrb[0].mxu0
  %v1536 = vadd.f32 %v212, %v1535
  %v1537 = vpop.f32.mrb[0].mxu0
  %v1538 = vpop.f32.mrb[0].mxu0
  %v1539 = vadd.f32 %v212, %v1538
  %v1540 = vpop.f32.mrb[0].mxu0
  %1541 = vmatprep.mubr.bf16.mxu0 %v1122
  %1542 = vmatmul.mubr.bf16.gmra.mrb[0].mxu0 %v758
  %v1543 = vpop.f32.mrb[0].mxu0
  %v1544 = vadd.f32 %v212, %v1543
  %v1545 = vpop.f32.mrb[0].mxu0
  %v1546 = vpop.f32.mrb[0].mxu0
  %v1547 = vadd.f32 %v212, %v1546
  %v1548 = vpop.f32.mrb[0].mxu0
  %1549 = vmatprep.mubr.bf16.mxu0 %v1125
  %1550 = vmatmul.mubr.bf16.gmra.mrb[0].mxu0 %v760
  %v1551 = vpop.f32.mrb[0].mxu0
  %v1552 = vadd.f32 %v212, %v1551
  %v1553 = vpop.f32.mrb[0].mxu0
  %v1554 = vpop.f32.mrb[0].mxu0
  %v1555 = vadd.f32 %v212, %v1554
  %v1556 = vpop.f32.mrb[0].mxu0
  %1557 = vmatprep.mubr.bf16.mxu0 %v1128
  %1558 = vmatmul.mubr.bf16.gmra.mrb[0].mxu0 %v762
  %v1559 = vpop.f32.mrb[0].mxu0
  %v1560 = vadd.f32 %v212, %v1559
  %v1561 = vpop.f32.mrb[0].mxu0
  %v1562 = vpop.f32.mrb[0].mxu0
  %v1563 = vadd.f32 %v212, %v1562
  %v1564 = vpop.f32.mrb[0].mxu0
  %1565 = vmatprep.mubr.bf16.mxu0 %v1131
  %1566 = vmatmul.mubr.bf16.gmra.mrb[0].mxu0 %v764
  %v1567 = vpop.f32.mrb[0].mxu0
  %v1568 = vadd.f32 %v212, %v1567
  %v1569 = vpop.f32.mrb[0].mxu0
  %v1570 = vpop.f32.mrb[0].mxu0
  %v1571 = vadd.f32 %v212, %v1570
  %v1572 = vpop.f32.mrb[0].mxu0
  %1573 = vmatprep.mubr.bf16.mxu0 %v1134
  %1574 = vmatmul.mubr.bf16.gmra.mrb[0].mxu0 %v766
  %v1575 = vpop.f32.mrb[0].mxu0
  %v1576 = vadd.f32 %v212, %v1575
  %v1577 = vpop.f32.mrb[0].mxu0
  %v1578 = vpop.f32.mrb[0].mxu0
  %v1579 = vadd.f32 %v212, %v1578
  %v1580 = vpop.f32.mrb[0].mxu0
  %1581 = vmatprep.mubr.bf16.mxu0 %v1137
  %1582 = vmatmul.mubr.bf16.gmra.mrb[0].mxu0 %v768
  %v1583 = vpop.f32.mrb[0].mxu0
  %v1584 = vadd.f32 %v212, %v1583
  %v1585 = vpop.f32.mrb[0].mxu0
  %v1586 = vpop.f32.mrb[0].mxu0
  %v1587 = vadd.f32 %v212, %v1586
  %v1588 = vpop.f32.mrb[0].mxu0
  %1589 = vmatprep.mubr.bf16.mxu0 %v1140
  %1590 = vmatmul.mubr.bf16.gmra.mrb[0].mxu0 %v770
  %v1591 = vpop.f32.mrb[0].mxu0
  %v1592 = vadd.f32 %v212, %v1591
  %v1593 = vpop.f32.mrb[0].mxu0
  %v1594 = vpop.f32.mrb[0].mxu0
  %v1595 = vadd.f32 %v212, %v1594
  %v1596 = vpop.f32.mrb[0].mxu0
  %1597 = vmatprep.mubr.bf16.mxu0 %v1143
  %1598 = vmatmul.mubr.bf16.gmra.mrb[0].mxu0 %v772
  %v1599 = vpop.f32.mrb[0].mxu0
  %v1600 = vadd.f32 %v212, %v1599
  %v1601 = vpop.f32.mrb[0].mxu0
  %v1602 = vpop.f32.mrb[0].mxu0
  %v1603 = vadd.f32 %v212, %v1602
  %v1604 = vpop.f32.mrb[0].mxu0
  %1605 = vmatprep.mubr.bf16.mxu0 %v1146
  %1606 = vmatmul.mubr.bf16.gmra.mrb[0].mxu0 %v774
  %v1607 = vpop.f32.mrb[0].mxu0
  %v1608 = vadd.f32 %v212, %v1607
  %v1609 = vpop.f32.mrb[0].mxu0
  %v1610 = vpop.f32.mrb[0].mxu0
  %v1611 = vadd.f32 %v212, %v1610
  %v1612 = vpop.f32.mrb[0].mxu0
  %1613 = vmatprep.mubr.bf16.mxu0 %v1149
  %1614 = vmatmul.mubr.bf16.gmra.mrb[0].mxu0 %v776
  %v1615 = vpop.f32.mrb[0].mxu0
  %v1616 = vadd.f32 %v212, %v1615
  %v1617 = vpop.f32.mrb[0].mxu0
  %v1618 = vpop.f32.mrb[0].mxu0
  %v1619 = vadd.f32 %v212, %v1618
  %v1620 = vpop.f32.mrb[0].mxu0
  %1621 = vmatprep.mubr.bf16.mxu0 %v1152
  %1622 = vmatmul.mubr.bf16.gmra.mrb[0].mxu0 %v778
  %v1623 = vpop.f32.mrb[0].mxu0
  %v1624 = vadd.f32 %v212, %v1623
  %v1625 = vpop.f32.mrb[0].mxu0
  %v1626 = vpop.f32.mrb[0].mxu0
  %v1627 = vadd.f32 %v212, %v1626
  %v1628 = vpop.f32.mrb[0].mxu0
  %1629 = vmatprep.mubr.bf16.mxu0 %v1155
  %1630 = vmatmul.mubr.bf16.gmra.mrb[0].mxu0 %v780
  %v1631 = vpop.f32.mrb[0].mxu0
  %v1632 = vadd.f32 %v212, %v1631
  %v1633 = vpop.f32.mrb[0].mxu0
  %v1634 = vpop.f32.mrb[0].mxu0
  %v1635 = vadd.f32 %v212, %v1634
  %v1636 = vpop.f32.mrb[0].mxu0
  %1637 = vmatprep.mubr.bf16.mxu0 %v1158
  %1638 = vmatmul.mubr.bf16.gmra.mrb[0].mxu0 %v782
  %v1639 = vpop.f32.mrb[0].mxu0
  %v1640 = vadd.f32 %v212, %v1639
  %v1641 = vpop.f32.mrb[0].mxu0
  %v1642 = vpop.f32.mrb[0].mxu0
  %v1643 = vadd.f32 %v212, %v1642
  %v1644 = vpop.f32.mrb[0].mxu0
  %1645 = vmatprep.mubr.bf16.mxu0 %v1161
  %1646 = vmatmul.mubr.bf16.gmra.mrb[0].mxu0 %v784
  %v1647 = vpop.f32.mrb[0].mxu0
  %v1648 = vadd.f32 %v212, %v1647
  %v1649 = vpop.f32.mrb[0].mxu0
  %v1650 = vpop.f32.mrb[0].mxu0
  %v1651 = vadd.f32 %v212, %v1650
  %v1652 = vpop.f32.mrb[0].mxu0
  %1653 = vmatprep.mubr.bf16.mxu0 %v1164
  %1654 = vmatmul.mubr.bf16.gmra.mrb[0].mxu0 %v786
  %v1655 = vpop.f32.mrb[0].mxu0
  %v1656 = vadd.f32 %v212, %v1655
  %v1657 = vpop.f32.mrb[0].mxu0
  %v1658 = vpop.f32.mrb[0].mxu0
  %v1659 = vadd.f32 %v212, %v1658
  %v1660 = vpop.f32.mrb[0].mxu0
  %1661 = vmatprep.mubr.bf16.mxu0 %v1167
  %1662 = vmatmul.mubr.bf16.gmra.mrb[0].mxu0 %v788
  %v1663 = vpop.f32.mrb[0].mxu0
  %v1664 = vadd.f32 %v212, %v1663
  %v1665 = vpop.f32.mrb[0].mxu0
  %v1666 = vpop.f32.mrb[0].mxu0
  %v1667 = vadd.f32 %v212, %v1666
  %v1668 = vpop.f32.mrb[0].mxu0
  %1669 = vmatprep.mubr.bf16.mxu0 %v1170
  %1670 = vmatmul.mubr.bf16.gmra.mrb[0].mxu0 %v790
  %v1671 = vpop.f32.mrb[0].mxu0
  %v1672 = vadd.f32 %v212, %v1671
  %v1673 = vpop.f32.mrb[0].mxu0
  %v1674 = vpop.f32.mrb[0].mxu0
  %v1675 = vadd.f32 %v212, %v1674
  %v1676 = vpop.f32.mrb[0].mxu0
  %1677 = vmatprep.mubr.bf16.mxu0 %v1173
  %1678 = vmatmul.mubr.bf16.gmra.mrb[0].mxu0 %v792
  %v1679 = vpop.f32.mrb[0].mxu0
  %v1680 = vadd.f32 %v212, %v1679
  %v1681 = vpop.f32.mrb[0].mxu0
  %v1682 = vpop.f32.mrb[0].mxu0
  %v1683 = vadd.f32 %v212, %v1682
  %v1684 = vpop.f32.mrb[0].mxu0
  %1685 = vmatprep.mubr.bf16.mxu0 %v1176
  %1686 = vmatmul.mubr.bf16.gmra.mrb[0].mxu0 %v794
  %v1687 = vpop.f32.mrb[0].mxu0
  %v1688 = vadd.f32 %v212, %v1687
  %v1689 = vpop.f32.mrb[0].mxu0
  %v1690 = vpop.f32.mrb[0].mxu0
  %v1691 = vadd.f32 %v212, %v1690
  %v1692 = vpop.f32.mrb[0].mxu0
  %1693 = vmatprep.mubr.bf16.mxu0 %v1179
  %1694 = vmatmul.mubr.bf16.gmra.mrb[0].mxu0 %v796
  %v1695 = vpop.f32.mrb[0].mxu0
  %v1696 = vadd.f32 %v212, %v1695
  %v1697 = vpop.f32.mrb[0].mxu0
  %v1698 = vpop.f32.mrb[0].mxu0
  %v1699 = vadd.f32 %v212, %v1698
  %v1700 = vpop.f32.mrb[0].mxu0
  %1701 = vmatprep.mubr.bf16.mxu0 %v1182
  %1702 = vmatmul.mubr.bf16.gmra.mrb[0].mxu0 %v798
  %v1703 = vpop.f32.mrb[0].mxu0
  %v1704 = vadd.f32 %v212, %v1703
  %v1705 = vpop.f32.mrb[0].mxu0
  %v1706 = vpop.f32.mrb[0].mxu0
  %v1707 = vadd.f32 %v212, %v1706
  %v1708 = vpop.f32.mrb[0].mxu0
  %1709 = vmatprep.mubr.bf16.mxu0 %v1185
  %1710 = vmatmul.mubr.bf16.gmra.mrb[0].mxu0 %v800
  %v1711 = vpop.f32.mrb[0].mxu0
  %v1712 = vadd.f32 %v212, %v1711
  %v1713 = vpop.f32.mrb[0].mxu0
  %v1714 = vpop.f32.mrb[0].mxu0
  %v1715 = vadd.f32 %v212, %v1714
  %v1716 = vpop.f32.mrb[0].mxu0
  %1717 = vmatprep.mubr.bf16.mxu0 %v1188
  %1718 = vmatmul.mubr.bf16.gmra.mrb[0].mxu0 %v802
  %v1719 = vpop.f32.mrb[0].mxu0
  %v1720 = vadd.f32 %v212, %v1719
  %v1721 = vpop.f32.mrb[0].mxu0
  %v1722 = vpop.f32.mrb[0].mxu0
  %v1723 = vadd.f32 %v212, %v1722
  %v1724 = vpop.f32.mrb[0].mxu0
  %1725 = vmatprep.mubr.bf16.mxu0 %v1191
  %1726 = vmatmul.mubr.bf16.gmra.mrb[0].mxu0 %v804
  %v1727 = vpop.f32.mrb[0].mxu0
  %v1728 = vadd.f32 %v212, %v1727
  %v1729 = vpop.f32.mrb[0].mxu0
  %v1730 = vpop.f32.mrb[0].mxu0
  %v1731 = vadd.f32 %v212, %v1730
  %v1732 = vpop.f32.mrb[0].mxu0
  %1733 = vmatprep.mubr.bf16.mxu0 %v1194
  %1734 = vmatmul.mubr.bf16.gmra.mrb[0].mxu0 %v806
  %v1735 = vpop.f32.mrb[0].mxu0
  %v1736 = vadd.f32 %v212, %v1735
  %v1737 = vpop.f32.mrb[0].mxu0
  %v1738 = vpop.f32.mrb[0].mxu0
  %v1739 = vadd.f32 %v212, %v1738
  %v1740 = vpop.f32.mrb[0].mxu0
  %1741 = vmatprep.mubr.bf16.mxu0 %v1197
  %1742 = vmatmul.mubr.bf16.gmra.mrb[0].mxu0 %v808
  %v1743 = vpop.f32.mrb[0].mxu0
  %v1744 = vadd.f32 %v212, %v1743
  %v1745 = vpop.f32.mrb[0].mxu0
  %v1746 = vpop.f32.mrb[0].mxu0
  %v1747 = vadd.f32 %v212, %v1746
  %v1748 = vpop.f32.mrb[0].mxu0
  %1749 = vmatprep.mubr.bf16.mxu0 %v1200
  %1750 = vmatmul.mubr.bf16.gmra.mrb[0].mxu0 %v810
  %v1751 = vpop.f32.mrb[0].mxu0
  %v1752 = vadd.f32 %v212, %v1751
  %v1753 = vpop.f32.mrb[0].mxu0
  %v1754 = vpop.f32.mrb[0].mxu0
  %v1755 = vadd.f32 %v212, %v1754
  %v1756 = vpop.f32.mrb[0].mxu0
  %1757 = vmatprep.mubr.bf16.mxu0 %v1203
  %1758 = vmatmul.mubr.bf16.gmra.mrb[0].mxu0 %v812
  %v1759 = vpop.f32.mrb[0].mxu0
  %v1760 = vadd.f32 %v212, %v1759
  %v1761 = vpop.f32.mrb[0].mxu0
  %v1762 = vpop.f32.mrb[0].mxu0
  %v1763 = vadd.f32 %v212, %v1762
  %v1764 = vpop.f32.mrb[0].mxu0
  %1765 = vmatprep.mubr.bf16.mxu0 %v1206
  %1766 = vmatmul.mubr.bf16.gmra.mrb[0].mxu0 %v814
  %v1767 = vpop.f32.mrb[0].mxu0
  %v1768 = vadd.f32 %v212, %v1767
  %v1769 = vpop.f32.mrb[0].mxu0
  %v1770 = vpop.f32.mrb[0].mxu0
  %v1771 = vadd.f32 %v212, %v1770
  %v1772 = vpop.f32.mrb[0].mxu0
  %1773 = vmatprep.mubr.bf16.mxu0 %v1209
  %1774 = vmatmul.mubr.bf16.gmra.mrb[0].mxu0 %v816
  %v1775 = vpop.f32.mrb[0].mxu0
  %v1776 = vadd.f32 %v212, %v1775
  %v1777 = vpop.f32.mrb[0].mxu0
  %v1778 = vpop.f32.mrb[0].mxu0
  %v1779 = vadd.f32 %v212, %v1778
  %v1780 = vpop.f32.mrb[0].mxu0
  %1781 = vmatprep.mubr.bf16.mxu0 %v1212
  %1782 = vmatmul.mubr.bf16.gmra.mrb[0].mxu0 %v818
  %v1783 = vpop.f32.mrb[0].mxu0
  %v1784 = vadd.f32 %v212, %v1783
  %v1785 = vpop.f32.mrb[0].mxu0
  %v1786 = vpop.f32.mrb[0].mxu0
  %v1787 = vadd.f32 %v212, %v1786
  %v1788 = vpop.f32.mrb[0].mxu0
  %1789 = vmatprep.mubr.bf16.mxu0 %v1215
  %1790 = vmatmul.mubr.bf16.gmra.mrb[0].mxu0 %v820
  %v1791 = vpop.f32.mrb[0].mxu0
  %v1792 = vadd.f32 %v212, %v1791
  %v1793 = vpop.f32.mrb[0].mxu0
  %v1794 = vpop.f32.mrb[0].mxu0
  %v1795 = vadd.f32 %v212, %v1794
  %v1796 = vpop.f32.mrb[0].mxu0
  %1797 = vmatprep.mubr.bf16.mxu0 %v1218
  %1798 = vmatmul.mubr.bf16.gmra.mrb[0].mxu0 %v822
  %v1799 = vpop.f32.mrb[0].mxu0
  %v1800 = vadd.f32 %v212, %v1799
  %v1801 = vpop.f32.mrb[0].mxu0
  %v1802 = vpop.f32.mrb[0].mxu0
  %v1803 = vadd.f32 %v212, %v1802
  %v1804 = vpop.f32.mrb[0].mxu0
  %1805 = vmatprep.mubr.bf16.mxu0 %v1221
  %1806 = vmatmul.mubr.bf16.gmra.mrb[0].mxu0 %v824
  %v1807 = vpop.f32.mrb[0].mxu0
  %v1808 = vadd.f32 %v212, %v1807
  %v1809 = vpop.f32.mrb[0].mxu0
  %v1810 = vpop.f32.mrb[0].mxu0
  %v1811 = vadd.f32 %v212, %v1810
  %v1812 = vpop.f32.mrb[0].mxu0
  %1813 = vmatprep.mubr.bf16.mxu0 %v1224
  %1814 = vmatmul.mubr.bf16.gmra.mrb[0].mxu0 %v826
  %v1815 = vpop.f32.mrb[0].mxu0
  %v1816 = vadd.f32 %v212, %v1815
  %v1817 = vpop.f32.mrb[0].mxu0
  %v1818 = vpop.f32.mrb[0].mxu0
  %v1819 = vadd.f32 %v212, %v1818
  %v1820 = vpop.f32.mrb[0].mxu0
  %1821 = vmatprep.mubr.bf16.mxu0 %v1227
  %1822 = vmatmul.mubr.bf16.gmra.mrb[0].mxu0 %v828
  %v1823 = vpop.f32.mrb[0].mxu0
  %v1824 = vadd.f32 %v212, %v1823
  %v1825 = vpop.f32.mrb[0].mxu0
  %v1826 = vpop.f32.mrb[0].mxu0
  %v1827 = vadd.f32 %v212, %v1826
  %v1828 = vpop.f32.mrb[0].mxu0
  %1829 = vmatprep.mubr.bf16.mxu0 %v1230
  %1830 = vmatmul.mubr.bf16.gmra.mrb[0].mxu0 %v830
  %v1831 = vpop.f32.mrb[0].mxu0
  %v1832 = vadd.f32 %v212, %v1831
  %v1833 = vpop.f32.mrb[0].mxu0
  %v1834 = vpop.f32.mrb[0].mxu0
  %v1835 = vadd.f32 %v212, %v1834
  %v1836 = vpop.f32.mrb[0].mxu0
  %1837 = vmatprep.mubr.bf16.mxu0 %v1233
  %1838 = vmatmul.mubr.bf16.gmra.mrb[0].mxu0 %v832
  %v1839 = vpop.f32.mrb[0].mxu0
  %v1840 = vadd.f32 %v212, %v1839
  %v1841 = vpop.f32.mrb[0].mxu0
  %v1842 = vpop.f32.mrb[0].mxu0
  %v1843 = vadd.f32 %v212, %v1842
  %v1844 = vpop.f32.mrb[0].mxu0
  %1845 = vmatprep.mubr.bf16.mxu0 %v1236
  %1846 = vmatmul.mubr.bf16.gmra.mrb[0].mxu0 %v834
  %v1847 = vpop.f32.mrb[0].mxu0
  %v1848 = vadd.f32 %v212, %v1847
  %v1849 = vpop.f32.mrb[0].mxu0
  %v1850 = vpop.f32.mrb[0].mxu0
  %v1851 = vadd.f32 %v212, %v1850
  %v1852 = vpop.f32.mrb[0].mxu0
  %1853 = vmatprep.mubr.bf16.mxu0 %v1239
  %1854 = vmatmul.mubr.bf16.gmra.mrb[0].mxu0 %v836
  %v1855 = vpop.f32.mrb[0].mxu0
  %v1856 = vadd.f32 %v212, %v1855
  %v1857 = vpop.f32.mrb[0].mxu0
  %v1858 = vpop.f32.mrb[0].mxu0
  %v1859 = vadd.f32 %v212, %v1858
  %v1860 = vpop.f32.mrb[0].mxu0
  %1861 = vmatprep.mubr.bf16.mxu0 %v1242
  %1862 = vmatmul.mubr.bf16.gmra.mrb[0].mxu0 %v838
  %v1863 = vpop.f32.mrb[0].mxu0
  %v1864 = vadd.f32 %v212, %v1863
  %v1865 = vpop.f32.mrb[0].mxu0
  %v1866 = vpop.f32.mrb[0].mxu0
  %v1867 = vadd.f32 %v212, %v1866
  %v1868 = vpop.f32.mrb[0].mxu0
  %1869 = vmatprep.mubr.bf16.mxu0 %v1245
  %1870 = vmatmul.mubr.bf16.gmra.mrb[0].mxu0 %v840
  %v1871 = vpop.f32.mrb[0].mxu0
  %v1872 = vadd.f32 %v212, %v1871
  %v1873 = vpop.f32.mrb[0].mxu0
  %v1874 = vpop.f32.mrb[0].mxu0
  %v1875 = vadd.f32 %v212, %v1874
  %v1876 = vpop.f32.mrb[0].mxu0
  %1877 = vmatprep.mubr.bf16.mxu0 %v1248
  %1878 = vmatmul.mubr.bf16.gmra.mrb[0].mxu0 %v842
  %v1879 = vpop.f32.mrb[0].mxu0
  %v1880 = vadd.f32 %v212, %v1879
  %v1881 = vpop.f32.mrb[0].mxu0
  %v1882 = vpop.f32.mrb[0].mxu0
  %v1883 = vadd.f32 %v212, %v1882
  %v1884 = vpop.f32.mrb[0].mxu0
  %1885 = vmatprep.mubr.bf16.mxu0 %v1251
  %1886 = vmatmul.mubr.bf16.gmra.mrb[0].mxu0 %v844
  %v1887 = vpop.f32.mrb[0].mxu0
  %v1888 = vadd.f32 %v212, %v1887
  %v1889 = vpop.f32.mrb[0].mxu0
  %v1890 = vpop.f32.mrb[0].mxu0
  %v1891 = vadd.f32 %v212, %v1890
  %v1892 = vpop.f32.mrb[0].mxu0
  %1893 = vmatprep.mubr.bf16.mxu0 %v1254
  %1894 = vmatmul.mubr.bf16.gmra.mrb[0].mxu0 %v846
  %v1895 = vpop.f32.mrb[0].mxu0
  %v1896 = vadd.f32 %v212, %v1895
  %v1897 = vpop.f32.mrb[0].mxu0
  %v1898 = vpop.f32.mrb[0].mxu0
  %v1899 = vadd.f32 %v212, %v1898
  %v1900 = vpop.f32.mrb[0].mxu0
  %1901 = vmatprep.mubr.bf16.mxu0 %v1257
  %1902 = vmatmul.mubr.bf16.gmra.mrb[0].mxu0 %v848
  %v1903 = vpop.f32.mrb[0].mxu0
  %v1904 = vadd.f32 %v212, %v1903
  %v1905 = vpop.f32.mrb[0].mxu0
  %v1906 = vpop.f32.mrb[0].mxu0
  %v1907 = vadd.f32 %v212, %v1906
  %v1908 = vpop.f32.mrb[0].mxu0
  %1909 = vmatprep.mubr.bf16.mxu0 %v1260
  %1910 = vmatmul.mubr.bf16.gmra.mrb[0].mxu0 %v850
  %v1911 = vpop.f32.mrb[0].mxu0
  %v1912 = vadd.f32 %v212, %v1911
  %v1913 = vpop.f32.mrb[0].mxu0
  %v1914 = vpop.f32.mrb[0].mxu0
  %v1915 = vadd.f32 %v212, %v1914
  %v1916 = vpop.f32.mrb[0].mxu0
  %1917 = vmatprep.mubr.bf16.mxu0 %v1263
  %1918 = vmatmul.mubr.bf16.gmra.mrb[0].mxu0 %v852
  %v1919 = vpop.f32.mrb[0].mxu0
  %v1920 = vadd.f32 %v212, %v1919
  %v1921 = vpop.f32.mrb[0].mxu0
  %v1922 = vpop.f32.mrb[0].mxu0
  %v1923 = vadd.f32 %v212, %v1922
  %v1924 = vpop.f32.mrb[0].mxu0
  %1925 = vmatprep.mubr.bf16.mxu0 %v1266
  %1926 = vmatmul.mubr.bf16.gmra.mrb[0].mxu0 %v854
  %v1927 = vpop.f32.mrb[0].mxu0
  %v1928 = vadd.f32 %v212, %v1927
  %v1929 = vpop.f32.mrb[0].mxu0
  %v1930 = vpop.f32.mrb[0].mxu0
  %v1931 = vadd.f32 %v212, %v1930
  %v1932 = vpop.f32.mrb[0].mxu0
  %1933 = vmatprep.mubr.bf16.mxu0 %v1269
  %1934 = vmatmul.mubr.bf16.gmra.mrb[0].mxu0 %v856
  %v1935 = vpop.f32.mrb[0].mxu0
  %v1936 = vadd.f32 %v212, %v1935
  %v1937 = vpop.f32.mrb[0].mxu0
  %v1938 = vpop.f32.mrb[0].mxu0
  %v1939 = vadd.f32 %v212, %v1938
  %v1940 = vpop.f32.mrb[0].mxu0
  %1941 = vmatprep.mubr.bf16.mxu0 %v1272
  %1942 = vmatmul.mubr.bf16.gmra.mrb[0].mxu0 %v858
  %v1943 = vpop.f32.mrb[0].mxu0
  %v1944 = vadd.f32 %v212, %v1943
  %v1945 = vpop.f32.mrb[0].mxu0
  %v1946 = vpop.f32.mrb[0].mxu0
  %v1947 = vadd.f32 %v212, %v1946
  %v1948 = vpop.f32.mrb[0].mxu0
  %1949 = vmatprep.mubr.bf16.mxu0 %v1275
  %1950 = vmatmul.mubr.bf16.gmra.mrb[0].mxu0 %v860
  %v1951 = vpop.f32.mrb[0].mxu0
  %v1952 = vadd.f32 %v212, %v1951
  %v1953 = vpop.f32.mrb[0].mxu0
  %v1954 = vpop.f32.mrb[0].mxu0
  %v1955 = vadd.f32 %v212, %v1954
  %v1956 = vpop.f32.mrb[0].mxu0
  %1957 = vdwg.mxu0
  %v1958 = vmax.f32 %v1312, 0.0
  %v1959 = vmax.f32 %v1315, 0.0
  %v1960 = vmax.f32 %v1320, 0.0
  %v1961 = vmax.f32 %v1323, 0.0
  %v1962 = vmax.f32 %v1328, 0.0
  %v1963 = vmax.f32 %v1331, 0.0
  %v1964 = vmax.f32 %v1336, 0.0
  %v1965 = vmax.f32 %v1339, 0.0
  %v1966 = vmax.f32 %v1344, 0.0
  %v1967 = vmax.f32 %v1347, 0.0
  %v1968 = vmax.f32 %v1352, 0.0
  %v1969 = vmax.f32 %v1355, 0.0
  %v1970 = vmax.f32 %v1360, 0.0
  %v1971 = vmax.f32 %v1363, 0.0
  %v1972 = vmax.f32 %v1368, 0.0
  %v1973 = vmax.f32 %v1371, 0.0
  %v1974 = vmax.f32 %v1376, 0.0
  %v1975 = vmax.f32 %v1379, 0.0
  %v1976 = vmax.f32 %v1384, 0.0
  %v1977 = vmax.f32 %v1387, 0.0
  %v1978 = vmax.f32 %v1392, 0.0
  %v1979 = vmax.f32 %v1395, 0.0
  %v1980 = vmax.f32 %v1400, 0.0
  %v1981 = vmax.f32 %v1403, 0.0
  %v1982 = vmax.f32 %v1408, 0.0
  %v1983 = vmax.f32 %v1411, 0.0
  %v1984 = vmax.f32 %v1416, 0.0
  %v1985 = vmax.f32 %v1419, 0.0
  %v1986 = vmax.f32 %v1424, 0.0
  %v1987 = vmax.f32 %v1427, 0.0
  %v1988 = vmax.f32 %v1432, 0.0
  %v1989 = vmax.f32 %v1435, 0.0
  %v1990 = vmax.f32 %v1440, 0.0
  %v1991 = vmax.f32 %v1443, 0.0
  %v1992 = vmax.f32 %v1448, 0.0
  %v1993 = vmax.f32 %v1451, 0.0
  %v1994 = vmax.f32 %v1456, 0.0
  %v1995 = vmax.f32 %v1459, 0.0
  %v1996 = vmax.f32 %v1464, 0.0
  %v1997 = vmax.f32 %v1467, 0.0
  %v1998 = vmax.f32 %v1472, 0.0
  %v1999 = vmax.f32 %v1475, 0.0
  %v2000 = vmax.f32 %v1480, 0.0
  %v2001 = vmax.f32 %v1483, 0.0
  %v2002 = vmax.f32 %v1488, 0.0
  %v2003 = vmax.f32 %v1491, 0.0
  %v2004 = vmax.f32 %v1496, 0.0
  %v2005 = vmax.f32 %v1499, 0.0
  %v2006 = vmax.f32 %v1504, 0.0
  %v2007 = vmax.f32 %v1507, 0.0
  %v2008 = vmax.f32 %v1512, 0.0
  %v2009 = vmax.f32 %v1515, 0.0
  %v2010 = vmax.f32 %v1520, 0.0
  %v2011 = vmax.f32 %v1523, 0.0
  %v2012 = vmax.f32 %v1528, 0.0
  %v2013 = vmax.f32 %v1531, 0.0
  %v2014 = vmax.f32 %v1536, 0.0
  %v2015 = vmax.f32 %v1539, 0.0
  %v2016 = vmax.f32 %v1544, 0.0
  %v2017 = vmax.f32 %v1547, 0.0
  %v2018 = vmax.f32 %v1552, 0.0
  %v2019 = vmax.f32 %v1555, 0.0
  %v2020 = vmax.f32 %v1560, 0.0
  %v2021 = vmax.f32 %v1563, 0.0
  %v2022 = vmax.f32 %v1568, 0.0
  %v2023 = vmax.f32 %v1571, 0.0
  %v2024 = vmax.f32 %v1576, 0.0
  %v2025 = vmax.f32 %v1579, 0.0
  %v2026 = vmax.f32 %v1584, 0.0
  %v2027 = vmax.f32 %v1587, 0.0
  %v2028 = vmax.f32 %v1592, 0.0
  %v2029 = vmax.f32 %v1595, 0.0
  %v2030 = vmax.f32 %v1600, 0.0
  %v2031 = vmax.f32 %v1603, 0.0
  %v2032 = vmax.f32 %v1608, 0.0
  %v2033 = vmax.f32 %v1611, 0.0
  %v2034 = vmax.f32 %v1616, 0.0
  %v2035 = vmax.f32 %v1619, 0.0
  %v2036 = vmax.f32 %v1624, 0.0
  %v2037 = vmax.f32 %v1627, 0.0
  %v2038 = vmax.f32 %v1632, 0.0
  %v2039 = vmax.f32 %v1635, 0.0
  %v2040 = vmax.f32 %v1640, 0.0
  %v2041 = vmax.f32 %v1643, 0.0
  %v2042 = vmax.f32 %v1648, 0.0
  %v2043 = vmax.f32 %v1651, 0.0
  %v2044 = vmax.f32 %v1656, 0.0
  %v2045 = vmax.f32 %v1659, 0.0
  %v2046 = vmax.f32 %v1664, 0.0
  %v2047 = vmax.f32 %v1667, 0.0
  %v2048 = vmax.f32 %v1672, 0.0
  %v2049 = vmax.f32 %v1675, 0.0
  %v2050 = vmax.f32 %v1680, 0.0
  %v2051 = vmax.f32 %v1683, 0.0
  %v2052 = vmax.f32 %v1688, 0.0
  %v2053 = vmax.f32 %v1691, 0.0
  %v2054 = vmax.f32 %v1696, 0.0
  %v2055 = vmax.f32 %v1699, 0.0
  %v2056 = vmax.f32 %v1704, 0.0
  %v2057 = vmax.f32 %v1707, 0.0
  %v2058 = vmax.f32 %v1712, 0.0
  %v2059 = vmax.f32 %v1715, 0.0
  %v2060 = vmax.f32 %v1720, 0.0
  %v2061 = vmax.f32 %v1723, 0.0
  %v2062 = vmax.f32 %v1728, 0.0
  %v2063 = vmax.f32 %v1731, 0.0
  %v2064 = vmax.f32 %v1736, 0.0
  %v2065 = vmax.f32 %v1739, 0.0
  %v2066 = vmax.f32 %v1744, 0.0
  %v2067 = vmax.f32 %v1747, 0.0
  %v2068 = vmax.f32 %v1752, 0.0
  %v2069 = vmax.f32 %v1755, 0.0
  %v2070 = vmax.f32 %v1760, 0.0
  %v2071 = vmax.f32 %v1763, 0.0
  %v2072 = vmax.f32 %v1768, 0.0
  %v2073 = vmax.f32 %v1771, 0.0
  %v2074 = vmax.f32 %v1776, 0.0
  %v2075 = vmax.f32 %v1779, 0.0
  %v2076 = vmax.f32 %v1784, 0.0
  %v2077 = vmax.f32 %v1787, 0.0
  %v2078 = vmax.f32 %v1792, 0.0
  %v2079 = vmax.f32 %v1795, 0.0
  %v2080 = vmax.f32 %v1800, 0.0
  %v2081 = vmax.f32 %v1803, 0.0
  %v2082 = vmax.f32 %v1808, 0.0
  %v2083 = vmax.f32 %v1811, 0.0
  %v2084 = vmax.f32 %v1816, 0.0
  %v2085 = vmax.f32 %v1819, 0.0
  %v2086 = vmax.f32 %v1824, 0.0
  %v2087 = vmax.f32 %v1827, 0.0
  %v2088 = vmax.f32 %v1832, 0.0
  %v2089 = vmax.f32 %v1835, 0.0
  %v2090 = vmax.f32 %v1840, 0.0
  %v2091 = vmax.f32 %v1843, 0.0
  %v2092 = vmax.f32 %v1848, 0.0
  %v2093 = vmax.f32 %v1851, 0.0
  %v2094 = vmax.f32 %v1856, 0.0
  %v2095 = vmax.f32 %v1859, 0.0
  %v2096 = vmax.f32 %v1864, 0.0
  %v2097 = vmax.f32 %v1867, 0.0
  %v2098 = vmax.f32 %v1872, 0.0
  %v2099 = vmax.f32 %v1875, 0.0
  %v2100 = vmax.f32 %v1880, 0.0
  %v2101 = vmax.f32 %v1883, 0.0
  %v2102 = vmax.f32 %v1888, 0.0
  %v2103 = vmax.f32 %v1891, 0.0
  %v2104 = vmax.f32 %v1896, 0.0
  %v2105 = vmax.f32 %v1899, 0.0
  %v2106 = vmax.f32 %v1904, 0.0
  %v2107 = vmax.f32 %v1907, 0.0
  %v2108 = vmax.f32 %v1912, 0.0
  %v2109 = vmax.f32 %v1915, 0.0
  %v2110 = vmax.f32 %v1920, 0.0
  %v2111 = vmax.f32 %v1923, 0.0
  %v2112 = vmax.f32 %v1928, 0.0
  %v2113 = vmax.f32 %v1931, 0.0
  %v2114 = vmax.f32 %v1936, 0.0
  %v2115 = vmax.f32 %v1939, 0.0
  %v2116 = vmax.f32 %v1944, 0.0
  %v2117 = vmax.f32 %v1947, 0.0
  %v2118 = vmax.f32 %v1952, 0.0
  %v2119 = vmax.f32 %v1955, 0.0
  %v2120 = vpack.c.bf16 %v1959, %v1958
  %v2121 = vpack.c.bf16 %v1961, %v1960
  %v2122 = vpack.c.bf16 %v1963, %v1962
  %v2123 = vpack.c.bf16 %v1965, %v1964
  %v2124 = vpack.c.bf16 %v1967, %v1966
  %v2125 = vpack.c.bf16 %v1969, %v1968
  %v2126 = vpack.c.bf16 %v1971, %v1970
  %v2127 = vpack.c.bf16 %v1973, %v1972
  %v2128 = vpack.c.bf16 %v1975, %v1974
  %v2129 = vpack.c.bf16 %v1977, %v1976
  %v2130 = vpack.c.bf16 %v1979, %v1978
  %v2131 = vpack.c.bf16 %v1981, %v1980
  %v2132 = vpack.c.bf16 %v1983, %v1982
  %v2133 = vpack.c.bf16 %v1985, %v1984
  %v2134 = vpack.c.bf16 %v1987, %v1986
  %v2135 = vpack.c.bf16 %v1989, %v1988
  %v2136 = vpack.c.bf16 %v1991, %v1990
  %v2137 = vpack.c.bf16 %v1993, %v1992
  %v2138 = vpack.c.bf16 %v1995, %v1994
  %v2139 = vpack.c.bf16 %v1997, %v1996
  %v2140 = vpack.c.bf16 %v1999, %v1998
  %v2141 = vpack.c.bf16 %v2001, %v2000
  %v2142 = vpack.c.bf16 %v2003, %v2002
  %v2143 = vpack.c.bf16 %v2005, %v2004
  %v2144 = vpack.c.bf16 %v2007, %v2006
  %v2145 = vpack.c.bf16 %v2009, %v2008
  %v2146 = vpack.c.bf16 %v2011, %v2010
  %v2147 = vpack.c.bf16 %v2013, %v2012
  %v2148 = vpack.c.bf16 %v2015, %v2014
  %v2149 = vpack.c.bf16 %v2017, %v2016
  %v2150 = vpack.c.bf16 %v2019, %v2018
  %v2151 = vpack.c.bf16 %v2021, %v2020
  %v2152 = vpack.c.bf16 %v2023, %v2022
  %v2153 = vpack.c.bf16 %v2025, %v2024
  %v2154 = vpack.c.bf16 %v2027, %v2026
  %v2155 = vpack.c.bf16 %v2029, %v2028
  %v2156 = vpack.c.bf16 %v2031, %v2030
  %v2157 = vpack.c.bf16 %v2033, %v2032
  %v2158 = vpack.c.bf16 %v2035, %v2034
  %v2159 = vpack.c.bf16 %v2037, %v2036
  %v2160 = vpack.c.bf16 %v2039, %v2038
  %v2161 = vpack.c.bf16 %v2041, %v2040
  %v2162 = vpack.c.bf16 %v2043, %v2042
  %v2163 = vpack.c.bf16 %v2045, %v2044
  %v2164 = vpack.c.bf16 %v2047, %v2046
  %v2165 = vpack.c.bf16 %v2049, %v2048
  %v2166 = vpack.c.bf16 %v2051, %v2050
  %v2167 = vpack.c.bf16 %v2053, %v2052
  %v2168 = vpack.c.bf16 %v2055, %v2054
  %v2169 = vpack.c.bf16 %v2057, %v2056
  %v2170 = vpack.c.bf16 %v2059, %v2058
  %v2171 = vpack.c.bf16 %v2061, %v2060
  %v2172 = vpack.c.bf16 %v2063, %v2062
  %v2173 = vpack.c.bf16 %v2065, %v2064
  %v2174 = vpack.c.bf16 %v2067, %v2066
  %v2175 = vpack.c.bf16 %v2069, %v2068
  %v2176 = vpack.c.bf16 %v2071, %v2070
  %v2177 = vpack.c.bf16 %v2073, %v2072
  %v2178 = vpack.c.bf16 %v2075, %v2074
  %v2179 = vpack.c.bf16 %v2077, %v2076
  %v2180 = vpack.c.bf16 %v2079, %v2078
  %v2181 = vpack.c.bf16 %v2081, %v2080
  %v2182 = vpack.c.bf16 %v2083, %v2082
  %v2183 = vpack.c.bf16 %v2085, %v2084
  %v2184 = vpack.c.bf16 %v2087, %v2086
  %v2185 = vpack.c.bf16 %v2089, %v2088
  %v2186 = vpack.c.bf16 %v2091, %v2090
  %v2187 = vpack.c.bf16 %v2093, %v2092
  %v2188 = vpack.c.bf16 %v2095, %v2094
  %v2189 = vpack.c.bf16 %v2097, %v2096
  %v2190 = vpack.c.bf16 %v2099, %v2098
  %v2191 = vpack.c.bf16 %v2101, %v2100
  %v2192 = vpack.c.bf16 %v2103, %v2102
  %v2193 = vpack.c.bf16 %v2105, %v2104
  %v2194 = vpack.c.bf16 %v2107, %v2106
  %v2195 = vpack.c.bf16 %v2109, %v2108
  %v2196 = vpack.c.bf16 %v2111, %v2110
  %v2197 = vpack.c.bf16 %v2113, %v2112
  %v2198 = vpack.c.bf16 %v2115, %v2114
  %v2199 = vpack.c.bf16 %v2117, %v2116
  %v2200 = vpack.c.bf16 %v2119, %v2118
  %v2282 = vunpack.c.l.b16 %v2120
  %v2283 = vunpack.c.h.b16 %v2120
  %v2284 = vunpack.c.l.b16 %v2121
  %v2285 = vunpack.c.h.b16 %v2121
  %v2286 = vunpack.c.l.b16 %v2122
  %v2287 = vunpack.c.h.b16 %v2122
  %v2288 = vunpack.c.l.b16 %v2123
  %v2289 = vunpack.c.h.b16 %v2123
  %v2290 = vunpack.c.l.b16 %v2124
  %v2291 = vunpack.c.h.b16 %v2124
  %v2292 = vunpack.c.l.b16 %v2125
  %v2293 = vunpack.c.h.b16 %v2125
  %v2294 = vunpack.c.l.b16 %v2126
  %v2295 = vunpack.c.h.b16 %v2126
  %v2296 = vunpack.c.l.b16 %v2127
  %v2297 = vunpack.c.h.b16 %v2127
  %v2298 = vunpack.c.l.b16 %v2128
  %v2299 = vunpack.c.h.b16 %v2128
  %v2300 = vunpack.c.l.b16 %v2129
  %v2301 = vunpack.c.h.b16 %v2129
  %v2302 = vunpack.c.l.b16 %v2130
  %v2303 = vunpack.c.h.b16 %v2130
  %v2304 = vunpack.c.l.b16 %v2131
  %v2305 = vunpack.c.h.b16 %v2131
  %v2306 = vunpack.c.l.b16 %v2132
  %v2307 = vunpack.c.h.b16 %v2132
  %v2308 = vunpack.c.l.b16 %v2133
  %v2309 = vunpack.c.h.b16 %v2133
  %v2310 = vunpack.c.l.b16 %v2134
  %v2311 = vunpack.c.h.b16 %v2134
  %v2312 = vunpack.c.l.b16 %v2135
  %v2313 = vunpack.c.h.b16 %v2135
  %v2314 = vunpack.c.l.b16 %v2136
  %v2315 = vunpack.c.h.b16 %v2136
  %v2316 = vunpack.c.l.b16 %v2137
  %v2317 = vunpack.c.h.b16 %v2137
  %v2318 = vunpack.c.l.b16 %v2138
  %v2319 = vunpack.c.h.b16 %v2138
  %v2320 = vunpack.c.l.b16 %v2139
  %v2321 = vunpack.c.h.b16 %v2139
  %v2322 = vunpack.c.l.b16 %v2140
  %v2323 = vunpack.c.h.b16 %v2140
  %v2324 = vunpack.c.l.b16 %v2141
  %v2325 = vunpack.c.h.b16 %v2141
  %v2326 = vunpack.c.l.b16 %v2142
  %v2327 = vunpack.c.h.b16 %v2142
  %v2328 = vunpack.c.l.b16 %v2143
  %v2329 = vunpack.c.h.b16 %v2143
  %v2330 = vunpack.c.l.b16 %v2144
  %v2331 = vunpack.c.h.b16 %v2144
  %v2332 = vunpack.c.l.b16 %v2145
  %v2333 = vunpack.c.h.b16 %v2145
  %v2334 = vunpack.c.l.b16 %v2146
  %v2335 = vunpack.c.h.b16 %v2146
  %v2336 = vunpack.c.l.b16 %v2147
  %v2337 = vunpack.c.h.b16 %v2147
  %v2338 = vunpack.c.l.b16 %v2148
  %v2339 = vunpack.c.h.b16 %v2148
  %v2340 = vunpack.c.l.b16 %v2149
  %v2341 = vunpack.c.h.b16 %v2149
  %v2342 = vunpack.c.l.b16 %v2150
  %v2343 = vunpack.c.h.b16 %v2150
  %v2344 = vunpack.c.l.b16 %v2151
  %v2345 = vunpack.c.h.b16 %v2151
  %v2346 = vunpack.c.l.b16 %v2152
  %v2347 = vunpack.c.h.b16 %v2152
  %v2348 = vunpack.c.l.b16 %v2153
  %v2349 = vunpack.c.h.b16 %v2153
  %v2350 = vunpack.c.l.b16 %v2154
  %v2351 = vunpack.c.h.b16 %v2154
  %v2352 = vunpack.c.l.b16 %v2155
  %v2353 = vunpack.c.h.b16 %v2155
  %v2354 = vunpack.c.l.b16 %v2156
  %v2355 = vunpack.c.h.b16 %v2156
  %v2356 = vunpack.c.l.b16 %v2157
  %v2357 = vunpack.c.h.b16 %v2157
  %v2358 = vunpack.c.l.b16 %v2158
  %v2359 = vunpack.c.h.b16 %v2158
  %v2360 = vunpack.c.l.b16 %v2159
  %v2361 = vunpack.c.h.b16 %v2159
  %v2362 = vunpack.c.l.b16 %v2160
  %v2363 = vunpack.c.h.b16 %v2160
  %v2364 = vunpack.c.l.b16 %v2161
  %v2365 = vunpack.c.h.b16 %v2161
  %v2366 = vunpack.c.l.b16 %v2162
  %v2367 = vunpack.c.h.b16 %v2162
  %v2368 = vunpack.c.l.b16 %v2163
  %v2369 = vunpack.c.h.b16 %v2163
  %v2370 = vunpack.c.l.b16 %v2164
  %v2371 = vunpack.c.h.b16 %v2164
  %v2372 = vunpack.c.l.b16 %v2165
  %v2373 = vunpack.c.h.b16 %v2165
  %v2374 = vunpack.c.l.b16 %v2166
  %v2375 = vunpack.c.h.b16 %v2166
  %v2376 = vunpack.c.l.b16 %v2167
  %v2377 = vunpack.c.h.b16 %v2167
  %v2378 = vunpack.c.l.b16 %v2168
  %v2379 = vunpack.c.h.b16 %v2168
  %v2380 = vunpack.c.l.b16 %v2169
  %v2381 = vunpack.c.h.b16 %v2169
  %v2382 = vunpack.c.l.b16 %v2170
  %v2383 = vunpack.c.h.b16 %v2170
  %v2384 = vunpack.c.l.b16 %v2171
  %v2385 = vunpack.c.h.b16 %v2171
  %v2386 = vunpack.c.l.b16 %v2172
  %v2387 = vunpack.c.h.b16 %v2172
  %v2388 = vunpack.c.l.b16 %v2173
  %v2389 = vunpack.c.h.b16 %v2173
  %v2390 = vunpack.c.l.b16 %v2174
  %v2391 = vunpack.c.h.b16 %v2174
  %v2392 = vunpack.c.l.b16 %v2175
  %v2393 = vunpack.c.h.b16 %v2175
  %v2394 = vunpack.c.l.b16 %v2176
  %v2395 = vunpack.c.h.b16 %v2176
  %v2396 = vunpack.c.l.b16 %v2177
  %v2397 = vunpack.c.h.b16 %v2177
  %v2398 = vunpack.c.l.b16 %v2178
  %v2399 = vunpack.c.h.b16 %v2178
  %v2400 = vunpack.c.l.b16 %v2179
  %v2401 = vunpack.c.h.b16 %v2179
  %v2402 = vunpack.c.l.b16 %v2180
  %v2403 = vunpack.c.h.b16 %v2180
  %v2404 = vunpack.c.l.b16 %v2181
  %v2405 = vunpack.c.h.b16 %v2181
  %v2406 = vunpack.c.l.b16 %v2182
  %v2407 = vunpack.c.h.b16 %v2182
  %v2408 = vunpack.c.l.b16 %v2183
  %v2409 = vunpack.c.h.b16 %v2183
  %v2410 = vunpack.c.l.b16 %v2184
  %v2411 = vunpack.c.h.b16 %v2184
  %v2412 = vunpack.c.l.b16 %v2185
  %v2413 = vunpack.c.h.b16 %v2185
  %v2414 = vunpack.c.l.b16 %v2186
  %v2415 = vunpack.c.h.b16 %v2186
  %v2416 = vunpack.c.l.b16 %v2187
  %v2417 = vunpack.c.h.b16 %v2187
  %v2418 = vunpack.c.l.b16 %v2188
  %v2419 = vunpack.c.h.b16 %v2188
  %v2420 = vunpack.c.l.b16 %v2189
  %v2421 = vunpack.c.h.b16 %v2189
  %v2422 = vunpack.c.l.b16 %v2190
  %v2423 = vunpack.c.h.b16 %v2190
  %v2424 = vunpack.c.l.b16 %v2191
  %v2425 = vunpack.c.h.b16 %v2191
  %v2426 = vunpack.c.l.b16 %v2192
  %v2427 = vunpack.c.h.b16 %v2192
  %v2428 = vunpack.c.l.b16 %v2193
  %v2429 = vunpack.c.h.b16 %v2193
  %v2430 = vunpack.c.l.b16 %v2194
  %v2431 = vunpack.c.h.b16 %v2194
  %v2432 = vunpack.c.l.b16 %v2195
  %v2433 = vunpack.c.h.b16 %v2195
  %v2434 = vunpack.c.l.b16 %v2196
  %v2435 = vunpack.c.h.b16 %v2196
  %v2436 = vunpack.c.l.b16 %v2197
  %v2437 = vunpack.c.h.b16 %v2197
  %v2438 = vunpack.c.l.b16 %v2198
  %v2439 = vunpack.c.h.b16 %v2198
  %v2440 = vunpack.c.l.b16 %v2199
  %v2441 = vunpack.c.h.b16 %v2199
  %v2442 = vunpack.c.l.b16 %v2200
  %v2443 = vunpack.c.h.b16 %v2200
  %v2444 = vpack.c.b16 %v2282, %v2282
  %v2445 = vpack.c.b16 %v2283, %v2283
  %v2446 = vpack.c.b16 %v2284, %v2284
  %v2447 = vpack.c.b16 %v2285, %v2285
  %v2448 = vpack.c.b16 %v2286, %v2286
  %v2449 = vpack.c.b16 %v2287, %v2287
  %v2450 = vpack.c.b16 %v2288, %v2288
  %v2451 = vpack.c.b16 %v2289, %v2289
  %v2452 = vpack.c.b16 %v2290, %v2290
  %v2453 = vpack.c.b16 %v2291, %v2291
  %v2454 = vpack.c.b16 %v2292, %v2292
  %v2455 = vpack.c.b16 %v2293, %v2293
  %v2456 = vpack.c.b16 %v2294, %v2294
  %v2457 = vpack.c.b16 %v2295, %v2295
  %v2458 = vpack.c.b16 %v2296, %v2296
  %v2459 = vpack.c.b16 %v2297, %v2297
  %v2460 = vpack.c.b16 %v2298, %v2298
  %v2461 = vpack.c.b16 %v2299, %v2299
  %v2462 = vpack.c.b16 %v2300, %v2300
  %v2463 = vpack.c.b16 %v2301, %v2301
  %v2464 = vpack.c.b16 %v2302, %v2302
  %v2465 = vpack.c.b16 %v2303, %v2303
  %v2466 = vpack.c.b16 %v2304, %v2304
  %v2467 = vpack.c.b16 %v2305, %v2305
  %v2468 = vpack.c.b16 %v2306, %v2306
  %v2469 = vpack.c.b16 %v2307, %v2307
  %v2470 = vpack.c.b16 %v2308, %v2308
  %v2471 = vpack.c.b16 %v2309, %v2309
  %v2472 = vpack.c.b16 %v2310, %v2310
  %v2473 = vpack.c.b16 %v2311, %v2311
  %v2474 = vpack.c.b16 %v2312, %v2312
  %v2475 = vpack.c.b16 %v2313, %v2313
  %v2476 = vpack.c.b16 %v2314, %v2314
  %v2477 = vpack.c.b16 %v2315, %v2315
  %v2478 = vpack.c.b16 %v2316, %v2316
  %v2479 = vpack.c.b16 %v2317, %v2317
  %v2480 = vpack.c.b16 %v2318, %v2318
  %v2481 = vpack.c.b16 %v2319, %v2319
  %v2482 = vpack.c.b16 %v2320, %v2320
  %v2483 = vpack.c.b16 %v2321, %v2321
  %v2484 = vpack.c.b16 %v2322, %v2322
  %v2485 = vpack.c.b16 %v2323, %v2323
  %v2486 = vpack.c.b16 %v2324, %v2324
  %v2487 = vpack.c.b16 %v2325, %v2325
  %v2488 = vpack.c.b16 %v2326, %v2326
  %v2489 = vpack.c.b16 %v2327, %v2327
  %v2490 = vpack.c.b16 %v2328, %v2328
  %v2491 = vpack.c.b16 %v2329, %v2329
  %v2492 = vpack.c.b16 %v2330, %v2330
  %v2493 = vpack.c.b16 %v2331, %v2331
  %v2494 = vpack.c.b16 %v2332, %v2332
  %v2495 = vpack.c.b16 %v2333, %v2333
  %v2496 = vpack.c.b16 %v2334, %v2334
  %v2497 = vpack.c.b16 %v2335, %v2335
  %v2498 = vpack.c.b16 %v2336, %v2336
  %v2499 = vpack.c.b16 %v2337, %v2337
  %v2500 = vpack.c.b16 %v2338, %v2338
  %v2501 = vpack.c.b16 %v2339, %v2339
  %v2502 = vpack.c.b16 %v2340, %v2340
  %v2503 = vpack.c.b16 %v2341, %v2341
  %v2504 = vpack.c.b16 %v2342, %v2342
  %v2505 = vpack.c.b16 %v2343, %v2343
  %v2506 = vpack.c.b16 %v2344, %v2344
  %v2507 = vpack.c.b16 %v2345, %v2345
  %v2508 = vpack.c.b16 %v2346, %v2346
  %v2509 = vpack.c.b16 %v2347, %v2347
  %v2510 = vpack.c.b16 %v2348, %v2348
  %v2511 = vpack.c.b16 %v2349, %v2349
  %v2512 = vpack.c.b16 %v2350, %v2350
  %v2513 = vpack.c.b16 %v2351, %v2351
  %v2514 = vpack.c.b16 %v2352, %v2352
  %v2515 = vpack.c.b16 %v2353, %v2353
  %v2516 = vpack.c.b16 %v2354, %v2354
  %v2517 = vpack.c.b16 %v2355, %v2355
  %v2518 = vpack.c.b16 %v2356, %v2356
  %v2519 = vpack.c.b16 %v2357, %v2357
  %v2520 = vpack.c.b16 %v2358, %v2358
  %v2521 = vpack.c.b16 %v2359, %v2359
  %v2522 = vpack.c.b16 %v2360, %v2360
  %v2523 = vpack.c.b16 %v2361, %v2361
  %v2524 = vpack.c.b16 %v2362, %v2362
  %v2525 = vpack.c.b16 %v2363, %v2363
  %v2526 = vpack.c.b16 %v2364, %v2364
  %v2527 = vpack.c.b16 %v2365, %v2365
  %v2528 = vpack.c.b16 %v2366, %v2366
  %v2529 = vpack.c.b16 %v2367, %v2367
  %v2530 = vpack.c.b16 %v2368, %v2368
  %v2531 = vpack.c.b16 %v2369, %v2369
  %v2532 = vpack.c.b16 %v2370, %v2370
  %v2533 = vpack.c.b16 %v2371, %v2371
  %v2534 = vpack.c.b16 %v2372, %v2372
  %v2535 = vpack.c.b16 %v2373, %v2373
  %v2536 = vpack.c.b16 %v2374, %v2374
  %v2537 = vpack.c.b16 %v2375, %v2375
  %v2538 = vpack.c.b16 %v2376, %v2376
  %v2539 = vpack.c.b16 %v2377, %v2377
  %v2540 = vpack.c.b16 %v2378, %v2378
  %v2541 = vpack.c.b16 %v2379, %v2379
  %v2542 = vpack.c.b16 %v2380, %v2380
  %v2543 = vpack.c.b16 %v2381, %v2381
  %v2544 = vpack.c.b16 %v2382, %v2382
  %v2545 = vpack.c.b16 %v2383, %v2383
  %v2546 = vpack.c.b16 %v2384, %v2384
  %v2547 = vpack.c.b16 %v2385, %v2385
  %v2548 = vpack.c.b16 %v2386, %v2386
  %v2549 = vpack.c.b16 %v2387, %v2387
  %v2550 = vpack.c.b16 %v2388, %v2388
  %v2551 = vpack.c.b16 %v2389, %v2389
  %v2552 = vpack.c.b16 %v2390, %v2390
  %v2553 = vpack.c.b16 %v2391, %v2391
  %v2554 = vpack.c.b16 %v2392, %v2392
  %v2555 = vpack.c.b16 %v2393, %v2393
  %v2556 = vpack.c.b16 %v2394, %v2394
  %v2557 = vpack.c.b16 %v2395, %v2395
  %v2558 = vpack.c.b16 %v2396, %v2396
  %v2559 = vpack.c.b16 %v2397, %v2397
  %v2560 = vpack.c.b16 %v2398, %v2398
  %v2561 = vpack.c.b16 %v2399, %v2399
  %v2562 = vpack.c.b16 %v2400, %v2400
  %v2563 = vpack.c.b16 %v2401, %v2401
  %v2564 = vpack.c.b16 %v2402, %v2402
  %v2565 = vpack.c.b16 %v2403, %v2403
  %v2566 = vpack.c.b16 %v2404, %v2404
  %v2567 = vpack.c.b16 %v2405, %v2405
  %v2568 = vpack.c.b16 %v2406, %v2406
  %v2569 = vpack.c.b16 %v2407, %v2407
  %v2570 = vpack.c.b16 %v2408, %v2408
  %v2571 = vpack.c.b16 %v2409, %v2409
  %v2572 = vpack.c.b16 %v2410, %v2410
  %v2573 = vpack.c.b16 %v2411, %v2411
  %v2574 = vpack.c.b16 %v2412, %v2412
  %v2575 = vpack.c.b16 %v2413, %v2413
  %v2576 = vpack.c.b16 %v2414, %v2414
  %v2577 = vpack.c.b16 %v2415, %v2415
  %v2578 = vpack.c.b16 %v2416, %v2416
  %v2579 = vpack.c.b16 %v2417, %v2417
  %v2580 = vpack.c.b16 %v2418, %v2418
  %v2581 = vpack.c.b16 %v2419, %v2419
  %v2582 = vpack.c.b16 %v2420, %v2420
  %v2583 = vpack.c.b16 %v2421, %v2421
  %v2584 = vpack.c.b16 %v2422, %v2422
  %v2585 = vpack.c.b16 %v2423, %v2423
  %v2586 = vpack.c.b16 %v2424, %v2424
  %v2587 = vpack.c.b16 %v2425, %v2425
  %v2588 = vpack.c.b16 %v2426, %v2426
  %v2589 = vpack.c.b16 %v2427, %v2427
  %v2590 = vpack.c.b16 %v2428, %v2428
  %v2591 = vpack.c.b16 %v2429, %v2429
  %v2592 = vpack.c.b16 %v2430, %v2430
  %v2593 = vpack.c.b16 %v2431, %v2431
  %v2594 = vpack.c.b16 %v2432, %v2432
  %v2595 = vpack.c.b16 %v2433, %v2433
  %v2596 = vpack.c.b16 %v2434, %v2434
  %v2597 = vpack.c.b16 %v2435, %v2435
  %v2598 = vpack.c.b16 %v2436, %v2436
  %v2599 = vpack.c.b16 %v2437, %v2437
  %v2600 = vpack.c.b16 %v2438, %v2438
  %v2601 = vpack.c.b16 %v2439, %v2439
  %v2602 = vpack.c.b16 %v2440, %v2440
  %v2603 = vpack.c.b16 %v2441, %v2441
  %v2604 = vpack.c.b16 %v2442, %v2442
  %v2605 = vpack.c.b16 %v2443, %v2443
  %vm2768 = vcmask 191488
  %2769 = vst.msk [vmem:[%s3] sm:$0xf] %vm2768, %v2444
  %2770 = vst.msk [vmem:[%s3 + $0x4] sm:$0xf] %vm2768, %v2445
  %2771 = vst.msk [vmem:[%s3 + $0x8] sm:$0xf] %vm2768, %v2446
  %2772 = vst.msk [vmem:[%s3 + $0xc] sm:$0xf] %vm2768, %v2447
  %2773 = vst.msk [vmem:[%s3 + $0x10] sm:$0xf] %vm2768, %v2448
  %2774 = vst.msk [vmem:[%s3 + $0x14] sm:$0xf] %vm2768, %v2449
  %2775 = vst.msk [vmem:[%s3 + $0x18] sm:$0xf] %vm2768, %v2450
  %2776 = vst.msk [vmem:[%s3 + $0x1c] sm:$0xf] %vm2768, %v2451
  %2777 = vst.msk [vmem:[%s3 + $0x20] sm:$0xf] %vm2768, %v2452
  %2778 = vst.msk [vmem:[%s3 + $0x24] sm:$0xf] %vm2768, %v2453
  %2779 = vst.msk [vmem:[%s3 + $0x28] sm:$0xf] %vm2768, %v2454
  %2780 = vst.msk [vmem:[%s3 + $0x2c] sm:$0xf] %vm2768, %v2455
  %2781 = vst.msk [vmem:[%s3 + $0x30] sm:$0xf] %vm2768, %v2456
  %2782 = vst.msk [vmem:[%s3 + $0x34] sm:$0xf] %vm2768, %v2457
  %2783 = vst.msk [vmem:[%s3 + $0x38] sm:$0xf] %vm2768, %v2458
  %2784 = vst.msk [vmem:[%s3 + $0x3c] sm:$0xf] %vm2768, %v2459
  %2785 = vst.msk [vmem:[%s3 + $0x40] sm:$0xf] %vm2768, %v2460
  %2786 = vst.msk [vmem:[%s3 + $0x44] sm:$0xf] %vm2768, %v2461
  %2787 = vst.msk [vmem:[%s3 + $0x48] sm:$0xf] %vm2768, %v2462
  %2788 = vst.msk [vmem:[%s3 + $0x4c] sm:$0xf] %vm2768, %v2463
  %2789 = vst.msk [vmem:[%s3 + $0x50] sm:$0xf] %vm2768, %v2464
  %2790 = vst.msk [vmem:[%s3 + $0x54] sm:$0xf] %vm2768, %v2465
  %2791 = vst.msk [vmem:[%s3 + $0x58] sm:$0xf] %vm2768, %v2466
  %2792 = vst.msk [vmem:[%s3 + $0x5c] sm:$0xf] %vm2768, %v2467
  %2793 = vst.msk [vmem:[%s3 + $0x60] sm:$0xf] %vm2768, %v2468
  %2794 = vst.msk [vmem:[%s3 + $0x64] sm:$0xf] %vm2768, %v2469
  %2795 = vst.msk [vmem:[%s3 + $0x68] sm:$0xf] %vm2768, %v2470
  %2796 = vst.msk [vmem:[%s3 + $0x6c] sm:$0xf] %vm2768, %v2471
  %2797 = vst.msk [vmem:[%s3 + $0x70] sm:$0xf] %vm2768, %v2472
  %2798 = vst.msk [vmem:[%s3 + $0x74] sm:$0xf] %vm2768, %v2473
  %2799 = vst.msk [vmem:[%s3 + $0x78] sm:$0xf] %vm2768, %v2474
  %2800 = vst.msk [vmem:[%s3 + $0x7c] sm:$0xf] %vm2768, %v2475
  %2801 = vst.msk [vmem:[%s3 + $0x80] sm:$0xf] %vm2768, %v2476
  %2802 = vst.msk [vmem:[%s3 + $0x84] sm:$0xf] %vm2768, %v2477
  %2803 = vst.msk [vmem:[%s3 + $0x88] sm:$0xf] %vm2768, %v2478
  %2804 = vst.msk [vmem:[%s3 + $0x8c] sm:$0xf] %vm2768, %v2479
  %2805 = vst.msk [vmem:[%s3 + $0x90] sm:$0xf] %vm2768, %v2480
  %2806 = vst.msk [vmem:[%s3 + $0x94] sm:$0xf] %vm2768, %v2481
  %2807 = vst.msk [vmem:[%s3 + $0x98] sm:$0xf] %vm2768, %v2482
  %2808 = vst.msk [vmem:[%s3 + $0x9c] sm:$0xf] %vm2768, %v2483
  %2809 = vst.msk [vmem:[%s3 + $0xa0] sm:$0xf] %vm2768, %v2484
  %2810 = vst.msk [vmem:[%s3 + $0xa4] sm:$0xf] %vm2768, %v2485
  %2811 = vst.msk [vmem:[%s3 + $0xa8] sm:$0xf] %vm2768, %v2486
  %2812 = vst.msk [vmem:[%s3 + $0xac] sm:$0xf] %vm2768, %v2487
  %2813 = vst.msk [vmem:[%s3 + $0xb0] sm:$0xf] %vm2768, %v2488
  %2814 = vst.msk [vmem:[%s3 + $0xb4] sm:$0xf] %vm2768, %v2489
  %2815 = vst.msk [vmem:[%s3 + $0xb8] sm:$0xf] %vm2768, %v2490
  %2816 = vst.msk [vmem:[%s3 + $0xbc] sm:$0xf] %vm2768, %v2491
  %2817 = vst.msk [vmem:[%s3 + $0xc0] sm:$0xf] %vm2768, %v2492
  %2818 = vst.msk [vmem:[%s3 + $0xc4] sm:$0xf] %vm2768, %v2493
  %2819 = vst.msk [vmem:[%s3 + $0xc8] sm:$0xf] %vm2768, %v2494
  %2820 = vst.msk [vmem:[%s3 + $0xcc] sm:$0xf] %vm2768, %v2495
  %2821 = vst.msk [vmem:[%s3 + $0xd0] sm:$0xf] %vm2768, %v2496
  %2822 = vst.msk [vmem:[%s3 + $0xd4] sm:$0xf] %vm2768, %v2497
  %2823 = vst.msk [vmem:[%s3 + $0xd8] sm:$0xf] %vm2768, %v2498
  %2824 = vst.msk [vmem:[%s3 + $0xdc] sm:$0xf] %vm2768, %v2499
  %2825 = vst.msk [vmem:[%s3 + $0xe0] sm:$0xf] %vm2768, %v2500
  %2826 = vst.msk [vmem:[%s3 + $0xe4] sm:$0xf] %vm2768, %v2501
  %2827 = vst.msk [vmem:[%s3 + $0xe8] sm:$0xf] %vm2768, %v2502
  %2828 = vst.msk [vmem:[%s3 + $0xec] sm:$0xf] %vm2768, %v2503
  %2829 = vst.msk [vmem:[%s3 + $0xf0] sm:$0xf] %vm2768, %v2504
  %2830 = vst.msk [vmem:[%s3 + $0xf4] sm:$0xf] %vm2768, %v2505
  %2831 = vst.msk [vmem:[%s3 + $0xf8] sm:$0xf] %vm2768, %v2506
  %2832 = vst.msk [vmem:[%s3 + $0xfc] sm:$0xf] %vm2768, %v2507
  %2833 = vst.msk [vmem:[%s3 + $0x100] sm:$0xf] %vm2768, %v2508
  %2834 = vst.msk [vmem:[%s3 + $0x104] sm:$0xf] %vm2768, %v2509
  %2835 = vst.msk [vmem:[%s3 + $0x108] sm:$0xf] %vm2768, %v2510
  %2836 = vst.msk [vmem:[%s3 + $0x10c] sm:$0xf] %vm2768, %v2511
  %2837 = vst.msk [vmem:[%s3 + $0x110] sm:$0xf] %vm2768, %v2512
  %2838 = vst.msk [vmem:[%s3 + $0x114] sm:$0xf] %vm2768, %v2513
  %2839 = vst.msk [vmem:[%s3 + $0x118] sm:$0xf] %vm2768, %v2514
  %2840 = vst.msk [vmem:[%s3 + $0x11c] sm:$0xf] %vm2768, %v2515
  %2841 = vst.msk [vmem:[%s3 + $0x120] sm:$0xf] %vm2768, %v2516
  %2842 = vst.msk [vmem:[%s3 + $0x124] sm:$0xf] %vm2768, %v2517
  %2843 = vst.msk [vmem:[%s3 + $0x128] sm:$0xf] %vm2768, %v2518
  %2844 = vst.msk [vmem:[%s3 + $0x12c] sm:$0xf] %vm2768, %v2519
  %2845 = vst.msk [vmem:[%s3 + $0x130] sm:$0xf] %vm2768, %v2520
  %2846 = vst.msk [vmem:[%s3 + $0x134] sm:$0xf] %vm2768, %v2521
  %2847 = vst.msk [vmem:[%s3 + $0x138] sm:$0xf] %vm2768, %v2522
  %2848 = vst.msk [vmem:[%s3 + $0x13c] sm:$0xf] %vm2768, %v2523
  %2849 = vst.msk [vmem:[%s3 + $0x140] sm:$0xf] %vm2768, %v2524
  %2850 = vst.msk [vmem:[%s3 + $0x144] sm:$0xf] %vm2768, %v2525
  %2851 = vst.msk [vmem:[%s3 + $0x148] sm:$0xf] %vm2768, %v2526
  %2852 = vst.msk [vmem:[%s3 + $0x14c] sm:$0xf] %vm2768, %v2527
  %2853 = vst.msk [vmem:[%s3 + $0x150] sm:$0xf] %vm2768, %v2528
  %2854 = vst.msk [vmem:[%s3 + $0x154] sm:$0xf] %vm2768, %v2529
  %2855 = vst.msk [vmem:[%s3 + $0x158] sm:$0xf] %vm2768, %v2530
  %2856 = vst.msk [vmem:[%s3 + $0x15c] sm:$0xf] %vm2768, %v2531
  %2857 = vst.msk [vmem:[%s3 + $0x160] sm:$0xf] %vm2768, %v2532
  %2858 = vst.msk [vmem:[%s3 + $0x164] sm:$0xf] %vm2768, %v2533
  %2859 = vst.msk [vmem:[%s3 + $0x168] sm:$0xf] %vm2768, %v2534
  %2860 = vst.msk [vmem:[%s3 + $0x16c] sm:$0xf] %vm2768, %v2535
  %2861 = vst.msk [vmem:[%s3 + $0x170] sm:$0xf] %vm2768, %v2536
  %2862 = vst.msk [vmem:[%s3 + $0x174] sm:$0xf] %vm2768, %v2537
  %2863 = vst.msk [vmem:[%s3 + $0x178] sm:$0xf] %vm2768, %v2538
  %2864 = vst.msk [vmem:[%s3 + $0x17c] sm:$0xf] %vm2768, %v2539
  %2865 = vst.msk [vmem:[%s3 + $0x180] sm:$0xf] %vm2768, %v2540
  %2866 = vst.msk [vmem:[%s3 + $0x184] sm:$0xf] %vm2768, %v2541
  %2867 = vst.msk [vmem:[%s3 + $0x188] sm:$0xf] %vm2768, %v2542
  %2868 = vst.msk [vmem:[%s3 + $0x18c] sm:$0xf] %vm2768, %v2543
  %2869 = vst.msk [vmem:[%s3 + $0x190] sm:$0xf] %vm2768, %v2544
  %2870 = vst.msk [vmem:[%s3 + $0x194] sm:$0xf] %vm2768, %v2545
  %2871 = vst.msk [vmem:[%s3 + $0x198] sm:$0xf] %vm2768, %v2546
  %2872 = vst.msk [vmem:[%s3 + $0x19c] sm:$0xf] %vm2768, %v2547
  %2873 = vst.msk [vmem:[%s3 + $0x1a0] sm:$0xf] %vm2768, %v2548
  %2874 = vst.msk [vmem:[%s3 + $0x1a4] sm:$0xf] %vm2768, %v2549
  %2875 = vst.msk [vmem:[%s3 + $0x1a8] sm:$0xf] %vm2768, %v2550
  %2876 = vst.msk [vmem:[%s3 + $0x1ac] sm:$0xf] %vm2768, %v2551
  %2877 = vst.msk [vmem:[%s3 + $0x1b0] sm:$0xf] %vm2768, %v2552
  %2878 = vst.msk [vmem:[%s3 + $0x1b4] sm:$0xf] %vm2768, %v2553
  %2879 = vst.msk [vmem:[%s3 + $0x1b8] sm:$0xf] %vm2768, %v2554
  %2880 = vst.msk [vmem:[%s3 + $0x1bc] sm:$0xf] %vm2768, %v2555
  %2881 = vst.msk [vmem:[%s3 + $0x1c0] sm:$0xf] %vm2768, %v2556
  %2882 = vst.msk [vmem:[%s3 + $0x1c4] sm:$0xf] %vm2768, %v2557
  %2883 = vst.msk [vmem:[%s3 + $0x1c8] sm:$0xf] %vm2768, %v2558
  %2884 = vst.msk [vmem:[%s3 + $0x1cc] sm:$0xf] %vm2768, %v2559
  %2885 = vst.msk [vmem:[%s3 + $0x1d0] sm:$0xf] %vm2768, %v2560
  %2886 = vst.msk [vmem:[%s3 + $0x1d4] sm:$0xf] %vm2768, %v2561
  %2887 = vst.msk [vmem:[%s3 + $0x1d8] sm:$0xf] %vm2768, %v2562
  %2888 = vst.msk [vmem:[%s3 + $0x1dc] sm:$0xf] %vm2768, %v2563
  %2889 = vst.msk [vmem:[%s3 + $0x1e0] sm:$0xf] %vm2768, %v2564
  %2890 = vst.msk [vmem:[%s3 + $0x1e4] sm:$0xf] %vm2768, %v2565
  %2891 = vst.msk [vmem:[%s3 + $0x1e8] sm:$0xf] %vm2768, %v2566
  %2892 = vst.msk [vmem:[%s3 + $0x1ec] sm:$0xf] %vm2768, %v2567
  %2893 = vst.msk [vmem:[%s3 + $0x1f0] sm:$0xf] %vm2768, %v2568
  %2894 = vst.msk [vmem:[%s3 + $0x1f4] sm:$0xf] %vm2768, %v2569
  %2895 = vst.msk [vmem:[%s3 + $0x1f8] sm:$0xf] %vm2768, %v2570
  %2896 = vst.msk [vmem:[%s3 + $0x1fc] sm:$0xf] %vm2768, %v2571
  %2897 = vst.msk [vmem:[%s3 + $0x200] sm:$0xf] %vm2768, %v2572
  %2898 = vst.msk [vmem:[%s3 + $0x204] sm:$0xf] %vm2768, %v2573
  %2899 = vst.msk [vmem:[%s3 + $0x208] sm:$0xf] %vm2768, %v2574
  %2900 = vst.msk [vmem:[%s3 + $0x20c] sm:$0xf] %vm2768, %v2575
  %2901 = vst.msk [vmem:[%s3 + $0x210] sm:$0xf] %vm2768, %v2576
  %2902 = vst.msk [vmem:[%s3 + $0x214] sm:$0xf] %vm2768, %v2577
  %2903 = vst.msk [vmem:[%s3 + $0x218] sm:$0xf] %vm2768, %v2578
  %2904 = vst.msk [vmem:[%s3 + $0x21c] sm:$0xf] %vm2768, %v2579
  %2905 = vst.msk [vmem:[%s3 + $0x220] sm:$0xf] %vm2768, %v2580
  %2906 = vst.msk [vmem:[%s3 + $0x224] sm:$0xf] %vm2768, %v2581
  %2907 = vst.msk [vmem:[%s3 + $0x228] sm:$0xf] %vm2768, %v2582
  %2908 = vst.msk [vmem:[%s3 + $0x22c] sm:$0xf] %vm2768, %v2583
  %2909 = vst.msk [vmem:[%s3 + $0x230] sm:$0xf] %vm2768, %v2584
  %2910 = vst.msk [vmem:[%s3 + $0x234] sm:$0xf] %vm2768, %v2585
  %2911 = vst.msk [vmem:[%s3 + $0x238] sm:$0xf] %vm2768, %v2586
  %2912 = vst.msk [vmem:[%s3 + $0x23c] sm:$0xf] %vm2768, %v2587
  %2913 = vst.msk [vmem:[%s3 + $0x240] sm:$0xf] %vm2768, %v2588
  %2914 = vst.msk [vmem:[%s3 + $0x244] sm:$0xf] %vm2768, %v2589
  %2915 = vst.msk [vmem:[%s3 + $0x248] sm:$0xf] %vm2768, %v2590
  %2916 = vst.msk [vmem:[%s3 + $0x24c] sm:$0xf] %vm2768, %v2591
  %2917 = vst.msk [vmem:[%s3 + $0x250] sm:$0xf] %vm2768, %v2592
  %2918 = vst.msk [vmem:[%s3 + $0x254] sm:$0xf] %vm2768, %v2593
  %2919 = vst.msk [vmem:[%s3 + $0x258] sm:$0xf] %vm2768, %v2594
  %2920 = vst.msk [vmem:[%s3 + $0x25c] sm:$0xf] %vm2768, %v2595
  %2921 = vst.msk [vmem:[%s3 + $0x260] sm:$0xf] %vm2768, %v2596
  %2922 = vst.msk [vmem:[%s3 + $0x264] sm:$0xf] %vm2768, %v2597
  %2923 = vst.msk [vmem:[%s3 + $0x268] sm:$0xf] %vm2768, %v2598
  %2924 = vst.msk [vmem:[%s3 + $0x26c] sm:$0xf] %vm2768, %v2599
  %2925 = vst.msk [vmem:[%s3 + $0x270] sm:$0xf] %vm2768, %v2600
  %2926 = vst.msk [vmem:[%s3 + $0x274] sm:$0xf] %vm2768, %v2601
  %2927 = vst.msk [vmem:[%s3 + $0x278] sm:$0xf] %vm2768, %v2602
  %2928 = vst.msk [vmem:[%s3 + $0x27c] sm:$0xf] %vm2768, %v2603
  %2929 = vst.msk [vmem:[%s3 + $0x280] sm:$0xf] %vm2768, %v2604
  %2930 = vst.msk [vmem:[%s3 + $0x284] sm:$0xf] %vm2768, %v2605
  // Predicated region
  $region14: #{forward.2} parent=0 // pred_check
    _
  $region15: #{forward.2} parent=0 // pred_check_branch
    %2932 = sbr.rel (0) target = $region17
  $region16: #{forward.2} parent=0 // pred_region
    _
  $region17: #{forward.2} parent=0 // pred_fallthru
    _
  // Predicated region
  $region18: #{forward.2} parent=0 // pred_check
    _
  $region19: #{forward.2} parent=0 // pred_check_branch
    %2934 = sbr.rel (0) target = $region21
  $region20: #{forward.2} parent=0 // pred_region
    _
  $region21: #{forward.2} parent=0 // pred_fallthru
    _

// kernel: forward.3
$region0: #{forward.3}
  #allocation0 [shape = 'u32[]', space=smem, size = 0x4, offset = 0x4, fixed_abs, tag = 'smem constant byte address 0x4 - core index']
  #allocation1 [shape = 'u32[144,128]{1,0:T(1,128)}', space=vmem, size = 0x12000, scoped, tag = 'internal scratch']
  #allocation2 [shape = 'f32[4,2,512]{2,1,0:T(2,128)}', space=vmem, size = 0x4000, scoped, tag = 'scratch operand']
  #allocation3 [shape = 'f32[4,2,128]{2,1,0:T(2,128)}', space=vmem, size = 0x1000, scoped, tag = 'scratch operand']
  %s0 = inlined_call_operand.vmem [shape: bf16[8,3888], index: 0, kind: input, shape index: {}]
  %s1 = inlined_call_operand.vmem [shape: f32[2,128], index: 1, kind: input, shape index: {}]
  %s2 = inlined_call_operand.vmem [shape: f32[2,128], index: 2, kind: input, shape index: {}]
  %s3 = inlined_call_operand.vmem [shape: bf16[3888,512], index: 3, kind: input, shape index: {}]
  %s4 = inlined_call_operand.vmem [shape: f32[1,512], index: 4, kind: input, shape index: {}]
  %s5 = inlined_call_operand.vmem [shape: bf16[512,512], index: 5, kind: input, shape index: {}]
  %s6 = inlined_call_operand.vmem [shape: bf16[128,512], index: 6, kind: input, shape index: {}]
  %s7 = inlined_call_operand.vmem [shape: f32[1,512], index: 7, kind: input, shape index: {}]
  %s8 = inlined_call_operand.vmem [shape: bf16[128,64], index: 8, kind: input, shape index: {}]
  %s9 = inlined_call_operand.vmem [shape: f32[1,64], index: 9, kind: input, shape index: {}]
  %s10 = inlined_call_operand.vmem [shape: bf16[64,6], index: 10, kind: input, shape index: {}]
  %s11 = inlined_call_operand.vmem [shape: f32[1,6], index: 11, kind: input, shape index: {}]
  %s12 = inlined_call_operand.hbm [shape: f32[4,2,6], index: 12, kind: output, shape index: {0}]
  %s13 = inlined_call_operand.hbm [shape: f32[2,128], index: 13, kind: output, shape index: {1}]
  %s14 = inlined_call_operand.hbm [shape: f32[2,128], index: 14, kind: output, shape index: {2}]
  %15 = xla_tuple %s12, %s13, %s14
  %s16 = sld [smem:[#allocation0]]
  $region74: #{forward.3} parent=0
    _
  %s18 = ssub.s32 1, %s16
  %s19 = scalar_select 0, %s18, %s16
  $region1: #{forward.3} parent=0
    #allocation4 [shape = 'u8[4096]{0}', space=vmem, size = 0x1000, scoped, tag = 'output window, operand 0, single buffered']
    #allocation5 [shape = 's32[1]{0}', space=sflag, size = 0x4, scoped, tag = 'scoped memory for forward.3']
    #allocation6 [shape = 'u8[1024]{0}', space=vmem, size = 0x400, scoped, tag = 'output window, operand 1, single buffered']
    #allocation7 [shape = 's32[1]{0}', space=sflag, size = 0x4, scoped, tag = 'scoped memory for forward.3']
    #allocation8 [shape = 'u8[1024]{0}', space=vmem, size = 0x400, scoped, tag = 'output window, operand 2, single buffered']
    %20 = vsyncpa [#allocation5], 0
    %21 = vsyncpa [#allocation7], 0
    // Predicated region
    $region2: #{forward.3} parent=1 // pred_check
      _
    $region3: #{forward.3} parent=1 // pred_check_branch
      %23 = sbr.rel (0) target = $region5
    $region4: #{forward.3} parent=1 // pred_region
      _
    $region5: #{forward.3} parent=1 // pred_fallthru
      _
    // Predicated region
    $region6: #{forward.3} parent=1 // pred_check
      _
    $region7: #{forward.3} parent=1 // pred_check_branch
      %25 = sbr.rel (0) target = $region9
    $region8: #{forward.3} parent=1 // pred_region
      _
    $region9: #{forward.3} parent=1 // pred_fallthru
      _
    // Predicated region
    $region10: #{forward.3} parent=1 // pred_check
      _
    $region11: #{forward.3} parent=1 // pred_check_branch
      %27 = sbr.rel (0) target = $region13
    $region12: #{forward.3} parent=1 // pred_region
      _
    $region13: #{forward.3} parent=1 // pred_fallthru
      _
    // Predicated region
    $region14: #{forward.3} parent=1 // pred_check
      _
    $region15: #{forward.3} parent=1 // pred_check_branch
      %29 = sbr.rel (0) target = $region17
    $region16: #{forward.3} parent=1 // pred_region
      _
    $region17: #{forward.3} parent=1 // pred_fallthru
      _
    // Predicated region
    $region18: #{forward.3} parent=1 // pred_check
      _
    $region19: #{forward.3} parent=1 // pred_check_branch
      %31 = sbr.rel (0) target = $region21
    $region20: #{forward.3} parent=1 // pred_region
      _
    $region21: #{forward.3} parent=1 // pred_fallthru
      _
    // Predicated region
    $region22: #{forward.3} parent=1 // pred_check
      _
    $region23: #{forward.3} parent=1 // pred_check_branch
      %33 = sbr.rel (0) target = $region25
    $region24: #{forward.3} parent=1 // pred_region
      _
    $region25: #{forward.3} parent=1 // pred_fallthru
      _
    // Predicated region
    $region26: #{forward.3} parent=1 // pred_check
      _
    $region27: #{forward.3} parent=1 // pred_check_branch
      %35 = sbr.rel (0) target = $region29
    $region28: #{forward.3} parent=1 // pred_region
      _
    $region29: #{forward.3} parent=1 // pred_fallthru
      _
    // Predicated region
    $region30: #{forward.3} parent=1 // pred_check
      _
    $region31: #{forward.3} parent=1 // pred_check_branch
      %37 = sbr.rel (0) target = $region33
    $region32: #{forward.3} parent=1 // pred_region
      _
    $region33: #{forward.3} parent=1 // pred_fallthru
      _
    // Predicated region
    $region34: #{forward.3} parent=1 // pred_check
      _
    $region35: #{forward.3} parent=1 // pred_check_branch
      %39 = sbr.rel (0) target = $region37
    $region36: #{forward.3} parent=1 // pred_region
      _
    $region37: #{forward.3} parent=1 // pred_fallthru
      _
    // Predicated region
    $region38: #{forward.3} parent=1 // pred_check
      _
    $region39: #{forward.3} parent=1 // pred_check_branch
      %41 = sbr.rel (0) target = $region41
    $region40: #{forward.3} parent=1 // pred_region
      _
    $region41: #{forward.3} parent=1 // pred_fallthru
      _
    // Predicated region
    $region42: #{forward.3} parent=1 // pred_check
      _
    $region43: #{forward.3} parent=1 // pred_check_branch
      %43 = sbr.rel (0) target = $region45
    $region44: #{forward.3} parent=1 // pred_region
      _
    $region45: #{forward.3} parent=1 // pred_fallthru
      _
    // Predicated region
    $region46: #{forward.3} parent=1 // pred_check
      _
    $region47: #{forward.3} parent=1 // pred_check_branch
      %45 = sbr.rel (0) target = $region49
    $region48: #{forward.3} parent=1 // pred_region
      _
    $region49: #{forward.3} parent=1 // pred_fallthru
      _
    %v47 = vld [vmem:[%s0] sm:$0xff]
    %v48 = vld [vmem:[%s0 + $0x8] sm:$0xff]
    %v49 = vld [vmem:[%s0 + $0x10] sm:$0xff]
    %v50 = vld [vmem:[%s0 + $0x18] sm:$0xff]
    %v51 = vld [vmem:[%s0 + $0x20] sm:$0xff]
    %v52 = vld [vmem:[%s0 + $0x28] sm:$0xff]
    %v53 = vld [vmem:[%s0 + $0x30] sm:$0xff]
    %v54 = vld [vmem:[%s0 + $0x38] sm:$0xff]
    %v55 = vld [vmem:[%s0 + $0x40] sm:$0xff]
    %v56 = vld [vmem:[%s0 + $0x48] sm:$0xff]
    %v57 = vld [vmem:[%s0 + $0x50] sm:$0xff]
    %v58 = vld [vmem:[%s0 + $0x58] sm:$0xff]
    %v59 = vld [vmem:[%s0 + $0x60] sm:$0xff]
    %v60 = vld [vmem:[%s0 + $0x68] sm:$0xff]
    %v61 = vld [vmem:[%s0 + $0x70] sm:$0xff]
    %v62 = vld [vmem:[%s0 + $0x78] sm:$0xf]
    %v63 = vld [vmem:[%s3] sm:$0xff]
    %v64 = vld [vmem:[%s3 + $0x8] sm:$0xff]
    %v65 = vld [vmem:[%s3 + $0x10] sm:$0xff]
    %v66 = vld [vmem:[%s3 + $0x18] sm:$0xff]
    %v67 = vld [vmem:[%s3 + $0x20] sm:$0xff]
    %v68 = vld [vmem:[%s3 + $0x28] sm:$0xff]
    %v69 = vld [vmem:[%s3 + $0x30] sm:$0xff]
    %v70 = vld [vmem:[%s3 + $0x38] sm:$0xff]
    %v71 = vld [vmem:[%s3 + $0x40] sm:$0xff]
    %v72 = vld [vmem:[%s3 + $0x48] sm:$0xff]
    %v73 = vld [vmem:[%s3 + $0x50] sm:$0xff]
    %v74 = vld [vmem:[%s3 + $0x58] sm:$0xff]
    %v75 = vld [vmem:[%s3 + $0x60] sm:$0xff]
    %v76 = vld [vmem:[%s3 + $0x68] sm:$0xff]
    %v77 = vld [vmem:[%s3 + $0x70] sm:$0xff]
    %v78 = vld [vmem:[%s3 + $0x78] sm:$0xff]
    %v79 = vld [vmem:[%s3 + $0x80] sm:$0xff]
    %v80 = vld [vmem:[%s3 + $0x88] sm:$0xff]
    %v81 = vld [vmem:[%s3 + $0x90] sm:$0xff]
    %v82 = vld [vmem:[%s3 + $0x98] sm:$0xff]
    %v83 = vld [vmem:[%s3 + $0xa0] sm:$0xff]
    %v84 = vld [vmem:[%s3 + $0xa8] sm:$0xff]
    %v85 = vld [vmem:[%s3 + $0xb0] sm:$0xff]
    %v86 = vld [vmem:[%s3 + $0xb8] sm:$0xff]
    %v87 = vld [vmem:[%s3 + $0xc0] sm:$0xff]
    %v88 = vld [vmem:[%s3 + $0xc8] sm:$0xff]
    %v89 = vld [vmem:[%s3 + $0xd0] sm:$0xff]
    %v90 = vld [vmem:[%s3 + $0xd8] sm:$0xff]
    %v91 = vld [vmem:[%s3 + $0xe0] sm:$0xff]
    %v92 = vld [vmem:[%s3 + $0xe8] sm:$0xff]
    %v93 = vld [vmem:[%s3 + $0xf0] sm:$0xff]
    %v94 = vld [vmem:[%s3 + $0xf8] sm:$0xff]
    %v95 = vld [vmem:[%s3 + $0x100] sm:$0xff]
    %v96 = vld [vmem:[%s3 + $0x108] sm:$0xff]
    %v97 = vld [vmem:[%s3 + $0x110] sm:$0xff]
    %v98 = vld [vmem:[%s3 + $0x118] sm:$0xff]
    %v99 = vld [vmem:[%s3 + $0x120] sm:$0xff]
    %v100 = vld [vmem:[%s3 + $0x128] sm:$0xff]
    %v101 = vld [vmem:[%s3 + $0x130] sm:$0xff]
    %v102 = vld [vmem:[%s3 + $0x138] sm:$0xff]
    %v103 = vld [vmem:[%s3 + $0x140] sm:$0xff]
    %v104 = vld [vmem:[%s3 + $0x148] sm:$0xff]
    %v105 = vld [vmem:[%s3 + $0x150] sm:$0xff]
    %v106 = vld [vmem:[%s3 + $0x158] sm:$0xff]
    %v107 = vld [vmem:[%s3 + $0x160] sm:$0xff]
    %v108 = vld [vmem:[%s3 + $0x168] sm:$0xff]
    %v109 = vld [vmem:[%s3 + $0x170] sm:$0xff]
    %v110 = vld [vmem:[%s3 + $0x178] sm:$0xff]
    %v111 = vld [vmem:[%s3 + $0x180] sm:$0xff]
    %v112 = vld [vmem:[%s3 + $0x188] sm:$0xff]
    %v113 = vld [vmem:[%s3 + $0x190] sm:$0xff]
    %v114 = vld [vmem:[%s3 + $0x198] sm:$0xff]
    %v115 = vld [vmem:[%s3 + $0x1a0] sm:$0xff]
    %v116 = vld [vmem:[%s3 + $0x1a8] sm:$0xff]
    %v117 = vld [vmem:[%s3 + $0x1b0] sm:$0xff]
    %v118 = vld [vmem:[%s3 + $0x1b8] sm:$0xff]
    %v119 = vld [vmem:[%s3 + $0x1c0] sm:$0xff]
    %v120 = vld [vmem:[%s3 + $0x1c8] sm:$0xff]
    %v121 = vld [vmem:[%s3 + $0x1d0] sm:$0xff]
    %v122 = vld [vmem:[%s3 + $0x1d8] sm:$0xff]
    %v123 = vld [vmem:[%s3 + $0x1e0] sm:$0xff]
    %v124 = vld [vmem:[%s3 + $0x1e8] sm:$0xff]
    %v125 = vld [vmem:[%s3 + $0x1f0] sm:$0xff]
    %v126 = vld [vmem:[%s3 + $0x1f8] sm:$0xff]
    %v127 = vld [vmem:[%s3 + $0x200] sm:$0xff]
    %v128 = vld [vmem:[%s3 + $0x208] sm:$0xff]
    %v129 = vld [vmem:[%s3 + $0x210] sm:$0xff]
    %v130 = vld [vmem:[%s3 + $0x218] sm:$0xff]
    %v131 = vld [vmem:[%s3 + $0x220] sm:$0xff]
    %v132 = vld [vmem:[%s3 + $0x228] sm:$0xff]
    %v133 = vld [vmem:[%s3 + $0x230] sm:$0xff]
    %v134 = vld [vmem:[%s3 + $0x238] sm:$0xff]
    %v135 = vld [vmem:[%s3 + $0x240] sm:$0xff]
    %v136 = vld [vmem:[%s3 + $0x248] sm:$0xff]
    %v137 = vld [vmem:[%s3 + $0x250] sm:$0xff]
    %v138 = vld [vmem:[%s3 + $0x258] sm:$0xff]
    %v139 = vld [vmem:[%s3 + $0x260] sm:$0xff]
    %v140 = vld [vmem:[%s3 + $0x268] sm:$0xff]
    %v141 = vld [vmem:[%s3 + $0x270] sm:$0xff]
    %v142 = vld [vmem:[%s3 + $0x278] sm:$0xff]
    %v143 = vld [vmem:[%s3 + $0x280] sm:$0xff]
    %v144 = vld [vmem:[%s3 + $0x288] sm:$0xff]
    %v145 = vld [vmem:[%s3 + $0x290] sm:$0xff]
    %v146 = vld [vmem:[%s3 + $0x298] sm:$0xff]
    %v147 = vld [vmem:[%s3 + $0x2a0] sm:$0xff]
    %v148 = vld [vmem:[%s3 + $0x2a8] sm:$0xff]
    %v149 = vld [vmem:[%s3 + $0x2b0] sm:$0xff]
    %v150 = vld [vmem:[%s3 + $0x2b8] sm:$0xff]
    %v151 = vld [vmem:[%s3 + $0x2c0] sm:$0xff]
    %v152 = vld [vmem:[%s3 + $0x2c8] sm:$0xff]
    %v153 = vld [vmem:[%s3 + $0x2d0] sm:$0xff]
    %v154 = vld [vmem:[%s3 + $0x2d8] sm:$0xff]
    %v155 = vld [vmem:[%s3 + $0x2e0] sm:$0xff]
    %v156 = vld [vmem:[%s3 + $0x2e8] sm:$0xff]
    %v157 = vld [vmem:[%s3 + $0x2f0] sm:$0xff]
    %v158 = vld [vmem:[%s3 + $0x2f8] sm:$0xff]
    %v159 = vld [vmem:[%s3 + $0x300] sm:$0xff]
    %v160 = vld [vmem:[%s3 + $0x308] sm:$0xff]
    %v161 = vld [vmem:[%s3 + $0x310] sm:$0xff]
    %v162 = vld [vmem:[%s3 + $0x318] sm:$0xff]
    %v163 = vld [vmem:[%s3 + $0x320] sm:$0xff]
    %v164 = vld [vmem:[%s3 + $0x328] sm:$0xff]
    %v165 = vld [vmem:[%s3 + $0x330] sm:$0xff]
    %v166 = vld [vmem:[%s3 + $0x338] sm:$0xff]
    %v167 = vld [vmem:[%s3 + $0x340] sm:$0xff]
    %v168 = vld [vmem:[%s3 + $0x348] sm:$0xff]
    %v169 = vld [vmem:[%s3 + $0x350] sm:$0xff]
    %v170 = vld [vmem:[%s3 + $0x358] sm:$0xff]
    %v171 = vld [vmem:[%s3 + $0x360] sm:$0xff]
    %v172 = vld [vmem:[%s3 + $0x368] sm:$0xff]
    %v173 = vld [vmem:[%s3 + $0x370] sm:$0xff]
    %v174 = vld [vmem:[%s3 + $0x378] sm:$0xff]
    %v175 = vld [vmem:[%s3 + $0x380] sm:$0xff]
    %v176 = vld [vmem:[%s3 + $0x388] sm:$0xff]
    %v177 = vld [vmem:[%s3 + $0x390] sm:$0xff]
    %v178 = vld [vmem:[%s3 + $0x398] sm:$0xff]
    %v179 = vld [vmem:[%s3 + $0x3a0] sm:$0xff]
    %v180 = vld [vmem:[%s3 + $0x3a8] sm:$0xff]
    %v181 = vld [vmem:[%s3 + $0x3b0] sm:$0xff]
    %v182 = vld [vmem:[%s3 + $0x3b8] sm:$0xff]
    %v183 = vld [vmem:[%s3 + $0x3c0] sm:$0xff]
    %v184 = vld [vmem:[%s3 + $0x3c8] sm:$0xff]
    %v185 = vld [vmem:[%s3 + $0x3d0] sm:$0xff]
    %v186 = vld [vmem:[%s3 + $0x3d8] sm:$0xff]
    %v187 = vld [vmem:[%s3 + $0x3e0] sm:$0xff]
    %v188 = vld [vmem:[%s3 + $0x3e8] sm:$0xff]
    %v189 = vld [vmem:[%s3 + $0x3f0] sm:$0xff]
    %v190 = vld [vmem:[%s3 + $0x3f8] sm:$0xff]
    %v191 = vld [vmem:[%s3 + $0x400] sm:$0xff]
    %v192 = vld [vmem:[%s3 + $0x408] sm:$0xff]
    %v193 = vld [vmem:[%s3 + $0x410] sm:$0xff]
    %v194 = vld [vmem:[%s3 + $0x418] sm:$0xff]
    %v195 = vld [vmem:[%s3 + $0x420] sm:$0xff]
    %v196 = vld [vmem:[%s3 + $0x428] sm:$0xff]
    %v197 = vld [vmem:[%s3 + $0x430] sm:$0xff]
    %v198 = vld [vmem:[%s3 + $0x438] sm:$0xff]
    %v199 = vld [vmem:[%s3 + $0x440] sm:$0xff]
    %v200 = vld [vmem:[%s3 + $0x448] sm:$0xff]
    %v201 = vld [vmem:[%s3 + $0x450] sm:$0xff]
    %v202 = vld [vmem:[%s3 + $0x458] sm:$0xff]
    %v203 = vld [vmem:[%s3 + $0x460] sm:$0xff]
    %v204 = vld [vmem:[%s3 + $0x468] sm:$0xff]
    %v205 = vld [vmem:[%s3 + $0x470] sm:$0xff]
    %v206 = vld [vmem:[%s3 + $0x478] sm:$0xff]
    %v207 = vld [vmem:[%s3 + $0x480] sm:$0xff]
    %v208 = vld [vmem:[%s3 + $0x488] sm:$0xff]
    %v209 = vld [vmem:[%s3 + $0x490] sm:$0xff]
    %v210 = vld [vmem:[%s3 + $0x498] sm:$0xff]
    %v211 = vld [vmem:[%s3 + $0x4a0] sm:$0xff]
    %v212 = vld [vmem:[%s3 + $0x4a8] sm:$0xff]
    %v213 = vld [vmem:[%s3 + $0x4b0] sm:$0xff]
    %v214 = vld [vmem:[%s3 + $0x4b8] sm:$0xff]
    %v215 = vld [vmem:[%s3 + $0x4c0] sm:$0xff]
    %v216 = vld [vmem:[%s3 + $0x4c8] sm:$0xff]
    %v217 = vld [vmem:[%s3 + $0x4d0] sm:$0xff]
    %v218 = vld [vmem:[%s3 + $0x4d8] sm:$0xff]
    %v219 = vld [vmem:[%s3 + $0x4e0] sm:$0xff]
    %v220 = vld [vmem:[%s3 + $0x4e8] sm:$0xff]
    %v221 = vld [vmem:[%s3 + $0x4f0] sm:$0xff]
    %v222 = vld [vmem:[%s3 + $0x4f8] sm:$0xff]
    %v223 = vld [vmem:[%s3 + $0x500] sm:$0xff]
    %v224 = vld [vmem:[%s3 + $0x508] sm:$0xff]
    %v225 = vld [vmem:[%s3 + $0x510] sm:$0xff]
    %v226 = vld [vmem:[%s3 + $0x518] sm:$0xff]
    %v227 = vld [vmem:[%s3 + $0x520] sm:$0xff]
    %v228 = vld [vmem:[%s3 + $0x528] sm:$0xff]
    %v229 = vld [vmem:[%s3 + $0x530] sm:$0xff]
    %v230 = vld [vmem:[%s3 + $0x538] sm:$0xff]
    %v231 = vld [vmem:[%s3 + $0x540] sm:$0xff]
    %v232 = vld [vmem:[%s3 + $0x548] sm:$0xff]
    %v233 = vld [vmem:[%s3 + $0x550] sm:$0xff]
    %v234 = vld [vmem:[%s3 + $0x558] sm:$0xff]
    %v235 = vld [vmem:[%s3 + $0x560] sm:$0xff]
    %v236 = vld [vmem:[%s3 + $0x568] sm:$0xff]
    %v237 = vld [vmem:[%s3 + $0x570] sm:$0xff]
    %v238 = vld [vmem:[%s3 + $0x578] sm:$0xff]
    %v239 = vld [vmem:[%s3 + $0x580] sm:$0xff]
    %v240 = vld [vmem:[%s3 + $0x588] sm:$0xff]
    %v241 = vld [vmem:[%s3 + $0x590] sm:$0xff]
    %v242 = vld [vmem:[%s3 + $0x598] sm:$0xff]
    %v243 = vld [vmem:[%s3 + $0x5a0] sm:$0xff]
    %v244 = vld [vmem:[%s3 + $0x5a8] sm:$0xff]
    %v245 = vld [vmem:[%s3 + $0x5b0] sm:$0xff]
    %v246 = vld [vmem:[%s3 + $0x5b8] sm:$0xff]
    %v247 = vld [vmem:[%s3 + $0x5c0] sm:$0xff]
    %v248 = vld [vmem:[%s3 + $0x5c8] sm:$0xff]
    %v249 = vld [vmem:[%s3 + $0x5d0] sm:$0xff]
    %v250 = vld [vmem:[%s3 + $0x5d8] sm:$0xff]
    %v251 = vld [vmem:[%s3 + $0x5e0] sm:$0xff]
    %v252 = vld [vmem:[%s3 + $0x5e8] sm:$0xff]
    %v253 = vld [vmem:[%s3 + $0x5f0] sm:$0xff]
    %v254 = vld [vmem:[%s3 + $0x5f8] sm:$0xff]
    %v255 = vld [vmem:[%s3 + $0x600] sm:$0xff]
    %v256 = vld [vmem:[%s3 + $0x608] sm:$0xff]
    %v257 = vld [vmem:[%s3 + $0x610] sm:$0xff]
    %v258 = vld [vmem:[%s3 + $0x618] sm:$0xff]
    %v259 = vld [vmem:[%s3 + $0x620] sm:$0xff]
    %v260 = vld [vmem:[%s3 + $0x628] sm:$0xff]
    %v261 = vld [vmem:[%s3 + $0x630] sm:$0xff]
    %v262 = vld [vmem:[%s3 + $0x638] sm:$0xff]
    %v263 = vld [vmem:[%s3 + $0x640] sm:$0xff]
    %v264 = vld [vmem:[%s3 + $0x648] sm:$0xff]
    %v265 = vld [vmem:[%s3 + $0x650] sm:$0xff]
    %v266 = vld [vmem:[%s3 + $0x658] sm:$0xff]
    %v267 = vld [vmem:[%s3 + $0x660] sm:$0xff]
    %v268 = vld [vmem:[%s3 + $0x668] sm:$0xff]
    %v269 = vld [vmem:[%s3 + $0x670] sm:$0xff]
    %v270 = vld [vmem:[%s3 + $0x678] sm:$0xff]
    %v271 = vld [vmem:[%s3 + $0x680] sm:$0xff]
    %v272 = vld [vmem:[%s3 + $0x688] sm:$0xff]
    %v273 = vld [vmem:[%s3 + $0x690] sm:$0xff]
    %v274 = vld [vmem:[%s3 + $0x698] sm:$0xff]
    %v275 = vld [vmem:[%s3 + $0x6a0] sm:$0xff]
    %v276 = vld [vmem:[%s3 + $0x6a8] sm:$0xff]
    %v277 = vld [vmem:[%s3 + $0x6b0] sm:$0xff]
    %v278 = vld [vmem:[%s3 + $0x6b8] sm:$0xff]
    %v279 = vld [vmem:[%s3 + $0x6c0] sm:$0xff]
    %v280 = vld [vmem:[%s3 + $0x6c8] sm:$0xff]
    %v281 = vld [vmem:[%s3 + $0x6d0] sm:$0xff]
    %v282 = vld [vmem:[%s3 + $0x6d8] sm:$0xff]
    %v283 = vld [vmem:[%s3 + $0x6e0] sm:$0xff]
    %v284 = vld [vmem:[%s3 + $0x6e8] sm:$0xff]
    %v285 = vld [vmem:[%s3 + $0x6f0] sm:$0xff]
    %v286 = vld [vmem:[%s3 + $0x6f8] sm:$0xff]
    %v287 = vld [vmem:[%s3 + $0x700] sm:$0xff]
    %v288 = vld [vmem:[%s3 + $0x708] sm:$0xff]
    %v289 = vld [vmem:[%s3 + $0x710] sm:$0xff]
    %v290 = vld [vmem:[%s3 + $0x718] sm:$0xff]
    %v291 = vld [vmem:[%s3 + $0x720] sm:$0xff]
    %v292 = vld [vmem:[%s3 + $0x728] sm:$0xff]
    %v293 = vld [vmem:[%s3 + $0x730] sm:$0xff]
    %v294 = vld [vmem:[%s3 + $0x738] sm:$0xff]
    %v295 = vld [vmem:[%s3 + $0x740] sm:$0xff]
    %v296 = vld [vmem:[%s3 + $0x748] sm:$0xff]
    %v297 = vld [vmem:[%s3 + $0x750] sm:$0xff]
    %v298 = vld [vmem:[%s3 + $0x758] sm:$0xff]
    %v299 = vld [vmem:[%s3 + $0x760] sm:$0xff]
    %v300 = vld [vmem:[%s3 + $0x768] sm:$0xff]
    %v301 = vld [vmem:[%s3 + $0x770] sm:$0xff]
    %v302 = vld [vmem:[%s3 + $0x778] sm:$0xff]
    %v303 = vld [vmem:[%s3 + $0x780] sm:$0xff]
    %v304 = vld [vmem:[%s3 + $0x788] sm:$0xff]
    %v305 = vld [vmem:[%s3 + $0x790] sm:$0xff]
    %v306 = vld [vmem:[%s3 + $0x798] sm:$0xff]
    %v307 = vld [vmem:[%s3 + $0x7a0] sm:$0xff]
    %v308 = vld [vmem:[%s3 + $0x7a8] sm:$0xff]
    %v309 = vld [vmem:[%s3 + $0x7b0] sm:$0xff]
    %v310 = vld [vmem:[%s3 + $0x7b8] sm:$0xff]
    %v311 = vld [vmem:[%s3 + $0x7c0] sm:$0xff]
    %v312 = vld [vmem:[%s3 + $0x7c8] sm:$0xff]
    %v313 = vld [vmem:[%s3 + $0x7d0] sm:$0xff]
    %v314 = vld [vmem:[%s3 + $0x7d8] sm:$0xff]
    %v315 = vld [vmem:[%s3 + $0x7e0] sm:$0xff]
    %v316 = vld [vmem:[%s3 + $0x7e8] sm:$0xff]
    %v317 = vld [vmem:[%s3 + $0x7f0] sm:$0xff]
    %v318 = vld [vmem:[%s3 + $0x7f8] sm:$0xff]
    %v319 = vld [vmem:[%s3 + $0x800] sm:$0xff]
    %v320 = vld [vmem:[%s3 + $0x808] sm:$0xff]
    %v321 = vld [vmem:[%s3 + $0x810] sm:$0xff]
    %v322 = vld [vmem:[%s3 + $0x818] sm:$0xff]
    %v323 = vld [vmem:[%s3 + $0x820] sm:$0xff]
    %v324 = vld [vmem:[%s3 + $0x828] sm:$0xff]
    %v325 = vld [vmem:[%s3 + $0x830] sm:$0xff]
    %v326 = vld [vmem:[%s3 + $0x838] sm:$0xff]
    %v327 = vld [vmem:[%s3 + $0x840] sm:$0xff]
    %v328 = vld [vmem:[%s3 + $0x848] sm:$0xff]
    %v329 = vld [vmem:[%s3 + $0x850] sm:$0xff]
    %v330 = vld [vmem:[%s3 + $0x858] sm:$0xff]
    %v331 = vld [vmem:[%s3 + $0x860] sm:$0xff]
    %v332 = vld [vmem:[%s3 + $0x868] sm:$0xff]
    %v333 = vld [vmem:[%s3 + $0x870] sm:$0xff]
    %v334 = vld [vmem:[%s3 + $0x878] sm:$0xff]
    %v335 = vld [vmem:[%s3 + $0x880] sm:$0xff]
    %v336 = vld [vmem:[%s3 + $0x888] sm:$0xff]
    %v337 = vld [vmem:[%s3 + $0x890] sm:$0xff]
    %v338 = vld [vmem:[%s3 + $0x898] sm:$0xff]
    %v339 = vld [vmem:[%s3 + $0x8a0] sm:$0xff]
    %v340 = vld [vmem:[%s3 + $0x8a8] sm:$0xff]
    %v341 = vld [vmem:[%s3 + $0x8b0] sm:$0xff]
    %v342 = vld [vmem:[%s3 + $0x8b8] sm:$0xff]
    %v343 = vld [vmem:[%s3 + $0x8c0] sm:$0xff]
    %v344 = vld [vmem:[%s3 + $0x8c8] sm:$0xff]
    %v345 = vld [vmem:[%s3 + $0x8d0] sm:$0xff]
    %v346 = vld [vmem:[%s3 + $0x8d8] sm:$0xff]
    %v347 = vld [vmem:[%s3 + $0x8e0] sm:$0xff]
    %v348 = vld [vmem:[%s3 + $0x8e8] sm:$0xff]
    %v349 = vld [vmem:[%s3 + $0x8f0] sm:$0xff]
    %v350 = vld [vmem:[%s3 + $0x8f8] sm:$0xff]
    %v351 = vld [vmem:[%s3 + $0x900] sm:$0xff]
    %v352 = vld [vmem:[%s3 + $0x908] sm:$0xff]
    %v353 = vld [vmem:[%s3 + $0x910] sm:$0xff]
    %v354 = vld [vmem:[%s3 + $0x918] sm:$0xff]
    %v355 = vld [vmem:[%s3 + $0x920] sm:$0xff]
    %v356 = vld [vmem:[%s3 + $0x928] sm:$0xff]
    %v357 = vld [vmem:[%s3 + $0x930] sm:$0xff]
    %v358 = vld [vmem:[%s3 + $0x938] sm:$0xff]
    %v359 = vld [vmem:[%s3 + $0x940] sm:$0xff]
    %v360 = vld [vmem:[%s3 + $0x948] sm:$0xff]
    %v361 = vld [vmem:[%s3 + $0x950] sm:$0xff]
    %v362 = vld [vmem:[%s3 + $0x958] sm:$0xff]
    %v363 = vld [vmem:[%s3 + $0x960] sm:$0xff]
    %v364 = vld [vmem:[%s3 + $0x968] sm:$0xff]
    %v365 = vld [vmem:[%s3 + $0x970] sm:$0xff]
    %v366 = vld [vmem:[%s3 + $0x978] sm:$0xff]
    %v367 = vld [vmem:[%s3 + $0x980] sm:$0xff]
    %v368 = vld [vmem:[%s3 + $0x988] sm:$0xff]
    %v369 = vld [vmem:[%s3 + $0x990] sm:$0xff]
    %v370 = vld [vmem:[%s3 + $0x998] sm:$0xff]
    %v371 = vld [vmem:[%s3 + $0x9a0] sm:$0xff]
    %v372 = vld [vmem:[%s3 + $0x9a8] sm:$0xff]
    %v373 = vld [vmem:[%s3 + $0x9b0] sm:$0xff]
    %v374 = vld [vmem:[%s3 + $0x9b8] sm:$0xff]
    %v375 = vld [vmem:[%s3 + $0x9c0] sm:$0xff]
    %v376 = vld [vmem:[%s3 + $0x9c8] sm:$0xff]
    %v377 = vld [vmem:[%s3 + $0x9d0] sm:$0xff]
    %v378 = vld [vmem:[%s3 + $0x9d8] sm:$0xff]
    %v379 = vld [vmem:[%s3 + $0x9e0] sm:$0xff]
    %v380 = vld [vmem:[%s3 + $0x9e8] sm:$0xff]
    %v381 = vld [vmem:[%s3 + $0x9f0] sm:$0xff]
    %v382 = vld [vmem:[%s3 + $0x9f8] sm:$0xff]
    %v383 = vld [vmem:[%s3 + $0xa00] sm:$0xff]
    %v384 = vld [vmem:[%s3 + $0xa08] sm:$0xff]
    %v385 = vld [vmem:[%s3 + $0xa10] sm:$0xff]
    %v386 = vld [vmem:[%s3 + $0xa18] sm:$0xff]
    %v387 = vld [vmem:[%s3 + $0xa20] sm:$0xff]
    %v388 = vld [vmem:[%s3 + $0xa28] sm:$0xff]
    %v389 = vld [vmem:[%s3 + $0xa30] sm:$0xff]
    %v390 = vld [vmem:[%s3 + $0xa38] sm:$0xff]
    %v391 = vld [vmem:[%s3 + $0xa40] sm:$0xff]
    %v392 = vld [vmem:[%s3 + $0xa48] sm:$0xff]
    %v393 = vld [vmem:[%s3 + $0xa50] sm:$0xff]
    %v394 = vld [vmem:[%s3 + $0xa58] sm:$0xff]
    %v395 = vld [vmem:[%s3 + $0xa60] sm:$0xff]
    %v396 = vld [vmem:[%s3 + $0xa68] sm:$0xff]
    %v397 = vld [vmem:[%s3 + $0xa70] sm:$0xff]
    %v398 = vld [vmem:[%s3 + $0xa78] sm:$0xff]
    %v399 = vld [vmem:[%s3 + $0xa80] sm:$0xff]
    %v400 = vld [vmem:[%s3 + $0xa88] sm:$0xff]
    %v401 = vld [vmem:[%s3 + $0xa90] sm:$0xff]
    %v402 = vld [vmem:[%s3 + $0xa98] sm:$0xff]
    %v403 = vld [vmem:[%s3 + $0xaa0] sm:$0xff]
    %v404 = vld [vmem:[%s3 + $0xaa8] sm:$0xff]
    %v405 = vld [vmem:[%s3 + $0xab0] sm:$0xff]
    %v406 = vld [vmem:[%s3 + $0xab8] sm:$0xff]
    %v407 = vld [vmem:[%s3 + $0xac0] sm:$0xff]
    %v408 = vld [vmem:[%s3 + $0xac8] sm:$0xff]
    %v409 = vld [vmem:[%s3 + $0xad0] sm:$0xff]
    %v410 = vld [vmem:[%s3 + $0xad8] sm:$0xff]
    %v411 = vld [vmem:[%s3 + $0xae0] sm:$0xff]
    %v412 = vld [vmem:[%s3 + $0xae8] sm:$0xff]
    %v413 = vld [vmem:[%s3 + $0xaf0] sm:$0xff]
    %v414 = vld [vmem:[%s3 + $0xaf8] sm:$0xff]
    %v415 = vld [vmem:[%s3 + $0xb00] sm:$0xff]
    %v416 = vld [vmem:[%s3 + $0xb08] sm:$0xff]
    %v417 = vld [vmem:[%s3 + $0xb10] sm:$0xff]
    %v418 = vld [vmem:[%s3 + $0xb18] sm:$0xff]
    %v419 = vld [vmem:[%s3 + $0xb20] sm:$0xff]
    %v420 = vld [vmem:[%s3 + $0xb28] sm:$0xff]
    %v421 = vld [vmem:[%s3 + $0xb30] sm:$0xff]
    %v422 = vld [vmem:[%s3 + $0xb38] sm:$0xff]
    %v423 = vld [vmem:[%s3 + $0xb40] sm:$0xff]
    %v424 = vld [vmem:[%s3 + $0xb48] sm:$0xff]
    %v425 = vld [vmem:[%s3 + $0xb50] sm:$0xff]
    %v426 = vld [vmem:[%s3 + $0xb58] sm:$0xff]
    %v427 = vld [vmem:[%s3 + $0xb60] sm:$0xff]
    %v428 = vld [vmem:[%s3 + $0xb68] sm:$0xff]
    %v429 = vld [vmem:[%s3 + $0xb70] sm:$0xff]
    %v430 = vld [vmem:[%s3 + $0xb78] sm:$0xff]
    %v431 = vld [vmem:[%s3 + $0xb80] sm:$0xff]
    %v432 = vld [vmem:[%s3 + $0xb88] sm:$0xff]
    %v433 = vld [vmem:[%s3 + $0xb90] sm:$0xff]
    %v434 = vld [vmem:[%s3 + $0xb98] sm:$0xff]
    %v435 = vld [vmem:[%s3 + $0xba0] sm:$0xff]
    %v436 = vld [vmem:[%s3 + $0xba8] sm:$0xff]
    %v437 = vld [vmem:[%s3 + $0xbb0] sm:$0xff]
    %v438 = vld [vmem:[%s3 + $0xbb8] sm:$0xff]
    %v439 = vld [vmem:[%s3 + $0xbc0] sm:$0xff]
    %v440 = vld [vmem:[%s3 + $0xbc8] sm:$0xff]
    %v441 = vld [vmem:[%s3 + $0xbd0] sm:$0xff]
    %v442 = vld [vmem:[%s3 + $0xbd8] sm:$0xff]
    %v443 = vld [vmem:[%s3 + $0xbe0] sm:$0xff]
    %v444 = vld [vmem:[%s3 + $0xbe8] sm:$0xff]
    %v445 = vld [vmem:[%s3 + $0xbf0] sm:$0xff]
    %v446 = vld [vmem:[%s3 + $0xbf8] sm:$0xff]
    %v447 = vld [vmem:[%s3 + $0xc00] sm:$0xff]
    %v448 = vld [vmem:[%s3 + $0xc08] sm:$0xff]
    %v449 = vld [vmem:[%s3 + $0xc10] sm:$0xff]
    %v450 = vld [vmem:[%s3 + $0xc18] sm:$0xff]
    %v451 = vld [vmem:[%s3 + $0xc20] sm:$0xff]
    %v452 = vld [vmem:[%s3 + $0xc28] sm:$0xff]
    %v453 = vld [vmem:[%s3 + $0xc30] sm:$0xff]
    %v454 = vld [vmem:[%s3 + $0xc38] sm:$0xff]
    %v455 = vld [vmem:[%s3 + $0xc40] sm:$0xff]
    %v456 = vld [vmem:[%s3 + $0xc48] sm:$0xff]
    %v457 = vld [vmem:[%s3 + $0xc50] sm:$0xff]
    %v458 = vld [vmem:[%s3 + $0xc58] sm:$0xff]
    %v459 = vld [vmem:[%s3 + $0xc60] sm:$0xff]
    %v460 = vld [vmem:[%s3 + $0xc68] sm:$0xff]
    %v461 = vld [vmem:[%s3 + $0xc70] sm:$0xff]
    %v462 = vld [vmem:[%s3 + $0xc78] sm:$0xff]
    %v463 = vld [vmem:[%s3 + $0xc80] sm:$0xff]
    %v464 = vld [vmem:[%s3 + $0xc88] sm:$0xff]
    %v465 = vld [vmem:[%s3 + $0xc90] sm:$0xff]
    %v466 = vld [vmem:[%s3 + $0xc98] sm:$0xff]
    %v467 = vld [vmem:[%s3 + $0xca0] sm:$0xff]
    %v468 = vld [vmem:[%s3 + $0xca8] sm:$0xff]
    %v469 = vld [vmem:[%s3 + $0xcb0] sm:$0xff]
    %v470 = vld [vmem:[%s3 + $0xcb8] sm:$0xff]
    %v471 = vld [vmem:[%s3 + $0xcc0] sm:$0xff]
    %v472 = vld [vmem:[%s3 + $0xcc8] sm:$0xff]
    %v473 = vld [vmem:[%s3 + $0xcd0] sm:$0xff]
    %v474 = vld [vmem:[%s3 + $0xcd8] sm:$0xff]
    %v475 = vld [vmem:[%s3 + $0xce0] sm:$0xff]
    %v476 = vld [vmem:[%s3 + $0xce8] sm:$0xff]
    %v477 = vld [vmem:[%s3 + $0xcf0] sm:$0xff]
    %v478 = vld [vmem:[%s3 + $0xcf8] sm:$0xff]
    %v479 = vld [vmem:[%s3 + $0xd00] sm:$0xff]
    %v480 = vld [vmem:[%s3 + $0xd08] sm:$0xff]
    %v481 = vld [vmem:[%s3 + $0xd10] sm:$0xff]
    %v482 = vld [vmem:[%s3 + $0xd18] sm:$0xff]
    %v483 = vld [vmem:[%s3 + $0xd20] sm:$0xff]
    %v484 = vld [vmem:[%s3 + $0xd28] sm:$0xff]
    %v485 = vld [vmem:[%s3 + $0xd30] sm:$0xff]
    %v486 = vld [vmem:[%s3 + $0xd38] sm:$0xff]
    %v487 = vld [vmem:[%s3 + $0xd40] sm:$0xff]
    %v488 = vld [vmem:[%s3 + $0xd48] sm:$0xff]
    %v489 = vld [vmem:[%s3 + $0xd50] sm:$0xff]
    %v490 = vld [vmem:[%s3 + $0xd58] sm:$0xff]
    %v491 = vld [vmem:[%s3 + $0xd60] sm:$0xff]
    %v492 = vld [vmem:[%s3 + $0xd68] sm:$0xff]
    %v493 = vld [vmem:[%s3 + $0xd70] sm:$0xff]
    %v494 = vld [vmem:[%s3 + $0xd78] sm:$0xff]
    %v495 = vld [vmem:[%s3 + $0xd80] sm:$0xff]
    %v496 = vld [vmem:[%s3 + $0xd88] sm:$0xff]
    %v497 = vld [vmem:[%s3 + $0xd90] sm:$0xff]
    %v498 = vld [vmem:[%s3 + $0xd98] sm:$0xff]
    %v499 = vld [vmem:[%s3 + $0xda0] sm:$0xff]
    %v500 = vld [vmem:[%s3 + $0xda8] sm:$0xff]
    %v501 = vld [vmem:[%s3 + $0xdb0] sm:$0xff]
    %v502 = vld [vmem:[%s3 + $0xdb8] sm:$0xff]
    %v503 = vld [vmem:[%s3 + $0xdc0] sm:$0xff]
    %v504 = vld [vmem:[%s3 + $0xdc8] sm:$0xff]
    %v505 = vld [vmem:[%s3 + $0xdd0] sm:$0xff]
    %v506 = vld [vmem:[%s3 + $0xdd8] sm:$0xff]
    %v507 = vld [vmem:[%s3 + $0xde0] sm:$0xff]
    %v508 = vld [vmem:[%s3 + $0xde8] sm:$0xff]
    %v509 = vld [vmem:[%s3 + $0xdf0] sm:$0xff]
    %v510 = vld [vmem:[%s3 + $0xdf8] sm:$0xff]
    %v511 = vld [vmem:[%s3 + $0xe00] sm:$0xff]
    %v512 = vld [vmem:[%s3 + $0xe08] sm:$0xff]
    %v513 = vld [vmem:[%s3 + $0xe10] sm:$0xff]
    %v514 = vld [vmem:[%s3 + $0xe18] sm:$0xff]
    %v515 = vld [vmem:[%s3 + $0xe20] sm:$0xff]
    %v516 = vld [vmem:[%s3 + $0xe28] sm:$0xff]
    %v517 = vld [vmem:[%s3 + $0xe30] sm:$0xff]
    %v518 = vld [vmem:[%s3 + $0xe38] sm:$0xff]
    %v519 = vld [vmem:[%s3 + $0xe40] sm:$0xff]
    %v520 = vld [vmem:[%s3 + $0xe48] sm:$0xff]
    %v521 = vld [vmem:[%s3 + $0xe50] sm:$0xff]
    %v522 = vld [vmem:[%s3 + $0xe58] sm:$0xff]
    %v523 = vld [vmem:[%s3 + $0xe60] sm:$0xff]
    %v524 = vld [vmem:[%s3 + $0xe68] sm:$0xff]
    %v525 = vld [vmem:[%s3 + $0xe70] sm:$0xff]
    %v526 = vld [vmem:[%s3 + $0xe78] sm:$0xff]
    %v527 = vld [vmem:[%s3 + $0xe80] sm:$0xff]
    %v528 = vld [vmem:[%s3 + $0xe88] sm:$0xff]
    %v529 = vld [vmem:[%s3 + $0xe90] sm:$0xff]
    %v530 = vld [vmem:[%s3 + $0xe98] sm:$0xff]
    %v531 = vld [vmem:[%s3 + $0xea0] sm:$0xff]
    %v532 = vld [vmem:[%s3 + $0xea8] sm:$0xff]
    %v533 = vld [vmem:[%s3 + $0xeb0] sm:$0xff]
    %v534 = vld [vmem:[%s3 + $0xeb8] sm:$0xff]
    %v535 = vld [vmem:[%s3 + $0xec0] sm:$0xff]
    %v536 = vld [vmem:[%s3 + $0xec8] sm:$0xff]
    %v537 = vld [vmem:[%s3 + $0xed0] sm:$0xff]
    %v538 = vld [vmem:[%s3 + $0xed8] sm:$0xff]
    %v539 = vld [vmem:[%s3 + $0xee0] sm:$0xff]
    %v540 = vld [vmem:[%s3 + $0xee8] sm:$0xff]
    %v541 = vld [vmem:[%s3 + $0xef0] sm:$0xff]
    %v542 = vld [vmem:[%s3 + $0xef8] sm:$0xff]
    %v543 = vld [vmem:[%s3 + $0xf00] sm:$0xff]
    %v544 = vld [vmem:[%s3 + $0xf08] sm:$0xff]
    %v545 = vld [vmem:[%s3 + $0xf10] sm:$0xff]
    %v546 = vld [vmem:[%s3 + $0xf18] sm:$0xff]
    %v547 = vld [vmem:[%s3 + $0xf20] sm:$0xff]
    %v548 = vld [vmem:[%s3 + $0xf28] sm:$0xff]
    %v549 = vld [vmem:[%s3 + $0xf30] sm:$0xff]
    %v550 = vld [vmem:[%s3 + $0xf38] sm:$0xff]
    %v551 = vld [vmem:[%s3 + $0xf40] sm:$0xff]
    %v552 = vld [vmem:[%s3 + $0xf48] sm:$0xff]
    %v553 = vld [vmem:[%s3 + $0xf50] sm:$0xff]
    %v554 = vld [vmem:[%s3 + $0xf58] sm:$0xff]
    %v555 = vld [vmem:[%s3 + $0xf60] sm:$0xff]
    %v556 = vld [vmem:[%s3 + $0xf68] sm:$0xff]
    %v557 = vld [vmem:[%s3 + $0xf70] sm:$0xff]
    %v558 = vld [vmem:[%s3 + $0xf78] sm:$0xff]
    %v559 = vld [vmem:[%s3 + $0xf80] sm:$0xff]
    %v560 = vld [vmem:[%s3 + $0xf88] sm:$0xff]
    %v561 = vld [vmem:[%s3 + $0xf90] sm:$0xff]
    %v562 = vld [vmem:[%s3 + $0xf98] sm:$0xff]
    %v563 = vld [vmem:[%s3 + $0xfa0] sm:$0xff]
    %v564 = vld [vmem:[%s3 + $0xfa8] sm:$0xff]
    %v565 = vld [vmem:[%s3 + $0xfb0] sm:$0xff]
    %v566 = vld [vmem:[%s3 + $0xfb8] sm:$0xff]
    %v567 = vld [vmem:[%s3 + $0xfc0] sm:$0xff]
    %v568 = vld [vmem:[%s3 + $0xfc8] sm:$0xff]
    %v569 = vld [vmem:[%s3 + $0xfd0] sm:$0xff]
    %v570 = vld [vmem:[%s3 + $0xfd8] sm:$0xff]
    %v571 = vld [vmem:[%s3 + $0xfe0] sm:$0xff]
    %v572 = vld [vmem:[%s3 + $0xfe8] sm:$0xff]
    %v573 = vld [vmem:[%s3 + $0xff0] sm:$0xff]
    %v574 = vld [vmem:[%s3 + $0xff8] sm:$0xff]
    %v575 = vld [vmem:[%s3 + $0x1000] sm:$0xff]
    %v576 = vld [vmem:[%s3 + $0x1008] sm:$0xff]
    %v577 = vld [vmem:[%s3 + $0x1010] sm:$0xff]
    %v578 = vld [vmem:[%s3 + $0x1018] sm:$0xff]
    %v579 = vld [vmem:[%s3 + $0x1020] sm:$0xff]
    %v580 = vld [vmem:[%s3 + $0x1028] sm:$0xff]
    %v581 = vld [vmem:[%s3 + $0x1030] sm:$0xff]
    %v582 = vld [vmem:[%s3 + $0x1038] sm:$0xff]
    %v583 = vld [vmem:[%s3 + $0x1040] sm:$0xff]
    %v584 = vld [vmem:[%s3 + $0x1048] sm:$0xff]
    %v585 = vld [vmem:[%s3 + $0x1050] sm:$0xff]
    %v586 = vld [vmem:[%s3 + $0x1058] sm:$0xff]
    %v587 = vld [vmem:[%s3 + $0x1060] sm:$0xff]
    %v588 = vld [vmem:[%s3 + $0x1068] sm:$0xff]
    %v589 = vld [vmem:[%s3 + $0x1070] sm:$0xff]
    %v590 = vld [vmem:[%s3 + $0x1078] sm:$0xff]
    %v591 = vld [vmem:[%s3 + $0x1080] sm:$0xff]
    %v592 = vld [vmem:[%s3 + $0x1088] sm:$0xff]
    %v593 = vld [vmem:[%s3 + $0x1090] sm:$0xff]
    %v594 = vld [vmem:[%s3 + $0x1098] sm:$0xff]
    %v595 = vld [vmem:[%s3 + $0x10a0] sm:$0xff]
    %v596 = vld [vmem:[%s3 + $0x10a8] sm:$0xff]
    %v597 = vld [vmem:[%s3 + $0x10b0] sm:$0xff]
    %v598 = vld [vmem:[%s3 + $0x10b8] sm:$0xff]
    %v599 = vld [vmem:[%s3 + $0x10c0] sm:$0xff]
    %v600 = vld [vmem:[%s3 + $0x10c8] sm:$0xff]
    %v601 = vld [vmem:[%s3 + $0x10d0] sm:$0xff]
    %v602 = vld [vmem:[%s3 + $0x10d8] sm:$0xff]
    %v603 = vld [vmem:[%s3 + $0x10e0] sm:$0xff]
    %v604 = vld [vmem:[%s3 + $0x10e8] sm:$0xff]
    %v605 = vld [vmem:[%s3 + $0x10f0] sm:$0xff]
    %v606 = vld [vmem:[%s3 + $0x10f8] sm:$0xff]
    %v607 = vld [vmem:[%s3 + $0x1100] sm:$0xff]
    %v608 = vld [vmem:[%s3 + $0x1108] sm:$0xff]
    %v609 = vld [vmem:[%s3 + $0x1110] sm:$0xff]
    %v610 = vld [vmem:[%s3 + $0x1118] sm:$0xff]
    %v611 = vld [vmem:[%s3 + $0x1120] sm:$0xff]
    %v612 = vld [vmem:[%s3 + $0x1128] sm:$0xff]
    %v613 = vld [vmem:[%s3 + $0x1130] sm:$0xff]
    %v614 = vld [vmem:[%s3 + $0x1138] sm:$0xff]
    %v615 = vld [vmem:[%s3 + $0x1140] sm:$0xff]
    %v616 = vld [vmem:[%s3 + $0x1148] sm:$0xff]
    %v617 = vld [vmem:[%s3 + $0x1150] sm:$0xff]
    %v618 = vld [vmem:[%s3 + $0x1158] sm:$0xff]
    %v619 = vld [vmem:[%s3 + $0x1160] sm:$0xff]
    %v620 = vld [vmem:[%s3 + $0x1168] sm:$0xff]
    %v621 = vld [vmem:[%s3 + $0x1170] sm:$0xff]
    %v622 = vld [vmem:[%s3 + $0x1178] sm:$0xff]
    %v623 = vld [vmem:[%s3 + $0x1180] sm:$0xff]
    %v624 = vld [vmem:[%s3 + $0x1188] sm:$0xff]
    %v625 = vld [vmem:[%s3 + $0x1190] sm:$0xff]
    %v626 = vld [vmem:[%s3 + $0x1198] sm:$0xff]
    %v627 = vld [vmem:[%s3 + $0x11a0] sm:$0xff]
    %v628 = vld [vmem:[%s3 + $0x11a8] sm:$0xff]
    %v629 = vld [vmem:[%s3 + $0x11b0] sm:$0xff]
    %v630 = vld [vmem:[%s3 + $0x11b8] sm:$0xff]
    %v631 = vld [vmem:[%s3 + $0x11c0] sm:$0xff]
    %v632 = vld [vmem:[%s3 + $0x11c8] sm:$0xff]
    %v633 = vld [vmem:[%s3 + $0x11d0] sm:$0xff]
    %v634 = vld [vmem:[%s3 + $0x11d8] sm:$0xff]
    %v635 = vld [vmem:[%s3 + $0x11e0] sm:$0xff]
    %v636 = vld [vmem:[%s3 + $0x11e8] sm:$0xff]
    %v637 = vld [vmem:[%s3 + $0x11f0] sm:$0xff]
    %v638 = vld [vmem:[%s3 + $0x11f8] sm:$0xff]
    %v639 = vld [vmem:[%s3 + $0x1200] sm:$0xff]
    %v640 = vld [vmem:[%s3 + $0x1208] sm:$0xff]
    %v641 = vld [vmem:[%s3 + $0x1210] sm:$0xff]
    %v642 = vld [vmem:[%s3 + $0x1218] sm:$0xff]
    %v643 = vld [vmem:[%s3 + $0x1220] sm:$0xff]
    %v644 = vld [vmem:[%s3 + $0x1228] sm:$0xff]
    %v645 = vld [vmem:[%s3 + $0x1230] sm:$0xff]
    %v646 = vld [vmem:[%s3 + $0x1238] sm:$0xff]
    %v647 = vld [vmem:[%s3 + $0x1240] sm:$0xff]
    %v648 = vld [vmem:[%s3 + $0x1248] sm:$0xff]
    %v649 = vld [vmem:[%s3 + $0x1250] sm:$0xff]
    %v650 = vld [vmem:[%s3 + $0x1258] sm:$0xff]
    %v651 = vld [vmem:[%s3 + $0x1260] sm:$0xff]
    %v652 = vld [vmem:[%s3 + $0x1268] sm:$0xff]
    %v653 = vld [vmem:[%s3 + $0x1270] sm:$0xff]
    %v654 = vld [vmem:[%s3 + $0x1278] sm:$0xff]
    %v655 = vld [vmem:[%s3 + $0x1280] sm:$0xff]
    %v656 = vld [vmem:[%s3 + $0x1288] sm:$0xff]
    %v657 = vld [vmem:[%s3 + $0x1290] sm:$0xff]
    %v658 = vld [vmem:[%s3 + $0x1298] sm:$0xff]
    %v659 = vld [vmem:[%s3 + $0x12a0] sm:$0xff]
    %v660 = vld [vmem:[%s3 + $0x12a8] sm:$0xff]
    %v661 = vld [vmem:[%s3 + $0x12b0] sm:$0xff]
    %v662 = vld [vmem:[%s3 + $0x12b8] sm:$0xff]
    %v663 = vld [vmem:[%s3 + $0x12c0] sm:$0xff]
    %v664 = vld [vmem:[%s3 + $0x12c8] sm:$0xff]
    %v665 = vld [vmem:[%s3 + $0x12d0] sm:$0xff]
    %v666 = vld [vmem:[%s3 + $0x12d8] sm:$0xff]
    %v667 = vld [vmem:[%s3 + $0x12e0] sm:$0xff]
    %v668 = vld [vmem:[%s3 + $0x12e8] sm:$0xff]
    %v669 = vld [vmem:[%s3 + $0x12f0] sm:$0xff]
    %v670 = vld [vmem:[%s3 + $0x12f8] sm:$0xff]
    %v671 = vld [vmem:[%s3 + $0x1300] sm:$0xff]
    %v672 = vld [vmem:[%s3 + $0x1308] sm:$0xff]
    %v673 = vld [vmem:[%s3 + $0x1310] sm:$0xff]
    %v674 = vld [vmem:[%s3 + $0x1318] sm:$0xff]
    %v675 = vld [vmem:[%s3 + $0x1320] sm:$0xff]
    %v676 = vld [vmem:[%s3 + $0x1328] sm:$0xff]
    %v677 = vld [vmem:[%s3 + $0x1330] sm:$0xff]
    %v678 = vld [vmem:[%s3 + $0x1338] sm:$0xff]
    %v679 = vld [vmem:[%s3 + $0x1340] sm:$0xff]
    %v680 = vld [vmem:[%s3 + $0x1348] sm:$0xff]
    %v681 = vld [vmem:[%s3 + $0x1350] sm:$0xff]
    %v682 = vld [vmem:[%s3 + $0x1358] sm:$0xff]
    %v683 = vld [vmem:[%s3 + $0x1360] sm:$0xff]
    %v684 = vld [vmem:[%s3 + $0x1368] sm:$0xff]
    %v685 = vld [vmem:[%s3 + $0x1370] sm:$0xff]
    %v686 = vld [vmem:[%s3 + $0x1378] sm:$0xff]
    %v687 = vld [vmem:[%s3 + $0x1380] sm:$0xff]
    %v688 = vld [vmem:[%s3 + $0x1388] sm:$0xff]
    %v689 = vld [vmem:[%s3 + $0x1390] sm:$0xff]
    %v690 = vld [vmem:[%s3 + $0x1398] sm:$0xff]
    %v691 = vld [vmem:[%s3 + $0x13a0] sm:$0xff]
    %v692 = vld [vmem:[%s3 + $0x13a8] sm:$0xff]
    %v693 = vld [vmem:[%s3 + $0x13b0] sm:$0xff]
    %v694 = vld [vmem:[%s3 + $0x13b8] sm:$0xff]
    %v695 = vld [vmem:[%s3 + $0x13c0] sm:$0xff]
    %v696 = vld [vmem:[%s3 + $0x13c8] sm:$0xff]
    %v697 = vld [vmem:[%s3 + $0x13d0] sm:$0xff]
    %v698 = vld [vmem:[%s3 + $0x13d8] sm:$0xff]
    %v699 = vld [vmem:[%s3 + $0x13e0] sm:$0xff]
    %v700 = vld [vmem:[%s3 + $0x13e8] sm:$0xff]
    %v701 = vld [vmem:[%s3 + $0x13f0] sm:$0xff]
    %v702 = vld [vmem:[%s3 + $0x13f8] sm:$0xff]
    %v703 = vld [vmem:[%s3 + $0x1400] sm:$0xff]
    %v704 = vld [vmem:[%s3 + $0x1408] sm:$0xff]
    %v705 = vld [vmem:[%s3 + $0x1410] sm:$0xff]
    %v706 = vld [vmem:[%s3 + $0x1418] sm:$0xff]
    %v707 = vld [vmem:[%s3 + $0x1420] sm:$0xff]
    %v708 = vld [vmem:[%s3 + $0x1428] sm:$0xff]
    %v709 = vld [vmem:[%s3 + $0x1430] sm:$0xff]
    %v710 = vld [vmem:[%s3 + $0x1438] sm:$0xff]
    %v711 = vld [vmem:[%s3 + $0x1440] sm:$0xff]
    %v712 = vld [vmem:[%s3 + $0x1448] sm:$0xff]
    %v713 = vld [vmem:[%s3 + $0x1450] sm:$0xff]
    %v714 = vld [vmem:[%s3 + $0x1458] sm:$0xff]
    %v715 = vld [vmem:[%s3 + $0x1460] sm:$0xff]
    %v716 = vld [vmem:[%s3 + $0x1468] sm:$0xff]
    %v717 = vld [vmem:[%s3 + $0x1470] sm:$0xff]
    %v718 = vld [vmem:[%s3 + $0x1478] sm:$0xff]
    %v719 = vld [vmem:[%s3 + $0x1480] sm:$0xff]
    %v720 = vld [vmem:[%s3 + $0x1488] sm:$0xff]
    %v721 = vld [vmem:[%s3 + $0x1490] sm:$0xff]
    %v722 = vld [vmem:[%s3 + $0x1498] sm:$0xff]
    %v723 = vld [vmem:[%s3 + $0x14a0] sm:$0xff]
    %v724 = vld [vmem:[%s3 + $0x14a8] sm:$0xff]
    %v725 = vld [vmem:[%s3 + $0x14b0] sm:$0xff]
    %v726 = vld [vmem:[%s3 + $0x14b8] sm:$0xff]
    %v727 = vld [vmem:[%s3 + $0x14c0] sm:$0xff]
    %v728 = vld [vmem:[%s3 + $0x14c8] sm:$0xff]
    %v729 = vld [vmem:[%s3 + $0x14d0] sm:$0xff]
    %v730 = vld [vmem:[%s3 + $0x14d8] sm:$0xff]
    %v731 = vld [vmem:[%s3 + $0x14e0] sm:$0xff]
    %v732 = vld [vmem:[%s3 + $0x14e8] sm:$0xff]
    %v733 = vld [vmem:[%s3 + $0x14f0] sm:$0xff]
    %v734 = vld [vmem:[%s3 + $0x14f8] sm:$0xff]
    %v735 = vld [vmem:[%s3 + $0x1500] sm:$0xff]
    %v736 = vld [vmem:[%s3 + $0x1508] sm:$0xff]
    %v737 = vld [vmem:[%s3 + $0x1510] sm:$0xff]
    %v738 = vld [vmem:[%s3 + $0x1518] sm:$0xff]
    %v739 = vld [vmem:[%s3 + $0x1520] sm:$0xff]
    %v740 = vld [vmem:[%s3 + $0x1528] sm:$0xff]
    %v741 = vld [vmem:[%s3 + $0x1530] sm:$0xff]
    %v742 = vld [vmem:[%s3 + $0x1538] sm:$0xff]
    %v743 = vld [vmem:[%s3 + $0x1540] sm:$0xff]
    %v744 = vld [vmem:[%s3 + $0x1548] sm:$0xff]
    %v745 = vld [vmem:[%s3 + $0x1550] sm:$0xff]
    %v746 = vld [vmem:[%s3 + $0x1558] sm:$0xff]
    %v747 = vld [vmem:[%s3 + $0x1560] sm:$0xff]
    %v748 = vld [vmem:[%s3 + $0x1568] sm:$0xff]
    %v749 = vld [vmem:[%s3 + $0x1570] sm:$0xff]
    %v750 = vld [vmem:[%s3 + $0x1578] sm:$0xff]
    %v751 = vld [vmem:[%s3 + $0x1580] sm:$0xff]
    %v752 = vld [vmem:[%s3 + $0x1588] sm:$0xff]
    %v753 = vld [vmem:[%s3 + $0x1590] sm:$0xff]
    %v754 = vld [vmem:[%s3 + $0x1598] sm:$0xff]
    %v755 = vld [vmem:[%s3 + $0x15a0] sm:$0xff]
    %v756 = vld [vmem:[%s3 + $0x15a8] sm:$0xff]
    %v757 = vld [vmem:[%s3 + $0x15b0] sm:$0xff]
    %v758 = vld [vmem:[%s3 + $0x15b8] sm:$0xff]
    %v759 = vld [vmem:[%s3 + $0x15c0] sm:$0xff]
    %v760 = vld [vmem:[%s3 + $0x15c8] sm:$0xff]
    %v761 = vld [vmem:[%s3 + $0x15d0] sm:$0xff]
    %v762 = vld [vmem:[%s3 + $0x15d8] sm:$0xff]
    %v763 = vld [vmem:[%s3 + $0x15e0] sm:$0xff]
    %v764 = vld [vmem:[%s3 + $0x15e8] sm:$0xff]
    %v765 = vld [vmem:[%s3 + $0x15f0] sm:$0xff]
    %v766 = vld [vmem:[%s3 + $0x15f8] sm:$0xff]
    %v767 = vld [vmem:[%s3 + $0x1600] sm:$0xff]
    %v768 = vld [vmem:[%s3 + $0x1608] sm:$0xff]
    %v769 = vld [vmem:[%s3 + $0x1610] sm:$0xff]
    %v770 = vld [vmem:[%s3 + $0x1618] sm:$0xff]
    %v771 = vld [vmem:[%s3 + $0x1620] sm:$0xff]
    %v772 = vld [vmem:[%s3 + $0x1628] sm:$0xff]
    %v773 = vld [vmem:[%s3 + $0x1630] sm:$0xff]
    %v774 = vld [vmem:[%s3 + $0x1638] sm:$0xff]
    %v775 = vld [vmem:[%s3 + $0x1640] sm:$0xff]
    %v776 = vld [vmem:[%s3 + $0x1648] sm:$0xff]
    %v777 = vld [vmem:[%s3 + $0x1650] sm:$0xff]
    %v778 = vld [vmem:[%s3 + $0x1658] sm:$0xff]
    %v779 = vld [vmem:[%s3 + $0x1660] sm:$0xff]
    %v780 = vld [vmem:[%s3 + $0x1668] sm:$0xff]
    %v781 = vld [vmem:[%s3 + $0x1670] sm:$0xff]
    %v782 = vld [vmem:[%s3 + $0x1678] sm:$0xff]
    %v783 = vld [vmem:[%s3 + $0x1680] sm:$0xff]
    %v784 = vld [vmem:[%s3 + $0x1688] sm:$0xff]
    %v785 = vld [vmem:[%s3 + $0x1690] sm:$0xff]
    %v786 = vld [vmem:[%s3 + $0x1698] sm:$0xff]
    %v787 = vld [vmem:[%s3 + $0x16a0] sm:$0xff]
    %v788 = vld [vmem:[%s3 + $0x16a8] sm:$0xff]
    %v789 = vld [vmem:[%s3 + $0x16b0] sm:$0xff]
    %v790 = vld [vmem:[%s3 + $0x16b8] sm:$0xff]
    %v791 = vld [vmem:[%s3 + $0x16c0] sm:$0xff]
    %v792 = vld [vmem:[%s3 + $0x16c8] sm:$0xff]
    %v793 = vld [vmem:[%s3 + $0x16d0] sm:$0xff]
    %v794 = vld [vmem:[%s3 + $0x16d8] sm:$0xff]
    %v795 = vld [vmem:[%s3 + $0x16e0] sm:$0xff]
    %v796 = vld [vmem:[%s3 + $0x16e8] sm:$0xff]
    %v797 = vld [vmem:[%s3 + $0x16f0] sm:$0xff]
    %v798 = vld [vmem:[%s3 + $0x16f8] sm:$0xff]
    %v799 = vld [vmem:[%s3 + $0x1700] sm:$0xff]
    %v800 = vld [vmem:[%s3 + $0x1708] sm:$0xff]
    %v801 = vld [vmem:[%s3 + $0x1710] sm:$0xff]
    %v802 = vld [vmem:[%s3 + $0x1718] sm:$0xff]
    %v803 = vld [vmem:[%s3 + $0x1720] sm:$0xff]
    %v804 = vld [vmem:[%s3 + $0x1728] sm:$0xff]
    %v805 = vld [vmem:[%s3 + $0x1730] sm:$0xff]
    %v806 = vld [vmem:[%s3 + $0x1738] sm:$0xff]
    %v807 = vld [vmem:[%s3 + $0x1740] sm:$0xff]
    %v808 = vld [vmem:[%s3 + $0x1748] sm:$0xff]
    %v809 = vld [vmem:[%s3 + $0x1750] sm:$0xff]
    %v810 = vld [vmem:[%s3 + $0x1758] sm:$0xff]
    %v811 = vld [vmem:[%s3 + $0x1760] sm:$0xff]
    %v812 = vld [vmem:[%s3 + $0x1768] sm:$0xff]
    %v813 = vld [vmem:[%s3 + $0x1770] sm:$0xff]
    %v814 = vld [vmem:[%s3 + $0x1778] sm:$0xff]
    %v815 = vld [vmem:[%s3 + $0x1780] sm:$0xff]
    %v816 = vld [vmem:[%s3 + $0x1788] sm:$0xff]
    %v817 = vld [vmem:[%s3 + $0x1790] sm:$0xff]
    %v818 = vld [vmem:[%s3 + $0x1798] sm:$0xff]
    %v819 = vld [vmem:[%s3 + $0x17a0] sm:$0xff]
    %v820 = vld [vmem:[%s3 + $0x17a8] sm:$0xff]
    %v821 = vld [vmem:[%s3 + $0x17b0] sm:$0xff]
    %v822 = vld [vmem:[%s3 + $0x17b8] sm:$0xff]
    %v823 = vld [vmem:[%s3 + $0x17c0] sm:$0xff]
    %v824 = vld [vmem:[%s3 + $0x17c8] sm:$0xff]
    %v825 = vld [vmem:[%s3 + $0x17d0] sm:$0xff]
    %v826 = vld [vmem:[%s3 + $0x17d8] sm:$0xff]
    %v827 = vld [vmem:[%s3 + $0x17e0] sm:$0xff]
    %v828 = vld [vmem:[%s3 + $0x17e8] sm:$0xff]
    %v829 = vld [vmem:[%s3 + $0x17f0] sm:$0xff]
    %v830 = vld [vmem:[%s3 + $0x17f8] sm:$0xff]
    %v831 = vld [vmem:[%s3 + $0x1800] sm:$0xff]
    %v832 = vld [vmem:[%s3 + $0x1808] sm:$0xff]
    %v833 = vld [vmem:[%s3 + $0x1810] sm:$0xff]
    %v834 = vld [vmem:[%s3 + $0x1818] sm:$0xff]
    %v835 = vld [vmem:[%s3 + $0x1820] sm:$0xff]
    %v836 = vld [vmem:[%s3 + $0x1828] sm:$0xff]
    %v837 = vld [vmem:[%s3 + $0x1830] sm:$0xff]
    %v838 = vld [vmem:[%s3 + $0x1838] sm:$0xff]
    %v839 = vld [vmem:[%s3 + $0x1840] sm:$0xff]
    %v840 = vld [vmem:[%s3 + $0x1848] sm:$0xff]
    %v841 = vld [vmem:[%s3 + $0x1850] sm:$0xff]
    %v842 = vld [vmem:[%s3 + $0x1858] sm:$0xff]
    %v843 = vld [vmem:[%s3 + $0x1860] sm:$0xff]
    %v844 = vld [vmem:[%s3 + $0x1868] sm:$0xff]
    %v845 = vld [vmem:[%s3 + $0x1870] sm:$0xff]
    %v846 = vld [vmem:[%s3 + $0x1878] sm:$0xff]
    %v847 = vld [vmem:[%s3 + $0x1880] sm:$0xff]
    %v848 = vld [vmem:[%s3 + $0x1888] sm:$0xff]
    %v849 = vld [vmem:[%s3 + $0x1890] sm:$0xff]
    %v850 = vld [vmem:[%s3 + $0x1898] sm:$0xff]
    %v851 = vld [vmem:[%s3 + $0x18a0] sm:$0xff]
    %v852 = vld [vmem:[%s3 + $0x18a8] sm:$0xff]
    %v853 = vld [vmem:[%s3 + $0x18b0] sm:$0xff]
    %v854 = vld [vmem:[%s3 + $0x18b8] sm:$0xff]
    %v855 = vld [vmem:[%s3 + $0x18c0] sm:$0xff]
    %v856 = vld [vmem:[%s3 + $0x18c8] sm:$0xff]
    %v857 = vld [vmem:[%s3 + $0x18d0] sm:$0xff]
    %v858 = vld [vmem:[%s3 + $0x18d8] sm:$0xff]
    %v859 = vld [vmem:[%s3 + $0x18e0] sm:$0xff]
    %v860 = vld [vmem:[%s3 + $0x18e8] sm:$0xff]
    %v861 = vld [vmem:[%s3 + $0x18f0] sm:$0xff]
    %v862 = vld [vmem:[%s3 + $0x18f8] sm:$0xff]
    %v863 = vld [vmem:[%s3 + $0x1900] sm:$0xff]
    %v864 = vld [vmem:[%s3 + $0x1908] sm:$0xff]
    %v865 = vld [vmem:[%s3 + $0x1910] sm:$0xff]
    %v866 = vld [vmem:[%s3 + $0x1918] sm:$0xff]
    %v867 = vld [vmem:[%s3 + $0x1920] sm:$0xff]
    %v868 = vld [vmem:[%s3 + $0x1928] sm:$0xff]
    %v869 = vld [vmem:[%s3 + $0x1930] sm:$0xff]
    %v870 = vld [vmem:[%s3 + $0x1938] sm:$0xff]
    %v871 = vld [vmem:[%s3 + $0x1940] sm:$0xff]
    %v872 = vld [vmem:[%s3 + $0x1948] sm:$0xff]
    %v873 = vld [vmem:[%s3 + $0x1950] sm:$0xff]
    %v874 = vld [vmem:[%s3 + $0x1958] sm:$0xff]
    %v875 = vld [vmem:[%s3 + $0x1960] sm:$0xff]
    %v876 = vld [vmem:[%s3 + $0x1968] sm:$0xff]
    %v877 = vld [vmem:[%s3 + $0x1970] sm:$0xff]
    %v878 = vld [vmem:[%s3 + $0x1978] sm:$0xff]
    %v879 = vld [vmem:[%s3 + $0x1980] sm:$0xff]
    %v880 = vld [vmem:[%s3 + $0x1988] sm:$0xff]
    %v881 = vld [vmem:[%s3 + $0x1990] sm:$0xff]
    %v882 = vld [vmem:[%s3 + $0x1998] sm:$0xff]
    %v883 = vld [vmem:[%s3 + $0x19a0] sm:$0xff]
    %v884 = vld [vmem:[%s3 + $0x19a8] sm:$0xff]
    %v885 = vld [vmem:[%s3 + $0x19b0] sm:$0xff]
    %v886 = vld [vmem:[%s3 + $0x19b8] sm:$0xff]
    %v887 = vld [vmem:[%s3 + $0x19c0] sm:$0xff]
    %v888 = vld [vmem:[%s3 + $0x19c8] sm:$0xff]
    %v889 = vld [vmem:[%s3 + $0x19d0] sm:$0xff]
    %v890 = vld [vmem:[%s3 + $0x19d8] sm:$0xff]
    %v891 = vld [vmem:[%s3 + $0x19e0] sm:$0xff]
    %v892 = vld [vmem:[%s3 + $0x19e8] sm:$0xff]
    %v893 = vld [vmem:[%s3 + $0x19f0] sm:$0xff]
    %v894 = vld [vmem:[%s3 + $0x19f8] sm:$0xff]
    %v895 = vld [vmem:[%s3 + $0x1a00] sm:$0xff]
    %v896 = vld [vmem:[%s3 + $0x1a08] sm:$0xff]
    %v897 = vld [vmem:[%s3 + $0x1a10] sm:$0xff]
    %v898 = vld [vmem:[%s3 + $0x1a18] sm:$0xff]
    %v899 = vld [vmem:[%s3 + $0x1a20] sm:$0xff]
    %v900 = vld [vmem:[%s3 + $0x1a28] sm:$0xff]
    %v901 = vld [vmem:[%s3 + $0x1a30] sm:$0xff]
    %v902 = vld [vmem:[%s3 + $0x1a38] sm:$0xff]
    %v903 = vld [vmem:[%s3 + $0x1a40] sm:$0xff]
    %v904 = vld [vmem:[%s3 + $0x1a48] sm:$0xff]
    %v905 = vld [vmem:[%s3 + $0x1a50] sm:$0xff]
    %v906 = vld [vmem:[%s3 + $0x1a58] sm:$0xff]
    %v907 = vld [vmem:[%s3 + $0x1a60] sm:$0xff]
    %v908 = vld [vmem:[%s3 + $0x1a68] sm:$0xff]
    %v909 = vld [vmem:[%s3 + $0x1a70] sm:$0xff]
    %v910 = vld [vmem:[%s3 + $0x1a78] sm:$0xff]
    %v911 = vld [vmem:[%s3 + $0x1a80] sm:$0xff]
    %v912 = vld [vmem:[%s3 + $0x1a88] sm:$0xff]
    %v913 = vld [vmem:[%s3 + $0x1a90] sm:$0xff]
    %v914 = vld [vmem:[%s3 + $0x1a98] sm:$0xff]
    %v915 = vld [vmem:[%s3 + $0x1aa0] sm:$0xff]
    %v916 = vld [vmem:[%s3 + $0x1aa8] sm:$0xff]
    %v917 = vld [vmem:[%s3 + $0x1ab0] sm:$0xff]
    %v918 = vld [vmem:[%s3 + $0x1ab8] sm:$0xff]
    %v919 = vld [vmem:[%s3 + $0x1ac0] sm:$0xff]
    %v920 = vld [vmem:[%s3 + $0x1ac8] sm:$0xff]
    %v921 = vld [vmem:[%s3 + $0x1ad0] sm:$0xff]
    %v922 = vld [vmem:[%s3 + $0x1ad8] sm:$0xff]
    %v923 = vld [vmem:[%s3 + $0x1ae0] sm:$0xff]
    %v924 = vld [vmem:[%s3 + $0x1ae8] sm:$0xff]
    %v925 = vld [vmem:[%s3 + $0x1af0] sm:$0xff]
    %v926 = vld [vmem:[%s3 + $0x1af8] sm:$0xff]
    %v927 = vld [vmem:[%s3 + $0x1b00] sm:$0xff]
    %v928 = vld [vmem:[%s3 + $0x1b08] sm:$0xff]
    %v929 = vld [vmem:[%s3 + $0x1b10] sm:$0xff]
    %v930 = vld [vmem:[%s3 + $0x1b18] sm:$0xff]
    %v931 = vld [vmem:[%s3 + $0x1b20] sm:$0xff]
    %v932 = vld [vmem:[%s3 + $0x1b28] sm:$0xff]
    %v933 = vld [vmem:[%s3 + $0x1b30] sm:$0xff]
    %v934 = vld [vmem:[%s3 + $0x1b38] sm:$0xff]
    %v935 = vld [vmem:[%s3 + $0x1b40] sm:$0xff]
    %v936 = vld [vmem:[%s3 + $0x1b48] sm:$0xff]
    %v937 = vld [vmem:[%s3 + $0x1b50] sm:$0xff]
    %v938 = vld [vmem:[%s3 + $0x1b58] sm:$0xff]
    %v939 = vld [vmem:[%s3 + $0x1b60] sm:$0xff]
    %v940 = vld [vmem:[%s3 + $0x1b68] sm:$0xff]
    %v941 = vld [vmem:[%s3 + $0x1b70] sm:$0xff]
    %v942 = vld [vmem:[%s3 + $0x1b78] sm:$0xff]
    %v943 = vld [vmem:[%s3 + $0x1b80] sm:$0xff]
    %v944 = vld [vmem:[%s3 + $0x1b88] sm:$0xff]
    %v945 = vld [vmem:[%s3 + $0x1b90] sm:$0xff]
    %v946 = vld [vmem:[%s3 + $0x1b98] sm:$0xff]
    %v947 = vld [vmem:[%s3 + $0x1ba0] sm:$0xff]
    %v948 = vld [vmem:[%s3 + $0x1ba8] sm:$0xff]
    %v949 = vld [vmem:[%s3 + $0x1bb0] sm:$0xff]
    %v950 = vld [vmem:[%s3 + $0x1bb8] sm:$0xff]
    %v951 = vld [vmem:[%s3 + $0x1bc0] sm:$0xff]
    %v952 = vld [vmem:[%s3 + $0x1bc8] sm:$0xff]
    %v953 = vld [vmem:[%s3 + $0x1bd0] sm:$0xff]
    %v954 = vld [vmem:[%s3 + $0x1bd8] sm:$0xff]
    %v955 = vld [vmem:[%s3 + $0x1be0] sm:$0xff]
    %v956 = vld [vmem:[%s3 + $0x1be8] sm:$0xff]
    %v957 = vld [vmem:[%s3 + $0x1bf0] sm:$0xff]
    %v958 = vld [vmem:[%s3 + $0x1bf8] sm:$0xff]
    %v959 = vld [vmem:[%s3 + $0x1c00] sm:$0xff]
    %v960 = vld [vmem:[%s3 + $0x1c08] sm:$0xff]
    %v961 = vld [vmem:[%s3 + $0x1c10] sm:$0xff]
    %v962 = vld [vmem:[%s3 + $0x1c18] sm:$0xff]
    %v963 = vld [vmem:[%s3 + $0x1c20] sm:$0xff]
    %v964 = vld [vmem:[%s3 + $0x1c28] sm:$0xff]
    %v965 = vld [vmem:[%s3 + $0x1c30] sm:$0xff]
    %v966 = vld [vmem:[%s3 + $0x1c38] sm:$0xff]
    %v967 = vld [vmem:[%s3 + $0x1c40] sm:$0xff]
    %v968 = vld [vmem:[%s3 + $0x1c48] sm:$0xff]
    %v969 = vld [vmem:[%s3 + $0x1c50] sm:$0xff]
    %v970 = vld [vmem:[%s3 + $0x1c58] sm:$0xff]
    %v971 = vld [vmem:[%s3 + $0x1c60] sm:$0xff]
    %v972 = vld [vmem:[%s3 + $0x1c68] sm:$0xff]
    %v973 = vld [vmem:[%s3 + $0x1c70] sm:$0xff]
    %v974 = vld [vmem:[%s3 + $0x1c78] sm:$0xff]
    %v975 = vld [vmem:[%s3 + $0x1c80] sm:$0xff]
    %v976 = vld [vmem:[%s3 + $0x1c88] sm:$0xff]
    %v977 = vld [vmem:[%s3 + $0x1c90] sm:$0xff]
    %v978 = vld [vmem:[%s3 + $0x1c98] sm:$0xff]
    %v979 = vld [vmem:[%s3 + $0x1ca0] sm:$0xff]
    %v980 = vld [vmem:[%s3 + $0x1ca8] sm:$0xff]
    %v981 = vld [vmem:[%s3 + $0x1cb0] sm:$0xff]
    %v982 = vld [vmem:[%s3 + $0x1cb8] sm:$0xff]
    %v983 = vld [vmem:[%s3 + $0x1cc0] sm:$0xff]
    %v984 = vld [vmem:[%s3 + $0x1cc8] sm:$0xff]
    %v985 = vld [vmem:[%s3 + $0x1cd0] sm:$0xff]
    %v986 = vld [vmem:[%s3 + $0x1cd8] sm:$0xff]
    %v987 = vld [vmem:[%s3 + $0x1ce0] sm:$0xff]
    %v988 = vld [vmem:[%s3 + $0x1ce8] sm:$0xff]
    %v989 = vld [vmem:[%s3 + $0x1cf0] sm:$0xff]
    %v990 = vld [vmem:[%s3 + $0x1cf8] sm:$0xff]
    %v991 = vld [vmem:[%s3 + $0x1d00] sm:$0xff]
    %v992 = vld [vmem:[%s3 + $0x1d08] sm:$0xff]
    %v993 = vld [vmem:[%s3 + $0x1d10] sm:$0xff]
    %v994 = vld [vmem:[%s3 + $0x1d18] sm:$0xff]
    %v995 = vld [vmem:[%s3 + $0x1d20] sm:$0xff]
    %v996 = vld [vmem:[%s3 + $0x1d28] sm:$0xff]
    %v997 = vld [vmem:[%s3 + $0x1d30] sm:$0xff]
    %v998 = vld [vmem:[%s3 + $0x1d38] sm:$0xff]
    %v999 = vld [vmem:[%s3 + $0x1d40] sm:$0xff]
    %v1000 = vld [vmem:[%s3 + $0x1d48] sm:$0xff]
    %v1001 = vld [vmem:[%s3 + $0x1d50] sm:$0xff]
    %v1002 = vld [vmem:[%s3 + $0x1d58] sm:$0xff]
    %v1003 = vld [vmem:[%s3 + $0x1d60] sm:$0xff]
    %v1004 = vld [vmem:[%s3 + $0x1d68] sm:$0xff]
    %v1005 = vld [vmem:[%s3 + $0x1d70] sm:$0xff]
    %v1006 = vld [vmem:[%s3 + $0x1d78] sm:$0xff]
    %v1007 = vld [vmem:[%s3 + $0x1d80] sm:$0xff]
    %v1008 = vld [vmem:[%s3 + $0x1d88] sm:$0xff]
    %v1009 = vld [vmem:[%s3 + $0x1d90] sm:$0xff]
    %v1010 = vld [vmem:[%s3 + $0x1d98] sm:$0xff]
    %v1011 = vld [vmem:[%s3 + $0x1da0] sm:$0xff]
    %v1012 = vld [vmem:[%s3 + $0x1da8] sm:$0xff]
    %v1013 = vld [vmem:[%s3 + $0x1db0] sm:$0xff]
    %v1014 = vld [vmem:[%s3 + $0x1db8] sm:$0xff]
    %v1015 = vld [vmem:[%s3 + $0x1dc0] sm:$0xff]
    %v1016 = vld [vmem:[%s3 + $0x1dc8] sm:$0xff]
    %v1017 = vld [vmem:[%s3 + $0x1dd0] sm:$0xff]
    %v1018 = vld [vmem:[%s3 + $0x1dd8] sm:$0xff]
    %v1019 = vld [vmem:[%s3 + $0x1de0] sm:$0xff]
    %v1020 = vld [vmem:[%s3 + $0x1de8] sm:$0xff]
    %v1021 = vld [vmem:[%s3 + $0x1df0] sm:$0xff]
    %v1022 = vld [vmem:[%s3 + $0x1df8] sm:$0xff]
    %v1023 = vld [vmem:[%s3 + $0x1e00] sm:$0xff]
    %v1024 = vld [vmem:[%s3 + $0x1e08] sm:$0xff]
    %v1025 = vld [vmem:[%s3 + $0x1e10] sm:$0xff]
    %v1026 = vld [vmem:[%s3 + $0x1e18] sm:$0xff]
    %v1027 = vld [vmem:[%s3 + $0x1e20] sm:$0xff]
    %v1028 = vld [vmem:[%s3 + $0x1e28] sm:$0xff]
    %v1029 = vld [vmem:[%s3 + $0x1e30] sm:$0xff]
    %v1030 = vld [vmem:[%s3 + $0x1e38] sm:$0xff]
    %v1031 = vld [vmem:[%s3 + $0x1e40] sm:$0xff]
    %v1032 = vld [vmem:[%s3 + $0x1e48] sm:$0xff]
    %v1033 = vld [vmem:[%s3 + $0x1e50] sm:$0xff]
    %v1034 = vld [vmem:[%s3 + $0x1e58] sm:$0xff]
    %v1035 = vld [vmem:[%s4] sm:$0xf]
    %v1037 = vlaneseq
    %v1038 = vshrl.u32 %v1037, 7
    %v1039 = vsub.s32 0, %v1038
    %v1040 = vrot.slane %v1035, %v1039
    %v1041 = vlaneseq
    %v1042 = vshrl.u32 %v1041, 7
    %v1043 = vsub.s32 1, %v1042
    %v1044 = vrot.slane %v1035, %v1043
    %v1045 = vlaneseq
    %v1046 = vshrl.u32 %v1045, 7
    %v1047 = vsub.s32 2, %v1046
    %v1048 = vrot.slane %v1035, %v1047
    %v1049 = vlaneseq
    %v1050 = vshrl.u32 %v1049, 7
    %v1051 = vsub.s32 3, %v1050
    %v1052 = vrot.slane %v1035, %v1051
    %v1073 = vunpack.c.l.b16 %v47
    %v1074 = vunpack.c.h.b16 %v47
    %v1075 = vunpack.c.l.b16 %v48
    %v1076 = vunpack.c.h.b16 %v48
    %v1077 = vunpack.c.l.b16 %v49
    %v1078 = vunpack.c.h.b16 %v49
    %v1079 = vunpack.c.l.b16 %v50
    %v1080 = vunpack.c.h.b16 %v50
    %v1081 = vunpack.c.l.b16 %v51
    %v1082 = vunpack.c.h.b16 %v51
    %v1083 = vunpack.c.l.b16 %v52
    %v1084 = vunpack.c.h.b16 %v52
    %v1085 = vunpack.c.l.b16 %v53
    %v1086 = vunpack.c.h.b16 %v53
    %v1087 = vunpack.c.l.b16 %v54
    %v1088 = vunpack.c.h.b16 %v54
    %v1089 = vunpack.c.l.b16 %v55
    %v1090 = vunpack.c.h.b16 %v55
    %v1091 = vunpack.c.l.b16 %v56
    %v1092 = vunpack.c.h.b16 %v56
    %v1093 = vunpack.c.l.b16 %v57
    %v1094 = vunpack.c.h.b16 %v57
    %v1095 = vunpack.c.l.b16 %v58
    %v1096 = vunpack.c.h.b16 %v58
    %v1097 = vunpack.c.l.b16 %v59
    %v1098 = vunpack.c.h.b16 %v59
    %v1099 = vunpack.c.l.b16 %v60
    %v1100 = vunpack.c.h.b16 %v60
    %v1101 = vunpack.c.l.b16 %v61
    %v1102 = vunpack.c.h.b16 %v61
    %v1103 = vunpack.c.l.b16 %v62
    %v1104 = vpack.c.b16 %v1073, %v1073
    %v1105 = vpack.c.b16 %v1074, %v1074
    %v1106 = vpack.c.b16 %v1075, %v1075
    %v1107 = vpack.c.b16 %v1076, %v1076
    %v1108 = vpack.c.b16 %v1077, %v1077
    %v1109 = vpack.c.b16 %v1078, %v1078
    %v1110 = vpack.c.b16 %v1079, %v1079
    %v1111 = vpack.c.b16 %v1080, %v1080
    %v1112 = vpack.c.b16 %v1081, %v1081
    %v1113 = vpack.c.b16 %v1082, %v1082
    %v1114 = vpack.c.b16 %v1083, %v1083
    %v1115 = vpack.c.b16 %v1084, %v1084
    %v1116 = vpack.c.b16 %v1085, %v1085
    %v1117 = vpack.c.b16 %v1086, %v1086
    %v1118 = vpack.c.b16 %v1087, %v1087
    %v1119 = vpack.c.b16 %v1088, %v1088
    %v1120 = vpack.c.b16 %v1089, %v1089
    %v1121 = vpack.c.b16 %v1090, %v1090
    %v1122 = vpack.c.b16 %v1091, %v1091
    %v1123 = vpack.c.b16 %v1092, %v1092
    %v1124 = vpack.c.b16 %v1093, %v1093
    %v1125 = vpack.c.b16 %v1094, %v1094
    %v1126 = vpack.c.b16 %v1095, %v1095
    %v1127 = vpack.c.b16 %v1096, %v1096
    %v1128 = vpack.c.b16 %v1097, %v1097
    %v1129 = vpack.c.b16 %v1098, %v1098
    %v1130 = vpack.c.b16 %v1099, %v1099
    %v1131 = vpack.c.b16 %v1100, %v1100
    %v1132 = vpack.c.b16 %v1101, %v1101
    %v1133 = vpack.c.b16 %v1102, %v1102
    %v1134 = vpack.c.b16 %v1103, %v1103
    %v2137 = vunpack.c.l.b16 %v63
    %v2138 = vunpack.c.h.b16 %v63
    %v2139 = vunpack.c.l.b16 %v64
    %v2140 = vunpack.c.h.b16 %v64
    %v2141 = vunpack.c.l.b16 %v65
    %v2142 = vunpack.c.h.b16 %v65
    %v2143 = vunpack.c.l.b16 %v66
    %v2144 = vunpack.c.h.b16 %v66
    %v2145 = vunpack.c.l.b16 %v67
    %v2146 = vunpack.c.h.b16 %v67
    %v2147 = vunpack.c.l.b16 %v68
    %v2148 = vunpack.c.h.b16 %v68
    %v2149 = vunpack.c.l.b16 %v69
    %v2150 = vunpack.c.h.b16 %v69
    %v2151 = vunpack.c.l.b16 %v70
    %v2152 = vunpack.c.h.b16 %v70
    %v2153 = vunpack.c.l.b16 %v71
    %v2154 = vunpack.c.h.b16 %v71
    %v2155 = vunpack.c.l.b16 %v72
    %v2156 = vunpack.c.h.b16 %v72
    %v2157 = vunpack.c.l.b16 %v73
    %v2158 = vunpack.c.h.b16 %v73
    %v2159 = vunpack.c.l.b16 %v74
    %v2160 = vunpack.c.h.b16 %v74
    %v2161 = vunpack.c.l.b16 %v75
    %v2162 = vunpack.c.h.b16 %v75
    %v2163 = vunpack.c.l.b16 %v76
    %v2164 = vunpack.c.h.b16 %v76
    %v2165 = vunpack.c.l.b16 %v77
    %v2166 = vunpack.c.h.b16 %v77
    %v2167 = vunpack.c.l.b16 %v78
    %v2168 = vunpack.c.h.b16 %v78
    %v2169 = vunpack.c.l.b16 %v79
    %v2170 = vunpack.c.h.b16 %v79
    %v2171 = vunpack.c.l.b16 %v80
    %v2172 = vunpack.c.h.b16 %v80
    %v2173 = vunpack.c.l.b16 %v81
    %v2174 = vunpack.c.h.b16 %v81
    %v2175 = vunpack.c.l.b16 %v82
    %v2176 = vunpack.c.h.b16 %v82
    %v2177 = vunpack.c.l.b16 %v83
    %v2178 = vunpack.c.h.b16 %v83
    %v2179 = vunpack.c.l.b16 %v84
    %v2180 = vunpack.c.h.b16 %v84
    %v2181 = vunpack.c.l.b16 %v85
    %v2182 = vunpack.c.h.b16 %v85
    %v2183 = vunpack.c.l.b16 %v86
    %v2184 = vunpack.c.h.b16 %v86
    %v2185 = vunpack.c.l.b16 %v87
    %v2186 = vunpack.c.h.b16 %v87
    %v2187 = vunpack.c.l.b16 %v88
    %v2188 = vunpack.c.h.b16 %v88
    %v2189 = vunpack.c.l.b16 %v89
    %v2190 = vunpack.c.h.b16 %v89
    %v2191 = vunpack.c.l.b16 %v90
    %v2192 = vunpack.c.h.b16 %v90
    %v2193 = vunpack.c.l.b16 %v91
    %v2194 = vunpack.c.h.b16 %v91
    %v2195 = vunpack.c.l.b16 %v92
    %v2196 = vunpack.c.h.b16 %v92
    %v2197 = vunpack.c.l.b16 %v93
    %v2198 = vunpack.c.h.b16 %v93
    %v2199 = vunpack.c.l.b16 %v94
    %v2200 = vunpack.c.h.b16 %v94
    %v2201 = vunpack.c.l.b16 %v95
    %v2202 = vunpack.c.h.b16 %v95
    %v2203 = vunpack.c.l.b16 %v96
    %v2204 = vunpack.c.h.b16 %v96
    %v2205 = vunpack.c.l.b16 %v97
    %v2206 = vunpack.c.h.b16 %v97
    %v2207 = vunpack.c.l.b16 %v98
    %v2208 = vunpack.c.h.b16 %v98
    %v2209 = vunpack.c.l.b16 %v99
    %v2210 = vunpack.c.h.b16 %v99
    %v2211 = vunpack.c.l.b16 %v100
    %v2212 = vunpack.c.h.b16 %v100
    %v2213 = vunpack.c.l.b16 %v101
    %v2214 = vunpack.c.h.b16 %v101
    %v2215 = vunpack.c.l.b16 %v102
    %v2216 = vunpack.c.h.b16 %v102
    %v2217 = vunpack.c.l.b16 %v103
    %v2218 = vunpack.c.h.b16 %v103
    %v2219 = vunpack.c.l.b16 %v104
    %v2220 = vunpack.c.h.b16 %v104
    %v2221 = vunpack.c.l.b16 %v105
    %v2222 = vunpack.c.h.b16 %v105
    %v2223 = vunpack.c.l.b16 %v106
    %v2224 = vunpack.c.h.b16 %v106
    %v2225 = vunpack.c.l.b16 %v107
    %v2226 = vunpack.c.h.b16 %v107
    %v2227 = vunpack.c.l.b16 %v108
    %v2228 = vunpack.c.h.b16 %v108
    %v2229 = vunpack.c.l.b16 %v109
    %v2230 = vunpack.c.h.b16 %v109
    %v2231 = vunpack.c.l.b16 %v110
    %v2232 = vunpack.c.h.b16 %v110
    %v2233 = vunpack.c.l.b16 %v111
    %v2234 = vunpack.c.h.b16 %v111
    %v2235 = vunpack.c.l.b16 %v112
    %v2236 = vunpack.c.h.b16 %v112
    %v2237 = vunpack.c.l.b16 %v113
    %v2238 = vunpack.c.h.b16 %v113
    %v2239 = vunpack.c.l.b16 %v114
    %v2240 = vunpack.c.h.b16 %v114
    %v2241 = vunpack.c.l.b16 %v115
    %v2242 = vunpack.c.h.b16 %v115
    %v2243 = vunpack.c.l.b16 %v116
    %v2244 = vunpack.c.h.b16 %v116
    %v2245 = vunpack.c.l.b16 %v117
    %v2246 = vunpack.c.h.b16 %v117
    %v2247 = vunpack.c.l.b16 %v118
    %v2248 = vunpack.c.h.b16 %v118
    %v2249 = vunpack.c.l.b16 %v119
    %v2250 = vunpack.c.h.b16 %v119
    %v2251 = vunpack.c.l.b16 %v120
    %v2252 = vunpack.c.h.b16 %v120
    %v2253 = vunpack.c.l.b16 %v121
    %v2254 = vunpack.c.h.b16 %v121
    %v2255 = vunpack.c.l.b16 %v122
    %v2256 = vunpack.c.h.b16 %v122
    %v2257 = vunpack.c.l.b16 %v123
    %v2258 = vunpack.c.h.b16 %v123
    %v2259 = vunpack.c.l.b16 %v124
    %v2260 = vunpack.c.h.b16 %v124
    %v2261 = vunpack.c.l.b16 %v125
    %v2262 = vunpack.c.h.b16 %v125
    %v2263 = vunpack.c.l.b16 %v126
    %v2264 = vunpack.c.h.b16 %v126
    %v2265 = vunpack.c.l.b16 %v127
    %v2266 = vunpack.c.h.b16 %v127
    %v2267 = vunpack.c.l.b16 %v128
    %v2268 = vunpack.c.h.b16 %v128
    %v2269 = vunpack.c.l.b16 %v129
    %v2270 = vunpack.c.h.b16 %v129
    %v2271 = vunpack.c.l.b16 %v130
    %v2272 = vunpack.c.h.b16 %v130
    %v2273 = vunpack.c.l.b16 %v131
    %v2274 = vunpack.c.h.b16 %v131
    %v2275 = vunpack.c.l.b16 %v132
    %v2276 = vunpack.c.h.b16 %v132
    %v2277 = vunpack.c.l.b16 %v133
    %v2278 = vunpack.c.h.b16 %v133
    %v2279 = vunpack.c.l.b16 %v134
    %v2280 = vunpack.c.h.b16 %v134
    %v2281 = vunpack.c.l.b16 %v135
    %v2282 = vunpack.c.h.b16 %v135
    %v2283 = vunpack.c.l.b16 %v136
    %v2284 = vunpack.c.h.b16 %v136
    %v2285 = vunpack.c.l.b16 %v137
    %v2286 = vunpack.c.h.b16 %v137
    %v2287 = vunpack.c.l.b16 %v138
    %v2288 = vunpack.c.h.b16 %v138
    %v2289 = vunpack.c.l.b16 %v139
    %v2290 = vunpack.c.h.b16 %v139
    %v2291 = vunpack.c.l.b16 %v140
    %v2292 = vunpack.c.h.b16 %v140
    %v2293 = vunpack.c.l.b16 %v141
    %v2294 = vunpack.c.h.b16 %v141
    %v2295 = vunpack.c.l.b16 %v142
    %v2296 = vunpack.c.h.b16 %v142
    %v2297 = vunpack.c.l.b16 %v143
    %v2298 = vunpack.c.h.b16 %v143
    %v2299 = vunpack.c.l.b16 %v144
    %v2300 = vunpack.c.h.b16 %v144
    %v2301 = vunpack.c.l.b16 %v145
    %v2302 = vunpack.c.h.b16 %v145
    %v2303 = vunpack.c.l.b16 %v146
    %v2304 = vunpack.c.h.b16 %v146
    %v2305 = vunpack.c.l.b16 %v147
    %v2306 = vunpack.c.h.b16 %v147
    %v2307 = vunpack.c.l.b16 %v148
    %v2308 = vunpack.c.h.b16 %v148
    %v2309 = vunpack.c.l.b16 %v149
    %v2310 = vunpack.c.h.b16 %v149
    %v2311 = vunpack.c.l.b16 %v150
    %v2312 = vunpack.c.h.b16 %v150
    %v2313 = vunpack.c.l.b16 %v151
    %v2314 = vunpack.c.h.b16 %v151
    %v2315 = vunpack.c.l.b16 %v152
    %v2316 = vunpack.c.h.b16 %v152
    %v2317 = vunpack.c.l.b16 %v153
    %v2318 = vunpack.c.h.b16 %v153
    %v2319 = vunpack.c.l.b16 %v154
    %v2320 = vunpack.c.h.b16 %v154
    %v2321 = vunpack.c.l.b16 %v155
    %v2322 = vunpack.c.h.b16 %v155
    %v2323 = vunpack.c.l.b16 %v156
    %v2324 = vunpack.c.h.b16 %v156
    %v2325 = vunpack.c.l.b16 %v157
    %v2326 = vunpack.c.h.b16 %v157
    %v2327 = vunpack.c.l.b16 %v158
    %v2328 = vunpack.c.h.b16 %v158
    %v2329 = vunpack.c.l.b16 %v159
    %v2330 = vunpack.c.h.b16 %v159
    %v2331 = vunpack.c.l.b16 %v160
    %v2332 = vunpack.c.h.b16 %v160
    %v2333 = vunpack.c.l.b16 %v161
    %v2334 = vunpack.c.h.b16 %v161
    %v2335 = vunpack.c.l.b16 %v162
    %v2336 = vunpack.c.h.b16 %v162
    %v2337 = vunpack.c.l.b16 %v163
    %v2338 = vunpack.c.h.b16 %v163
    %v2339 = vunpack.c.l.b16 %v164
    %v2340 = vunpack.c.h.b16 %v164
    %v2341 = vunpack.c.l.b16 %v165
    %v2342 = vunpack.c.h.b16 %v165
    %v2343 = vunpack.c.l.b16 %v166
    %v2344 = vunpack.c.h.b16 %v166
    %v2345 = vunpack.c.l.b16 %v167
    %v2346 = vunpack.c.h.b16 %v167
    %v2347 = vunpack.c.l.b16 %v168
    %v2348 = vunpack.c.h.b16 %v168
    %v2349 = vunpack.c.l.b16 %v169
    %v2350 = vunpack.c.h.b16 %v169
    %v2351 = vunpack.c.l.b16 %v170
    %v2352 = vunpack.c.h.b16 %v170
    %v2353 = vunpack.c.l.b16 %v171
    %v2354 = vunpack.c.h.b16 %v171
    %v2355 = vunpack.c.l.b16 %v172
    %v2356 = vunpack.c.h.b16 %v172
    %v2357 = vunpack.c.l.b16 %v173
    %v2358 = vunpack.c.h.b16 %v173
    %v2359 = vunpack.c.l.b16 %v174
    %v2360 = vunpack.c.h.b16 %v174
    %v2361 = vunpack.c.l.b16 %v175
    %v2362 = vunpack.c.h.b16 %v175
    %v2363 = vunpack.c.l.b16 %v176
    %v2364 = vunpack.c.h.b16 %v176
    %v2365 = vunpack.c.l.b16 %v177
    %v2366 = vunpack.c.h.b16 %v177
    %v2367 = vunpack.c.l.b16 %v178
    %v2368 = vunpack.c.h.b16 %v178
    %v2369 = vunpack.c.l.b16 %v179
    %v2370 = vunpack.c.h.b16 %v179
    %v2371 = vunpack.c.l.b16 %v180
    %v2372 = vunpack.c.h.b16 %v180
    %v2373 = vunpack.c.l.b16 %v181
    %v2374 = vunpack.c.h.b16 %v181
    %v2375 = vunpack.c.l.b16 %v182
    %v2376 = vunpack.c.h.b16 %v182
    %v2377 = vunpack.c.l.b16 %v183
    %v2378 = vunpack.c.h.b16 %v183
    %v2379 = vunpack.c.l.b16 %v184
    %v2380 = vunpack.c.h.b16 %v184
    %v2381 = vunpack.c.l.b16 %v185
    %v2382 = vunpack.c.h.b16 %v185
    %v2383 = vunpack.c.l.b16 %v186
    %v2384 = vunpack.c.h.b16 %v186
    %v2385 = vunpack.c.l.b16 %v187
    %v2386 = vunpack.c.h.b16 %v187
    %v2387 = vunpack.c.l.b16 %v188
    %v2388 = vunpack.c.h.b16 %v188
    %v2389 = vunpack.c.l.b16 %v189
    %v2390 = vunpack.c.h.b16 %v189
    %v2391 = vunpack.c.l.b16 %v190
    %v2392 = vunpack.c.h.b16 %v190
    %v2393 = vunpack.c.l.b16 %v191
    %v2394 = vunpack.c.h.b16 %v191
    %v2395 = vunpack.c.l.b16 %v192
    %v2396 = vunpack.c.h.b16 %v192
    %v2397 = vunpack.c.l.b16 %v193
    %v2398 = vunpack.c.h.b16 %v193
    %v2399 = vunpack.c.l.b16 %v194
    %v2400 = vunpack.c.h.b16 %v194
    %v2401 = vunpack.c.l.b16 %v195
    %v2402 = vunpack.c.h.b16 %v195
    %v2403 = vunpack.c.l.b16 %v196
    %v2404 = vunpack.c.h.b16 %v196
    %v2405 = vunpack.c.l.b16 %v197
    %v2406 = vunpack.c.h.b16 %v197
    %v2407 = vunpack.c.l.b16 %v198
    %v2408 = vunpack.c.h.b16 %v198
    %v2409 = vunpack.c.l.b16 %v199
    %v2410 = vunpack.c.h.b16 %v199
    %v2411 = vunpack.c.l.b16 %v200
    %v2412 = vunpack.c.h.b16 %v200
    %v2413 = vunpack.c.l.b16 %v201
    %v2414 = vunpack.c.h.b16 %v201
    %v2415 = vunpack.c.l.b16 %v202
    %v2416 = vunpack.c.h.b16 %v202
    %v2417 = vunpack.c.l.b16 %v203
    %v2418 = vunpack.c.h.b16 %v203
    %v2419 = vunpack.c.l.b16 %v204
    %v2420 = vunpack.c.h.b16 %v204
    %v2421 = vunpack.c.l.b16 %v205
    %v2422 = vunpack.c.h.b16 %v205
    %v2423 = vunpack.c.l.b16 %v206
    %v2424 = vunpack.c.h.b16 %v206
    %v2425 = vunpack.c.l.b16 %v207
    %v2426 = vunpack.c.h.b16 %v207
    %v2427 = vunpack.c.l.b16 %v208
    %v2428 = vunpack.c.h.b16 %v208
    %v2429 = vunpack.c.l.b16 %v209
    %v2430 = vunpack.c.h.b16 %v209
    %v2431 = vunpack.c.l.b16 %v210
    %v2432 = vunpack.c.h.b16 %v210
    %v2433 = vunpack.c.l.b16 %v211
    %v2434 = vunpack.c.h.b16 %v211
    %v2435 = vunpack.c.l.b16 %v212
    %v2436 = vunpack.c.h.b16 %v212
    %v2437 = vunpack.c.l.b16 %v213
    %v2438 = vunpack.c.h.b16 %v213
    %v2439 = vunpack.c.l.b16 %v214
    %v2440 = vunpack.c.h.b16 %v214
    %v2441 = vunpack.c.l.b16 %v215
    %v2442 = vunpack.c.h.b16 %v215
    %v2443 = vunpack.c.l.b16 %v216
    %v2444 = vunpack.c.h.b16 %v216
    %v2445 = vunpack.c.l.b16 %v217
    %v2446 = vunpack.c.h.b16 %v217
    %v2447 = vunpack.c.l.b16 %v218
    %v2448 = vunpack.c.h.b16 %v218
    %v2449 = vunpack.c.l.b16 %v219
    %v2450 = vunpack.c.h.b16 %v219
    %v2451 = vunpack.c.l.b16 %v220
    %v2452 = vunpack.c.h.b16 %v220
    %v2453 = vunpack.c.l.b16 %v221
    %v2454 = vunpack.c.h.b16 %v221
    %v2455 = vunpack.c.l.b16 %v222
    %v2456 = vunpack.c.h.b16 %v222
    %v2457 = vunpack.c.l.b16 %v223
    %v2458 = vunpack.c.h.b16 %v223
    %v2459 = vunpack.c.l.b16 %v224
    %v2460 = vunpack.c.h.b16 %v224
    %v2461 = vunpack.c.l.b16 %v225
    %v2462 = vunpack.c.h.b16 %v225
    %v2463 = vunpack.c.l.b16 %v226
    %v2464 = vunpack.c.h.b16 %v226
    %v2465 = vunpack.c.l.b16 %v227
    %v2466 = vunpack.c.h.b16 %v227
    %v2467 = vunpack.c.l.b16 %v228
    %v2468 = vunpack.c.h.b16 %v228
    %v2469 = vunpack.c.l.b16 %v229
    %v2470 = vunpack.c.h.b16 %v229
    %v2471 = vunpack.c.l.b16 %v230
    %v2472 = vunpack.c.h.b16 %v230
    %v2473 = vunpack.c.l.b16 %v231
    %v2474 = vunpack.c.h.b16 %v231
    %v2475 = vunpack.c.l.b16 %v232
    %v2476 = vunpack.c.h.b16 %v232
    %v2477 = vunpack.c.l.b16 %v233
    %v2478 = vunpack.c.h.b16 %v233
    %v2479 = vunpack.c.l.b16 %v234
    %v2480 = vunpack.c.h.b16 %v234
    %v2481 = vunpack.c.l.b16 %v235
    %v2482 = vunpack.c.h.b16 %v235
    %v2483 = vunpack.c.l.b16 %v236
    %v2484 = vunpack.c.h.b16 %v236
    %v2485 = vunpack.c.l.b16 %v237
    %v2486 = vunpack.c.h.b16 %v237
    %v2487 = vunpack.c.l.b16 %v238
    %v2488 = vunpack.c.h.b16 %v238
    %v2489 = vunpack.c.l.b16 %v239
    %v2490 = vunpack.c.h.b16 %v239
    %v2491 = vunpack.c.l.b16 %v240
    %v2492 = vunpack.c.h.b16 %v240
    %v2493 = vunpack.c.l.b16 %v241
    %v2494 = vunpack.c.h.b16 %v241
    %v2495 = vunpack.c.l.b16 %v242
    %v2496 = vunpack.c.h.b16 %v242
    %v2497 = vunpack.c.l.b16 %v243
    %v2498 = vunpack.c.h.b16 %v243
    %v2499 = vunpack.c.l.b16 %v244
    %v2500 = vunpack.c.h.b16 %v244
    %v2501 = vunpack.c.l.b16 %v245
    %v2502 = vunpack.c.h.b16 %v245
    %v2503 = vunpack.c.l.b16 %v246
    %v2504 = vunpack.c.h.b16 %v246
    %v2505 = vunpack.c.l.b16 %v247
    %v2506 = vunpack.c.h.b16 %v247
    %v2507 = vunpack.c.l.b16 %v248
    %v2508 = vunpack.c.h.b16 %v248
    %v2509 = vunpack.c.l.b16 %v249
    %v2510 = vunpack.c.h.b16 %v249
    %v2511 = vunpack.c.l.b16 %v250
    %v2512 = vunpack.c.h.b16 %v250
    %v2513 = vunpack.c.l.b16 %v251
    %v2514 = vunpack.c.h.b16 %v251
    %v2515 = vunpack.c.l.b16 %v252
    %v2516 = vunpack.c.h.b16 %v252
    %v2517 = vunpack.c.l.b16 %v253
    %v2518 = vunpack.c.h.b16 %v253
    %v2519 = vunpack.c.l.b16 %v254
    %v2520 = vunpack.c.h.b16 %v254
    %v2521 = vunpack.c.l.b16 %v255
    %v2522 = vunpack.c.h.b16 %v255
    %v2523 = vunpack.c.l.b16 %v256
    %v2524 = vunpack.c.h.b16 %v256
    %v2525 = vunpack.c.l.b16 %v257
    %v2526 = vunpack.c.h.b16 %v257
    %v2527 = vunpack.c.l.b16 %v258
    %v2528 = vunpack.c.h.b16 %v258
    %v2529 = vunpack.c.l.b16 %v259
    %v2530 = vunpack.c.h.b16 %v259
    %v2531 = vunpack.c.l.b16 %v260
    %v2532 = vunpack.c.h.b16 %v260
    %v2533 = vunpack.c.l.b16 %v261
    %v2534 = vunpack.c.h.b16 %v261
    %v2535 = vunpack.c.l.b16 %v262
    %v2536 = vunpack.c.h.b16 %v262
    %v2537 = vunpack.c.l.b16 %v263
    %v2538 = vunpack.c.h.b16 %v263
    %v2539 = vunpack.c.l.b16 %v264
    %v2540 = vunpack.c.h.b16 %v264
    %v2541 = vunpack.c.l.b16 %v265
    %v2542 = vunpack.c.h.b16 %v265
    %v2543 = vunpack.c.l.b16 %v266
    %v2544 = vunpack.c.h.b16 %v266
    %v2545 = vunpack.c.l.b16 %v267
    %v2546 = vunpack.c.h.b16 %v267
    %v2547 = vunpack.c.l.b16 %v268
    %v2548 = vunpack.c.h.b16 %v268
    %v2549 = vunpack.c.l.b16 %v269
    %v2550 = vunpack.c.h.b16 %v269
    %v2551 = vunpack.c.l.b16 %v270
    %v2552 = vunpack.c.h.b16 %v270
    %v2553 = vunpack.c.l.b16 %v271
    %v2554 = vunpack.c.h.b16 %v271
    %v2555 = vunpack.c.l.b16 %v272
    %v2556 = vunpack.c.h.b16 %v272
    %v2557 = vunpack.c.l.b16 %v273
    %v2558 = vunpack.c.h.b16 %v273
    %v2559 = vunpack.c.l.b16 %v274
    %v2560 = vunpack.c.h.b16 %v274
    %v2561 = vunpack.c.l.b16 %v275
    %v2562 = vunpack.c.h.b16 %v275
    %v2563 = vunpack.c.l.b16 %v276
    %v2564 = vunpack.c.h.b16 %v276
    %v2565 = vunpack.c.l.b16 %v277
    %v2566 = vunpack.c.h.b16 %v277
    %v2567 = vunpack.c.l.b16 %v278
    %v2568 = vunpack.c.h.b16 %v278
    %v2569 = vunpack.c.l.b16 %v279
    %v2570 = vunpack.c.h.b16 %v279
    %v2571 = vunpack.c.l.b16 %v280
    %v2572 = vunpack.c.h.b16 %v280
    %v2573 = vunpack.c.l.b16 %v281
    %v2574 = vunpack.c.h.b16 %v281
    %v2575 = vunpack.c.l.b16 %v282
    %v2576 = vunpack.c.h.b16 %v282
    %v2577 = vunpack.c.l.b16 %v283
    %v2578 = vunpack.c.h.b16 %v283
    %v2579 = vunpack.c.l.b16 %v284
    %v2580 = vunpack.c.h.b16 %v284
    %v2581 = vunpack.c.l.b16 %v285
    %v2582 = vunpack.c.h.b16 %v285
    %v2583 = vunpack.c.l.b16 %v286
    %v2584 = vunpack.c.h.b16 %v286
    %v2585 = vunpack.c.l.b16 %v287
    %v2586 = vunpack.c.h.b16 %v287
    %v2587 = vunpack.c.l.b16 %v288
    %v2588 = vunpack.c.h.b16 %v288
    %v2589 = vunpack.c.l.b16 %v289
    %v2590 = vunpack.c.h.b16 %v289
    %v2591 = vunpack.c.l.b16 %v290
    %v2592 = vunpack.c.h.b16 %v290
    %v2593 = vunpack.c.l.b16 %v291
    %v2594 = vunpack.c.h.b16 %v291
    %v2595 = vunpack.c.l.b16 %v292
    %v2596 = vunpack.c.h.b16 %v292
    %v2597 = vunpack.c.l.b16 %v293
    %v2598 = vunpack.c.h.b16 %v293
    %v2599 = vunpack.c.l.b16 %v294
    %v2600 = vunpack.c.h.b16 %v294
    %v2601 = vunpack.c.l.b16 %v295
    %v2602 = vunpack.c.h.b16 %v295
    %v2603 = vunpack.c.l.b16 %v296
    %v2604 = vunpack.c.h.b16 %v296
    %v2605 = vunpack.c.l.b16 %v297
    %v2606 = vunpack.c.h.b16 %v297
    %v2607 = vunpack.c.l.b16 %v298
    %v2608 = vunpack.c.h.b16 %v298
    %v2609 = vunpack.c.l.b16 %v299
    %v2610 = vunpack.c.h.b16 %v299
    %v2611 = vunpack.c.l.b16 %v300
    %v2612 = vunpack.c.h.b16 %v300
    %v2613 = vunpack.c.l.b16 %v301
    %v2614 = vunpack.c.h.b16 %v301
    %v2615 = vunpack.c.l.b16 %v302
    %v2616 = vunpack.c.h.b16 %v302
    %v2617 = vunpack.c.l.b16 %v303
    %v2618 = vunpack.c.h.b16 %v303
    %v2619 = vunpack.c.l.b16 %v304
    %v2620 = vunpack.c.h.b16 %v304
    %v2621 = vunpack.c.l.b16 %v305
    %v2622 = vunpack.c.h.b16 %v305
    %v2623 = vunpack.c.l.b16 %v306
    %v2624 = vunpack.c.h.b16 %v306
    %v2625 = vunpack.c.l.b16 %v307
    %v2626 = vunpack.c.h.b16 %v307
    %v2627 = vunpack.c.l.b16 %v308
    %v2628 = vunpack.c.h.b16 %v308
    %v2629 = vunpack.c.l.b16 %v309
    %v2630 = vunpack.c.h.b16 %v309
    %v2631 = vunpack.c.l.b16 %v310
    %v2632 = vunpack.c.h.b16 %v310
    %v2633 = vunpack.c.l.b16 %v311
    %v2634 = vunpack.c.h.b16 %v311
    %v2635 = vunpack.c.l.b16 %v312
    %v2636 = vunpack.c.h.b16 %v312
    %v2637 = vunpack.c.l.b16 %v313
    %v2638 = vunpack.c.h.b16 %v313
    %v2639 = vunpack.c.l.b16 %v314
    %v2640 = vunpack.c.h.b16 %v314
    %v2641 = vunpack.c.l.b16 %v315
    %v2642 = vunpack.c.h.b16 %v315
    %v2643 = vunpack.c.l.b16 %v316
    %v2644 = vunpack.c.h.b16 %v316
    %v2645 = vunpack.c.l.b16 %v317
    %v2646 = vunpack.c.h.b16 %v317
    %v2647 = vunpack.c.l.b16 %v318
    %v2648 = vunpack.c.h.b16 %v318
    %v2649 = vunpack.c.l.b16 %v319
    %v2650 = vunpack.c.h.b16 %v319
    %v2651 = vunpack.c.l.b16 %v320
    %v2652 = vunpack.c.h.b16 %v320
    %v2653 = vunpack.c.l.b16 %v321
    %v2654 = vunpack.c.h.b16 %v321
    %v2655 = vunpack.c.l.b16 %v322
    %v2656 = vunpack.c.h.b16 %v322
    %v2657 = vunpack.c.l.b16 %v323
    %v2658 = vunpack.c.h.b16 %v323
    %v2659 = vunpack.c.l.b16 %v324
    %v2660 = vunpack.c.h.b16 %v324
    %v2661 = vunpack.c.l.b16 %v325
    %v2662 = vunpack.c.h.b16 %v325
    %v2663 = vunpack.c.l.b16 %v326
    %v2664 = vunpack.c.h.b16 %v326
    %v2665 = vunpack.c.l.b16 %v327
    %v2666 = vunpack.c.h.b16 %v327
    %v2667 = vunpack.c.l.b16 %v328
    %v2668 = vunpack.c.h.b16 %v328
    %v2669 = vunpack.c.l.b16 %v329
    %v2670 = vunpack.c.h.b16 %v329
    %v2671 = vunpack.c.l.b16 %v330
    %v2672 = vunpack.c.h.b16 %v330
    %v2673 = vunpack.c.l.b16 %v331
    %v2674 = vunpack.c.h.b16 %v331
    %v2675 = vunpack.c.l.b16 %v332
    %v2676 = vunpack.c.h.b16 %v332
    %v2677 = vunpack.c.l.b16 %v333
    %v2678 = vunpack.c.h.b16 %v333
    %v2679 = vunpack.c.l.b16 %v334
    %v2680 = vunpack.c.h.b16 %v334
    %v2681 = vunpack.c.l.b16 %v335
    %v2682 = vunpack.c.h.b16 %v335
    %v2683 = vunpack.c.l.b16 %v336
    %v2684 = vunpack.c.h.b16 %v336
    %v2685 = vunpack.c.l.b16 %v337
    %v2686 = vunpack.c.h.b16 %v337
    %v2687 = vunpack.c.l.b16 %v338
    %v2688 = vunpack.c.h.b16 %v338
    %v2689 = vunpack.c.l.b16 %v339
    %v2690 = vunpack.c.h.b16 %v339
    %v2691 = vunpack.c.l.b16 %v340
    %v2692 = vunpack.c.h.b16 %v340
    %v2693 = vunpack.c.l.b16 %v341
    %v2694 = vunpack.c.h.b16 %v341
    %v2695 = vunpack.c.l.b16 %v342
    %v2696 = vunpack.c.h.b16 %v342
    %v2697 = vunpack.c.l.b16 %v343
    %v2698 = vunpack.c.h.b16 %v343
    %v2699 = vunpack.c.l.b16 %v344
    %v2700 = vunpack.c.h.b16 %v344
    %v2701 = vunpack.c.l.b16 %v345
    %v2702 = vunpack.c.h.b16 %v345
    %v2703 = vunpack.c.l.b16 %v346
    %v2704 = vunpack.c.h.b16 %v346
    %v2705 = vunpack.c.l.b16 %v347
    %v2706 = vunpack.c.h.b16 %v347
    %v2707 = vunpack.c.l.b16 %v348
    %v2708 = vunpack.c.h.b16 %v348
    %v2709 = vunpack.c.l.b16 %v349
    %v2710 = vunpack.c.h.b16 %v349
    %v2711 = vunpack.c.l.b16 %v350
    %v2712 = vunpack.c.h.b16 %v350
    %v2713 = vunpack.c.l.b16 %v351
    %v2714 = vunpack.c.h.b16 %v351
    %v2715 = vunpack.c.l.b16 %v352
    %v2716 = vunpack.c.h.b16 %v352
    %v2717 = vunpack.c.l.b16 %v353
    %v2718 = vunpack.c.h.b16 %v353
    %v2719 = vunpack.c.l.b16 %v354
    %v2720 = vunpack.c.h.b16 %v354
    %v2721 = vunpack.c.l.b16 %v355
    %v2722 = vunpack.c.h.b16 %v355
    %v2723 = vunpack.c.l.b16 %v356
    %v2724 = vunpack.c.h.b16 %v356
    %v2725 = vunpack.c.l.b16 %v357
    %v2726 = vunpack.c.h.b16 %v357
    %v2727 = vunpack.c.l.b16 %v358
    %v2728 = vunpack.c.h.b16 %v358
    %v2729 = vunpack.c.l.b16 %v359
    %v2730 = vunpack.c.h.b16 %v359
    %v2731 = vunpack.c.l.b16 %v360
    %v2732 = vunpack.c.h.b16 %v360
    %v2733 = vunpack.c.l.b16 %v361
    %v2734 = vunpack.c.h.b16 %v361
    %v2735 = vunpack.c.l.b16 %v362
    %v2736 = vunpack.c.h.b16 %v362
    %v2737 = vunpack.c.l.b16 %v363
    %v2738 = vunpack.c.h.b16 %v363
    %v2739 = vunpack.c.l.b16 %v364
    %v2740 = vunpack.c.h.b16 %v364
    %v2741 = vunpack.c.l.b16 %v365
    %v2742 = vunpack.c.h.b16 %v365
    %v2743 = vunpack.c.l.b16 %v366
    %v2744 = vunpack.c.h.b16 %v366
    %v2745 = vunpack.c.l.b16 %v367
    %v2746 = vunpack.c.h.b16 %v367
    %v2747 = vunpack.c.l.b16 %v368
    %v2748 = vunpack.c.h.b16 %v368
    %v2749 = vunpack.c.l.b16 %v369
    %v2750 = vunpack.c.h.b16 %v369
    %v2751 = vunpack.c.l.b16 %v370
    %v2752 = vunpack.c.h.b16 %v370
    %v2753 = vunpack.c.l.b16 %v371
    %v2754 = vunpack.c.h.b16 %v371
    %v2755 = vunpack.c.l.b16 %v372
    %v2756 = vunpack.c.h.b16 %v372
    %v2757 = vunpack.c.l.b16 %v373
    %v2758 = vunpack.c.h.b16 %v373
    %v2759 = vunpack.c.l.b16 %v374
    %v2760 = vunpack.c.h.b16 %v374
    %v2761 = vunpack.c.l.b16 %v375
    %v2762 = vunpack.c.h.b16 %v375
    %v2763 = vunpack.c.l.b16 %v376
    %v2764 = vunpack.c.h.b16 %v376
    %v2765 = vunpack.c.l.b16 %v377
    %v2766 = vunpack.c.h.b16 %v377
    %v2767 = vunpack.c.l.b16 %v378
    %v2768 = vunpack.c.h.b16 %v378
    %v2769 = vunpack.c.l.b16 %v379
    %v2770 = vunpack.c.h.b16 %v379
    %v2771 = vunpack.c.l.b16 %v380
    %v2772 = vunpack.c.h.b16 %v380
    %v2773 = vunpack.c.l.b16 %v381
    %v2774 = vunpack.c.h.b16 %v381
    %v2775 = vunpack.c.l.b16 %v382
    %v2776 = vunpack.c.h.b16 %v382
    %v2777 = vunpack.c.l.b16 %v383
    %v2778 = vunpack.c.h.b16 %v383
    %v2779 = vunpack.c.l.b16 %v384
    %v2780 = vunpack.c.h.b16 %v384
    %v2781 = vunpack.c.l.b16 %v385
    %v2782 = vunpack.c.h.b16 %v385
    %v2783 = vunpack.c.l.b16 %v386
    %v2784 = vunpack.c.h.b16 %v386
    %v2785 = vunpack.c.l.b16 %v387
    %v2786 = vunpack.c.h.b16 %v387
    %v2787 = vunpack.c.l.b16 %v388
    %v2788 = vunpack.c.h.b16 %v388
    %v2789 = vunpack.c.l.b16 %v389
    %v2790 = vunpack.c.h.b16 %v389
    %v2791 = vunpack.c.l.b16 %v390
    %v2792 = vunpack.c.h.b16 %v390
    %v2793 = vunpack.c.l.b16 %v391
    %v2794 = vunpack.c.h.b16 %v391
    %v2795 = vunpack.c.l.b16 %v392
    %v2796 = vunpack.c.h.b16 %v392
    %v2797 = vunpack.c.l.b16 %v393
    %v2798 = vunpack.c.h.b16 %v393
    %v2799 = vunpack.c.l.b16 %v394
    %v2800 = vunpack.c.h.b16 %v394
    %v2801 = vunpack.c.l.b16 %v395
    %v2802 = vunpack.c.h.b16 %v395
    %v2803 = vunpack.c.l.b16 %v396
    %v2804 = vunpack.c.h.b16 %v396
    %v2805 = vunpack.c.l.b16 %v397
    %v2806 = vunpack.c.h.b16 %v397
    %v2807 = vunpack.c.l.b16 %v398
    %v2808 = vunpack.c.h.b16 %v398
    %v2809 = vunpack.c.l.b16 %v399
    %v2810 = vunpack.c.h.b16 %v399
    %v2811 = vunpack.c.l.b16 %v400
    %v2812 = vunpack.c.h.b16 %v400
    %v2813 = vunpack.c.l.b16 %v401
    %v2814 = vunpack.c.h.b16 %v401
    %v2815 = vunpack.c.l.b16 %v402
    %v2816 = vunpack.c.h.b16 %v402
    %v2817 = vunpack.c.l.b16 %v403
    %v2818 = vunpack.c.h.b16 %v403
    %v2819 = vunpack.c.l.b16 %v404
    %v2820 = vunpack.c.h.b16 %v404
    %v2821 = vunpack.c.l.b16 %v405
    %v2822 = vunpack.c.h.b16 %v405
    %v2823 = vunpack.c.l.b16 %v406
    %v2824 = vunpack.c.h.b16 %v406
    %v2825 = vunpack.c.l.b16 %v407
    %v2826 = vunpack.c.h.b16 %v407
    %v2827 = vunpack.c.l.b16 %v408
    %v2828 = vunpack.c.h.b16 %v408
    %v2829 = vunpack.c.l.b16 %v409
    %v2830 = vunpack.c.h.b16 %v409
    %v2831 = vunpack.c.l.b16 %v410
    %v2832 = vunpack.c.h.b16 %v410
    %v2833 = vunpack.c.l.b16 %v411
    %v2834 = vunpack.c.h.b16 %v411
    %v2835 = vunpack.c.l.b16 %v412
    %v2836 = vunpack.c.h.b16 %v412
    %v2837 = vunpack.c.l.b16 %v413
    %v2838 = vunpack.c.h.b16 %v413
    %v2839 = vunpack.c.l.b16 %v414
    %v2840 = vunpack.c.h.b16 %v414
    %v2841 = vunpack.c.l.b16 %v415
    %v2842 = vunpack.c.h.b16 %v415
    %v2843 = vunpack.c.l.b16 %v416
    %v2844 = vunpack.c.h.b16 %v416
    %v2845 = vunpack.c.l.b16 %v417
    %v2846 = vunpack.c.h.b16 %v417
    %v2847 = vunpack.c.l.b16 %v418
    %v2848 = vunpack.c.h.b16 %v418
    %v2849 = vunpack.c.l.b16 %v419
    %v2850 = vunpack.c.h.b16 %v419
    %v2851 = vunpack.c.l.b16 %v420
    %v2852 = vunpack.c.h.b16 %v420
    %v2853 = vunpack.c.l.b16 %v421
    %v2854 = vunpack.c.h.b16 %v421
    %v2855 = vunpack.c.l.b16 %v422
    %v2856 = vunpack.c.h.b16 %v422
    %v2857 = vunpack.c.l.b16 %v423
    %v2858 = vunpack.c.h.b16 %v423
    %v2859 = vunpack.c.l.b16 %v424
    %v2860 = vunpack.c.h.b16 %v424
    %v2861 = vunpack.c.l.b16 %v425
    %v2862 = vunpack.c.h.b16 %v425
    %v2863 = vunpack.c.l.b16 %v426
    %v2864 = vunpack.c.h.b16 %v426
    %v2865 = vunpack.c.l.b16 %v427
    %v2866 = vunpack.c.h.b16 %v427
    %v2867 = vunpack.c.l.b16 %v428
    %v2868 = vunpack.c.h.b16 %v428
    %v2869 = vunpack.c.l.b16 %v429
    %v2870 = vunpack.c.h.b16 %v429
    %v2871 = vunpack.c.l.b16 %v430
    %v2872 = vunpack.c.h.b16 %v430
    %v2873 = vunpack.c.l.b16 %v431
    %v2874 = vunpack.c.h.b16 %v431
    %v2875 = vunpack.c.l.b16 %v432
    %v2876 = vunpack.c.h.b16 %v432
    %v2877 = vunpack.c.l.b16 %v433
    %v2878 = vunpack.c.h.b16 %v433
    %v2879 = vunpack.c.l.b16 %v434
    %v2880 = vunpack.c.h.b16 %v434
    %v2881 = vunpack.c.l.b16 %v435
    %v2882 = vunpack.c.h.b16 %v435
    %v2883 = vunpack.c.l.b16 %v436
    %v2884 = vunpack.c.h.b16 %v436
    %v2885 = vunpack.c.l.b16 %v437
    %v2886 = vunpack.c.h.b16 %v437
    %v2887 = vunpack.c.l.b16 %v438
    %v2888 = vunpack.c.h.b16 %v438
    %v2889 = vunpack.c.l.b16 %v439
    %v2890 = vunpack.c.h.b16 %v439
    %v2891 = vunpack.c.l.b16 %v440
    %v2892 = vunpack.c.h.b16 %v440
    %v2893 = vunpack.c.l.b16 %v441
    %v2894 = vunpack.c.h.b16 %v441
    %v2895 = vunpack.c.l.b16 %v442
    %v2896 = vunpack.c.h.b16 %v442
    %v2897 = vunpack.c.l.b16 %v443
    %v2898 = vunpack.c.h.b16 %v443
    %v2899 = vunpack.c.l.b16 %v444
    %v2900 = vunpack.c.h.b16 %v444
    %v2901 = vunpack.c.l.b16 %v445
    %v2902 = vunpack.c.h.b16 %v445
    %v2903 = vunpack.c.l.b16 %v446
    %v2904 = vunpack.c.h.b16 %v446
    %v2905 = vunpack.c.l.b16 %v447
    %v2906 = vunpack.c.h.b16 %v447
    %v2907 = vunpack.c.l.b16 %v448
    %v2908 = vunpack.c.h.b16 %v448
    %v2909 = vunpack.c.l.b16 %v449
    %v2910 = vunpack.c.h.b16 %v449
    %v2911 = vunpack.c.l.b16 %v450
    %v2912 = vunpack.c.h.b16 %v450
    %v2913 = vunpack.c.l.b16 %v451
    %v2914 = vunpack.c.h.b16 %v451
    %v2915 = vunpack.c.l.b16 %v452
    %v2916 = vunpack.c.h.b16 %v452
    %v2917 = vunpack.c.l.b16 %v453
    %v2918 = vunpack.c.h.b16 %v453
    %v2919 = vunpack.c.l.b16 %v454
    %v2920 = vunpack.c.h.b16 %v454
    %v2921 = vunpack.c.l.b16 %v455
    %v2922 = vunpack.c.h.b16 %v455
    %v2923 = vunpack.c.l.b16 %v456
    %v2924 = vunpack.c.h.b16 %v456
    %v2925 = vunpack.c.l.b16 %v457
    %v2926 = vunpack.c.h.b16 %v457
    %v2927 = vunpack.c.l.b16 %v458
    %v2928 = vunpack.c.h.b16 %v458
    %v2929 = vunpack.c.l.b16 %v459
    %v2930 = vunpack.c.h.b16 %v459
    %v2931 = vunpack.c.l.b16 %v460
    %v2932 = vunpack.c.h.b16 %v460
    %v2933 = vunpack.c.l.b16 %v461
    %v2934 = vunpack.c.h.b16 %v461
    %v2935 = vunpack.c.l.b16 %v462
    %v2936 = vunpack.c.h.b16 %v462
    %v2937 = vunpack.c.l.b16 %v463
    %v2938 = vunpack.c.h.b16 %v463
    %v2939 = vunpack.c.l.b16 %v464
    %v2940 = vunpack.c.h.b16 %v464
    %v2941 = vunpack.c.l.b16 %v465
    %v2942 = vunpack.c.h.b16 %v465
    %v2943 = vunpack.c.l.b16 %v466
    %v2944 = vunpack.c.h.b16 %v466
    %v2945 = vunpack.c.l.b16 %v467
    %v2946 = vunpack.c.h.b16 %v467
    %v2947 = vunpack.c.l.b16 %v468
    %v2948 = vunpack.c.h.b16 %v468
    %v2949 = vunpack.c.l.b16 %v469
    %v2950 = vunpack.c.h.b16 %v469
    %v2951 = vunpack.c.l.b16 %v470
    %v2952 = vunpack.c.h.b16 %v470
    %v2953 = vunpack.c.l.b16 %v471
    %v2954 = vunpack.c.h.b16 %v471
    %v2955 = vunpack.c.l.b16 %v472
    %v2956 = vunpack.c.h.b16 %v472
    %v2957 = vunpack.c.l.b16 %v473
    %v2958 = vunpack.c.h.b16 %v473
    %v2959 = vunpack.c.l.b16 %v474
    %v2960 = vunpack.c.h.b16 %v474
    %v2961 = vunpack.c.l.b16 %v475
    %v2962 = vunpack.c.h.b16 %v475
    %v2963 = vunpack.c.l.b16 %v476
    %v2964 = vunpack.c.h.b16 %v476
    %v2965 = vunpack.c.l.b16 %v477
    %v2966 = vunpack.c.h.b16 %v477
    %v2967 = vunpack.c.l.b16 %v478
    %v2968 = vunpack.c.h.b16 %v478
    %v2969 = vunpack.c.l.b16 %v479
    %v2970 = vunpack.c.h.b16 %v479
    %v2971 = vunpack.c.l.b16 %v480
    %v2972 = vunpack.c.h.b16 %v480
    %v2973 = vunpack.c.l.b16 %v481
    %v2974 = vunpack.c.h.b16 %v481
    %v2975 = vunpack.c.l.b16 %v482
    %v2976 = vunpack.c.h.b16 %v482
    %v2977 = vunpack.c.l.b16 %v483
    %v2978 = vunpack.c.h.b16 %v483
    %v2979 = vunpack.c.l.b16 %v484
    %v2980 = vunpack.c.h.b16 %v484
    %v2981 = vunpack.c.l.b16 %v485
    %v2982 = vunpack.c.h.b16 %v485
    %v2983 = vunpack.c.l.b16 %v486
    %v2984 = vunpack.c.h.b16 %v486
    %v2985 = vunpack.c.l.b16 %v487
    %v2986 = vunpack.c.h.b16 %v487
    %v2987 = vunpack.c.l.b16 %v488
    %v2988 = vunpack.c.h.b16 %v488
    %v2989 = vunpack.c.l.b16 %v489
    %v2990 = vunpack.c.h.b16 %v489
    %v2991 = vunpack.c.l.b16 %v490
    %v2992 = vunpack.c.h.b16 %v490
    %v2993 = vunpack.c.l.b16 %v491
    %v2994 = vunpack.c.h.b16 %v491
    %v2995 = vunpack.c.l.b16 %v492
    %v2996 = vunpack.c.h.b16 %v492
    %v2997 = vunpack.c.l.b16 %v493
    %v2998 = vunpack.c.h.b16 %v493
    %v2999 = vunpack.c.l.b16 %v494
    %v3000 = vunpack.c.h.b16 %v494
    %v3001 = vunpack.c.l.b16 %v495
    %v3002 = vunpack.c.h.b16 %v495
    %v3003 = vunpack.c.l.b16 %v496
    %v3004 = vunpack.c.h.b16 %v496
    %v3005 = vunpack.c.l.b16 %v497
    %v3006 = vunpack.c.h.b16 %v497
    %v3007 = vunpack.c.l.b16 %v498
    %v3008 = vunpack.c.h.b16 %v498
    %v3009 = vunpack.c.l.b16 %v499
    %v3010 = vunpack.c.h.b16 %v499
    %v3011 = vunpack.c.l.b16 %v500
    %v3012 = vunpack.c.h.b16 %v500
    %v3013 = vunpack.c.l.b16 %v501
    %v3014 = vunpack.c.h.b16 %v501
    %v3015 = vunpack.c.l.b16 %v502
    %v3016 = vunpack.c.h.b16 %v502
    %v3017 = vunpack.c.l.b16 %v503
    %v3018 = vunpack.c.h.b16 %v503
    %v3019 = vunpack.c.l.b16 %v504
    %v3020 = vunpack.c.h.b16 %v504
    %v3021 = vunpack.c.l.b16 %v505
    %v3022 = vunpack.c.h.b16 %v505
    %v3023 = vunpack.c.l.b16 %v506
    %v3024 = vunpack.c.h.b16 %v506
    %v3025 = vunpack.c.l.b16 %v507
    %v3026 = vunpack.c.h.b16 %v507
    %v3027 = vunpack.c.l.b16 %v508
    %v3028 = vunpack.c.h.b16 %v508
    %v3029 = vunpack.c.l.b16 %v509
    %v3030 = vunpack.c.h.b16 %v509
    %v3031 = vunpack.c.l.b16 %v510
    %v3032 = vunpack.c.h.b16 %v510
    %v3033 = vunpack.c.l.b16 %v511
    %v3034 = vunpack.c.h.b16 %v511
    %v3035 = vunpack.c.l.b16 %v512
    %v3036 = vunpack.c.h.b16 %v512
    %v3037 = vunpack.c.l.b16 %v513
    %v3038 = vunpack.c.h.b16 %v513
    %v3039 = vunpack.c.l.b16 %v514
    %v3040 = vunpack.c.h.b16 %v514
    %v3041 = vunpack.c.l.b16 %v515
    %v3042 = vunpack.c.h.b16 %v515
    %v3043 = vunpack.c.l.b16 %v516
    %v3044 = vunpack.c.h.b16 %v516
    %v3045 = vunpack.c.l.b16 %v517
    %v3046 = vunpack.c.h.b16 %v517
    %v3047 = vunpack.c.l.b16 %v518
    %v3048 = vunpack.c.h.b16 %v518
    %v3049 = vunpack.c.l.b16 %v519
    %v3050 = vunpack.c.h.b16 %v519
    %v3051 = vunpack.c.l.b16 %v520
    %v3052 = vunpack.c.h.b16 %v520
    %v3053 = vunpack.c.l.b16 %v521
    %v3054 = vunpack.c.h.b16 %v521
    %v3055 = vunpack.c.l.b16 %v522
    %v3056 = vunpack.c.h.b16 %v522
    %v3057 = vunpack.c.l.b16 %v523
    %v3058 = vunpack.c.h.b16 %v523
    %v3059 = vunpack.c.l.b16 %v524
    %v3060 = vunpack.c.h.b16 %v524
    %v3061 = vunpack.c.l.b16 %v525
    %v3062 = vunpack.c.h.b16 %v525
    %v3063 = vunpack.c.l.b16 %v526
    %v3064 = vunpack.c.h.b16 %v526
    %v3065 = vunpack.c.l.b16 %v527
    %v3066 = vunpack.c.h.b16 %v527
    %v3067 = vunpack.c.l.b16 %v528
    %v3068 = vunpack.c.h.b16 %v528
    %v3069 = vunpack.c.l.b16 %v529
    %v3070 = vunpack.c.h.b16 %v529
    %v3071 = vunpack.c.l.b16 %v530
    %v3072 = vunpack.c.h.b16 %v530
    %v3073 = vunpack.c.l.b16 %v531
    %v3074 = vunpack.c.h.b16 %v531
    %v3075 = vunpack.c.l.b16 %v532
    %v3076 = vunpack.c.h.b16 %v532
    %v3077 = vunpack.c.l.b16 %v533
    %v3078 = vunpack.c.h.b16 %v533
    %v3079 = vunpack.c.l.b16 %v534
    %v3080 = vunpack.c.h.b16 %v534
    %v3081 = vunpack.c.l.b16 %v535
    %v3082 = vunpack.c.h.b16 %v535
    %v3083 = vunpack.c.l.b16 %v536
    %v3084 = vunpack.c.h.b16 %v536
    %v3085 = vunpack.c.l.b16 %v537
    %v3086 = vunpack.c.h.b16 %v537
    %v3087 = vunpack.c.l.b16 %v538
    %v3088 = vunpack.c.h.b16 %v538
    %v3089 = vunpack.c.l.b16 %v539
    %v3090 = vunpack.c.h.b16 %v539
    %v3091 = vunpack.c.l.b16 %v540
    %v3092 = vunpack.c.h.b16 %v540
    %v3093 = vunpack.c.l.b16 %v541
    %v3094 = vunpack.c.h.b16 %v541
    %v3095 = vunpack.c.l.b16 %v542
    %v3096 = vunpack.c.h.b16 %v542
    %v3097 = vunpack.c.l.b16 %v543
    %v3098 = vunpack.c.h.b16 %v543
    %v3099 = vunpack.c.l.b16 %v544
    %v3100 = vunpack.c.h.b16 %v544
    %v3101 = vunpack.c.l.b16 %v545
    %v3102 = vunpack.c.h.b16 %v545
    %v3103 = vunpack.c.l.b16 %v546
    %v3104 = vunpack.c.h.b16 %v546
    %v3105 = vunpack.c.l.b16 %v547
    %v3106 = vunpack.c.h.b16 %v547
    %v3107 = vunpack.c.l.b16 %v548
    %v3108 = vunpack.c.h.b16 %v548
    %v3109 = vunpack.c.l.b16 %v549
    %v3110 = vunpack.c.h.b16 %v549
    %v3111 = vunpack.c.l.b16 %v550
    %v3112 = vunpack.c.h.b16 %v550
    %v3113 = vunpack.c.l.b16 %v551
    %v3114 = vunpack.c.h.b16 %v551
    %v3115 = vunpack.c.l.b16 %v552
    %v3116 = vunpack.c.h.b16 %v552
    %v3117 = vunpack.c.l.b16 %v553
    %v3118 = vunpack.c.h.b16 %v553
    %v3119 = vunpack.c.l.b16 %v554
    %v3120 = vunpack.c.h.b16 %v554
    %v3121 = vunpack.c.l.b16 %v555
    %v3122 = vunpack.c.h.b16 %v555
    %v3123 = vunpack.c.l.b16 %v556
    %v3124 = vunpack.c.h.b16 %v556
    %v3125 = vunpack.c.l.b16 %v557
    %v3126 = vunpack.c.h.b16 %v557
    %v3127 = vunpack.c.l.b16 %v558
    %v3128 = vunpack.c.h.b16 %v558
    %v3129 = vunpack.c.l.b16 %v559
    %v3130 = vunpack.c.h.b16 %v559
    %v3131 = vunpack.c.l.b16 %v560
    %v3132 = vunpack.c.h.b16 %v560
    %v3133 = vunpack.c.l.b16 %v561
    %v3134 = vunpack.c.h.b16 %v561
    %v3135 = vunpack.c.l.b16 %v562
    %v3136 = vunpack.c.h.b16 %v562
    %v3137 = vunpack.c.l.b16 %v563
    %v3138 = vunpack.c.h.b16 %v563
    %v3139 = vunpack.c.l.b16 %v564
    %v3140 = vunpack.c.h.b16 %v564
    %v3141 = vunpack.c.l.b16 %v565
    %v3142 = vunpack.c.h.b16 %v565
    %v3143 = vunpack.c.l.b16 %v566
    %v3144 = vunpack.c.h.b16 %v566
    %v3145 = vunpack.c.l.b16 %v567
    %v3146 = vunpack.c.h.b16 %v567
    %v3147 = vunpack.c.l.b16 %v568
    %v3148 = vunpack.c.h.b16 %v568
    %v3149 = vunpack.c.l.b16 %v569
    %v3150 = vunpack.c.h.b16 %v569
    %v3151 = vunpack.c.l.b16 %v570
    %v3152 = vunpack.c.h.b16 %v570
    %v3153 = vunpack.c.l.b16 %v571
    %v3154 = vunpack.c.h.b16 %v571
    %v3155 = vunpack.c.l.b16 %v572
    %v3156 = vunpack.c.h.b16 %v572
    %v3157 = vunpack.c.l.b16 %v573
    %v3158 = vunpack.c.h.b16 %v573
    %v3159 = vunpack.c.l.b16 %v574
    %v3160 = vunpack.c.h.b16 %v574
    %v3161 = vunpack.c.l.b16 %v575
    %v3162 = vunpack.c.h.b16 %v575
    %v3163 = vunpack.c.l.b16 %v576
    %v3164 = vunpack.c.h.b16 %v576
    %v3165 = vunpack.c.l.b16 %v577
    %v3166 = vunpack.c.h.b16 %v577
    %v3167 = vunpack.c.l.b16 %v578
    %v3168 = vunpack.c.h.b16 %v578
    %v3169 = vunpack.c.l.b16 %v579
    %v3170 = vunpack.c.h.b16 %v579
    %v3171 = vunpack.c.l.b16 %v580
    %v3172 = vunpack.c.h.b16 %v580
    %v3173 = vunpack.c.l.b16 %v581
    %v3174 = vunpack.c.h.b16 %v581
    %v3175 = vunpack.c.l.b16 %v582
    %v3176 = vunpack.c.h.b16 %v582
    %v3177 = vunpack.c.l.b16 %v583
    %v3178 = vunpack.c.h.b16 %v583
    %v3179 = vunpack.c.l.b16 %v584
    %v3180 = vunpack.c.h.b16 %v584
    %v3181 = vunpack.c.l.b16 %v585
    %v3182 = vunpack.c.h.b16 %v585
    %v3183 = vunpack.c.l.b16 %v586
    %v3184 = vunpack.c.h.b16 %v586
    %v3185 = vunpack.c.l.b16 %v587
    %v3186 = vunpack.c.h.b16 %v587
    %v3187 = vunpack.c.l.b16 %v588
    %v3188 = vunpack.c.h.b16 %v588
    %v3189 = vunpack.c.l.b16 %v589
    %v3190 = vunpack.c.h.b16 %v589
    %v3191 = vunpack.c.l.b16 %v590
    %v3192 = vunpack.c.h.b16 %v590
    %v3193 = vunpack.c.l.b16 %v591
    %v3194 = vunpack.c.h.b16 %v591
    %v3195 = vunpack.c.l.b16 %v592
    %v3196 = vunpack.c.h.b16 %v592
    %v3197 = vunpack.c.l.b16 %v593
    %v3198 = vunpack.c.h.b16 %v593
    %v3199 = vunpack.c.l.b16 %v594
    %v3200 = vunpack.c.h.b16 %v594
    %v3201 = vunpack.c.l.b16 %v595
    %v3202 = vunpack.c.h.b16 %v595
    %v3203 = vunpack.c.l.b16 %v596
    %v3204 = vunpack.c.h.b16 %v596
    %v3205 = vunpack.c.l.b16 %v597
    %v3206 = vunpack.c.h.b16 %v597
    %v3207 = vunpack.c.l.b16 %v598
    %v3208 = vunpack.c.h.b16 %v598
    %v3209 = vunpack.c.l.b16 %v599
    %v3210 = vunpack.c.h.b16 %v599
    %v3211 = vunpack.c.l.b16 %v600
    %v3212 = vunpack.c.h.b16 %v600
    %v3213 = vunpack.c.l.b16 %v601
    %v3214 = vunpack.c.h.b16 %v601
    %v3215 = vunpack.c.l.b16 %v602
    %v3216 = vunpack.c.h.b16 %v602
    %v3217 = vunpack.c.l.b16 %v603
    %v3218 = vunpack.c.h.b16 %v603
    %v3219 = vunpack.c.l.b16 %v604
    %v3220 = vunpack.c.h.b16 %v604
    %v3221 = vunpack.c.l.b16 %v605
    %v3222 = vunpack.c.h.b16 %v605
    %v3223 = vunpack.c.l.b16 %v606
    %v3224 = vunpack.c.h.b16 %v606
    %v3225 = vunpack.c.l.b16 %v607
    %v3226 = vunpack.c.h.b16 %v607
    %v3227 = vunpack.c.l.b16 %v608
    %v3228 = vunpack.c.h.b16 %v608
    %v3229 = vunpack.c.l.b16 %v609
    %v3230 = vunpack.c.h.b16 %v609
    %v3231 = vunpack.c.l.b16 %v610
    %v3232 = vunpack.c.h.b16 %v610
    %v3233 = vunpack.c.l.b16 %v611
    %v3234 = vunpack.c.h.b16 %v611
    %v3235 = vunpack.c.l.b16 %v612
    %v3236 = vunpack.c.h.b16 %v612
    %v3237 = vunpack.c.l.b16 %v613
    %v3238 = vunpack.c.h.b16 %v613
    %v3239 = vunpack.c.l.b16 %v614
    %v3240 = vunpack.c.h.b16 %v614
    %v3241 = vunpack.c.l.b16 %v615
    %v3242 = vunpack.c.h.b16 %v615
    %v3243 = vunpack.c.l.b16 %v616
    %v3244 = vunpack.c.h.b16 %v616
    %v3245 = vunpack.c.l.b16 %v617
    %v3246 = vunpack.c.h.b16 %v617
    %v3247 = vunpack.c.l.b16 %v618
    %v3248 = vunpack.c.h.b16 %v618
    %v3249 = vunpack.c.l.b16 %v619
    %v3250 = vunpack.c.h.b16 %v619
    %v3251 = vunpack.c.l.b16 %v620
    %v3252 = vunpack.c.h.b16 %v620
    %v3253 = vunpack.c.l.b16 %v621
    %v3254 = vunpack.c.h.b16 %v621
    %v3255 = vunpack.c.l.b16 %v622
    %v3256 = vunpack.c.h.b16 %v622
    %v3257 = vunpack.c.l.b16 %v623
    %v3258 = vunpack.c.h.b16 %v623
    %v3259 = vunpack.c.l.b16 %v624
    %v3260 = vunpack.c.h.b16 %v624
    %v3261 = vunpack.c.l.b16 %v625
    %v3262 = vunpack.c.h.b16 %v625
    %v3263 = vunpack.c.l.b16 %v626
    %v3264 = vunpack.c.h.b16 %v626
    %v3265 = vunpack.c.l.b16 %v627
    %v3266 = vunpack.c.h.b16 %v627
    %v3267 = vunpack.c.l.b16 %v628
    %v3268 = vunpack.c.h.b16 %v628
    %v3269 = vunpack.c.l.b16 %v629
    %v3270 = vunpack.c.h.b16 %v629
    %v3271 = vunpack.c.l.b16 %v630
    %v3272 = vunpack.c.h.b16 %v630
    %v3273 = vunpack.c.l.b16 %v631
    %v3274 = vunpack.c.h.b16 %v631
    %v3275 = vunpack.c.l.b16 %v632
    %v3276 = vunpack.c.h.b16 %v632
    %v3277 = vunpack.c.l.b16 %v633
    %v3278 = vunpack.c.h.b16 %v633
    %v3279 = vunpack.c.l.b16 %v634
    %v3280 = vunpack.c.h.b16 %v634
    %v3281 = vunpack.c.l.b16 %v635
    %v3282 = vunpack.c.h.b16 %v635
    %v3283 = vunpack.c.l.b16 %v636
    %v3284 = vunpack.c.h.b16 %v636
    %v3285 = vunpack.c.l.b16 %v637
    %v3286 = vunpack.c.h.b16 %v637
    %v3287 = vunpack.c.l.b16 %v638
    %v3288 = vunpack.c.h.b16 %v638
    %v3289 = vunpack.c.l.b16 %v639
    %v3290 = vunpack.c.h.b16 %v639
    %v3291 = vunpack.c.l.b16 %v640
    %v3292 = vunpack.c.h.b16 %v640
    %v3293 = vunpack.c.l.b16 %v641
    %v3294 = vunpack.c.h.b16 %v641
    %v3295 = vunpack.c.l.b16 %v642
    %v3296 = vunpack.c.h.b16 %v642
    %v3297 = vunpack.c.l.b16 %v643
    %v3298 = vunpack.c.h.b16 %v643
    %v3299 = vunpack.c.l.b16 %v644
    %v3300 = vunpack.c.h.b16 %v644
    %v3301 = vunpack.c.l.b16 %v645
    %v3302 = vunpack.c.h.b16 %v645
    %v3303 = vunpack.c.l.b16 %v646
    %v3304 = vunpack.c.h.b16 %v646
    %v3305 = vunpack.c.l.b16 %v647
    %v3306 = vunpack.c.h.b16 %v647
    %v3307 = vunpack.c.l.b16 %v648
    %v3308 = vunpack.c.h.b16 %v648
    %v3309 = vunpack.c.l.b16 %v649
    %v3310 = vunpack.c.h.b16 %v649
    %v3311 = vunpack.c.l.b16 %v650
    %v3312 = vunpack.c.h.b16 %v650
    %v3313 = vunpack.c.l.b16 %v651
    %v3314 = vunpack.c.h.b16 %v651
    %v3315 = vunpack.c.l.b16 %v652
    %v3316 = vunpack.c.h.b16 %v652
    %v3317 = vunpack.c.l.b16 %v653
    %v3318 = vunpack.c.h.b16 %v653
    %v3319 = vunpack.c.l.b16 %v654
    %v3320 = vunpack.c.h.b16 %v654
    %v3321 = vunpack.c.l.b16 %v655
    %v3322 = vunpack.c.h.b16 %v655
    %v3323 = vunpack.c.l.b16 %v656
    %v3324 = vunpack.c.h.b16 %v656
    %v3325 = vunpack.c.l.b16 %v657
    %v3326 = vunpack.c.h.b16 %v657
    %v3327 = vunpack.c.l.b16 %v658
    %v3328 = vunpack.c.h.b16 %v658
    %v3329 = vunpack.c.l.b16 %v659
    %v3330 = vunpack.c.h.b16 %v659
    %v3331 = vunpack.c.l.b16 %v660
    %v3332 = vunpack.c.h.b16 %v660
    %v3333 = vunpack.c.l.b16 %v661
    %v3334 = vunpack.c.h.b16 %v661
    %v3335 = vunpack.c.l.b16 %v662
    %v3336 = vunpack.c.h.b16 %v662
    %v3337 = vunpack.c.l.b16 %v663
    %v3338 = vunpack.c.h.b16 %v663
    %v3339 = vunpack.c.l.b16 %v664
    %v3340 = vunpack.c.h.b16 %v664
    %v3341 = vunpack.c.l.b16 %v665
    %v3342 = vunpack.c.h.b16 %v665
    %v3343 = vunpack.c.l.b16 %v666
    %v3344 = vunpack.c.h.b16 %v666
    %v3345 = vunpack.c.l.b16 %v667
    %v3346 = vunpack.c.h.b16 %v667
    %v3347 = vunpack.c.l.b16 %v668
    %v3348 = vunpack.c.h.b16 %v668
    %v3349 = vunpack.c.l.b16 %v669
    %v3350 = vunpack.c.h.b16 %v669
    %v3351 = vunpack.c.l.b16 %v670
    %v3352 = vunpack.c.h.b16 %v670
    %v3353 = vunpack.c.l.b16 %v671
    %v3354 = vunpack.c.h.b16 %v671
    %v3355 = vunpack.c.l.b16 %v672
    %v3356 = vunpack.c.h.b16 %v672
    %v3357 = vunpack.c.l.b16 %v673
    %v3358 = vunpack.c.h.b16 %v673
    %v3359 = vunpack.c.l.b16 %v674
    %v3360 = vunpack.c.h.b16 %v674
    %v3361 = vunpack.c.l.b16 %v675
    %v3362 = vunpack.c.h.b16 %v675
    %v3363 = vunpack.c.l.b16 %v676
    %v3364 = vunpack.c.h.b16 %v676
    %v3365 = vunpack.c.l.b16 %v677
    %v3366 = vunpack.c.h.b16 %v677
    %v3367 = vunpack.c.l.b16 %v678
    %v3368 = vunpack.c.h.b16 %v678
    %v3369 = vunpack.c.l.b16 %v679
    %v3370 = vunpack.c.h.b16 %v679
    %v3371 = vunpack.c.l.b16 %v680
    %v3372 = vunpack.c.h.b16 %v680
    %v3373 = vunpack.c.l.b16 %v681
    %v3374 = vunpack.c.h.b16 %v681
    %v3375 = vunpack.c.l.b16 %v682
    %v3376 = vunpack.c.h.b16 %v682
    %v3377 = vunpack.c.l.b16 %v683
    %v3378 = vunpack.c.h.b16 %v683
    %v3379 = vunpack.c.l.b16 %v684
    %v3380 = vunpack.c.h.b16 %v684
    %v3381 = vunpack.c.l.b16 %v685
    %v3382 = vunpack.c.h.b16 %v685
    %v3383 = vunpack.c.l.b16 %v686
    %v3384 = vunpack.c.h.b16 %v686
    %v3385 = vunpack.c.l.b16 %v687
    %v3386 = vunpack.c.h.b16 %v687
    %v3387 = vunpack.c.l.b16 %v688
    %v3388 = vunpack.c.h.b16 %v688
    %v3389 = vunpack.c.l.b16 %v689
    %v3390 = vunpack.c.h.b16 %v689
    %v3391 = vunpack.c.l.b16 %v690
    %v3392 = vunpack.c.h.b16 %v690
    %v3393 = vunpack.c.l.b16 %v691
    %v3394 = vunpack.c.h.b16 %v691
    %v3395 = vunpack.c.l.b16 %v692
    %v3396 = vunpack.c.h.b16 %v692
    %v3397 = vunpack.c.l.b16 %v693
    %v3398 = vunpack.c.h.b16 %v693
    %v3399 = vunpack.c.l.b16 %v694
    %v3400 = vunpack.c.h.b16 %v694
    %v3401 = vunpack.c.l.b16 %v695
    %v3402 = vunpack.c.h.b16 %v695
    %v3403 = vunpack.c.l.b16 %v696
    %v3404 = vunpack.c.h.b16 %v696
    %v3405 = vunpack.c.l.b16 %v697
    %v3406 = vunpack.c.h.b16 %v697
    %v3407 = vunpack.c.l.b16 %v698
    %v3408 = vunpack.c.h.b16 %v698
    %v3409 = vunpack.c.l.b16 %v699
    %v3410 = vunpack.c.h.b16 %v699
    %v3411 = vunpack.c.l.b16 %v700
    %v3412 = vunpack.c.h.b16 %v700
    %v3413 = vunpack.c.l.b16 %v701
    %v3414 = vunpack.c.h.b16 %v701
    %v3415 = vunpack.c.l.b16 %v702
    %v3416 = vunpack.c.h.b16 %v702
    %v3417 = vunpack.c.l.b16 %v703
    %v3418 = vunpack.c.h.b16 %v703
    %v3419 = vunpack.c.l.b16 %v704
    %v3420 = vunpack.c.h.b16 %v704
    %v3421 = vunpack.c.l.b16 %v705
    %v3422 = vunpack.c.h.b16 %v705
    %v3423 = vunpack.c.l.b16 %v706
    %v3424 = vunpack.c.h.b16 %v706
    %v3425 = vunpack.c.l.b16 %v707
    %v3426 = vunpack.c.h.b16 %v707
    %v3427 = vunpack.c.l.b16 %v708
    %v3428 = vunpack.c.h.b16 %v708
    %v3429 = vunpack.c.l.b16 %v709
    %v3430 = vunpack.c.h.b16 %v709
    %v3431 = vunpack.c.l.b16 %v710
    %v3432 = vunpack.c.h.b16 %v710
    %v3433 = vunpack.c.l.b16 %v711
    %v3434 = vunpack.c.h.b16 %v711
    %v3435 = vunpack.c.l.b16 %v712
    %v3436 = vunpack.c.h.b16 %v712
    %v3437 = vunpack.c.l.b16 %v713
    %v3438 = vunpack.c.h.b16 %v713
    %v3439 = vunpack.c.l.b16 %v714
    %v3440 = vunpack.c.h.b16 %v714
    %v3441 = vunpack.c.l.b16 %v715
    %v3442 = vunpack.c.h.b16 %v715
    %v3443 = vunpack.c.l.b16 %v716
    %v3444 = vunpack.c.h.b16 %v716
    %v3445 = vunpack.c.l.b16 %v717
    %v3446 = vunpack.c.h.b16 %v717
    %v3447 = vunpack.c.l.b16 %v718
    %v3448 = vunpack.c.h.b16 %v718
    %v3449 = vunpack.c.l.b16 %v719
    %v3450 = vunpack.c.h.b16 %v719
    %v3451 = vunpack.c.l.b16 %v720
    %v3452 = vunpack.c.h.b16 %v720
    %v3453 = vunpack.c.l.b16 %v721
    %v3454 = vunpack.c.h.b16 %v721
    %v3455 = vunpack.c.l.b16 %v722
    %v3456 = vunpack.c.h.b16 %v722
    %v3457 = vunpack.c.l.b16 %v723
    %v3458 = vunpack.c.h.b16 %v723
    %v3459 = vunpack.c.l.b16 %v724
    %v3460 = vunpack.c.h.b16 %v724
    %v3461 = vunpack.c.l.b16 %v725
    %v3462 = vunpack.c.h.b16 %v725
    %v3463 = vunpack.c.l.b16 %v726
    %v3464 = vunpack.c.h.b16 %v726
    %v3465 = vunpack.c.l.b16 %v727
    %v3466 = vunpack.c.h.b16 %v727
    %v3467 = vunpack.c.l.b16 %v728
    %v3468 = vunpack.c.h.b16 %v728
    %v3469 = vunpack.c.l.b16 %v729
    %v3470 = vunpack.c.h.b16 %v729
    %v3471 = vunpack.c.l.b16 %v730
    %v3472 = vunpack.c.h.b16 %v730
    %v3473 = vunpack.c.l.b16 %v731
    %v3474 = vunpack.c.h.b16 %v731
    %v3475 = vunpack.c.l.b16 %v732
    %v3476 = vunpack.c.h.b16 %v732
    %v3477 = vunpack.c.l.b16 %v733
    %v3478 = vunpack.c.h.b16 %v733
    %v3479 = vunpack.c.l.b16 %v734
    %v3480 = vunpack.c.h.b16 %v734
    %v3481 = vunpack.c.l.b16 %v735
    %v3482 = vunpack.c.h.b16 %v735
    %v3483 = vunpack.c.l.b16 %v736
    %v3484 = vunpack.c.h.b16 %v736
    %v3485 = vunpack.c.l.b16 %v737
    %v3486 = vunpack.c.h.b16 %v737
    %v3487 = vunpack.c.l.b16 %v738
    %v3488 = vunpack.c.h.b16 %v738
    %v3489 = vunpack.c.l.b16 %v739
    %v3490 = vunpack.c.h.b16 %v739
    %v3491 = vunpack.c.l.b16 %v740
    %v3492 = vunpack.c.h.b16 %v740
    %v3493 = vunpack.c.l.b16 %v741
    %v3494 = vunpack.c.h.b16 %v741
    %v3495 = vunpack.c.l.b16 %v742
    %v3496 = vunpack.c.h.b16 %v742
    %v3497 = vunpack.c.l.b16 %v743
    %v3498 = vunpack.c.h.b16 %v743
    %v3499 = vunpack.c.l.b16 %v744
    %v3500 = vunpack.c.h.b16 %v744
    %v3501 = vunpack.c.l.b16 %v745
    %v3502 = vunpack.c.h.b16 %v745
    %v3503 = vunpack.c.l.b16 %v746
    %v3504 = vunpack.c.h.b16 %v746
    %v3505 = vunpack.c.l.b16 %v747
    %v3506 = vunpack.c.h.b16 %v747
    %v3507 = vunpack.c.l.b16 %v748
    %v3508 = vunpack.c.h.b16 %v748
    %v3509 = vunpack.c.l.b16 %v749
    %v3510 = vunpack.c.h.b16 %v749
    %v3511 = vunpack.c.l.b16 %v750
    %v3512 = vunpack.c.h.b16 %v750
    %v3513 = vunpack.c.l.b16 %v751
    %v3514 = vunpack.c.h.b16 %v751
    %v3515 = vunpack.c.l.b16 %v752
    %v3516 = vunpack.c.h.b16 %v752
    %v3517 = vunpack.c.l.b16 %v753
    %v3518 = vunpack.c.h.b16 %v753
    %v3519 = vunpack.c.l.b16 %v754
    %v3520 = vunpack.c.h.b16 %v754
    %v3521 = vunpack.c.l.b16 %v755
    %v3522 = vunpack.c.h.b16 %v755
    %v3523 = vunpack.c.l.b16 %v756
    %v3524 = vunpack.c.h.b16 %v756
    %v3525 = vunpack.c.l.b16 %v757
    %v3526 = vunpack.c.h.b16 %v757
    %v3527 = vunpack.c.l.b16 %v758
    %v3528 = vunpack.c.h.b16 %v758
    %v3529 = vunpack.c.l.b16 %v759
    %v3530 = vunpack.c.h.b16 %v759
    %v3531 = vunpack.c.l.b16 %v760
    %v3532 = vunpack.c.h.b16 %v760
    %v3533 = vunpack.c.l.b16 %v761
    %v3534 = vunpack.c.h.b16 %v761
    %v3535 = vunpack.c.l.b16 %v762
    %v3536 = vunpack.c.h.b16 %v762
    %v3537 = vunpack.c.l.b16 %v763
    %v3538 = vunpack.c.h.b16 %v763
    %v3539 = vunpack.c.l.b16 %v764
    %v3540 = vunpack.c.h.b16 %v764
    %v3541 = vunpack.c.l.b16 %v765
    %v3542 = vunpack.c.h.b16 %v765
    %v3543 = vunpack.c.l.b16 %v766
    %v3544 = vunpack.c.h.b16 %v766
    %v3545 = vunpack.c.l.b16 %v767
    %v3546 = vunpack.c.h.b16 %v767
    %v3547 = vunpack.c.l.b16 %v768
    %v3548 = vunpack.c.h.b16 %v768
    %v3549 = vunpack.c.l.b16 %v769
    %v3550 = vunpack.c.h.b16 %v769
    %v3551 = vunpack.c.l.b16 %v770
    %v3552 = vunpack.c.h.b16 %v770
    %v3553 = vunpack.c.l.b16 %v771
    %v3554 = vunpack.c.h.b16 %v771
    %v3555 = vunpack.c.l.b16 %v772
    %v3556 = vunpack.c.h.b16 %v772
    %v3557 = vunpack.c.l.b16 %v773
    %v3558 = vunpack.c.h.b16 %v773
    %v3559 = vunpack.c.l.b16 %v774
    %v3560 = vunpack.c.h.b16 %v774
    %v3561 = vunpack.c.l.b16 %v775
    %v3562 = vunpack.c.h.b16 %v775
    %v3563 = vunpack.c.l.b16 %v776
    %v3564 = vunpack.c.h.b16 %v776
    %v3565 = vunpack.c.l.b16 %v777
    %v3566 = vunpack.c.h.b16 %v777
    %v3567 = vunpack.c.l.b16 %v778
    %v3568 = vunpack.c.h.b16 %v778
    %v3569 = vunpack.c.l.b16 %v779
    %v3570 = vunpack.c.h.b16 %v779
    %v3571 = vunpack.c.l.b16 %v780
    %v3572 = vunpack.c.h.b16 %v780
    %v3573 = vunpack.c.l.b16 %v781
    %v3574 = vunpack.c.h.b16 %v781
    %v3575 = vunpack.c.l.b16 %v782
    %v3576 = vunpack.c.h.b16 %v782
    %v3577 = vunpack.c.l.b16 %v783
    %v3578 = vunpack.c.h.b16 %v783
    %v3579 = vunpack.c.l.b16 %v784
    %v3580 = vunpack.c.h.b16 %v784
    %v3581 = vunpack.c.l.b16 %v785
    %v3582 = vunpack.c.h.b16 %v785
    %v3583 = vunpack.c.l.b16 %v786
    %v3584 = vunpack.c.h.b16 %v786
    %v3585 = vunpack.c.l.b16 %v787
    %v3586 = vunpack.c.h.b16 %v787
    %v3587 = vunpack.c.l.b16 %v788
    %v3588 = vunpack.c.h.b16 %v788
    %v3589 = vunpack.c.l.b16 %v789
    %v3590 = vunpack.c.h.b16 %v789
    %v3591 = vunpack.c.l.b16 %v790
    %v3592 = vunpack.c.h.b16 %v790
    %v3593 = vunpack.c.l.b16 %v791
    %v3594 = vunpack.c.h.b16 %v791
    %v3595 = vunpack.c.l.b16 %v792
    %v3596 = vunpack.c.h.b16 %v792
    %v3597 = vunpack.c.l.b16 %v793
    %v3598 = vunpack.c.h.b16 %v793
    %v3599 = vunpack.c.l.b16 %v794
    %v3600 = vunpack.c.h.b16 %v794
    %v3601 = vunpack.c.l.b16 %v795
    %v3602 = vunpack.c.h.b16 %v795
    %v3603 = vunpack.c.l.b16 %v796
    %v3604 = vunpack.c.h.b16 %v796
    %v3605 = vunpack.c.l.b16 %v797
    %v3606 = vunpack.c.h.b16 %v797
    %v3607 = vunpack.c.l.b16 %v798
    %v3608 = vunpack.c.h.b16 %v798
    %v3609 = vunpack.c.l.b16 %v799
    %v3610 = vunpack.c.h.b16 %v799
    %v3611 = vunpack.c.l.b16 %v800
    %v3612 = vunpack.c.h.b16 %v800
    %v3613 = vunpack.c.l.b16 %v801
    %v3614 = vunpack.c.h.b16 %v801
    %v3615 = vunpack.c.l.b16 %v802
    %v3616 = vunpack.c.h.b16 %v802
    %v3617 = vunpack.c.l.b16 %v803
    %v3618 = vunpack.c.h.b16 %v803
    %v3619 = vunpack.c.l.b16 %v804
    %v3620 = vunpack.c.h.b16 %v804
    %v3621 = vunpack.c.l.b16 %v805
    %v3622 = vunpack.c.h.b16 %v805
    %v3623 = vunpack.c.l.b16 %v806
    %v3624 = vunpack.c.h.b16 %v806
    %v3625 = vunpack.c.l.b16 %v807
    %v3626 = vunpack.c.h.b16 %v807
    %v3627 = vunpack.c.l.b16 %v808
    %v3628 = vunpack.c.h.b16 %v808
    %v3629 = vunpack.c.l.b16 %v809
    %v3630 = vunpack.c.h.b16 %v809
    %v3631 = vunpack.c.l.b16 %v810
    %v3632 = vunpack.c.h.b16 %v810
    %v3633 = vunpack.c.l.b16 %v811
    %v3634 = vunpack.c.h.b16 %v811
    %v3635 = vunpack.c.l.b16 %v812
    %v3636 = vunpack.c.h.b16 %v812
    %v3637 = vunpack.c.l.b16 %v813
    %v3638 = vunpack.c.h.b16 %v813
    %v3639 = vunpack.c.l.b16 %v814
    %v3640 = vunpack.c.h.b16 %v814
    %v3641 = vunpack.c.l.b16 %v815
    %v3642 = vunpack.c.h.b16 %v815
    %v3643 = vunpack.c.l.b16 %v816
    %v3644 = vunpack.c.h.b16 %v816
    %v3645 = vunpack.c.l.b16 %v817
    %v3646 = vunpack.c.h.b16 %v817
    %v3647 = vunpack.c.l.b16 %v818
    %v3648 = vunpack.c.h.b16 %v818
    %v3649 = vunpack.c.l.b16 %v819
    %v3650 = vunpack.c.h.b16 %v819
    %v3651 = vunpack.c.l.b16 %v820
    %v3652 = vunpack.c.h.b16 %v820
    %v3653 = vunpack.c.l.b16 %v821
    %v3654 = vunpack.c.h.b16 %v821
    %v3655 = vunpack.c.l.b16 %v822
    %v3656 = vunpack.c.h.b16 %v822
    %v3657 = vunpack.c.l.b16 %v823
    %v3658 = vunpack.c.h.b16 %v823
    %v3659 = vunpack.c.l.b16 %v824
    %v3660 = vunpack.c.h.b16 %v824
    %v3661 = vunpack.c.l.b16 %v825
    %v3662 = vunpack.c.h.b16 %v825
    %v3663 = vunpack.c.l.b16 %v826
    %v3664 = vunpack.c.h.b16 %v826
    %v3665 = vunpack.c.l.b16 %v827
    %v3666 = vunpack.c.h.b16 %v827
    %v3667 = vunpack.c.l.b16 %v828
    %v3668 = vunpack.c.h.b16 %v828
    %v3669 = vunpack.c.l.b16 %v829
    %v3670 = vunpack.c.h.b16 %v829
    %v3671 = vunpack.c.l.b16 %v830
    %v3672 = vunpack.c.h.b16 %v830
    %v3673 = vunpack.c.l.b16 %v831
    %v3674 = vunpack.c.h.b16 %v831
    %v3675 = vunpack.c.l.b16 %v832
    %v3676 = vunpack.c.h.b16 %v832
    %v3677 = vunpack.c.l.b16 %v833
    %v3678 = vunpack.c.h.b16 %v833
    %v3679 = vunpack.c.l.b16 %v834
    %v3680 = vunpack.c.h.b16 %v834
    %v3681 = vunpack.c.l.b16 %v835
    %v3682 = vunpack.c.h.b16 %v835
    %v3683 = vunpack.c.l.b16 %v836
    %v3684 = vunpack.c.h.b16 %v836
    %v3685 = vunpack.c.l.b16 %v837
    %v3686 = vunpack.c.h.b16 %v837
    %v3687 = vunpack.c.l.b16 %v838
    %v3688 = vunpack.c.h.b16 %v838
    %v3689 = vunpack.c.l.b16 %v839
    %v3690 = vunpack.c.h.b16 %v839
    %v3691 = vunpack.c.l.b16 %v840
    %v3692 = vunpack.c.h.b16 %v840
    %v3693 = vunpack.c.l.b16 %v841
    %v3694 = vunpack.c.h.b16 %v841
    %v3695 = vunpack.c.l.b16 %v842
    %v3696 = vunpack.c.h.b16 %v842
    %v3697 = vunpack.c.l.b16 %v843
    %v3698 = vunpack.c.h.b16 %v843
    %v3699 = vunpack.c.l.b16 %v844
    %v3700 = vunpack.c.h.b16 %v844
    %v3701 = vunpack.c.l.b16 %v845
    %v3702 = vunpack.c.h.b16 %v845
    %v3703 = vunpack.c.l.b16 %v846
    %v3704 = vunpack.c.h.b16 %v846
    %v3705 = vunpack.c.l.b16 %v847
    %v3706 = vunpack.c.h.b16 %v847
    %v3707 = vunpack.c.l.b16 %v848
    %v3708 = vunpack.c.h.b16 %v848
    %v3709 = vunpack.c.l.b16 %v849
    %v3710 = vunpack.c.h.b16 %v849
    %v3711 = vunpack.c.l.b16 %v850
    %v3712 = vunpack.c.h.b16 %v850
    %v3713 = vunpack.c.l.b16 %v851
    %v3714 = vunpack.c.h.b16 %v851
    %v3715 = vunpack.c.l.b16 %v852
    %v3716 = vunpack.c.h.b16 %v852
    %v3717 = vunpack.c.l.b16 %v853
    %v3718 = vunpack.c.h.b16 %v853
    %v3719 = vunpack.c.l.b16 %v854
    %v3720 = vunpack.c.h.b16 %v854
    %v3721 = vunpack.c.l.b16 %v855
    %v3722 = vunpack.c.h.b16 %v855
    %v3723 = vunpack.c.l.b16 %v856
    %v3724 = vunpack.c.h.b16 %v856
    %v3725 = vunpack.c.l.b16 %v857
    %v3726 = vunpack.c.h.b16 %v857
    %v3727 = vunpack.c.l.b16 %v858
    %v3728 = vunpack.c.h.b16 %v858
    %v3729 = vunpack.c.l.b16 %v859
    %v3730 = vunpack.c.h.b16 %v859
    %v3731 = vunpack.c.l.b16 %v860
    %v3732 = vunpack.c.h.b16 %v860
    %v3733 = vunpack.c.l.b16 %v861
    %v3734 = vunpack.c.h.b16 %v861
    %v3735 = vunpack.c.l.b16 %v862
    %v3736 = vunpack.c.h.b16 %v862
    %v3737 = vunpack.c.l.b16 %v863
    %v3738 = vunpack.c.h.b16 %v863
    %v3739 = vunpack.c.l.b16 %v864
    %v3740 = vunpack.c.h.b16 %v864
    %v3741 = vunpack.c.l.b16 %v865
    %v3742 = vunpack.c.h.b16 %v865
    %v3743 = vunpack.c.l.b16 %v866
    %v3744 = vunpack.c.h.b16 %v866
    %v3745 = vunpack.c.l.b16 %v867
    %v3746 = vunpack.c.h.b16 %v867
    %v3747 = vunpack.c.l.b16 %v868
    %v3748 = vunpack.c.h.b16 %v868
    %v3749 = vunpack.c.l.b16 %v869
    %v3750 = vunpack.c.h.b16 %v869
    %v3751 = vunpack.c.l.b16 %v870
    %v3752 = vunpack.c.h.b16 %v870
    %v3753 = vunpack.c.l.b16 %v871
    %v3754 = vunpack.c.h.b16 %v871
    %v3755 = vunpack.c.l.b16 %v872
    %v3756 = vunpack.c.h.b16 %v872
    %v3757 = vunpack.c.l.b16 %v873
    %v3758 = vunpack.c.h.b16 %v873
    %v3759 = vunpack.c.l.b16 %v874
    %v3760 = vunpack.c.h.b16 %v874
    %v3761 = vunpack.c.l.b16 %v875
    %v3762 = vunpack.c.h.b16 %v875
    %v3763 = vunpack.c.l.b16 %v876
    %v3764 = vunpack.c.h.b16 %v876
    %v3765 = vunpack.c.l.b16 %v877
    %v3766 = vunpack.c.h.b16 %v877
    %v3767 = vunpack.c.l.b16 %v878
    %v3768 = vunpack.c.h.b16 %v878
    %v3769 = vunpack.c.l.b16 %v879
    %v3770 = vunpack.c.h.b16 %v879
    %v3771 = vunpack.c.l.b16 %v880
    %v3772 = vunpack.c.h.b16 %v880
    %v3773 = vunpack.c.l.b16 %v881
    %v3774 = vunpack.c.h.b16 %v881
    %v3775 = vunpack.c.l.b16 %v882
    %v3776 = vunpack.c.h.b16 %v882
    %v3777 = vunpack.c.l.b16 %v883
    %v3778 = vunpack.c.h.b16 %v883
    %v3779 = vunpack.c.l.b16 %v884
    %v3780 = vunpack.c.h.b16 %v884
    %v3781 = vunpack.c.l.b16 %v885
    %v3782 = vunpack.c.h.b16 %v885
    %v3783 = vunpack.c.l.b16 %v886
    %v3784 = vunpack.c.h.b16 %v886
    %v3785 = vunpack.c.l.b16 %v887
    %v3786 = vunpack.c.h.b16 %v887
    %v3787 = vunpack.c.l.b16 %v888
    %v3788 = vunpack.c.h.b16 %v888
    %v3789 = vunpack.c.l.b16 %v889
    %v3790 = vunpack.c.h.b16 %v889
    %v3791 = vunpack.c.l.b16 %v890
    %v3792 = vunpack.c.h.b16 %v890
    %v3793 = vunpack.c.l.b16 %v891
    %v3794 = vunpack.c.h.b16 %v891
    %v3795 = vunpack.c.l.b16 %v892
    %v3796 = vunpack.c.h.b16 %v892
    %v3797 = vunpack.c.l.b16 %v893
    %v3798 = vunpack.c.h.b16 %v893
    %v3799 = vunpack.c.l.b16 %v894
    %v3800 = vunpack.c.h.b16 %v894
    %v3801 = vunpack.c.l.b16 %v895
    %v3802 = vunpack.c.h.b16 %v895
    %v3803 = vunpack.c.l.b16 %v896
    %v3804 = vunpack.c.h.b16 %v896
    %v3805 = vunpack.c.l.b16 %v897
    %v3806 = vunpack.c.h.b16 %v897
    %v3807 = vunpack.c.l.b16 %v898
    %v3808 = vunpack.c.h.b16 %v898
    %v3809 = vunpack.c.l.b16 %v899
    %v3810 = vunpack.c.h.b16 %v899
    %v3811 = vunpack.c.l.b16 %v900
    %v3812 = vunpack.c.h.b16 %v900
    %v3813 = vunpack.c.l.b16 %v901
    %v3814 = vunpack.c.h.b16 %v901
    %v3815 = vunpack.c.l.b16 %v902
    %v3816 = vunpack.c.h.b16 %v902
    %v3817 = vunpack.c.l.b16 %v903
    %v3818 = vunpack.c.h.b16 %v903
    %v3819 = vunpack.c.l.b16 %v904
    %v3820 = vunpack.c.h.b16 %v904
    %v3821 = vunpack.c.l.b16 %v905
    %v3822 = vunpack.c.h.b16 %v905
    %v3823 = vunpack.c.l.b16 %v906
    %v3824 = vunpack.c.h.b16 %v906
    %v3825 = vunpack.c.l.b16 %v907
    %v3826 = vunpack.c.h.b16 %v907
    %v3827 = vunpack.c.l.b16 %v908
    %v3828 = vunpack.c.h.b16 %v908
    %v3829 = vunpack.c.l.b16 %v909
    %v3830 = vunpack.c.h.b16 %v909
    %v3831 = vunpack.c.l.b16 %v910
    %v3832 = vunpack.c.h.b16 %v910
    %v3833 = vunpack.c.l.b16 %v911
    %v3834 = vunpack.c.h.b16 %v911
    %v3835 = vunpack.c.l.b16 %v912
    %v3836 = vunpack.c.h.b16 %v912
    %v3837 = vunpack.c.l.b16 %v913
    %v3838 = vunpack.c.h.b16 %v913
    %v3839 = vunpack.c.l.b16 %v914
    %v3840 = vunpack.c.h.b16 %v914
    %v3841 = vunpack.c.l.b16 %v915
    %v3842 = vunpack.c.h.b16 %v915
    %v3843 = vunpack.c.l.b16 %v916
    %v3844 = vunpack.c.h.b16 %v916
    %v3845 = vunpack.c.l.b16 %v917
    %v3846 = vunpack.c.h.b16 %v917
    %v3847 = vunpack.c.l.b16 %v918
    %v3848 = vunpack.c.h.b16 %v918
    %v3849 = vunpack.c.l.b16 %v919
    %v3850 = vunpack.c.h.b16 %v919
    %v3851 = vunpack.c.l.b16 %v920
    %v3852 = vunpack.c.h.b16 %v920
    %v3853 = vunpack.c.l.b16 %v921
    %v3854 = vunpack.c.h.b16 %v921
    %v3855 = vunpack.c.l.b16 %v922
    %v3856 = vunpack.c.h.b16 %v922
    %v3857 = vunpack.c.l.b16 %v923
    %v3858 = vunpack.c.h.b16 %v923
    %v3859 = vunpack.c.l.b16 %v924
    %v3860 = vunpack.c.h.b16 %v924
    %v3861 = vunpack.c.l.b16 %v925
    %v3862 = vunpack.c.h.b16 %v925
    %v3863 = vunpack.c.l.b16 %v926
    %v3864 = vunpack.c.h.b16 %v926
    %v3865 = vunpack.c.l.b16 %v927
    %v3866 = vunpack.c.h.b16 %v927
    %v3867 = vunpack.c.l.b16 %v928
    %v3868 = vunpack.c.h.b16 %v928
    %v3869 = vunpack.c.l.b16 %v929
    %v3870 = vunpack.c.h.b16 %v929
    %v3871 = vunpack.c.l.b16 %v930
    %v3872 = vunpack.c.h.b16 %v930
    %v3873 = vunpack.c.l.b16 %v931
    %v3874 = vunpack.c.h.b16 %v931
    %v3875 = vunpack.c.l.b16 %v932
    %v3876 = vunpack.c.h.b16 %v932
    %v3877 = vunpack.c.l.b16 %v933
    %v3878 = vunpack.c.h.b16 %v933
    %v3879 = vunpack.c.l.b16 %v934
    %v3880 = vunpack.c.h.b16 %v934
    %v3881 = vunpack.c.l.b16 %v935
    %v3882 = vunpack.c.h.b16 %v935
    %v3883 = vunpack.c.l.b16 %v936
    %v3884 = vunpack.c.h.b16 %v936
    %v3885 = vunpack.c.l.b16 %v937
    %v3886 = vunpack.c.h.b16 %v937
    %v3887 = vunpack.c.l.b16 %v938
    %v3888 = vunpack.c.h.b16 %v938
    %v3889 = vunpack.c.l.b16 %v939
    %v3890 = vunpack.c.h.b16 %v939
    %v3891 = vunpack.c.l.b16 %v940
    %v3892 = vunpack.c.h.b16 %v940
    %v3893 = vunpack.c.l.b16 %v941
    %v3894 = vunpack.c.h.b16 %v941
    %v3895 = vunpack.c.l.b16 %v942
    %v3896 = vunpack.c.h.b16 %v942
    %v3897 = vunpack.c.l.b16 %v943
    %v3898 = vunpack.c.h.b16 %v943
    %v3899 = vunpack.c.l.b16 %v944
    %v3900 = vunpack.c.h.b16 %v944
    %v3901 = vunpack.c.l.b16 %v945
    %v3902 = vunpack.c.h.b16 %v945
    %v3903 = vunpack.c.l.b16 %v946
    %v3904 = vunpack.c.h.b16 %v946
    %v3905 = vunpack.c.l.b16 %v947
    %v3906 = vunpack.c.h.b16 %v947
    %v3907 = vunpack.c.l.b16 %v948
    %v3908 = vunpack.c.h.b16 %v948
    %v3909 = vunpack.c.l.b16 %v949
    %v3910 = vunpack.c.h.b16 %v949
    %v3911 = vunpack.c.l.b16 %v950
    %v3912 = vunpack.c.h.b16 %v950
    %v3913 = vunpack.c.l.b16 %v951
    %v3914 = vunpack.c.h.b16 %v951
    %v3915 = vunpack.c.l.b16 %v952
    %v3916 = vunpack.c.h.b16 %v952
    %v3917 = vunpack.c.l.b16 %v953
    %v3918 = vunpack.c.h.b16 %v953
    %v3919 = vunpack.c.l.b16 %v954
    %v3920 = vunpack.c.h.b16 %v954
    %v3921 = vunpack.c.l.b16 %v955
    %v3922 = vunpack.c.h.b16 %v955
    %v3923 = vunpack.c.l.b16 %v956
    %v3924 = vunpack.c.h.b16 %v956
    %v3925 = vunpack.c.l.b16 %v957
    %v3926 = vunpack.c.h.b16 %v957
    %v3927 = vunpack.c.l.b16 %v958
    %v3928 = vunpack.c.h.b16 %v958
    %v3929 = vunpack.c.l.b16 %v959
    %v3930 = vunpack.c.h.b16 %v959
    %v3931 = vunpack.c.l.b16 %v960
    %v3932 = vunpack.c.h.b16 %v960
    %v3933 = vunpack.c.l.b16 %v961
    %v3934 = vunpack.c.h.b16 %v961
    %v3935 = vunpack.c.l.b16 %v962
    %v3936 = vunpack.c.h.b16 %v962
    %v3937 = vunpack.c.l.b16 %v963
    %v3938 = vunpack.c.h.b16 %v963
    %v3939 = vunpack.c.l.b16 %v964
    %v3940 = vunpack.c.h.b16 %v964
    %v3941 = vunpack.c.l.b16 %v965
    %v3942 = vunpack.c.h.b16 %v965
    %v3943 = vunpack.c.l.b16 %v966
    %v3944 = vunpack.c.h.b16 %v966
    %v3945 = vunpack.c.l.b16 %v967
    %v3946 = vunpack.c.h.b16 %v967
    %v3947 = vunpack.c.l.b16 %v968
    %v3948 = vunpack.c.h.b16 %v968
    %v3949 = vunpack.c.l.b16 %v969
    %v3950 = vunpack.c.h.b16 %v969
    %v3951 = vunpack.c.l.b16 %v970
    %v3952 = vunpack.c.h.b16 %v970
    %v3953 = vunpack.c.l.b16 %v971
    %v3954 = vunpack.c.h.b16 %v971
    %v3955 = vunpack.c.l.b16 %v972
    %v3956 = vunpack.c.h.b16 %v972
    %v3957 = vunpack.c.l.b16 %v973
    %v3958 = vunpack.c.h.b16 %v973
    %v3959 = vunpack.c.l.b16 %v974
    %v3960 = vunpack.c.h.b16 %v974
    %v3961 = vunpack.c.l.b16 %v975
    %v3962 = vunpack.c.h.b16 %v975
    %v3963 = vunpack.c.l.b16 %v976
    %v3964 = vunpack.c.h.b16 %v976
    %v3965 = vunpack.c.l.b16 %v977
    %v3966 = vunpack.c.h.b16 %v977
    %v3967 = vunpack.c.l.b16 %v978
    %v3968 = vunpack.c.h.b16 %v978
    %v3969 = vunpack.c.l.b16 %v979
    %v3970 = vunpack.c.h.b16 %v979
    %v3971 = vunpack.c.l.b16 %v980
    %v3972 = vunpack.c.h.b16 %v980
    %v3973 = vunpack.c.l.b16 %v981
    %v3974 = vunpack.c.h.b16 %v981
    %v3975 = vunpack.c.l.b16 %v982
    %v3976 = vunpack.c.h.b16 %v982
    %v3977 = vunpack.c.l.b16 %v983
    %v3978 = vunpack.c.h.b16 %v983
    %v3979 = vunpack.c.l.b16 %v984
    %v3980 = vunpack.c.h.b16 %v984
    %v3981 = vunpack.c.l.b16 %v985
    %v3982 = vunpack.c.h.b16 %v985
    %v3983 = vunpack.c.l.b16 %v986
    %v3984 = vunpack.c.h.b16 %v986
    %v3985 = vunpack.c.l.b16 %v987
    %v3986 = vunpack.c.h.b16 %v987
    %v3987 = vunpack.c.l.b16 %v988
    %v3988 = vunpack.c.h.b16 %v988
    %v3989 = vunpack.c.l.b16 %v989
    %v3990 = vunpack.c.h.b16 %v989
    %v3991 = vunpack.c.l.b16 %v990
    %v3992 = vunpack.c.h.b16 %v990
    %v3993 = vunpack.c.l.b16 %v991
    %v3994 = vunpack.c.h.b16 %v991
    %v3995 = vunpack.c.l.b16 %v992
    %v3996 = vunpack.c.h.b16 %v992
    %v3997 = vunpack.c.l.b16 %v993
    %v3998 = vunpack.c.h.b16 %v993
    %v3999 = vunpack.c.l.b16 %v994
    %v4000 = vunpack.c.h.b16 %v994
    %v4001 = vunpack.c.l.b16 %v995
    %v4002 = vunpack.c.h.b16 %v995
    %v4003 = vunpack.c.l.b16 %v996
    %v4004 = vunpack.c.h.b16 %v996
    %v4005 = vunpack.c.l.b16 %v997
    %v4006 = vunpack.c.h.b16 %v997
    %v4007 = vunpack.c.l.b16 %v998
    %v4008 = vunpack.c.h.b16 %v998
    %v4009 = vunpack.c.l.b16 %v999
    %v4010 = vunpack.c.h.b16 %v999
    %v4011 = vunpack.c.l.b16 %v1000
    %v4012 = vunpack.c.h.b16 %v1000
    %v4013 = vunpack.c.l.b16 %v1001
    %v4014 = vunpack.c.h.b16 %v1001
    %v4015 = vunpack.c.l.b16 %v1002
    %v4016 = vunpack.c.h.b16 %v1002
    %v4017 = vunpack.c.l.b16 %v1003
    %v4018 = vunpack.c.h.b16 %v1003
    %v4019 = vunpack.c.l.b16 %v1004
    %v4020 = vunpack.c.h.b16 %v1004
    %v4021 = vunpack.c.l.b16 %v1005
    %v4022 = vunpack.c.h.b16 %v1005
    %v4023 = vunpack.c.l.b16 %v1006
    %v4024 = vunpack.c.h.b16 %v1006
    %v4025 = vunpack.c.l.b16 %v1007
    %v4026 = vunpack.c.h.b16 %v1007
    %v4027 = vunpack.c.l.b16 %v1008
    %v4028 = vunpack.c.h.b16 %v1008
    %v4029 = vunpack.c.l.b16 %v1009
    %v4030 = vunpack.c.h.b16 %v1009
    %v4031 = vunpack.c.l.b16 %v1010
    %v4032 = vunpack.c.h.b16 %v1010
    %v4033 = vunpack.c.l.b16 %v1011
    %v4034 = vunpack.c.h.b16 %v1011
    %v4035 = vunpack.c.l.b16 %v1012
    %v4036 = vunpack.c.h.b16 %v1012
    %v4037 = vunpack.c.l.b16 %v1013
    %v4038 = vunpack.c.h.b16 %v1013
    %v4039 = vunpack.c.l.b16 %v1014
    %v4040 = vunpack.c.h.b16 %v1014
    %v4041 = vunpack.c.l.b16 %v1015
    %v4042 = vunpack.c.h.b16 %v1015
    %v4043 = vunpack.c.l.b16 %v1016
    %v4044 = vunpack.c.h.b16 %v1016
    %v4045 = vunpack.c.l.b16 %v1017
    %v4046 = vunpack.c.h.b16 %v1017
    %v4047 = vunpack.c.l.b16 %v1018
    %v4048 = vunpack.c.h.b16 %v1018
    %v4049 = vunpack.c.l.b16 %v1019
    %v4050 = vunpack.c.h.b16 %v1019
    %v4051 = vunpack.c.l.b16 %v1020
    %v4052 = vunpack.c.h.b16 %v1020
    %v4053 = vunpack.c.l.b16 %v1021
    %v4054 = vunpack.c.h.b16 %v1021
    %v4055 = vunpack.c.l.b16 %v1022
    %v4056 = vunpack.c.h.b16 %v1022
    %v4057 = vunpack.c.l.b16 %v1023
    %v4058 = vunpack.c.h.b16 %v1023
    %v4059 = vunpack.c.l.b16 %v1024
    %v4060 = vunpack.c.h.b16 %v1024
    %v4061 = vunpack.c.l.b16 %v1025
    %v4062 = vunpack.c.h.b16 %v1025
    %v4063 = vunpack.c.l.b16 %v1026
    %v4064 = vunpack.c.h.b16 %v1026
    %v4065 = vunpack.c.l.b16 %v1027
    %v4066 = vunpack.c.h.b16 %v1027
    %v4067 = vunpack.c.l.b16 %v1028
    %v4068 = vunpack.c.h.b16 %v1028
    %v4069 = vunpack.c.l.b16 %v1029
    %v4070 = vunpack.c.h.b16 %v1029
    %v4071 = vunpack.c.l.b16 %v1030
    %v4072 = vunpack.c.h.b16 %v1030
    %v4073 = vunpack.c.l.b16 %v1031
    %v4074 = vunpack.c.h.b16 %v1031
    %v4075 = vunpack.c.l.b16 %v1032
    %v4076 = vunpack.c.h.b16 %v1032
    %v4077 = vunpack.c.l.b16 %v1033
    %v4078 = vunpack.c.h.b16 %v1033
    %v4079 = vunpack.c.l.b16 %v1034
    %v4080 = vunpack.c.h.b16 %v1034
    %v4081 = vpack.c.b16 %v2141, %v2137
    %v4082 = vpack.c.b16 %v2142, %v2138
    %v4083 = vpack.c.b16 %v2143, %v2139
    %v4084 = vpack.c.b16 %v2144, %v2140
    %v4085 = vpack.c.b16 %v2149, %v2145
    %v4086 = vpack.c.b16 %v2150, %v2146
    %v4087 = vpack.c.b16 %v2151, %v2147
    %v4088 = vpack.c.b16 %v2152, %v2148
    %v4089 = vpack.c.b16 %v2157, %v2153
    %v4090 = vpack.c.b16 %v2158, %v2154
    %v4091 = vpack.c.b16 %v2159, %v2155
    %v4092 = vpack.c.b16 %v2160, %v2156
    %v4093 = vpack.c.b16 %v2165, %v2161
    %v4094 = vpack.c.b16 %v2166, %v2162
    %v4095 = vpack.c.b16 %v2167, %v2163
    %v4096 = vpack.c.b16 %v2168, %v2164
    %v4097 = vpack.c.b16 %v2173, %v2169
    %v4098 = vpack.c.b16 %v2174, %v2170
    %v4099 = vpack.c.b16 %v2175, %v2171
    %v4100 = vpack.c.b16 %v2176, %v2172
    %v4101 = vpack.c.b16 %v2181, %v2177
    %v4102 = vpack.c.b16 %v2182, %v2178
    %v4103 = vpack.c.b16 %v2183, %v2179
    %v4104 = vpack.c.b16 %v2184, %v2180
    %v4105 = vpack.c.b16 %v2189, %v2185
    %v4106 = vpack.c.b16 %v2190, %v2186
    %v4107 = vpack.c.b16 %v2191, %v2187
    %v4108 = vpack.c.b16 %v2192, %v2188
    %v4109 = vpack.c.b16 %v2197, %v2193
    %v4110 = vpack.c.b16 %v2198, %v2194
    %v4111 = vpack.c.b16 %v2199, %v2195
    %v4112 = vpack.c.b16 %v2200, %v2196
    %v4113 = vpack.c.b16 %v2205, %v2201
    %v4114 = vpack.c.b16 %v2206, %v2202
    %v4115 = vpack.c.b16 %v2207, %v2203
    %v4116 = vpack.c.b16 %v2208, %v2204
    %v4117 = vpack.c.b16 %v2213, %v2209
    %v4118 = vpack.c.b16 %v2214, %v2210
    %v4119 = vpack.c.b16 %v2215, %v2211
    %v4120 = vpack.c.b16 %v2216, %v2212
    %v4121 = vpack.c.b16 %v2221, %v2217
    %v4122 = vpack.c.b16 %v2222, %v2218
    %v4123 = vpack.c.b16 %v2223, %v2219
    %v4124 = vpack.c.b16 %v2224, %v2220
    %v4125 = vpack.c.b16 %v2229, %v2225
    %v4126 = vpack.c.b16 %v2230, %v2226
    %v4127 = vpack.c.b16 %v2231, %v2227
    %v4128 = vpack.c.b16 %v2232, %v2228
    %v4129 = vpack.c.b16 %v2237, %v2233
    %v4130 = vpack.c.b16 %v2238, %v2234
    %v4131 = vpack.c.b16 %v2239, %v2235
    %v4132 = vpack.c.b16 %v2240, %v2236
    %v4133 = vpack.c.b16 %v2245, %v2241
    %v4134 = vpack.c.b16 %v2246, %v2242
    %v4135 = vpack.c.b16 %v2247, %v2243
    %v4136 = vpack.c.b16 %v2248, %v2244
    %v4137 = vpack.c.b16 %v2253, %v2249
    %v4138 = vpack.c.b16 %v2254, %v2250
    %v4139 = vpack.c.b16 %v2255, %v2251
    %v4140 = vpack.c.b16 %v2256, %v2252
    %v4141 = vpack.c.b16 %v2261, %v2257
    %v4142 = vpack.c.b16 %v2262, %v2258
    %v4143 = vpack.c.b16 %v2263, %v2259
    %v4144 = vpack.c.b16 %v2264, %v2260
    %v4145 = vpack.c.b16 %v2269, %v2265
    %v4146 = vpack.c.b16 %v2270, %v2266
    %v4147 = vpack.c.b16 %v2271, %v2267
    %v4148 = vpack.c.b16 %v2272, %v2268
    %v4149 = vpack.c.b16 %v2277, %v2273
    %v4150 = vpack.c.b16 %v2278, %v2274
    %v4151 = vpack.c.b16 %v2279, %v2275
    %v4152 = vpack.c.b16 %v2280, %v2276
    %v4153 = vpack.c.b16 %v2285, %v2281
    %v4154 = vpack.c.b16 %v2286, %v2282
    %v4155 = vpack.c.b16 %v2287, %v2283
    %v4156 = vpack.c.b16 %v2288, %v2284
    %v4157 = vpack.c.b16 %v2293, %v2289
    %v4158 = vpack.c.b16 %v2294, %v2290
    %v4159 = vpack.c.b16 %v2295, %v2291
    %v4160 = vpack.c.b16 %v2296, %v2292
    %v4161 = vpack.c.b16 %v2301, %v2297
    %v4162 = vpack.c.b16 %v2302, %v2298
    %v4163 = vpack.c.b16 %v2303, %v2299
    %v4164 = vpack.c.b16 %v2304, %v2300
    %v4165 = vpack.c.b16 %v2309, %v2305
    %v4166 = vpack.c.b16 %v2310, %v2306
    %v4167 = vpack.c.b16 %v2311, %v2307
    %v4168 = vpack.c.b16 %v2312, %v2308
    %v4169 = vpack.c.b16 %v2317, %v2313
    %v4170 = vpack.c.b16 %v2318, %v2314
    %v4171 = vpack.c.b16 %v2319, %v2315
    %v4172 = vpack.c.b16 %v2320, %v2316
    %v4173 = vpack.c.b16 %v2325, %v2321
    %v4174 = vpack.c.b16 %v2326, %v2322
    %v4175 = vpack.c.b16 %v2327, %v2323
    %v4176 = vpack.c.b16 %v2328, %v2324
    %v4177 = vpack.c.b16 %v2333, %v2329
    %v4178 = vpack.c.b16 %v2334, %v2330
    %v4179 = vpack.c.b16 %v2335, %v2331
    %v4180 = vpack.c.b16 %v2336, %v2332
    %v4181 = vpack.c.b16 %v2341, %v2337
    %v4182 = vpack.c.b16 %v2342, %v2338
    %v4183 = vpack.c.b16 %v2343, %v2339
    %v4184 = vpack.c.b16 %v2344, %v2340
    %v4185 = vpack.c.b16 %v2349, %v2345
    %v4186 = vpack.c.b16 %v2350, %v2346
    %v4187 = vpack.c.b16 %v2351, %v2347
    %v4188 = vpack.c.b16 %v2352, %v2348
    %v4189 = vpack.c.b16 %v2357, %v2353
    %v4190 = vpack.c.b16 %v2358, %v2354
    %v4191 = vpack.c.b16 %v2359, %v2355
    %v4192 = vpack.c.b16 %v2360, %v2356
    %v4193 = vpack.c.b16 %v2365, %v2361
    %v4194 = vpack.c.b16 %v2366, %v2362
    %v4195 = vpack.c.b16 %v2367, %v2363
    %v4196 = vpack.c.b16 %v2368, %v2364
    %v4197 = vpack.c.b16 %v2373, %v2369
    %v4198 = vpack.c.b16 %v2374, %v2370
    %v4199 = vpack.c.b16 %v2375, %v2371
    %v4200 = vpack.c.b16 %v2376, %v2372
    %v4201 = vpack.c.b16 %v2381, %v2377
    %v4202 = vpack.c.b16 %v2382, %v2378
    %v4203 = vpack.c.b16 %v2383, %v2379
    %v4204 = vpack.c.b16 %v2384, %v2380
    %v4205 = vpack.c.b16 %v2389, %v2385
    %v4206 = vpack.c.b16 %v2390, %v2386
    %v4207 = vpack.c.b16 %v2391, %v2387
    %v4208 = vpack.c.b16 %v2392, %v2388
    %v4209 = vpack.c.b16 %v2397, %v2393
    %v4210 = vpack.c.b16 %v2398, %v2394
    %v4211 = vpack.c.b16 %v2399, %v2395
    %v4212 = vpack.c.b16 %v2400, %v2396
    %v4213 = vpack.c.b16 %v2405, %v2401
    %v4214 = vpack.c.b16 %v2406, %v2402
    %v4215 = vpack.c.b16 %v2407, %v2403
    %v4216 = vpack.c.b16 %v2408, %v2404
    %v4217 = vpack.c.b16 %v2413, %v2409
    %v4218 = vpack.c.b16 %v2414, %v2410
    %v4219 = vpack.c.b16 %v2415, %v2411
    %v4220 = vpack.c.b16 %v2416, %v2412
    %v4221 = vpack.c.b16 %v2421, %v2417
    %v4222 = vpack.c.b16 %v2422, %v2418
    %v4223 = vpack.c.b16 %v2423, %v2419
    %v4224 = vpack.c.b16 %v2424, %v2420
    %v4225 = vpack.c.b16 %v2429, %v2425
    %v4226 = vpack.c.b16 %v2430, %v2426
    %v4227 = vpack.c.b16 %v2431, %v2427
    %v4228 = vpack.c.b16 %v2432, %v2428
    %v4229 = vpack.c.b16 %v2437, %v2433
    %v4230 = vpack.c.b16 %v2438, %v2434
    %v4231 = vpack.c.b16 %v2439, %v2435
    %v4232 = vpack.c.b16 %v2440, %v2436
    %v4233 = vpack.c.b16 %v2445, %v2441
    %v4234 = vpack.c.b16 %v2446, %v2442
    %v4235 = vpack.c.b16 %v2447, %v2443
    %v4236 = vpack.c.b16 %v2448, %v2444
    %v4237 = vpack.c.b16 %v2453, %v2449
    %v4238 = vpack.c.b16 %v2454, %v2450
    %v4239 = vpack.c.b16 %v2455, %v2451
    %v4240 = vpack.c.b16 %v2456, %v2452
    %v4241 = vpack.c.b16 %v2461, %v2457
    %v4242 = vpack.c.b16 %v2462, %v2458
    %v4243 = vpack.c.b16 %v2463, %v2459
    %v4244 = vpack.c.b16 %v2464, %v2460
    %v4245 = vpack.c.b16 %v2469, %v2465
    %v4246 = vpack.c.b16 %v2470, %v2466
    %v4247 = vpack.c.b16 %v2471, %v2467
    %v4248 = vpack.c.b16 %v2472, %v2468
    %v4249 = vpack.c.b16 %v2477, %v2473
    %v4250 = vpack.c.b16 %v2478, %v2474
    %v4251 = vpack.c.b16 %v2479, %v2475
    %v4252 = vpack.c.b16 %v2480, %v2476
    %v4253 = vpack.c.b16 %v2485, %v2481
    %v4254 = vpack.c.b16 %v2486, %v2482
    %v4255 = vpack.c.b16 %v2487, %v2483
    %v4256 = vpack.c.b16 %v2488, %v2484
    %v4257 = vpack.c.b16 %v2493, %v2489
    %v4258 = vpack.c.b16 %v2494, %v2490
    %v4259 = vpack.c.b16 %v2495, %v2491
    %v4260 = vpack.c.b16 %v2496, %v2492
    %v4261 = vpack.c.b16 %v2501, %v2497
    %v4262 = vpack.c.b16 %v2502, %v2498
    %v4263 = vpack.c.b16 %v2503, %v2499
    %v4264 = vpack.c.b16 %v2504, %v2500
    %v4265 = vpack.c.b16 %v2509, %v2505
    %v4266 = vpack.c.b16 %v2510, %v2506
    %v4267 = vpack.c.b16 %v2511, %v2507
    %v4268 = vpack.c.b16 %v2512, %v2508
    %v4269 = vpack.c.b16 %v2517, %v2513
    %v4270 = vpack.c.b16 %v2518, %v2514
    %v4271 = vpack.c.b16 %v2519, %v2515
    %v4272 = vpack.c.b16 %v2520, %v2516
    %v4273 = vpack.c.b16 %v2525, %v2521
    %v4274 = vpack.c.b16 %v2526, %v2522
    %v4275 = vpack.c.b16 %v2527, %v2523
    %v4276 = vpack.c.b16 %v2528, %v2524
    %v4277 = vpack.c.b16 %v2533, %v2529
    %v4278 = vpack.c.b16 %v2534, %v2530
    %v4279 = vpack.c.b16 %v2535, %v2531
    %v4280 = vpack.c.b16 %v2536, %v2532
    %v4281 = vpack.c.b16 %v2541, %v2537
    %v4282 = vpack.c.b16 %v2542, %v2538
    %v4283 = vpack.c.b16 %v2543, %v2539
    %v4284 = vpack.c.b16 %v2544, %v2540
    %v4285 = vpack.c.b16 %v2549, %v2545
    %v4286 = vpack.c.b16 %v2550, %v2546
    %v4287 = vpack.c.b16 %v2551, %v2547
    %v4288 = vpack.c.b16 %v2552, %v2548
    %v4289 = vpack.c.b16 %v2557, %v2553
    %v4290 = vpack.c.b16 %v2558, %v2554
    %v4291 = vpack.c.b16 %v2559, %v2555
    %v4292 = vpack.c.b16 %v2560, %v2556
    %v4293 = vpack.c.b16 %v2565, %v2561
    %v4294 = vpack.c.b16 %v2566, %v2562
    %v4295 = vpack.c.b16 %v2567, %v2563
    %v4296 = vpack.c.b16 %v2568, %v2564
    %v4297 = vpack.c.b16 %v2573, %v2569
    %v4298 = vpack.c.b16 %v2574, %v2570
    %v4299 = vpack.c.b16 %v2575, %v2571
    %v4300 = vpack.c.b16 %v2576, %v2572
    %v4301 = vpack.c.b16 %v2581, %v2577
    %v4302 = vpack.c.b16 %v2582, %v2578
    %v4303 = vpack.c.b16 %v2583, %v2579
    %v4304 = vpack.c.b16 %v2584, %v2580
    %v4305 = vpack.c.b16 %v2589, %v2585
    %v4306 = vpack.c.b16 %v2590, %v2586
    %v4307 = vpack.c.b16 %v2591, %v2587
    %v4308 = vpack.c.b16 %v2592, %v2588
    %v4309 = vpack.c.b16 %v2597, %v2593
    %v4310 = vpack.c.b16 %v2598, %v2594
    %v4311 = vpack.c.b16 %v2599, %v2595
    %v4312 = vpack.c.b16 %v2600, %v2596
    %v4313 = vpack.c.b16 %v2605, %v2601
    %v4314 = vpack.c.b16 %v2606, %v2602
    %v4315 = vpack.c.b16 %v2607, %v2603
    %v4316 = vpack.c.b16 %v2608, %v2604
    %v4317 = vpack.c.b16 %v2613, %v2609
    %v4318 = vpack.c.b16 %v2614, %v2610
    %v4319 = vpack.c.b16 %v2615, %v2611
    %v4320 = vpack.c.b16 %v2616, %v2612
    %v4321 = vpack.c.b16 %v2621, %v2617
    %v4322 = vpack.c.b16 %v2622, %v2618
    %v4323 = vpack.c.b16 %v2623, %v2619
    %v4324 = vpack.c.b16 %v2624, %v2620
    %v4325 = vpack.c.b16 %v2629, %v2625
    %v4326 = vpack.c.b16 %v2630, %v2626
    %v4327 = vpack.c.b16 %v2631, %v2627
    %v4328 = vpack.c.b16 %v2632, %v2628
    %v4329 = vpack.c.b16 %v2637, %v2633
    %v4330 = vpack.c.b16 %v2638, %v2634
    %v4331 = vpack.c.b16 %v2639, %v2635
    %v4332 = vpack.c.b16 %v2640, %v2636
    %v4333 = vpack.c.b16 %v2645, %v2641
    %v4334 = vpack.c.b16 %v2646, %v2642
    %v4335 = vpack.c.b16 %v2647, %v2643
    %v4336 = vpack.c.b16 %v2648, %v2644
    %v4337 = vpack.c.b16 %v2653, %v2649
    %v4338 = vpack.c.b16 %v2654, %v2650
    %v4339 = vpack.c.b16 %v2655, %v2651
    %v4340 = vpack.c.b16 %v2656, %v2652
    %v4341 = vpack.c.b16 %v2661, %v2657
    %v4342 = vpack.c.b16 %v2662, %v2658
    %v4343 = vpack.c.b16 %v2663, %v2659
    %v4344 = vpack.c.b16 %v2664, %v2660
    %v4345 = vpack.c.b16 %v2669, %v2665
    %v4346 = vpack.c.b16 %v2670, %v2666
    %v4347 = vpack.c.b16 %v2671, %v2667
    %v4348 = vpack.c.b16 %v2672, %v2668
    %v4349 = vpack.c.b16 %v2677, %v2673
    %v4350 = vpack.c.b16 %v2678, %v2674
    %v4351 = vpack.c.b16 %v2679, %v2675
    %v4352 = vpack.c.b16 %v2680, %v2676
    %v4353 = vpack.c.b16 %v2685, %v2681
    %v4354 = vpack.c.b16 %v2686, %v2682
    %v4355 = vpack.c.b16 %v2687, %v2683
    %v4356 = vpack.c.b16 %v2688, %v2684
    %v4357 = vpack.c.b16 %v2693, %v2689
    %v4358 = vpack.c.b16 %v2694, %v2690
    %v4359 = vpack.c.b16 %v2695, %v2691
    %v4360 = vpack.c.b16 %v2696, %v2692
    %v4361 = vpack.c.b16 %v2701, %v2697
    %v4362 = vpack.c.b16 %v2702, %v2698
    %v4363 = vpack.c.b16 %v2703, %v2699
    %v4364 = vpack.c.b16 %v2704, %v2700
    %v4365 = vpack.c.b16 %v2709, %v2705
    %v4366 = vpack.c.b16 %v2710, %v2706
    %v4367 = vpack.c.b16 %v2711, %v2707
    %v4368 = vpack.c.b16 %v2712, %v2708
    %v4369 = vpack.c.b16 %v2717, %v2713
    %v4370 = vpack.c.b16 %v2718, %v2714
    %v4371 = vpack.c.b16 %v2719, %v2715
    %v4372 = vpack.c.b16 %v2720, %v2716
    %v4373 = vpack.c.b16 %v2725, %v2721
    %v4374 = vpack.c.b16 %v2726, %v2722
    %v4375 = vpack.c.b16 %v2727, %v2723
    %v4376 = vpack.c.b16 %v2728, %v2724
    %v4377 = vpack.c.b16 %v2733, %v2729
    %v4378 = vpack.c.b16 %v2734, %v2730
    %v4379 = vpack.c.b16 %v2735, %v2731
    %v4380 = vpack.c.b16 %v2736, %v2732
    %v4381 = vpack.c.b16 %v2741, %v2737
    %v4382 = vpack.c.b16 %v2742, %v2738
    %v4383 = vpack.c.b16 %v2743, %v2739
    %v4384 = vpack.c.b16 %v2744, %v2740
    %v4385 = vpack.c.b16 %v2749, %v2745
    %v4386 = vpack.c.b16 %v2750, %v2746
    %v4387 = vpack.c.b16 %v2751, %v2747
    %v4388 = vpack.c.b16 %v2752, %v2748
    %v4389 = vpack.c.b16 %v2757, %v2753
    %v4390 = vpack.c.b16 %v2758, %v2754
    %v4391 = vpack.c.b16 %v2759, %v2755
    %v4392 = vpack.c.b16 %v2760, %v2756
    %v4393 = vpack.c.b16 %v2765, %v2761
    %v4394 = vpack.c.b16 %v2766, %v2762
    %v4395 = vpack.c.b16 %v2767, %v2763
    %v4396 = vpack.c.b16 %v2768, %v2764
    %v4397 = vpack.c.b16 %v2773, %v2769
    %v4398 = vpack.c.b16 %v2774, %v2770
    %v4399 = vpack.c.b16 %v2775, %v2771
    %v4400 = vpack.c.b16 %v2776, %v2772
    %v4401 = vpack.c.b16 %v2781, %v2777
    %v4402 = vpack.c.b16 %v2782, %v2778
    %v4403 = vpack.c.b16 %v2783, %v2779
    %v4404 = vpack.c.b16 %v2784, %v2780
    %v4405 = vpack.c.b16 %v2789, %v2785
    %v4406 = vpack.c.b16 %v2790, %v2786
    %v4407 = vpack.c.b16 %v2791, %v2787
    %v4408 = vpack.c.b16 %v2792, %v2788
    %v4409 = vpack.c.b16 %v2797, %v2793
    %v4410 = vpack.c.b16 %v2798, %v2794
    %v4411 = vpack.c.b16 %v2799, %v2795
    %v4412 = vpack.c.b16 %v2800, %v2796
    %v4413 = vpack.c.b16 %v2805, %v2801
    %v4414 = vpack.c.b16 %v2806, %v2802
    %v4415 = vpack.c.b16 %v2807, %v2803
    %v4416 = vpack.c.b16 %v2808, %v2804
    %v4417 = vpack.c.b16 %v2813, %v2809
    %v4418 = vpack.c.b16 %v2814, %v2810
    %v4419 = vpack.c.b16 %v2815, %v2811
    %v4420 = vpack.c.b16 %v2816, %v2812
    %v4421 = vpack.c.b16 %v2821, %v2817
    %v4422 = vpack.c.b16 %v2822, %v2818
    %v4423 = vpack.c.b16 %v2823, %v2819
    %v4424 = vpack.c.b16 %v2824, %v2820
    %v4425 = vpack.c.b16 %v2829, %v2825
    %v4426 = vpack.c.b16 %v2830, %v2826
    %v4427 = vpack.c.b16 %v2831, %v2827
    %v4428 = vpack.c.b16 %v2832, %v2828
    %v4429 = vpack.c.b16 %v2837, %v2833
    %v4430 = vpack.c.b16 %v2838, %v2834
    %v4431 = vpack.c.b16 %v2839, %v2835
    %v4432 = vpack.c.b16 %v2840, %v2836
    %v4433 = vpack.c.b16 %v2845, %v2841
    %v4434 = vpack.c.b16 %v2846, %v2842
    %v4435 = vpack.c.b16 %v2847, %v2843
    %v4436 = vpack.c.b16 %v2848, %v2844
    %v4437 = vpack.c.b16 %v2853, %v2849
    %v4438 = vpack.c.b16 %v2854, %v2850
    %v4439 = vpack.c.b16 %v2855, %v2851
    %v4440 = vpack.c.b16 %v2856, %v2852
    %v4441 = vpack.c.b16 %v2861, %v2857
    %v4442 = vpack.c.b16 %v2862, %v2858
    %v4443 = vpack.c.b16 %v2863, %v2859
    %v4444 = vpack.c.b16 %v2864, %v2860
    %v4445 = vpack.c.b16 %v2869, %v2865
    %v4446 = vpack.c.b16 %v2870, %v2866
    %v4447 = vpack.c.b16 %v2871, %v2867
    %v4448 = vpack.c.b16 %v2872, %v2868
    %v4449 = vpack.c.b16 %v2877, %v2873
    %v4450 = vpack.c.b16 %v2878, %v2874
    %v4451 = vpack.c.b16 %v2879, %v2875
    %v4452 = vpack.c.b16 %v2880, %v2876
    %v4453 = vpack.c.b16 %v2885, %v2881
    %v4454 = vpack.c.b16 %v2886, %v2882
    %v4455 = vpack.c.b16 %v2887, %v2883
    %v4456 = vpack.c.b16 %v2888, %v2884
    %v4457 = vpack.c.b16 %v2893, %v2889
    %v4458 = vpack.c.b16 %v2894, %v2890
    %v4459 = vpack.c.b16 %v2895, %v2891
    %v4460 = vpack.c.b16 %v2896, %v2892
    %v4461 = vpack.c.b16 %v2901, %v2897
    %v4462 = vpack.c.b16 %v2902, %v2898
    %v4463 = vpack.c.b16 %v2903, %v2899
    %v4464 = vpack.c.b16 %v2904, %v2900
    %v4465 = vpack.c.b16 %v2909, %v2905
    %v4466 = vpack.c.b16 %v2910, %v2906
    %v4467 = vpack.c.b16 %v2911, %v2907
    %v4468 = vpack.c.b16 %v2912, %v2908
    %v4469 = vpack.c.b16 %v2917, %v2913
    %v4470 = vpack.c.b16 %v2918, %v2914
    %v4471 = vpack.c.b16 %v2919, %v2915
    %v4472 = vpack.c.b16 %v2920, %v2916
    %v4473 = vpack.c.b16 %v2925, %v2921
    %v4474 = vpack.c.b16 %v2926, %v2922
    %v4475 = vpack.c.b16 %v2927, %v2923
    %v4476 = vpack.c.b16 %v2928, %v2924
    %v4477 = vpack.c.b16 %v2933, %v2929
    %v4478 = vpack.c.b16 %v2934, %v2930
    %v4479 = vpack.c.b16 %v2935, %v2931
    %v4480 = vpack.c.b16 %v2936, %v2932
    %v4481 = vpack.c.b16 %v2941, %v2937
    %v4482 = vpack.c.b16 %v2942, %v2938
    %v4483 = vpack.c.b16 %v2943, %v2939
    %v4484 = vpack.c.b16 %v2944, %v2940
    %v4485 = vpack.c.b16 %v2949, %v2945
    %v4486 = vpack.c.b16 %v2950, %v2946
    %v4487 = vpack.c.b16 %v2951, %v2947
    %v4488 = vpack.c.b16 %v2952, %v2948
    %v4489 = vpack.c.b16 %v2957, %v2953
    %v4490 = vpack.c.b16 %v2958, %v2954
    %v4491 = vpack.c.b16 %v2959, %v2955
    %v4492 = vpack.c.b16 %v2960, %v2956
    %v4493 = vpack.c.b16 %v2965, %v2961
    %v4494 = vpack.c.b16 %v2966, %v2962
    %v4495 = vpack.c.b16 %v2967, %v2963
    %v4496 = vpack.c.b16 %v2968, %v2964
    %v4497 = vpack.c.b16 %v2973, %v2969
    %v4498 = vpack.c.b16 %v2974, %v2970
    %v4499 = vpack.c.b16 %v2975, %v2971
    %v4500 = vpack.c.b16 %v2976, %v2972
    %v4501 = vpack.c.b16 %v2981, %v2977
    %v4502 = vpack.c.b16 %v2982, %v2978
    %v4503 = vpack.c.b16 %v2983, %v2979
    %v4504 = vpack.c.b16 %v2984, %v2980
    %v4505 = vpack.c.b16 %v2989, %v2985
    %v4506 = vpack.c.b16 %v2990, %v2986
    %v4507 = vpack.c.b16 %v2991, %v2987
    %v4508 = vpack.c.b16 %v2992, %v2988
    %v4509 = vpack.c.b16 %v2997, %v2993
    %v4510 = vpack.c.b16 %v2998, %v2994
    %v4511 = vpack.c.b16 %v2999, %v2995
    %v4512 = vpack.c.b16 %v3000, %v2996
    %v4513 = vpack.c.b16 %v3005, %v3001
    %v4514 = vpack.c.b16 %v3006, %v3002
    %v4515 = vpack.c.b16 %v3007, %v3003
    %v4516 = vpack.c.b16 %v3008, %v3004
    %v4517 = vpack.c.b16 %v3013, %v3009
    %v4518 = vpack.c.b16 %v3014, %v3010
    %v4519 = vpack.c.b16 %v3015, %v3011
    %v4520 = vpack.c.b16 %v3016, %v3012
    %v4521 = vpack.c.b16 %v3021, %v3017
    %v4522 = vpack.c.b16 %v3022, %v3018
    %v4523 = vpack.c.b16 %v3023, %v3019
    %v4524 = vpack.c.b16 %v3024, %v3020
    %v4525 = vpack.c.b16 %v3029, %v3025
    %v4526 = vpack.c.b16 %v3030, %v3026
    %v4527 = vpack.c.b16 %v3031, %v3027
    %v4528 = vpack.c.b16 %v3032, %v3028
    %v4529 = vpack.c.b16 %v3037, %v3033
    %v4530 = vpack.c.b16 %v3038, %v3034
    %v4531 = vpack.c.b16 %v3039, %v3035
    %v4532 = vpack.c.b16 %v3040, %v3036
    %v4533 = vpack.c.b16 %v3045, %v3041
    %v4534 = vpack.c.b16 %v3046, %v3042
    %v4535 = vpack.c.b16 %v3047, %v3043
    %v4536 = vpack.c.b16 %v3048, %v3044
    %v4537 = vpack.c.b16 %v3053, %v3049
    %v4538 = vpack.c.b16 %v3054, %v3050
    %v4539 = vpack.c.b16 %v3055, %v3051
    %v4540 = vpack.c.b16 %v3056, %v3052
    %v4541 = vpack.c.b16 %v3061, %v3057
    %v4542 = vpack.c.b16 %v3062, %v3058
    %v4543 = vpack.c.b16 %v3063, %v3059
    %v4544 = vpack.c.b16 %v3064, %v3060
    %v4545 = vpack.c.b16 %v3069, %v3065
    %v4546 = vpack.c.b16 %v3070, %v3066
    %v4547 = vpack.c.b16 %v3071, %v3067
    %v4548 = vpack.c.b16 %v3072, %v3068
    %v4549 = vpack.c.b16 %v3077, %v3073
    %v4550 = vpack.c.b16 %v3078, %v3074
    %v4551 = vpack.c.b16 %v3079, %v3075
    %v4552 = vpack.c.b16 %v3080, %v3076
    %v4553 = vpack.c.b16 %v3085, %v3081
    %v4554 = vpack.c.b16 %v3086, %v3082
    %v4555 = vpack.c.b16 %v3087, %v3083
    %v4556 = vpack.c.b16 %v3088, %v3084
    %v4557 = vpack.c.b16 %v3093, %v3089
    %v4558 = vpack.c.b16 %v3094, %v3090
    %v4559 = vpack.c.b16 %v3095, %v3091
    %v4560 = vpack.c.b16 %v3096, %v3092
    %v4561 = vpack.c.b16 %v3101, %v3097
    %v4562 = vpack.c.b16 %v3102, %v3098
    %v4563 = vpack.c.b16 %v3103, %v3099
    %v4564 = vpack.c.b16 %v3104, %v3100
    %v4565 = vpack.c.b16 %v3109, %v3105
    %v4566 = vpack.c.b16 %v3110, %v3106
    %v4567 = vpack.c.b16 %v3111, %v3107
    %v4568 = vpack.c.b16 %v3112, %v3108
    %v4569 = vpack.c.b16 %v3117, %v3113
    %v4570 = vpack.c.b16 %v3118, %v3114
    %v4571 = vpack.c.b16 %v3119, %v3115
    %v4572 = vpack.c.b16 %v3120, %v3116
    %v4573 = vpack.c.b16 %v3125, %v3121
    %v4574 = vpack.c.b16 %v3126, %v3122
    %v4575 = vpack.c.b16 %v3127, %v3123
    %v4576 = vpack.c.b16 %v3128, %v3124
    %v4577 = vpack.c.b16 %v3133, %v3129
    %v4578 = vpack.c.b16 %v3134, %v3130
    %v4579 = vpack.c.b16 %v3135, %v3131
    %v4580 = vpack.c.b16 %v3136, %v3132
    %v4581 = vpack.c.b16 %v3141, %v3137
    %v4582 = vpack.c.b16 %v3142, %v3138
    %v4583 = vpack.c.b16 %v3143, %v3139
    %v4584 = vpack.c.b16 %v3144, %v3140
    %v4585 = vpack.c.b16 %v3149, %v3145
    %v4586 = vpack.c.b16 %v3150, %v3146
    %v4587 = vpack.c.b16 %v3151, %v3147
    %v4588 = vpack.c.b16 %v3152, %v3148
    %v4589 = vpack.c.b16 %v3157, %v3153
    %v4590 = vpack.c.b16 %v3158, %v3154
    %v4591 = vpack.c.b16 %v3159, %v3155
    %v4592 = vpack.c.b16 %v3160, %v3156
    %v4593 = vpack.c.b16 %v3165, %v3161
    %v4594 = vpack.c.b16 %v3166, %v3162
    %v4595 = vpack.c.b16 %v3167, %v3163
    %v4596 = vpack.c.b16 %v3168, %v3164
    %v4597 = vpack.c.b16 %v3173, %v3169
    %v4598 = vpack.c.b16 %v3174, %v3170
    %v4599 = vpack.c.b16 %v3175, %v3171
    %v4600 = vpack.c.b16 %v3176, %v3172
    %v4601 = vpack.c.b16 %v3181, %v3177
    %v4602 = vpack.c.b16 %v3182, %v3178
    %v4603 = vpack.c.b16 %v3183, %v3179
    %v4604 = vpack.c.b16 %v3184, %v3180
    %v4605 = vpack.c.b16 %v3189, %v3185
    %v4606 = vpack.c.b16 %v3190, %v3186
    %v4607 = vpack.c.b16 %v3191, %v3187
    %v4608 = vpack.c.b16 %v3192, %v3188
    %v4609 = vpack.c.b16 %v3197, %v3193
    %v4610 = vpack.c.b16 %v3198, %v3194
    %v4611 = vpack.c.b16 %v3199, %v3195
    %v4612 = vpack.c.b16 %v3200, %v3196
    %v4613 = vpack.c.b16 %v3205, %v3201
    %v4614 = vpack.c.b16 %v3206, %v3202
    %v4615 = vpack.c.b16 %v3207, %v3203
    %v4616 = vpack.c.b16 %v3208, %v3204
    %v4617 = vpack.c.b16 %v3213, %v3209
    %v4618 = vpack.c.b16 %v3214, %v3210
    %v4619 = vpack.c.b16 %v3215, %v3211
    %v4620 = vpack.c.b16 %v3216, %v3212
    %v4621 = vpack.c.b16 %v3221, %v3217
    %v4622 = vpack.c.b16 %v3222, %v3218
    %v4623 = vpack.c.b16 %v3223, %v3219
    %v4624 = vpack.c.b16 %v3224, %v3220
    %v4625 = vpack.c.b16 %v3229, %v3225
    %v4626 = vpack.c.b16 %v3230, %v3226
    %v4627 = vpack.c.b16 %v3231, %v3227
    %v4628 = vpack.c.b16 %v3232, %v3228
    %v4629 = vpack.c.b16 %v3237, %v3233
    %v4630 = vpack.c.b16 %v3238, %v3234
    %v4631 = vpack.c.b16 %v3239, %v3235
    %v4632 = vpack.c.b16 %v3240, %v3236
    %v4633 = vpack.c.b16 %v3245, %v3241
    %v4634 = vpack.c.b16 %v3246, %v3242
    %v4635 = vpack.c.b16 %v3247, %v3243
    %v4636 = vpack.c.b16 %v3248, %v3244
    %v4637 = vpack.c.b16 %v3253, %v3249
    %v4638 = vpack.c.b16 %v3254, %v3250
    %v4639 = vpack.c.b16 %v3255, %v3251
    %v4640 = vpack.c.b16 %v3256, %v3252
    %v4641 = vpack.c.b16 %v3261, %v3257
    %v4642 = vpack.c.b16 %v3262, %v3258
    %v4643 = vpack.c.b16 %v3263, %v3259
    %v4644 = vpack.c.b16 %v3264, %v3260
    %v4645 = vpack.c.b16 %v3269, %v3265
    %v4646 = vpack.c.b16 %v3270, %v3266
    %v4647 = vpack.c.b16 %v3271, %v3267
    %v4648 = vpack.c.b16 %v3272, %v3268
    %v4649 = vpack.c.b16 %v3277, %v3273
    %v4650 = vpack.c.b16 %v3278, %v3274
    %v4651 = vpack.c.b16 %v3279, %v3275
    %v4652 = vpack.c.b16 %v3280, %v3276
    %v4653 = vpack.c.b16 %v3285, %v3281
    %v4654 = vpack.c.b16 %v3286, %v3282
    %v4655 = vpack.c.b16 %v3287, %v3283
    %v4656 = vpack.c.b16 %v3288, %v3284
    %v4657 = vpack.c.b16 %v3293, %v3289
    %v4658 = vpack.c.b16 %v3294, %v3290
    %v4659 = vpack.c.b16 %v3295, %v3291
    %v4660 = vpack.c.b16 %v3296, %v3292
    %v4661 = vpack.c.b16 %v3301, %v3297
    %v4662 = vpack.c.b16 %v3302, %v3298
    %v4663 = vpack.c.b16 %v3303, %v3299
    %v4664 = vpack.c.b16 %v3304, %v3300
    %v4665 = vpack.c.b16 %v3309, %v3305
    %v4666 = vpack.c.b16 %v3310, %v3306
    %v4667 = vpack.c.b16 %v3311, %v3307
    %v4668 = vpack.c.b16 %v3312, %v3308
    %v4669 = vpack.c.b16 %v3317, %v3313
    %v4670 = vpack.c.b16 %v3318, %v3314
    %v4671 = vpack.c.b16 %v3319, %v3315
    %v4672 = vpack.c.b16 %v3320, %v3316
    %v4673 = vpack.c.b16 %v3325, %v3321
    %v4674 = vpack.c.b16 %v3326, %v3322
    %v4675 = vpack.c.b16 %v3327, %v3323
    %v4676 = vpack.c.b16 %v3328, %v3324
    %v4677 = vpack.c.b16 %v3333, %v3329
    %v4678 = vpack.c.b16 %v3334, %v3330
    %v4679 = vpack.c.b16 %v3335, %v3331
    %v4680 = vpack.c.b16 %v3336, %v3332
    %v4681 = vpack.c.b16 %v3341, %v3337
    %v4682 = vpack.c.b16 %v3342, %v3338
    %v4683 = vpack.c.b16 %v3343, %v3339
    %v4684 = vpack.c.b16 %v3344, %v3340
    %v4685 = vpack.c.b16 %v3349, %v3345
    %v4686 = vpack.c.b16 %v3350, %v3346
    %v4687 = vpack.c.b16 %v3351, %v3347
    %v4688 = vpack.c.b16 %v3352, %v3348
    %v4689 = vpack.c.b16 %v3357, %v3353
    %v4690 = vpack.c.b16 %v3358, %v3354
    %v4691 = vpack.c.b16 %v3359, %v3355
    %v4692 = vpack.c.b16 %v3360, %v3356
    %v4693 = vpack.c.b16 %v3365, %v3361
    %v4694 = vpack.c.b16 %v3366, %v3362
    %v4695 = vpack.c.b16 %v3367, %v3363
    %v4696 = vpack.c.b16 %v3368, %v3364
    %v4697 = vpack.c.b16 %v3373, %v3369
    %v4698 = vpack.c.b16 %v3374, %v3370
    %v4699 = vpack.c.b16 %v3375, %v3371
    %v4700 = vpack.c.b16 %v3376, %v3372
    %v4701 = vpack.c.b16 %v3381, %v3377
    %v4702 = vpack.c.b16 %v3382, %v3378
    %v4703 = vpack.c.b16 %v3383, %v3379
    %v4704 = vpack.c.b16 %v3384, %v3380
    %v4705 = vpack.c.b16 %v3389, %v3385
    %v4706 = vpack.c.b16 %v3390, %v3386
    %v4707 = vpack.c.b16 %v3391, %v3387
    %v4708 = vpack.c.b16 %v3392, %v3388
    %v4709 = vpack.c.b16 %v3397, %v3393
    %v4710 = vpack.c.b16 %v3398, %v3394
    %v4711 = vpack.c.b16 %v3399, %v3395
    %v4712 = vpack.c.b16 %v3400, %v3396
    %v4713 = vpack.c.b16 %v3405, %v3401
    %v4714 = vpack.c.b16 %v3406, %v3402
    %v4715 = vpack.c.b16 %v3407, %v3403
    %v4716 = vpack.c.b16 %v3408, %v3404
    %v4717 = vpack.c.b16 %v3413, %v3409
    %v4718 = vpack.c.b16 %v3414, %v3410
    %v4719 = vpack.c.b16 %v3415, %v3411
    %v4720 = vpack.c.b16 %v3416, %v3412
    %v4721 = vpack.c.b16 %v3421, %v3417
    %v4722 = vpack.c.b16 %v3422, %v3418
    %v4723 = vpack.c.b16 %v3423, %v3419
    %v4724 = vpack.c.b16 %v3424, %v3420
    %v4725 = vpack.c.b16 %v3429, %v3425
    %v4726 = vpack.c.b16 %v3430, %v3426
    %v4727 = vpack.c.b16 %v3431, %v3427
    %v4728 = vpack.c.b16 %v3432, %v3428
    %v4729 = vpack.c.b16 %v3437, %v3433
    %v4730 = vpack.c.b16 %v3438, %v3434
    %v4731 = vpack.c.b16 %v3439, %v3435
    %v4732 = vpack.c.b16 %v3440, %v3436
    %v4733 = vpack.c.b16 %v3445, %v3441
    %v4734 = vpack.c.b16 %v3446, %v3442
    %v4735 = vpack.c.b16 %v3447, %v3443
    %v4736 = vpack.c.b16 %v3448, %v3444
    %v4737 = vpack.c.b16 %v3453, %v3449
    %v4738 = vpack.c.b16 %v3454, %v3450
    %v4739 = vpack.c.b16 %v3455, %v3451
    %v4740 = vpack.c.b16 %v3456, %v3452
    %v4741 = vpack.c.b16 %v3461, %v3457
    %v4742 = vpack.c.b16 %v3462, %v3458
    %v4743 = vpack.c.b16 %v3463, %v3459
    %v4744 = vpack.c.b16 %v3464, %v3460
    %v4745 = vpack.c.b16 %v3469, %v3465
    %v4746 = vpack.c.b16 %v3470, %v3466
    %v4747 = vpack.c.b16 %v3471, %v3467
    %v4748 = vpack.c.b16 %v3472, %v3468
    %v4749 = vpack.c.b16 %v3477, %v3473
    %v4750 = vpack.c.b16 %v3478, %v3474
    %v4751 = vpack.c.b16 %v3479, %v3475
    %v4752 = vpack.c.b16 %v3480, %v3476
    %v4753 = vpack.c.b16 %v3485, %v3481
    %v4754 = vpack.c.b16 %v3486, %v3482
    %v4755 = vpack.c.b16 %v3487, %v3483
    %v4756 = vpack.c.b16 %v3488, %v3484
    %v4757 = vpack.c.b16 %v3493, %v3489
    %v4758 = vpack.c.b16 %v3494, %v3490
    %v4759 = vpack.c.b16 %v3495, %v3491
    %v4760 = vpack.c.b16 %v3496, %v3492
    %v4761 = vpack.c.b16 %v3501, %v3497
    %v4762 = vpack.c.b16 %v3502, %v3498
    %v4763 = vpack.c.b16 %v3503, %v3499
    %v4764 = vpack.c.b16 %v3504, %v3500
    %v4765 = vpack.c.b16 %v3509, %v3505
    %v4766 = vpack.c.b16 %v3510, %v3506
    %v4767 = vpack.c.b16 %v3511, %v3507
    %v4768 = vpack.c.b16 %v3512, %v3508
    %v4769 = vpack.c.b16 %v3517, %v3513
    %v4770 = vpack.c.b16 %v3518, %v3514
    %v4771 = vpack.c.b16 %v3519, %v3515
    %v4772 = vpack.c.b16 %v3520, %v3516
    %v4773 = vpack.c.b16 %v3525, %v3521
    %v4774 = vpack.c.b16 %v3526, %v3522
    %v4775 = vpack.c.b16 %v3527, %v3523
    %v4776 = vpack.c.b16 %v3528, %v3524
    %v4777 = vpack.c.b16 %v3533, %v3529
    %v4778 = vpack.c.b16 %v3534, %v3530
    %v4779 = vpack.c.b16 %v3535, %v3531
    %v4780 = vpack.c.b16 %v3536, %v3532
    %v4781 = vpack.c.b16 %v3541, %v3537
    %v4782 = vpack.c.b16 %v3542, %v3538
    %v4783 = vpack.c.b16 %v3543, %v3539
    %v4784 = vpack.c.b16 %v3544, %v3540
    %v4785 = vpack.c.b16 %v3549, %v3545
    %v4786 = vpack.c.b16 %v3550, %v3546
    %v4787 = vpack.c.b16 %v3551, %v3547
    %v4788 = vpack.c.b16 %v3552, %v3548
    %v4789 = vpack.c.b16 %v3557, %v3553
    %v4790 = vpack.c.b16 %v3558, %v3554
    %v4791 = vpack.c.b16 %v3559, %v3555
    %v4792 = vpack.c.b16 %v3560, %v3556
    %v4793 = vpack.c.b16 %v3565, %v3561
    %v4794 = vpack.c.b16 %v3566, %v3562
    %v4795 = vpack.c.b16 %v3567, %v3563
    %v4796 = vpack.c.b16 %v3568, %v3564
    %v4797 = vpack.c.b16 %v3573, %v3569
    %v4798 = vpack.c.b16 %v3574, %v3570
    %v4799 = vpack.c.b16 %v3575, %v3571
    %v4800 = vpack.c.b16 %v3576, %v3572
    %v4801 = vpack.c.b16 %v3581, %v3577
    %v4802 = vpack.c.b16 %v3582, %v3578
    %v4803 = vpack.c.b16 %v3583, %v3579
    %v4804 = vpack.c.b16 %v3584, %v3580
    %v4805 = vpack.c.b16 %v3589, %v3585
    %v4806 = vpack.c.b16 %v3590, %v3586
    %v4807 = vpack.c.b16 %v3591, %v3587
    %v4808 = vpack.c.b16 %v3592, %v3588
    %v4809 = vpack.c.b16 %v3597, %v3593
    %v4810 = vpack.c.b16 %v3598, %v3594
    %v4811 = vpack.c.b16 %v3599, %v3595
    %v4812 = vpack.c.b16 %v3600, %v3596
    %v4813 = vpack.c.b16 %v3605, %v3601
    %v4814 = vpack.c.b16 %v3606, %v3602
    %v4815 = vpack.c.b16 %v3607, %v3603
    %v4816 = vpack.c.b16 %v3608, %v3604
    %v4817 = vpack.c.b16 %v3613, %v3609
    %v4818 = vpack.c.b16 %v3614, %v3610
    %v4819 = vpack.c.b16 %v3615, %v3611
    %v4820 = vpack.c.b16 %v3616, %v3612
    %v4821 = vpack.c.b16 %v3621, %v3617
    %v4822 = vpack.c.b16 %v3622, %v3618
    %v4823 = vpack.c.b16 %v3623, %v3619
    %v4824 = vpack.c.b16 %v3624, %v3620
    %v4825 = vpack.c.b16 %v3629, %v3625
    %v4826 = vpack.c.b16 %v3630, %v3626
    %v4827 = vpack.c.b16 %v3631, %v3627
    %v4828 = vpack.c.b16 %v3632, %v3628
    %v4829 = vpack.c.b16 %v3637, %v3633
    %v4830 = vpack.c.b16 %v3638, %v3634
    %v4831 = vpack.c.b16 %v3639, %v3635
    %v4832 = vpack.c.b16 %v3640, %v3636
    %v4833 = vpack.c.b16 %v3645, %v3641
    %v4834 = vpack.c.b16 %v3646, %v3642
    %v4835 = vpack.c.b16 %v3647, %v3643
    %v4836 = vpack.c.b16 %v3648, %v3644
    %v4837 = vpack.c.b16 %v3653, %v3649
    %v4838 = vpack.c.b16 %v3654, %v3650
    %v4839 = vpack.c.b16 %v3655, %v3651
    %v4840 = vpack.c.b16 %v3656, %v3652
    %v4841 = vpack.c.b16 %v3661, %v3657
    %v4842 = vpack.c.b16 %v3662, %v3658
    %v4843 = vpack.c.b16 %v3663, %v3659
    %v4844 = vpack.c.b16 %v3664, %v3660
    %v4845 = vpack.c.b16 %v3669, %v3665
    %v4846 = vpack.c.b16 %v3670, %v3666
    %v4847 = vpack.c.b16 %v3671, %v3667
    %v4848 = vpack.c.b16 %v3672, %v3668
    %v4849 = vpack.c.b16 %v3677, %v3673
    %v4850 = vpack.c.b16 %v3678, %v3674
    %v4851 = vpack.c.b16 %v3679, %v3675
    %v4852 = vpack.c.b16 %v3680, %v3676
    %v4853 = vpack.c.b16 %v3685, %v3681
    %v4854 = vpack.c.b16 %v3686, %v3682
    %v4855 = vpack.c.b16 %v3687, %v3683
    %v4856 = vpack.c.b16 %v3688, %v3684
    %v4857 = vpack.c.b16 %v3693, %v3689
    %v4858 = vpack.c.b16 %v3694, %v3690
    %v4859 = vpack.c.b16 %v3695, %v3691
    %v4860 = vpack.c.b16 %v3696, %v3692
    %v4861 = vpack.c.b16 %v3701, %v3697
    %v4862 = vpack.c.b16 %v3702, %v3698
    %v4863 = vpack.c.b16 %v3703, %v3699
    %v4864 = vpack.c.b16 %v3704, %v3700
    %v4865 = vpack.c.b16 %v3709, %v3705
    %v4866 = vpack.c.b16 %v3710, %v3706
    %v4867 = vpack.c.b16 %v3711, %v3707
    %v4868 = vpack.c.b16 %v3712, %v3708
    %v4869 = vpack.c.b16 %v3717, %v3713
    %v4870 = vpack.c.b16 %v3718, %v3714
    %v4871 = vpack.c.b16 %v3719, %v3715
    %v4872 = vpack.c.b16 %v3720, %v3716
    %v4873 = vpack.c.b16 %v3725, %v3721
    %v4874 = vpack.c.b16 %v3726, %v3722
    %v4875 = vpack.c.b16 %v3727, %v3723
    %v4876 = vpack.c.b16 %v3728, %v3724
    %v4877 = vpack.c.b16 %v3733, %v3729
    %v4878 = vpack.c.b16 %v3734, %v3730
    %v4879 = vpack.c.b16 %v3735, %v3731
    %v4880 = vpack.c.b16 %v3736, %v3732
    %v4881 = vpack.c.b16 %v3741, %v3737
    %v4882 = vpack.c.b16 %v3742, %v3738
    %v4883 = vpack.c.b16 %v3743, %v3739
    %v4884 = vpack.c.b16 %v3744, %v3740
    %v4885 = vpack.c.b16 %v3749, %v3745
    %v4886 = vpack.c.b16 %v3750, %v3746
    %v4887 = vpack.c.b16 %v3751, %v3747
    %v4888 = vpack.c.b16 %v3752, %v3748
    %v4889 = vpack.c.b16 %v3757, %v3753
    %v4890 = vpack.c.b16 %v3758, %v3754
    %v4891 = vpack.c.b16 %v3759, %v3755
    %v4892 = vpack.c.b16 %v3760, %v3756
    %v4893 = vpack.c.b16 %v3765, %v3761
    %v4894 = vpack.c.b16 %v3766, %v3762
    %v4895 = vpack.c.b16 %v3767, %v3763
    %v4896 = vpack.c.b16 %v3768, %v3764
    %v4897 = vpack.c.b16 %v3773, %v3769
    %v4898 = vpack.c.b16 %v3774, %v3770
    %v4899 = vpack.c.b16 %v3775, %v3771
    %v4900 = vpack.c.b16 %v3776, %v3772
    %v4901 = vpack.c.b16 %v3781, %v3777
    %v4902 = vpack.c.b16 %v3782, %v3778
    %v4903 = vpack.c.b16 %v3783, %v3779
    %v4904 = vpack.c.b16 %v3784, %v3780
    %v4905 = vpack.c.b16 %v3789, %v3785
    %v4906 = vpack.c.b16 %v3790, %v3786
    %v4907 = vpack.c.b16 %v3791, %v3787
    %v4908 = vpack.c.b16 %v3792, %v3788
    %v4909 = vpack.c.b16 %v3797, %v3793
    %v4910 = vpack.c.b16 %v3798, %v3794
    %v4911 = vpack.c.b16 %v3799, %v3795
    %v4912 = vpack.c.b16 %v3800, %v3796
    %v4913 = vpack.c.b16 %v3805, %v3801
    %v4914 = vpack.c.b16 %v3806, %v3802
    %v4915 = vpack.c.b16 %v3807, %v3803
    %v4916 = vpack.c.b16 %v3808, %v3804
    %v4917 = vpack.c.b16 %v3813, %v3809
    %v4918 = vpack.c.b16 %v3814, %v3810
    %v4919 = vpack.c.b16 %v3815, %v3811
    %v4920 = vpack.c.b16 %v3816, %v3812
    %v4921 = vpack.c.b16 %v3821, %v3817
    %v4922 = vpack.c.b16 %v3822, %v3818
    %v4923 = vpack.c.b16 %v3823, %v3819
    %v4924 = vpack.c.b16 %v3824, %v3820
    %v4925 = vpack.c.b16 %v3829, %v3825
    %v4926 = vpack.c.b16 %v3830, %v3826
    %v4927 = vpack.c.b16 %v3831, %v3827
    %v4928 = vpack.c.b16 %v3832, %v3828
    %v4929 = vpack.c.b16 %v3837, %v3833
    %v4930 = vpack.c.b16 %v3838, %v3834
    %v4931 = vpack.c.b16 %v3839, %v3835
    %v4932 = vpack.c.b16 %v3840, %v3836
    %v4933 = vpack.c.b16 %v3845, %v3841
    %v4934 = vpack.c.b16 %v3846, %v3842
    %v4935 = vpack.c.b16 %v3847, %v3843
    %v4936 = vpack.c.b16 %v3848, %v3844
    %v4937 = vpack.c.b16 %v3853, %v3849
    %v4938 = vpack.c.b16 %v3854, %v3850
    %v4939 = vpack.c.b16 %v3855, %v3851
    %v4940 = vpack.c.b16 %v3856, %v3852
    %v4941 = vpack.c.b16 %v3861, %v3857
    %v4942 = vpack.c.b16 %v3862, %v3858
    %v4943 = vpack.c.b16 %v3863, %v3859
    %v4944 = vpack.c.b16 %v3864, %v3860
    %v4945 = vpack.c.b16 %v3869, %v3865
    %v4946 = vpack.c.b16 %v3870, %v3866
    %v4947 = vpack.c.b16 %v3871, %v3867
    %v4948 = vpack.c.b16 %v3872, %v3868
    %v4949 = vpack.c.b16 %v3877, %v3873
    %v4950 = vpack.c.b16 %v3878, %v3874
    %v4951 = vpack.c.b16 %v3879, %v3875
    %v4952 = vpack.c.b16 %v3880, %v3876
    %v4953 = vpack.c.b16 %v3885, %v3881
    %v4954 = vpack.c.b16 %v3886, %v3882
    %v4955 = vpack.c.b16 %v3887, %v3883
    %v4956 = vpack.c.b16 %v3888, %v3884
    %v4957 = vpack.c.b16 %v3893, %v3889
    %v4958 = vpack.c.b16 %v3894, %v3890
    %v4959 = vpack.c.b16 %v3895, %v3891
    %v4960 = vpack.c.b16 %v3896, %v3892
    %v4961 = vpack.c.b16 %v3901, %v3897
    %v4962 = vpack.c.b16 %v3902, %v3898
    %v4963 = vpack.c.b16 %v3903, %v3899
    %v4964 = vpack.c.b16 %v3904, %v3900
    %v4965 = vpack.c.b16 %v3909, %v3905
    %v4966 = vpack.c.b16 %v3910, %v3906
    %v4967 = vpack.c.b16 %v3911, %v3907
    %v4968 = vpack.c.b16 %v3912, %v3908
    %v4969 = vpack.c.b16 %v3917, %v3913
    %v4970 = vpack.c.b16 %v3918, %v3914
    %v4971 = vpack.c.b16 %v3919, %v3915
    %v4972 = vpack.c.b16 %v3920, %v3916
    %v4973 = vpack.c.b16 %v3925, %v3921
    %v4974 = vpack.c.b16 %v3926, %v3922
    %v4975 = vpack.c.b16 %v3927, %v3923
    %v4976 = vpack.c.b16 %v3928, %v3924
    %v4977 = vpack.c.b16 %v3933, %v3929
    %v4978 = vpack.c.b16 %v3934, %v3930
    %v4979 = vpack.c.b16 %v3935, %v3931
    %v4980 = vpack.c.b16 %v3936, %v3932
    %v4981 = vpack.c.b16 %v3941, %v3937
    %v4982 = vpack.c.b16 %v3942, %v3938
    %v4983 = vpack.c.b16 %v3943, %v3939
    %v4984 = vpack.c.b16 %v3944, %v3940
    %v4985 = vpack.c.b16 %v3949, %v3945
    %v4986 = vpack.c.b16 %v3950, %v3946
    %v4987 = vpack.c.b16 %v3951, %v3947
    %v4988 = vpack.c.b16 %v3952, %v3948
    %v4989 = vpack.c.b16 %v3957, %v3953
    %v4990 = vpack.c.b16 %v3958, %v3954
    %v4991 = vpack.c.b16 %v3959, %v3955
    %v4992 = vpack.c.b16 %v3960, %v3956
    %v4993 = vpack.c.b16 %v3965, %v3961
    %v4994 = vpack.c.b16 %v3966, %v3962
    %v4995 = vpack.c.b16 %v3967, %v3963
    %v4996 = vpack.c.b16 %v3968, %v3964
    %v4997 = vpack.c.b16 %v3973, %v3969
    %v4998 = vpack.c.b16 %v3974, %v3970
    %v4999 = vpack.c.b16 %v3975, %v3971
    %v5000 = vpack.c.b16 %v3976, %v3972
    %v5001 = vpack.c.b16 %v3981, %v3977
    %v5002 = vpack.c.b16 %v3982, %v3978
    %v5003 = vpack.c.b16 %v3983, %v3979
    %v5004 = vpack.c.b16 %v3984, %v3980
    %v5005 = vpack.c.b16 %v3989, %v3985
    %v5006 = vpack.c.b16 %v3990, %v3986
    %v5007 = vpack.c.b16 %v3991, %v3987
    %v5008 = vpack.c.b16 %v3992, %v3988
    %v5009 = vpack.c.b16 %v3997, %v3993
    %v5010 = vpack.c.b16 %v3998, %v3994
    %v5011 = vpack.c.b16 %v3999, %v3995
    %v5012 = vpack.c.b16 %v4000, %v3996
    %v5013 = vpack.c.b16 %v4005, %v4001
    %v5014 = vpack.c.b16 %v4006, %v4002
    %v5015 = vpack.c.b16 %v4007, %v4003
    %v5016 = vpack.c.b16 %v4008, %v4004
    %v5017 = vpack.c.b16 %v4013, %v4009
    %v5018 = vpack.c.b16 %v4014, %v4010
    %v5019 = vpack.c.b16 %v4015, %v4011
    %v5020 = vpack.c.b16 %v4016, %v4012
    %v5021 = vpack.c.b16 %v4021, %v4017
    %v5022 = vpack.c.b16 %v4022, %v4018
    %v5023 = vpack.c.b16 %v4023, %v4019
    %v5024 = vpack.c.b16 %v4024, %v4020
    %v5025 = vpack.c.b16 %v4029, %v4025
    %v5026 = vpack.c.b16 %v4030, %v4026
    %v5027 = vpack.c.b16 %v4031, %v4027
    %v5028 = vpack.c.b16 %v4032, %v4028
    %v5029 = vpack.c.b16 %v4037, %v4033
    %v5030 = vpack.c.b16 %v4038, %v4034
    %v5031 = vpack.c.b16 %v4039, %v4035
    %v5032 = vpack.c.b16 %v4040, %v4036
    %v5033 = vpack.c.b16 %v4045, %v4041
    %v5034 = vpack.c.b16 %v4046, %v4042
    %v5035 = vpack.c.b16 %v4047, %v4043
    %v5036 = vpack.c.b16 %v4048, %v4044
    %v5037 = vpack.c.b16 %v4053, %v4049
    %v5038 = vpack.c.b16 %v4054, %v4050
    %v5039 = vpack.c.b16 %v4055, %v4051
    %v5040 = vpack.c.b16 %v4056, %v4052
    %v5041 = vpack.c.b16 %v4061, %v4057
    %v5042 = vpack.c.b16 %v4062, %v4058
    %v5043 = vpack.c.b16 %v4063, %v4059
    %v5044 = vpack.c.b16 %v4064, %v4060
    %v5045 = vpack.c.b16 %v4069, %v4065
    %v5046 = vpack.c.b16 %v4070, %v4066
    %v5047 = vpack.c.b16 %v4071, %v4067
    %v5048 = vpack.c.b16 %v4072, %v4068
    %v5049 = vpack.c.b16 %v4077, %v4073
    %v5050 = vpack.c.b16 %v4078, %v4074
    %v5051 = vpack.c.b16 %v4079, %v4075
    %v5052 = vpack.c.b16 %v4080, %v4076
    %vm6025 = vcmask 392192
    %v6027 = vsel %vm6025, %v1134, 0
    %6029 = vmatprep.subr.bf16.mxu0 %v4082
    %6030 = vmatpush1.bf16.msra.mxu0 %v4081
    %6031 = vmatprep.subr.bf16.mxu0 %v4086
    %6032 = vmatpush1.bf16.msra.mxu0 %v4085
    %6033 = vmatprep.subr.bf16.mxu0 %v4090
    %6034 = vmatpush1.bf16.msra.mxu0 %v4089
    %6035 = vmatprep.subr.bf16.mxu0 %v4094
    %6036 = vmatpush1.bf16.msra.mxu0 %v4093
    %6037 = vmatprep.subr.bf16.mxu0 %v4098
    %6038 = vmatpush1.bf16.msra.mxu0 %v4097
    %6039 = vmatprep.subr.bf16.mxu0 %v4102
    %6040 = vmatpush1.bf16.msra.mxu0 %v4101
    %6041 = vmatprep.subr.bf16.mxu0 %v4106
    %6042 = vmatpush1.bf16.msra.mxu0 %v4105
    %6043 = vmatprep.subr.bf16.mxu0 %v4110
    %6044 = vmatpush1.bf16.msra.mxu0 %v4109
    %6045 = vmatprep.subr.bf16.mxu0 %v4114
    %6046 = vmatpush1.bf16.msra.mxu0 %v4113
    %6047 = vmatprep.subr.bf16.mxu0 %v4118
    %6048 = vmatpush1.bf16.msra.mxu0 %v4117
    %6049 = vmatprep.subr.bf16.mxu0 %v4122
    %6050 = vmatpush1.bf16.msra.mxu0 %v4121
    %6051 = vmatprep.subr.bf16.mxu0 %v4126
    %6052 = vmatpush1.bf16.msra.mxu0 %v4125
    %6053 = vmatprep.subr.bf16.mxu0 %v4130
    %6054 = vmatpush1.bf16.msra.mxu0 %v4129
    %6055 = vmatprep.subr.bf16.mxu0 %v4134
    %6056 = vmatpush1.bf16.msra.mxu0 %v4133
    %6057 = vmatprep.subr.bf16.mxu0 %v4138
    %6058 = vmatpush1.bf16.msra.mxu0 %v4137
    %6059 = vmatprep.subr.bf16.mxu0 %v4142
    %6060 = vmatpush1.bf16.msra.mxu0 %v4141
    %6061 = vmatprep.mubr.bf16.mxu0 %v1105
    %6062 = vmatmul.mubr.bf16.gmra.mrb[0].mxu0 %v1104
    %v6063 = vpop.f32.mrb[0].mxu0
    %v6064 = vadd.f32 %v1040, %v6063
    %v6065 = vpop.f32.mrb[0].mxu0
    %v6066 = vadd.f32 %v1044, %v6065
    %v6067 = vpop.f32.mrb[0].mxu0
    %v6068 = vpop.f32.mrb[0].mxu0
    %6069 = vdwg.mxu0
    %6070 = vmatprep.subr.bf16.mxu0 %v4146
    %6071 = vmatpush1.bf16.msra.mxu0 %v4145
    %6072 = vmatprep.subr.bf16.mxu0 %v4150
    %6073 = vmatpush1.bf16.msra.mxu0 %v4149
    %6074 = vmatprep.subr.bf16.mxu0 %v4154
    %6075 = vmatpush1.bf16.msra.mxu0 %v4153
    %6076 = vmatprep.subr.bf16.mxu0 %v4158
    %6077 = vmatpush1.bf16.msra.mxu0 %v4157
    %6078 = vmatprep.subr.bf16.mxu0 %v4162
    %6079 = vmatpush1.bf16.msra.mxu0 %v4161
    %6080 = vmatprep.subr.bf16.mxu0 %v4166
    %6081 = vmatpush1.bf16.msra.mxu0 %v4165
    %6082 = vmatprep.subr.bf16.mxu0 %v4170
    %6083 = vmatpush1.bf16.msra.mxu0 %v4169
    %6084 = vmatprep.subr.bf16.mxu0 %v4174
    %6085 = vmatpush1.bf16.msra.mxu0 %v4173
    %6086 = vmatprep.subr.bf16.mxu0 %v4178
    %6087 = vmatpush1.bf16.msra.mxu0 %v4177
    %6088 = vmatprep.subr.bf16.mxu0 %v4182
    %6089 = vmatpush1.bf16.msra.mxu0 %v4181
    %6090 = vmatprep.subr.bf16.mxu0 %v4186
    %6091 = vmatpush1.bf16.msra.mxu0 %v4185
    %6092 = vmatprep.subr.bf16.mxu0 %v4190
    %6093 = vmatpush1.bf16.msra.mxu0 %v4189
    %6094 = vmatprep.subr.bf16.mxu0 %v4194
    %6095 = vmatpush1.bf16.msra.mxu0 %v4193
    %6096 = vmatprep.subr.bf16.mxu0 %v4198
    %6097 = vmatpush1.bf16.msra.mxu0 %v4197
    %6098 = vmatprep.subr.bf16.mxu0 %v4202
    %6099 = vmatpush1.bf16.msra.mxu0 %v4201
    %6100 = vmatprep.subr.bf16.mxu0 %v4206
    %6101 = vmatpush1.bf16.msra.mxu0 %v4205
    %6102 = vmatprep.mubr.bf16.mxu0 %v1107
    %6103 = vmatmul.mubr.bf16.gmra.mrb[0].mxu0 %v1106
    %v6104 = vpop.f32.mrb[0].mxu0
    %v6105 = vadd.f32 %v6064, %v6104
    %v6106 = vpop.f32.mrb[0].mxu0
    %v6107 = vadd.f32 %v6066, %v6106
    %v6108 = vpop.f32.mrb[0].mxu0
    %v6109 = vpop.f32.mrb[0].mxu0
    %6110 = vdwg.mxu0
    %6111 = vmatprep.subr.bf16.mxu0 %v4210
    %6112 = vmatpush1.bf16.msra.mxu0 %v4209
    %6113 = vmatprep.subr.bf16.mxu0 %v4214
    %6114 = vmatpush1.bf16.msra.mxu0 %v4213
    %6115 = vmatprep.subr.bf16.mxu0 %v4218
    %6116 = vmatpush1.bf16.msra.mxu0 %v4217
    %6117 = vmatprep.subr.bf16.mxu0 %v4222
    %6118 = vmatpush1.bf16.msra.mxu0 %v4221
    %6119 = vmatprep.subr.bf16.mxu0 %v4226
    %6120 = vmatpush1.bf16.msra.mxu0 %v4225
    %6121 = vmatprep.subr.bf16.mxu0 %v4230
    %6122 = vmatpush1.bf16.msra.mxu0 %v4229
    %6123 = vmatprep.subr.bf16.mxu0 %v4234
    %6124 = vmatpush1.bf16.msra.mxu0 %v4233
    %6125 = vmatprep.subr.bf16.mxu0 %v4238
    %6126 = vmatpush1.bf16.msra.mxu0 %v4237
    %6127 = vmatprep.subr.bf16.mxu0 %v4242
    %6128 = vmatpush1.bf16.msra.mxu0 %v4241
    %6129 = vmatprep.subr.bf16.mxu0 %v4246
    %6130 = vmatpush1.bf16.msra.mxu0 %v4245
    %6131 = vmatprep.subr.bf16.mxu0 %v4250
    %6132 = vmatpush1.bf16.msra.mxu0 %v4249
    %6133 = vmatprep.subr.bf16.mxu0 %v4254
    %6134 = vmatpush1.bf16.msra.mxu0 %v4253
    %6135 = vmatprep.subr.bf16.mxu0 %v4258
    %6136 = vmatpush1.bf16.msra.mxu0 %v4257
    %6137 = vmatprep.subr.bf16.mxu0 %v4262
    %6138 = vmatpush1.bf16.msra.mxu0 %v4261
    %6139 = vmatprep.subr.bf16.mxu0 %v4266
    %6140 = vmatpush1.bf16.msra.mxu0 %v4265
    %6141 = vmatprep.subr.bf16.mxu0 %v4270
    %6142 = vmatpush1.bf16.msra.mxu0 %v4269
    %6143 = vmatprep.mubr.bf16.mxu0 %v1109
    %6144 = vmatmul.mubr.bf16.gmra.mrb[0].mxu0 %v1108
    %v6145 = vpop.f32.mrb[0].mxu0
    %v6146 = vadd.f32 %v6105, %v6145
    %v6147 = vpop.f32.mrb[0].mxu0
    %v6148 = vadd.f32 %v6107, %v6147
    %v6149 = vpop.f32.mrb[0].mxu0
    %v6150 = vpop.f32.mrb[0].mxu0
    %6151 = vdwg.mxu0
    %6152 = vmatprep.subr.bf16.mxu0 %v4274
    %6153 = vmatpush1.bf16.msra.mxu0 %v4273
    %6154 = vmatprep.subr.bf16.mxu0 %v4278
    %6155 = vmatpush1.bf16.msra.mxu0 %v4277
    %6156 = vmatprep.subr.bf16.mxu0 %v4282
    %6157 = vmatpush1.bf16.msra.mxu0 %v4281
    %6158 = vmatprep.subr.bf16.mxu0 %v4286
    %6159 = vmatpush1.bf16.msra.mxu0 %v4285
    %6160 = vmatprep.subr.bf16.mxu0 %v4290
    %6161 = vmatpush1.bf16.msra.mxu0 %v4289
    %6162 = vmatprep.subr.bf16.mxu0 %v4294
    %6163 = vmatpush1.bf16.msra.mxu0 %v4293
    %6164 = vmatprep.subr.bf16.mxu0 %v4298
    %6165 = vmatpush1.bf16.msra.mxu0 %v4297
    %6166 = vmatprep.subr.bf16.mxu0 %v4302
    %6167 = vmatpush1.bf16.msra.mxu0 %v4301
    %6168 = vmatprep.subr.bf16.mxu0 %v4306
    %6169 = vmatpush1.bf16.msra.mxu0 %v4305
    %6170 = vmatprep.subr.bf16.mxu0 %v4310
    %6171 = vmatpush1.bf16.msra.mxu0 %v4309
    %6172 = vmatprep.subr.bf16.mxu0 %v4314
    %6173 = vmatpush1.bf16.msra.mxu0 %v4313
    %6174 = vmatprep.subr.bf16.mxu0 %v4318
    %6175 = vmatpush1.bf16.msra.mxu0 %v4317
    %6176 = vmatprep.subr.bf16.mxu0 %v4322
    %6177 = vmatpush1.bf16.msra.mxu0 %v4321
    %6178 = vmatprep.subr.bf16.mxu0 %v4326
    %6179 = vmatpush1.bf16.msra.mxu0 %v4325
    %6180 = vmatprep.subr.bf16.mxu0 %v4330
    %6181 = vmatpush1.bf16.msra.mxu0 %v4329
    %6182 = vmatprep.subr.bf16.mxu0 %v4334
    %6183 = vmatpush1.bf16.msra.mxu0 %v4333
    %6184 = vmatprep.mubr.bf16.mxu0 %v1111
    %6185 = vmatmul.mubr.bf16.gmra.mrb[0].mxu0 %v1110
    %v6186 = vpop.f32.mrb[0].mxu0
    %v6187 = vadd.f32 %v6146, %v6186
    %v6188 = vpop.f32.mrb[0].mxu0
    %v6189 = vadd.f32 %v6148, %v6188
    %v6190 = vpop.f32.mrb[0].mxu0
    %v6191 = vpop.f32.mrb[0].mxu0
    %6192 = vdwg.mxu0
    %6193 = vmatprep.subr.bf16.mxu0 %v4338
    %6194 = vmatpush1.bf16.msra.mxu0 %v4337
    %6195 = vmatprep.subr.bf16.mxu0 %v4342
    %6196 = vmatpush1.bf16.msra.mxu0 %v4341
    %6197 = vmatprep.subr.bf16.mxu0 %v4346
    %6198 = vmatpush1.bf16.msra.mxu0 %v4345
    %6199 = vmatprep.subr.bf16.mxu0 %v4350
    %6200 = vmatpush1.bf16.msra.mxu0 %v4349
    %6201 = vmatprep.subr.bf16.mxu0 %v4354
    %6202 = vmatpush1.bf16.msra.mxu0 %v4353
    %6203 = vmatprep.subr.bf16.mxu0 %v4358
    %6204 = vmatpush1.bf16.msra.mxu0 %v4357
    %6205 = vmatprep.subr.bf16.mxu0 %v4362
    %6206 = vmatpush1.bf16.msra.mxu0 %v4361
    %6207 = vmatprep.subr.bf16.mxu0 %v4366
    %6208 = vmatpush1.bf16.msra.mxu0 %v4365
    %6209 = vmatprep.subr.bf16.mxu0 %v4370
    %6210 = vmatpush1.bf16.msra.mxu0 %v4369
    %6211 = vmatprep.subr.bf16.mxu0 %v4374
    %6212 = vmatpush1.bf16.msra.mxu0 %v4373
    %6213 = vmatprep.subr.bf16.mxu0 %v4378
    %6214 = vmatpush1.bf16.msra.mxu0 %v4377
    %6215 = vmatprep.subr.bf16.mxu0 %v4382
    %6216 = vmatpush1.bf16.msra.mxu0 %v4381
    %6217 = vmatprep.subr.bf16.mxu0 %v4386
    %6218 = vmatpush1.bf16.msra.mxu0 %v4385
    %6219 = vmatprep.subr.bf16.mxu0 %v4390
    %6220 = vmatpush1.bf16.msra.mxu0 %v4389
    %6221 = vmatprep.subr.bf16.mxu0 %v4394
    %6222 = vmatpush1.bf16.msra.mxu0 %v4393
    %6223 = vmatprep.subr.bf16.mxu0 %v4398
    %6224 = vmatpush1.bf16.msra.mxu0 %v4397
    %6225 = vmatprep.mubr.bf16.mxu0 %v1113
    %6226 = vmatmul.mubr.bf16.gmra.mrb[0].mxu0 %v1112
    %v6227 = vpop.f32.mrb[0].mxu0
    %v6228 = vadd.f32 %v6187, %v6227
    %v6229 = vpop.f32.mrb[0].mxu0
    %v6230 = vadd.f32 %v6189, %v6229
    %v6231 = vpop.f32.mrb[0].mxu0
    %v6232 = vpop.f32.mrb[0].mxu0
    %6233 = vdwg.mxu0
    %6234 = vmatprep.subr.bf16.mxu0 %v4402
    %6235 = vmatpush1.bf16.msra.mxu0 %v4401
    %6236 = vmatprep.subr.bf16.mxu0 %v4406
    %6237 = vmatpush1.bf16.msra.mxu0 %v4405
    %6238 = vmatprep.subr.bf16.mxu0 %v4410
    %6239 = vmatpush1.bf16.msra.mxu0 %v4409
    %6240 = vmatprep.subr.bf16.mxu0 %v4414
    %6241 = vmatpush1.bf16.msra.mxu0 %v4413
    %6242 = vmatprep.subr.bf16.mxu0 %v4418
    %6243 = vmatpush1.bf16.msra.mxu0 %v4417
    %6244 = vmatprep.subr.bf16.mxu0 %v4422
    %6245 = vmatpush1.bf16.msra.mxu0 %v4421
    %6246 = vmatprep.subr.bf16.mxu0 %v4426
    %6247 = vmatpush1.bf16.msra.mxu0 %v4425
    %6248 = vmatprep.subr.bf16.mxu0 %v4430
    %6249 = vmatpush1.bf16.msra.mxu0 %v4429
    %6250 = vmatprep.subr.bf16.mxu0 %v4434
    %6251 = vmatpush1.bf16.msra.mxu0 %v4433
    %6252 = vmatprep.subr.bf16.mxu0 %v4438
    %6253 = vmatpush1.bf16.msra.mxu0 %v4437
    %6254 = vmatprep.subr.bf16.mxu0 %v4442
    %6255 = vmatpush1.bf16.msra.mxu0 %v4441
    %6256 = vmatprep.subr.bf16.mxu0 %v4446
    %6257 = vmatpush1.bf16.msra.mxu0 %v4445
    %6258 = vmatprep.subr.bf16.mxu0 %v4450
    %6259 = vmatpush1.bf16.msra.mxu0 %v4449
    %6260 = vmatprep.subr.bf16.mxu0 %v4454
    %6261 = vmatpush1.bf16.msra.mxu0 %v4453
    %6262 = vmatprep.subr.bf16.mxu0 %v4458
    %6263 = vmatpush1.bf16.msra.mxu0 %v4457
    %6264 = vmatprep.subr.bf16.mxu0 %v4462
    %6265 = vmatpush1.bf16.msra.mxu0 %v4461
    %6266 = vmatprep.mubr.bf16.mxu0 %v1115
    %6267 = vmatmul.mubr.bf16.gmra.mrb[0].mxu0 %v1114
    %v6268 = vpop.f32.mrb[0].mxu0
    %v6269 = vadd.f32 %v6228, %v6268
    %v6270 = vpop.f32.mrb[0].mxu0
    %v6271 = vadd.f32 %v6230, %v6270
    %v6272 = vpop.f32.mrb[0].mxu0
    %v6273 = vpop.f32.mrb[0].mxu0
    %6274 = vdwg.mxu0
    %6275 = vmatprep.subr.bf16.mxu0 %v4466
    %6276 = vmatpush1.bf16.msra.mxu0 %v4465
    %6277 = vmatprep.subr.bf16.mxu0 %v4470
    %6278 = vmatpush1.bf16.msra.mxu0 %v4469
    %6279 = vmatprep.subr.bf16.mxu0 %v4474
    %6280 = vmatpush1.bf16.msra.mxu0 %v4473
    %6281 = vmatprep.subr.bf16.mxu0 %v4478
    %6282 = vmatpush1.bf16.msra.mxu0 %v4477
    %6283 = vmatprep.subr.bf16.mxu0 %v4482
    %6284 = vmatpush1.bf16.msra.mxu0 %v4481
    %6285 = vmatprep.subr.bf16.mxu0 %v4486
    %6286 = vmatpush1.bf16.msra.mxu0 %v4485
    %6287 = vmatprep.subr.bf16.mxu0 %v4490
    %6288 = vmatpush1.bf16.msra.mxu0 %v4489
    %6289 = vmatprep.subr.bf16.mxu0 %v4494
    %6290 = vmatpush1.bf16.msra.mxu0 %v4493
    %6291 = vmatprep.subr.bf16.mxu0 %v4498
    %6292 = vmatpush1.bf16.msra.mxu0 %v4497
    %6293 = vmatprep.subr.bf16.mxu0 %v4502
    %6294 = vmatpush1.bf16.msra.mxu0 %v4501
    %6295 = vmatprep.subr.bf16.mxu0 %v4506
    %6296 = vmatpush1.bf16.msra.mxu0 %v4505
    %6297 = vmatprep.subr.bf16.mxu0 %v4510
    %6298 = vmatpush1.bf16.msra.mxu0 %v4509
    %6299 = vmatprep.subr.bf16.mxu0 %v4514
    %6300 = vmatpush1.bf16.msra.mxu0 %v4513
    %6301 = vmatprep.subr.bf16.mxu0 %v4518
    %6302 = vmatpush1.bf16.msra.mxu0 %v4517
    %6303 = vmatprep.subr.bf16.mxu0 %v4522
    %6304 = vmatpush1.bf16.msra.mxu0 %v4521
    %6305 = vmatprep.subr.bf16.mxu0 %v4526
    %6306 = vmatpush1.bf16.msra.mxu0 %v4525
    %6307 = vmatprep.mubr.bf16.mxu0 %v1117
    %6308 = vmatmul.mubr.bf16.gmra.mrb[0].mxu0 %v1116
    %v6309 = vpop.f32.mrb[0].mxu0
    %v6310 = vadd.f32 %v6269, %v6309
    %v6311 = vpop.f32.mrb[0].mxu0
    %v6312 = vadd.f32 %v6271, %v6311
    %v6313 = vpop.f32.mrb[0].mxu0
    %v6314 = vpop.f32.mrb[0].mxu0
    %6315 = vdwg.mxu0
    %6316 = vmatprep.subr.bf16.mxu0 %v4530
    %6317 = vmatpush1.bf16.msra.mxu0 %v4529
    %6318 = vmatprep.subr.bf16.mxu0 %v4534
    %6319 = vmatpush1.bf16.msra.mxu0 %v4533
    %6320 = vmatprep.subr.bf16.mxu0 %v4538
    %6321 = vmatpush1.bf16.msra.mxu0 %v4537
    %6322 = vmatprep.subr.bf16.mxu0 %v4542
    %6323 = vmatpush1.bf16.msra.mxu0 %v4541
    %6324 = vmatprep.subr.bf16.mxu0 %v4546
    %6325 = vmatpush1.bf16.msra.mxu0 %v4545
    %6326 = vmatprep.subr.bf16.mxu0 %v4550
    %6327 = vmatpush1.bf16.msra.mxu0 %v4549
    %6328 = vmatprep.subr.bf16.mxu0 %v4554
    %6329 = vmatpush1.bf16.msra.mxu0 %v4553
    %6330 = vmatprep.subr.bf16.mxu0 %v4558
    %6331 = vmatpush1.bf16.msra.mxu0 %v4557
    %6332 = vmatprep.subr.bf16.mxu0 %v4562
    %6333 = vmatpush1.bf16.msra.mxu0 %v4561
    %6334 = vmatprep.subr.bf16.mxu0 %v4566
    %6335 = vmatpush1.bf16.msra.mxu0 %v4565
    %6336 = vmatprep.subr.bf16.mxu0 %v4570
    %6337 = vmatpush1.bf16.msra.mxu0 %v4569
    %6338 = vmatprep.subr.bf16.mxu0 %v4574
    %6339 = vmatpush1.bf16.msra.mxu0 %v4573
    %6340 = vmatprep.subr.bf16.mxu0 %v4578
    %6341 = vmatpush1.bf16.msra.mxu0 %v4577
    %6342 = vmatprep.subr.bf16.mxu0 %v4582
    %6343 = vmatpush1.bf16.msra.mxu0 %v4581
    %6344 = vmatprep.subr.bf16.mxu0 %v4586
    %6345 = vmatpush1.bf16.msra.mxu0 %v4585
    %6346 = vmatprep.subr.bf16.mxu0 %v4590
    %6347 = vmatpush1.bf16.msra.mxu0 %v4589
    %6348 = vmatprep.mubr.bf16.mxu0 %v1119
    %6349 = vmatmul.mubr.bf16.gmra.mrb[0].mxu0 %v1118
    %v6350 = vpop.f32.mrb[0].mxu0
    %v6351 = vadd.f32 %v6310, %v6350
    %v6352 = vpop.f32.mrb[0].mxu0
    %v6353 = vadd.f32 %v6312, %v6352
    %v6354 = vpop.f32.mrb[0].mxu0
    %v6355 = vpop.f32.mrb[0].mxu0
    %6356 = vdwg.mxu0
    %6357 = vmatprep.subr.bf16.mxu0 %v4594
    %6358 = vmatpush1.bf16.msra.mxu0 %v4593
    %6359 = vmatprep.subr.bf16.mxu0 %v4598
    %6360 = vmatpush1.bf16.msra.mxu0 %v4597
    %6361 = vmatprep.subr.bf16.mxu0 %v4602
    %6362 = vmatpush1.bf16.msra.mxu0 %v4601
    %6363 = vmatprep.subr.bf16.mxu0 %v4606
    %6364 = vmatpush1.bf16.msra.mxu0 %v4605
    %6365 = vmatprep.subr.bf16.mxu0 %v4610
    %6366 = vmatpush1.bf16.msra.mxu0 %v4609
    %6367 = vmatprep.subr.bf16.mxu0 %v4614
    %6368 = vmatpush1.bf16.msra.mxu0 %v4613
    %6369 = vmatprep.subr.bf16.mxu0 %v4618
    %6370 = vmatpush1.bf16.msra.mxu0 %v4617
    %6371 = vmatprep.subr.bf16.mxu0 %v4622
    %6372 = vmatpush1.bf16.msra.mxu0 %v4621
    %6373 = vmatprep.subr.bf16.mxu0 %v4626
    %6374 = vmatpush1.bf16.msra.mxu0 %v4625
    %6375 = vmatprep.subr.bf16.mxu0 %v4630
    %6376 = vmatpush1.bf16.msra.mxu0 %v4629
    %6377 = vmatprep.subr.bf16.mxu0 %v4634
    %6378 = vmatpush1.bf16.msra.mxu0 %v4633
    %6379 = vmatprep.subr.bf16.mxu0 %v4638
    %6380 = vmatpush1.bf16.msra.mxu0 %v4637
    %6381 = vmatprep.subr.bf16.mxu0 %v4642
    %6382 = vmatpush1.bf16.msra.mxu0 %v4641
    %6383 = vmatprep.subr.bf16.mxu0 %v4646
    %6384 = vmatpush1.bf16.msra.mxu0 %v4645
    %6385 = vmatprep.subr.bf16.mxu0 %v4650
    %6386 = vmatpush1.bf16.msra.mxu0 %v4649
    %6387 = vmatprep.subr.bf16.mxu0 %v4654
    %6388 = vmatpush1.bf16.msra.mxu0 %v4653
    %6389 = vmatprep.mubr.bf16.mxu0 %v1121
    %6390 = vmatmul.mubr.bf16.gmra.mrb[0].mxu0 %v1120
    %v6391 = vpop.f32.mrb[0].mxu0
    %v6392 = vadd.f32 %v6351, %v6391
    %v6393 = vpop.f32.mrb[0].mxu0
    %v6394 = vadd.f32 %v6353, %v6393
    %v6395 = vpop.f32.mrb[0].mxu0
    %v6396 = vpop.f32.mrb[0].mxu0
    %6397 = vdwg.mxu0
    %6398 = vmatprep.subr.bf16.mxu0 %v4658
    %6399 = vmatpush1.bf16.msra.mxu0 %v4657
    %6400 = vmatprep.subr.bf16.mxu0 %v4662
    %6401 = vmatpush1.bf16.msra.mxu0 %v4661
    %6402 = vmatprep.subr.bf16.mxu0 %v4666
    %6403 = vmatpush1.bf16.msra.mxu0 %v4665
    %6404 = vmatprep.subr.bf16.mxu0 %v4670
    %6405 = vmatpush1.bf16.msra.mxu0 %v4669
    %6406 = vmatprep.subr.bf16.mxu0 %v4674
    %6407 = vmatpush1.bf16.msra.mxu0 %v4673
    %6408 = vmatprep.subr.bf16.mxu0 %v4678
    %6409 = vmatpush1.bf16.msra.mxu0 %v4677
    %6410 = vmatprep.subr.bf16.mxu0 %v4682
    %6411 = vmatpush1.bf16.msra.mxu0 %v4681
    %6412 = vmatprep.subr.bf16.mxu0 %v4686
    %6413 = vmatpush1.bf16.msra.mxu0 %v4685
    %6414 = vmatprep.subr.bf16.mxu0 %v4690
    %6415 = vmatpush1.bf16.msra.mxu0 %v4689
    %6416 = vmatprep.subr.bf16.mxu0 %v4694
    %6417 = vmatpush1.bf16.msra.mxu0 %v4693
    %6418 = vmatprep.subr.bf16.mxu0 %v4698
    %6419 = vmatpush1.bf16.msra.mxu0 %v4697
    %6420 = vmatprep.subr.bf16.mxu0 %v4702
    %6421 = vmatpush1.bf16.msra.mxu0 %v4701
    %6422 = vmatprep.subr.bf16.mxu0 %v4706
    %6423 = vmatpush1.bf16.msra.mxu0 %v4705
    %6424 = vmatprep.subr.bf16.mxu0 %v4710
    %6425 = vmatpush1.bf16.msra.mxu0 %v4709
    %6426 = vmatprep.subr.bf16.mxu0 %v4714
    %6427 = vmatpush1.bf16.msra.mxu0 %v4713
    %6428 = vmatprep.subr.bf16.mxu0 %v4718
    %6429 = vmatpush1.bf16.msra.mxu0 %v4717
    %6430 = vmatprep.mubr.bf16.mxu0 %v1123
    %6431 = vmatmul.mubr.bf16.gmra.mrb[0].mxu0 %v1122
    %v6432 = vpop.f32.mrb[0].mxu0
    %v6433 = vadd.f32 %v6392, %v6432
    %v6434 = vpop.f32.mrb[0].mxu0
    %v6435 = vadd.f32 %v6394, %v6434
    %v6436 = vpop.f32.mrb[0].mxu0
    %v6437 = vpop.f32.mrb[0].mxu0
    %6438 = vdwg.mxu0
    %6439 = vmatprep.subr.bf16.mxu0 %v4722
    %6440 = vmatpush1.bf16.msra.mxu0 %v4721
    %6441 = vmatprep.subr.bf16.mxu0 %v4726
    %6442 = vmatpush1.bf16.msra.mxu0 %v4725
    %6443 = vmatprep.subr.bf16.mxu0 %v4730
    %6444 = vmatpush1.bf16.msra.mxu0 %v4729
    %6445 = vmatprep.subr.bf16.mxu0 %v4734
    %6446 = vmatpush1.bf16.msra.mxu0 %v4733
    %6447 = vmatprep.subr.bf16.mxu0 %v4738
    %6448 = vmatpush1.bf16.msra.mxu0 %v4737
    %6449 = vmatprep.subr.bf16.mxu0 %v4742
    %6450 = vmatpush1.bf16.msra.mxu0 %v4741
    %6451 = vmatprep.subr.bf16.mxu0 %v4746
    %6452 = vmatpush1.bf16.msra.mxu0 %v4745
    %6453 = vmatprep.subr.bf16.mxu0 %v4750
    %6454 = vmatpush1.bf16.msra.mxu0 %v4749
    %6455 = vmatprep.subr.bf16.mxu0 %v4754
    %6456 = vmatpush1.bf16.msra.mxu0 %v4753
    %6457 = vmatprep.subr.bf16.mxu0 %v4758
    %6458 = vmatpush1.bf16.msra.mxu0 %v4757
    %6459 = vmatprep.subr.bf16.mxu0 %v4762
    %6460 = vmatpush1.bf16.msra.mxu0 %v4761
    %6461 = vmatprep.subr.bf16.mxu0 %v4766
    %6462 = vmatpush1.bf16.msra.mxu0 %v4765
    %6463 = vmatprep.subr.bf16.mxu0 %v4770
    %6464 = vmatpush1.bf16.msra.mxu0 %v4769
    %6465 = vmatprep.subr.bf16.mxu0 %v4774
    %6466 = vmatpush1.bf16.msra.mxu0 %v4773
    %6467 = vmatprep.subr.bf16.mxu0 %v4778
    %6468 = vmatpush1.bf16.msra.mxu0 %v4777
    %6469 = vmatprep.subr.bf16.mxu0 %v4782
    %6470 = vmatpush1.bf16.msra.mxu0 %v4781
    %6471 = vmatprep.mubr.bf16.mxu0 %v1125
    %6472 = vmatmul.mubr.bf16.gmra.mrb[0].mxu0 %v1124
    %v6473 = vpop.f32.mrb[0].mxu0
    %v6474 = vadd.f32 %v6433, %v6473
    %v6475 = vpop.f32.mrb[0].mxu0
    %v6476 = vadd.f32 %v6435, %v6475
    %v6477 = vpop.f32.mrb[0].mxu0
    %v6478 = vpop.f32.mrb[0].mxu0
    %6479 = vdwg.mxu0
    %6480 = vmatprep.subr.bf16.mxu0 %v4786
    %6481 = vmatpush1.bf16.msra.mxu0 %v4785
    %6482 = vmatprep.subr.bf16.mxu0 %v4790
    %6483 = vmatpush1.bf16.msra.mxu0 %v4789
    %6484 = vmatprep.subr.bf16.mxu0 %v4794
    %6485 = vmatpush1.bf16.msra.mxu0 %v4793
    %6486 = vmatprep.subr.bf16.mxu0 %v4798
    %6487 = vmatpush1.bf16.msra.mxu0 %v4797
    %6488 = vmatprep.subr.bf16.mxu0 %v4802
    %6489 = vmatpush1.bf16.msra.mxu0 %v4801
    %6490 = vmatprep.subr.bf16.mxu0 %v4806
    %6491 = vmatpush1.bf16.msra.mxu0 %v4805
    %6492 = vmatprep.subr.bf16.mxu0 %v4810
    %6493 = vmatpush1.bf16.msra.mxu0 %v4809
    %6494 = vmatprep.subr.bf16.mxu0 %v4814
    %6495 = vmatpush1.bf16.msra.mxu0 %v4813
    %6496 = vmatprep.subr.bf16.mxu0 %v4818
    %6497 = vmatpush1.bf16.msra.mxu0 %v4817
    %6498 = vmatprep.subr.bf16.mxu0 %v4822
    %6499 = vmatpush1.bf16.msra.mxu0 %v4821
    %6500 = vmatprep.subr.bf16.mxu0 %v4826
    %6501 = vmatpush1.bf16.msra.mxu0 %v4825
    %6502 = vmatprep.subr.bf16.mxu0 %v4830
    %6503 = vmatpush1.bf16.msra.mxu0 %v4829
    %6504 = vmatprep.subr.bf16.mxu0 %v4834
    %6505 = vmatpush1.bf16.msra.mxu0 %v4833
    %6506 = vmatprep.subr.bf16.mxu0 %v4838
    %6507 = vmatpush1.bf16.msra.mxu0 %v4837
    %6508 = vmatprep.subr.bf16.mxu0 %v4842
    %6509 = vmatpush1.bf16.msra.mxu0 %v4841
    %6510 = vmatprep.subr.bf16.mxu0 %v4846
    %6511 = vmatpush1.bf16.msra.mxu0 %v4845
    %6512 = vmatprep.mubr.bf16.mxu0 %v1127
    %6513 = vmatmul.mubr.bf16.gmra.mrb[0].mxu0 %v1126
    %v6514 = vpop.f32.mrb[0].mxu0
    %v6515 = vadd.f32 %v6474, %v6514
    %v6516 = vpop.f32.mrb[0].mxu0
    %v6517 = vadd.f32 %v6476, %v6516
    %v6518 = vpop.f32.mrb[0].mxu0
    %v6519 = vpop.f32.mrb[0].mxu0
    %6520 = vdwg.mxu0
    %6521 = vmatprep.subr.bf16.mxu0 %v4850
    %6522 = vmatpush1.bf16.msra.mxu0 %v4849
    %6523 = vmatprep.subr.bf16.mxu0 %v4854
    %6524 = vmatpush1.bf16.msra.mxu0 %v4853
    %6525 = vmatprep.subr.bf16.mxu0 %v4858
    %6526 = vmatpush1.bf16.msra.mxu0 %v4857
    %6527 = vmatprep.subr.bf16.mxu0 %v4862
    %6528 = vmatpush1.bf16.msra.mxu0 %v4861
    %6529 = vmatprep.subr.bf16.mxu0 %v4866
    %6530 = vmatpush1.bf16.msra.mxu0 %v4865
    %6531 = vmatprep.subr.bf16.mxu0 %v4870
    %6532 = vmatpush1.bf16.msra.mxu0 %v4869
    %6533 = vmatprep.subr.bf16.mxu0 %v4874
    %6534 = vmatpush1.bf16.msra.mxu0 %v4873
    %6535 = vmatprep.subr.bf16.mxu0 %v4878
    %6536 = vmatpush1.bf16.msra.mxu0 %v4877
    %6537 = vmatprep.subr.bf16.mxu0 %v4882
    %6538 = vmatpush1.bf16.msra.mxu0 %v4881
    %6539 = vmatprep.subr.bf16.mxu0 %v4886
    %6540 = vmatpush1.bf16.msra.mxu0 %v4885
    %6541 = vmatprep.subr.bf16.mxu0 %v4890
    %6542 = vmatpush1.bf16.msra.mxu0 %v4889
    %6543 = vmatprep.subr.bf16.mxu0 %v4894
    %6544 = vmatpush1.bf16.msra.mxu0 %v4893
    %6545 = vmatprep.subr.bf16.mxu0 %v4898
    %6546 = vmatpush1.bf16.msra.mxu0 %v4897
    %6547 = vmatprep.subr.bf16.mxu0 %v4902
    %6548 = vmatpush1.bf16.msra.mxu0 %v4901
    %6549 = vmatprep.subr.bf16.mxu0 %v4906
    %6550 = vmatpush1.bf16.msra.mxu0 %v4905
    %6551 = vmatprep.subr.bf16.mxu0 %v4910
    %6552 = vmatpush1.bf16.msra.mxu0 %v4909
    %6553 = vmatprep.mubr.bf16.mxu0 %v1129
    %6554 = vmatmul.mubr.bf16.gmra.mrb[0].mxu0 %v1128
    %v6555 = vpop.f32.mrb[0].mxu0
    %v6556 = vadd.f32 %v6515, %v6555
    %v6557 = vpop.f32.mrb[0].mxu0
    %v6558 = vadd.f32 %v6517, %v6557
    %v6559 = vpop.f32.mrb[0].mxu0
    %v6560 = vpop.f32.mrb[0].mxu0
    %6561 = vdwg.mxu0
    %6562 = vmatprep.subr.bf16.mxu0 %v4914
    %6563 = vmatpush1.bf16.msra.mxu0 %v4913
    %6564 = vmatprep.subr.bf16.mxu0 %v4918
    %6565 = vmatpush1.bf16.msra.mxu0 %v4917
    %6566 = vmatprep.subr.bf16.mxu0 %v4922
    %6567 = vmatpush1.bf16.msra.mxu0 %v4921
    %6568 = vmatprep.subr.bf16.mxu0 %v4926
    %6569 = vmatpush1.bf16.msra.mxu0 %v4925
    %6570 = vmatprep.subr.bf16.mxu0 %v4930
    %6571 = vmatpush1.bf16.msra.mxu0 %v4929
    %6572 = vmatprep.subr.bf16.mxu0 %v4934
    %6573 = vmatpush1.bf16.msra.mxu0 %v4933
    %6574 = vmatprep.subr.bf16.mxu0 %v4938
    %6575 = vmatpush1.bf16.msra.mxu0 %v4937
    %6576 = vmatprep.subr.bf16.mxu0 %v4942
    %6577 = vmatpush1.bf16.msra.mxu0 %v4941
    %6578 = vmatprep.subr.bf16.mxu0 %v4946
    %6579 = vmatpush1.bf16.msra.mxu0 %v4945
    %6580 = vmatprep.subr.bf16.mxu0 %v4950
    %6581 = vmatpush1.bf16.msra.mxu0 %v4949
    %6582 = vmatprep.subr.bf16.mxu0 %v4954
    %6583 = vmatpush1.bf16.msra.mxu0 %v4953
    %6584 = vmatprep.subr.bf16.mxu0 %v4958
    %6585 = vmatpush1.bf16.msra.mxu0 %v4957
    %6586 = vmatprep.subr.bf16.mxu0 %v4962
    %6587 = vmatpush1.bf16.msra.mxu0 %v4961
    %6588 = vmatprep.subr.bf16.mxu0 %v4966
    %6589 = vmatpush1.bf16.msra.mxu0 %v4965
    %6590 = vmatprep.subr.bf16.mxu0 %v4970
    %6591 = vmatpush1.bf16.msra.mxu0 %v4969
    %6592 = vmatprep.subr.bf16.mxu0 %v4974
    %6593 = vmatpush1.bf16.msra.mxu0 %v4973
    %6594 = vmatprep.mubr.bf16.mxu0 %v1131
    %6595 = vmatmul.mubr.bf16.gmra.mrb[0].mxu0 %v1130
    %v6596 = vpop.f32.mrb[0].mxu0
    %v6597 = vadd.f32 %v6556, %v6596
    %v6598 = vpop.f32.mrb[0].mxu0
    %v6599 = vadd.f32 %v6558, %v6598
    %v6600 = vpop.f32.mrb[0].mxu0
    %v6601 = vpop.f32.mrb[0].mxu0
    %6602 = vdwg.mxu0
    %6603 = vmatprep.subr.bf16.mxu0 %v4978
    %6604 = vmatpush1.bf16.msra.mxu0 %v4977
    %6605 = vmatprep.subr.bf16.mxu0 %v4982
    %6606 = vmatpush1.bf16.msra.mxu0 %v4981
    %6607 = vmatprep.subr.bf16.mxu0 %v4986
    %6608 = vmatpush1.bf16.msra.mxu0 %v4985
    %6609 = vmatprep.subr.bf16.mxu0 %v4990
    %6610 = vmatpush1.bf16.msra.mxu0 %v4989
    %6611 = vmatprep.subr.bf16.mxu0 %v4994
    %6612 = vmatpush1.bf16.msra.mxu0 %v4993
    %6613 = vmatprep.subr.bf16.mxu0 %v4998
    %6614 = vmatpush1.bf16.msra.mxu0 %v4997
    %6615 = vmatprep.subr.bf16.mxu0 %v5002
    %6616 = vmatpush1.bf16.msra.mxu0 %v5001
    %6617 = vmatprep.subr.bf16.mxu0 %v5006
    %6618 = vmatpush1.bf16.msra.mxu0 %v5005
    %6619 = vmatprep.subr.bf16.mxu0 %v5010
    %6620 = vmatpush1.bf16.msra.mxu0 %v5009
    %6621 = vmatprep.subr.bf16.mxu0 %v5014
    %6622 = vmatpush1.bf16.msra.mxu0 %v5013
    %6623 = vmatprep.subr.bf16.mxu0 %v5018
    %6624 = vmatpush1.bf16.msra.mxu0 %v5017
    %6625 = vmatprep.subr.bf16.mxu0 %v5022
    %6626 = vmatpush1.bf16.msra.mxu0 %v5021
    %6627 = vmatprep.subr.bf16.mxu0 %v5026
    %6628 = vmatpush1.bf16.msra.mxu0 %v5025
    %6629 = vmatprep.subr.bf16.mxu0 %v5030
    %6630 = vmatpush1.bf16.msra.mxu0 %v5029
    %6631 = vmatprep.subr.bf16.mxu0 %v5034
    %6632 = vmatpush1.bf16.msra.mxu0 %v5033
    %6633 = vmatprep.subr.bf16.mxu0 %v5038
    %6634 = vmatpush1.bf16.msra.mxu0 %v5037
    %6635 = vmatprep.mubr.bf16.mxu0 %v1133
    %6636 = vmatmul.mubr.bf16.gmra.mrb[0].mxu0 %v1132
    %v6637 = vpop.f32.mrb[0].mxu0
    %v6638 = vadd.f32 %v6597, %v6637
    %v6639 = vpop.f32.mrb[0].mxu0
    %v6640 = vadd.f32 %v6599, %v6639
    %v6641 = vpop.f32.mrb[0].mxu0
    %v6642 = vpop.f32.mrb[0].mxu0
    %6643 = vdwg.mxu0
    %6644 = vmatprep.subr.bf16.mxu0 %v5042
    %6645 = vmatpush1.bf16.msra.mxu0 %v5041
    %6646 = vmatprep.subr.bf16.mxu0 %v5046
    %6647 = vmatpush1.bf16.msra.mxu0 %v5045
    %6648 = vmatprep.subr.bf16.mxu0 %v5050
    %6649 = vmatpush1.bf16.msra.mxu0 %v5049
    %6650 = vmatprep.subr.bf16.mxu0 0
    %6651 = vmatpush1.bf16.msra.mxu0 0
    %6652 = vmatprep.subr.bf16.mxu0 0
    %6653 = vmatpush1.bf16.msra.mxu0 0
    %6654 = vmatprep.subr.bf16.mxu0 0
    %6655 = vmatpush1.bf16.msra.mxu0 0
    %6656 = vmatprep.subr.bf16.mxu0 0
    %6657 = vmatpush1.bf16.msra.mxu0 0
    %6658 = vmatprep.subr.bf16.mxu0 0
    %6659 = vmatpush1.bf16.msra.mxu0 0
    %6660 = vmatprep.subr.bf16.mxu0 0
    %6661 = vmatpush1.bf16.msra.mxu0 0
    %6662 = vmatprep.subr.bf16.mxu0 0
    %6663 = vmatpush1.bf16.msra.mxu0 0
    %6664 = vmatprep.subr.bf16.mxu0 0
    %6665 = vmatpush1.bf16.msra.mxu0 0
    %6666 = vmatprep.subr.bf16.mxu0 0
    %6667 = vmatpush1.bf16.msra.mxu0 0
    %6668 = vmatprep.subr.bf16.mxu0 0
    %6669 = vmatpush1.bf16.msra.mxu0 0
    %6670 = vmatprep.subr.bf16.mxu0 0
    %6671 = vmatpush1.bf16.msra.mxu0 0
    %6672 = vmatprep.subr.bf16.mxu0 0
    %6673 = vmatpush1.bf16.msra.mxu0 0
    %6674 = vmatprep.subr.bf16.mxu0 0
    %6675 = vmatpush1.bf16.msra.mxu0 0
    %6676 = vmatprep.mubr.bf16.mxu0 0
    %6677 = vmatmul.mubr.bf16.gmra.mrb[0].mxu0 %v6027
    %v6678 = vpop.f32.mrb[0].mxu0
    %v6679 = vadd.f32 %v6638, %v6678
    %v6680 = vpop.f32.mrb[0].mxu0
    %v6681 = vadd.f32 %v6640, %v6680
    %v6682 = vpop.f32.mrb[0].mxu0
    %v6683 = vpop.f32.mrb[0].mxu0
    %6684 = vdwg.mxu0
    %6685 = vmatprep.subr.bf16.mxu0 %v4084
    %6686 = vmatpush1.bf16.msra.mxu0 %v4083
    %6687 = vmatprep.subr.bf16.mxu0 %v4088
    %6688 = vmatpush1.bf16.msra.mxu0 %v4087
    %6689 = vmatprep.subr.bf16.mxu0 %v4092
    %6690 = vmatpush1.bf16.msra.mxu0 %v4091
    %6691 = vmatprep.subr.bf16.mxu0 %v4096
    %6692 = vmatpush1.bf16.msra.mxu0 %v4095
    %6693 = vmatprep.subr.bf16.mxu0 %v4100
    %6694 = vmatpush1.bf16.msra.mxu0 %v4099
    %6695 = vmatprep.subr.bf16.mxu0 %v4104
    %6696 = vmatpush1.bf16.msra.mxu0 %v4103
    %6697 = vmatprep.subr.bf16.mxu0 %v4108
    %6698 = vmatpush1.bf16.msra.mxu0 %v4107
    %6699 = vmatprep.subr.bf16.mxu0 %v4112
    %6700 = vmatpush1.bf16.msra.mxu0 %v4111
    %6701 = vmatprep.subr.bf16.mxu0 %v4116
    %6702 = vmatpush1.bf16.msra.mxu0 %v4115
    %6703 = vmatprep.subr.bf16.mxu0 %v4120
    %6704 = vmatpush1.bf16.msra.mxu0 %v4119
    %6705 = vmatprep.subr.bf16.mxu0 %v4124
    %6706 = vmatpush1.bf16.msra.mxu0 %v4123
    %6707 = vmatprep.subr.bf16.mxu0 %v4128
    %6708 = vmatpush1.bf16.msra.mxu0 %v4127
    %6709 = vmatprep.subr.bf16.mxu0 %v4132
    %6710 = vmatpush1.bf16.msra.mxu0 %v4131
    %6711 = vmatprep.subr.bf16.mxu0 %v4136
    %6712 = vmatpush1.bf16.msra.mxu0 %v4135
    %6713 = vmatprep.subr.bf16.mxu0 %v4140
    %6714 = vmatpush1.bf16.msra.mxu0 %v4139
    %6715 = vmatprep.subr.bf16.mxu0 %v4144
    %6716 = vmatpush1.bf16.msra.mxu0 %v4143
    %6717 = vmatprep.mubr.bf16.mxu0 %v1105
    %6718 = vmatmul.mubr.bf16.gmra.mrb[0].mxu0 %v1104
    %v6719 = vpop.f32.mrb[0].mxu0
    %v6720 = vadd.f32 %v1048, %v6719
    %v6721 = vpop.f32.mrb[0].mxu0
    %v6722 = vadd.f32 %v1052, %v6721
    %v6723 = vpop.f32.mrb[0].mxu0
    %v6724 = vpop.f32.mrb[0].mxu0
    %6725 = vdwg.mxu0
    %6726 = vmatprep.subr.bf16.mxu0 %v4148
    %6727 = vmatpush1.bf16.msra.mxu0 %v4147
    %6728 = vmatprep.subr.bf16.mxu0 %v4152
    %6729 = vmatpush1.bf16.msra.mxu0 %v4151
    %6730 = vmatprep.subr.bf16.mxu0 %v4156
    %6731 = vmatpush1.bf16.msra.mxu0 %v4155
    %6732 = vmatprep.subr.bf16.mxu0 %v4160
    %6733 = vmatpush1.bf16.msra.mxu0 %v4159
    %6734 = vmatprep.subr.bf16.mxu0 %v4164
    %6735 = vmatpush1.bf16.msra.mxu0 %v4163
    %6736 = vmatprep.subr.bf16.mxu0 %v4168
    %6737 = vmatpush1.bf16.msra.mxu0 %v4167
    %6738 = vmatprep.subr.bf16.mxu0 %v4172
    %6739 = vmatpush1.bf16.msra.mxu0 %v4171
    %6740 = vmatprep.subr.bf16.mxu0 %v4176
    %6741 = vmatpush1.bf16.msra.mxu0 %v4175
    %6742 = vmatprep.subr.bf16.mxu0 %v4180
    %6743 = vmatpush1.bf16.msra.mxu0 %v4179
    %6744 = vmatprep.subr.bf16.mxu0 %v4184
    %6745 = vmatpush1.bf16.msra.mxu0 %v4183
    %6746 = vmatprep.subr.bf16.mxu0 %v4188
    %6747 = vmatpush1.bf16.msra.mxu0 %v4187
    %6748 = vmatprep.subr.bf16.mxu0 %v4192
    %6749 = vmatpush1.bf16.msra.mxu0 %v4191
    %6750 = vmatprep.subr.bf16.mxu0 %v4196
    %6751 = vmatpush1.bf16.msra.mxu0 %v4195
    %6752 = vmatprep.subr.bf16.mxu0 %v4200
    %6753 = vmatpush1.bf16.msra.mxu0 %v4199
    %6754 = vmatprep.subr.bf16.mxu0 %v4204
    %6755 = vmatpush1.bf16.msra.mxu0 %v4203
    %6756 = vmatprep.subr.bf16.mxu0 %v4208
    %6757 = vmatpush1.bf16.msra.mxu0 %v4207
    %6758 = vmatprep.mubr.bf16.mxu0 %v1107
    %6759 = vmatmul.mubr.bf16.gmra.mrb[0].mxu0 %v1106
    %v6760 = vpop.f32.mrb[0].mxu0
    %v6761 = vadd.f32 %v6720, %v6760
    %v6762 = vpop.f32.mrb[0].mxu0
    %v6763 = vadd.f32 %v6722, %v6762
    %v6764 = vpop.f32.mrb[0].mxu0
    %v6765 = vpop.f32.mrb[0].mxu0
    %6766 = vdwg.mxu0
    %6767 = vmatprep.subr.bf16.mxu0 %v4212
    %6768 = vmatpush1.bf16.msra.mxu0 %v4211
    %6769 = vmatprep.subr.bf16.mxu0 %v4216
    %6770 = vmatpush1.bf16.msra.mxu0 %v4215
    %6771 = vmatprep.subr.bf16.mxu0 %v4220
    %6772 = vmatpush1.bf16.msra.mxu0 %v4219
    %6773 = vmatprep.subr.bf16.mxu0 %v4224
    %6774 = vmatpush1.bf16.msra.mxu0 %v4223
    %6775 = vmatprep.subr.bf16.mxu0 %v4228
    %6776 = vmatpush1.bf16.msra.mxu0 %v4227
    %6777 = vmatprep.subr.bf16.mxu0 %v4232
    %6778 = vmatpush1.bf16.msra.mxu0 %v4231
    %6779 = vmatprep.subr.bf16.mxu0 %v4236
    %6780 = vmatpush1.bf16.msra.mxu0 %v4235
    %6781 = vmatprep.subr.bf16.mxu0 %v4240
    %6782 = vmatpush1.bf16.msra.mxu0 %v4239
    %6783 = vmatprep.subr.bf16.mxu0 %v4244
    %6784 = vmatpush1.bf16.msra.mxu0 %v4243
    %6785 = vmatprep.subr.bf16.mxu0 %v4248
    %6786 = vmatpush1.bf16.msra.mxu0 %v4247
    %6787 = vmatprep.subr.bf16.mxu0 %v4252
    %6788 = vmatpush1.bf16.msra.mxu0 %v4251
    %6789 = vmatprep.subr.bf16.mxu0 %v4256
    %6790 = vmatpush1.bf16.msra.mxu0 %v4255
    %6791 = vmatprep.subr.bf16.mxu0 %v4260
    %6792 = vmatpush1.bf16.msra.mxu0 %v4259
    %6793 = vmatprep.subr.bf16.mxu0 %v4264
    %6794 = vmatpush1.bf16.msra.mxu0 %v4263
    %6795 = vmatprep.subr.bf16.mxu0 %v4268
    %6796 = vmatpush1.bf16.msra.mxu0 %v4267
    %6797 = vmatprep.subr.bf16.mxu0 %v4272
    %6798 = vmatpush1.bf16.msra.mxu0 %v4271
    %6799 = vmatprep.mubr.bf16.mxu0 %v1109
    %6800 = vmatmul.mubr.bf16.gmra.mrb[0].mxu0 %v1108
    %v6801 = vpop.f32.mrb[0].mxu0
    %v6802 = vadd.f32 %v6761, %v6801
    %v6803 = vpop.f32.mrb[0].mxu0
    %v6804 = vadd.f32 %v6763, %v6803
    %v6805 = vpop.f32.mrb[0].mxu0
    %v6806 = vpop.f32.mrb[0].mxu0
    %6807 = vdwg.mxu0
    %6808 = vmatprep.subr.bf16.mxu0 %v4276
    %6809 = vmatpush1.bf16.msra.mxu0 %v4275
    %6810 = vmatprep.subr.bf16.mxu0 %v4280
    %6811 = vmatpush1.bf16.msra.mxu0 %v4279
    %6812 = vmatprep.subr.bf16.mxu0 %v4284
    %6813 = vmatpush1.bf16.msra.mxu0 %v4283
    %6814 = vmatprep.subr.bf16.mxu0 %v4288
    %6815 = vmatpush1.bf16.msra.mxu0 %v4287
    %6816 = vmatprep.subr.bf16.mxu0 %v4292
    %6817 = vmatpush1.bf16.msra.mxu0 %v4291
    %6818 = vmatprep.subr.bf16.mxu0 %v4296
    %6819 = vmatpush1.bf16.msra.mxu0 %v4295
    %6820 = vmatprep.subr.bf16.mxu0 %v4300
    %6821 = vmatpush1.bf16.msra.mxu0 %v4299
    %6822 = vmatprep.subr.bf16.mxu0 %v4304
    %6823 = vmatpush1.bf16.msra.mxu0 %v4303
    %6824 = vmatprep.subr.bf16.mxu0 %v4308
    %6825 = vmatpush1.bf16.msra.mxu0 %v4307
    %6826 = vmatprep.subr.bf16.mxu0 %v4312
    %6827 = vmatpush1.bf16.msra.mxu0 %v4311
    %6828 = vmatprep.subr.bf16.mxu0 %v4316
    %6829 = vmatpush1.bf16.msra.mxu0 %v4315
    %6830 = vmatprep.subr.bf16.mxu0 %v4320
    %6831 = vmatpush1.bf16.msra.mxu0 %v4319
    %6832 = vmatprep.subr.bf16.mxu0 %v4324
    %6833 = vmatpush1.bf16.msra.mxu0 %v4323
    %6834 = vmatprep.subr.bf16.mxu0 %v4328
    %6835 = vmatpush1.bf16.msra.mxu0 %v4327
    %6836 = vmatprep.subr.bf16.mxu0 %v4332
    %6837 = vmatpush1.bf16.msra.mxu0 %v4331
    %6838 = vmatprep.subr.bf16.mxu0 %v4336
    %6839 = vmatpush1.bf16.msra.mxu0 %v4335
    %6840 = vmatprep.mubr.bf16.mxu0 %v1111
    %6841 = vmatmul.mubr.bf16.gmra.mrb[0].mxu0 %v1110
    %v6842 = vpop.f32.mrb[0].mxu0
    %v6843 = vadd.f32 %v6802, %v6842
    %v6844 = vpop.f32.mrb[0].mxu0
    %v6845 = vadd.f32 %v6804, %v6844
    %v6846 = vpop.f32.mrb[0].mxu0
    %v6847 = vpop.f32.mrb[0].mxu0
    %6848 = vdwg.mxu0
    %6849 = vmatprep.subr.bf16.mxu0 %v4340
    %6850 = vmatpush1.bf16.msra.mxu0 %v4339
    %6851 = vmatprep.subr.bf16.mxu0 %v4344
    %6852 = vmatpush1.bf16.msra.mxu0 %v4343
    %6853 = vmatprep.subr.bf16.mxu0 %v4348
    %6854 = vmatpush1.bf16.msra.mxu0 %v4347
    %6855 = vmatprep.subr.bf16.mxu0 %v4352
    %6856 = vmatpush1.bf16.msra.mxu0 %v4351
    %6857 = vmatprep.subr.bf16.mxu0 %v4356
    %6858 = vmatpush1.bf16.msra.mxu0 %v4355
    %6859 = vmatprep.subr.bf16.mxu0 %v4360
    %6860 = vmatpush1.bf16.msra.mxu0 %v4359
    %6861 = vmatprep.subr.bf16.mxu0 %v4364
    %6862 = vmatpush1.bf16.msra.mxu0 %v4363
    %6863 = vmatprep.subr.bf16.mxu0 %v4368
    %6864 = vmatpush1.bf16.msra.mxu0 %v4367
    %6865 = vmatprep.subr.bf16.mxu0 %v4372
    %6866 = vmatpush1.bf16.msra.mxu0 %v4371
    %6867 = vmatprep.subr.bf16.mxu0 %v4376
    %6868 = vmatpush1.bf16.msra.mxu0 %v4375
    %6869 = vmatprep.subr.bf16.mxu0 %v4380
    %6870 = vmatpush1.bf16.msra.mxu0 %v4379
    %6871 = vmatprep.subr.bf16.mxu0 %v4384
    %6872 = vmatpush1.bf16.msra.mxu0 %v4383
    %6873 = vmatprep.subr.bf16.mxu0 %v4388
    %6874 = vmatpush1.bf16.msra.mxu0 %v4387
    %6875 = vmatprep.subr.bf16.mxu0 %v4392
    %6876 = vmatpush1.bf16.msra.mxu0 %v4391
    %6877 = vmatprep.subr.bf16.mxu0 %v4396
    %6878 = vmatpush1.bf16.msra.mxu0 %v4395
    %6879 = vmatprep.subr.bf16.mxu0 %v4400
    %6880 = vmatpush1.bf16.msra.mxu0 %v4399
    %6881 = vmatprep.mubr.bf16.mxu0 %v1113
    %6882 = vmatmul.mubr.bf16.gmra.mrb[0].mxu0 %v1112
    %v6883 = vpop.f32.mrb[0].mxu0
    %v6884 = vadd.f32 %v6843, %v6883
    %v6885 = vpop.f32.mrb[0].mxu0
    %v6886 = vadd.f32 %v6845, %v6885
    %v6887 = vpop.f32.mrb[0].mxu0
    %v6888 = vpop.f32.mrb[0].mxu0
    %6889 = vdwg.mxu0
    %6890 = vmatprep.subr.bf16.mxu0 %v4404
    %6891 = vmatpush1.bf16.msra.mxu0 %v4403
    %6892 = vmatprep.subr.bf16.mxu0 %v4408
    %6893 = vmatpush1.bf16.msra.mxu0 %v4407
    %6894 = vmatprep.subr.bf16.mxu0 %v4412
    %6895 = vmatpush1.bf16.msra.mxu0 %v4411
    %6896 = vmatprep.subr.bf16.mxu0 %v4416
    %6897 = vmatpush1.bf16.msra.mxu0 %v4415
    %6898 = vmatprep.subr.bf16.mxu0 %v4420
    %6899 = vmatpush1.bf16.msra.mxu0 %v4419
    %6900 = vmatprep.subr.bf16.mxu0 %v4424
    %6901 = vmatpush1.bf16.msra.mxu0 %v4423
    %6902 = vmatprep.subr.bf16.mxu0 %v4428
    %6903 = vmatpush1.bf16.msra.mxu0 %v4427
    %6904 = vmatprep.subr.bf16.mxu0 %v4432
    %6905 = vmatpush1.bf16.msra.mxu0 %v4431
    %6906 = vmatprep.subr.bf16.mxu0 %v4436
    %6907 = vmatpush1.bf16.msra.mxu0 %v4435
    %6908 = vmatprep.subr.bf16.mxu0 %v4440
    %6909 = vmatpush1.bf16.msra.mxu0 %v4439
    %6910 = vmatprep.subr.bf16.mxu0 %v4444
    %6911 = vmatpush1.bf16.msra.mxu0 %v4443
    %6912 = vmatprep.subr.bf16.mxu0 %v4448
    %6913 = vmatpush1.bf16.msra.mxu0 %v4447
    %6914 = vmatprep.subr.bf16.mxu0 %v4452
    %6915 = vmatpush1.bf16.msra.mxu0 %v4451
    %6916 = vmatprep.subr.bf16.mxu0 %v4456
    %6917 = vmatpush1.bf16.msra.mxu0 %v4455
    %6918 = vmatprep.subr.bf16.mxu0 %v4460
    %6919 = vmatpush1.bf16.msra.mxu0 %v4459
    %6920 = vmatprep.subr.bf16.mxu0 %v4464
    %6921 = vmatpush1.bf16.msra.mxu0 %v4463
    %6922 = vmatprep.mubr.bf16.mxu0 %v1115
    %6923 = vmatmul.mubr.bf16.gmra.mrb[0].mxu0 %v1114
    %v6924 = vpop.f32.mrb[0].mxu0
    %v6925 = vadd.f32 %v6884, %v6924
    %v6926 = vpop.f32.mrb[0].mxu0
    %v6927 = vadd.f32 %v6886, %v6926
    %v6928 = vpop.f32.mrb[0].mxu0
    %v6929 = vpop.f32.mrb[0].mxu0
    %6930 = vdwg.mxu0
    %6931 = vmatprep.subr.bf16.mxu0 %v4468
    %6932 = vmatpush1.bf16.msra.mxu0 %v4467
    %6933 = vmatprep.subr.bf16.mxu0 %v4472
    %6934 = vmatpush1.bf16.msra.mxu0 %v4471
    %6935 = vmatprep.subr.bf16.mxu0 %v4476
    %6936 = vmatpush1.bf16.msra.mxu0 %v4475
    %6937 = vmatprep.subr.bf16.mxu0 %v4480
    %6938 = vmatpush1.bf16.msra.mxu0 %v4479
    %6939 = vmatprep.subr.bf16.mxu0 %v4484
    %6940 = vmatpush1.bf16.msra.mxu0 %v4483
    %6941 = vmatprep.subr.bf16.mxu0 %v4488
    %6942 = vmatpush1.bf16.msra.mxu0 %v4487
    %6943 = vmatprep.subr.bf16.mxu0 %v4492
    %6944 = vmatpush1.bf16.msra.mxu0 %v4491
    %6945 = vmatprep.subr.bf16.mxu0 %v4496
    %6946 = vmatpush1.bf16.msra.mxu0 %v4495
    %6947 = vmatprep.subr.bf16.mxu0 %v4500
    %6948 = vmatpush1.bf16.msra.mxu0 %v4499
    %6949 = vmatprep.subr.bf16.mxu0 %v4504
    %6950 = vmatpush1.bf16.msra.mxu0 %v4503
    %6951 = vmatprep.subr.bf16.mxu0 %v4508
    %6952 = vmatpush1.bf16.msra.mxu0 %v4507
    %6953 = vmatprep.subr.bf16.mxu0 %v4512
    %6954 = vmatpush1.bf16.msra.mxu0 %v4511
    %6955 = vmatprep.subr.bf16.mxu0 %v4516
    %6956 = vmatpush1.bf16.msra.mxu0 %v4515
    %6957 = vmatprep.subr.bf16.mxu0 %v4520
    %6958 = vmatpush1.bf16.msra.mxu0 %v4519
    %6959 = vmatprep.subr.bf16.mxu0 %v4524
    %6960 = vmatpush1.bf16.msra.mxu0 %v4523
    %6961 = vmatprep.subr.bf16.mxu0 %v4528
    %6962 = vmatpush1.bf16.msra.mxu0 %v4527
    %6963 = vmatprep.mubr.bf16.mxu0 %v1117
    %6964 = vmatmul.mubr.bf16.gmra.mrb[0].mxu0 %v1116
    %v6965 = vpop.f32.mrb[0].mxu0
    %v6966 = vadd.f32 %v6925, %v6965
    %v6967 = vpop.f32.mrb[0].mxu0
    %v6968 = vadd.f32 %v6927, %v6967
    %v6969 = vpop.f32.mrb[0].mxu0
    %v6970 = vpop.f32.mrb[0].mxu0
    %6971 = vdwg.mxu0
    %6972 = vmatprep.subr.bf16.mxu0 %v4532
    %6973 = vmatpush1.bf16.msra.mxu0 %v4531
    %6974 = vmatprep.subr.bf16.mxu0 %v4536
    %6975 = vmatpush1.bf16.msra.mxu0 %v4535
    %6976 = vmatprep.subr.bf16.mxu0 %v4540
    %6977 = vmatpush1.bf16.msra.mxu0 %v4539
    %6978 = vmatprep.subr.bf16.mxu0 %v4544
    %6979 = vmatpush1.bf16.msra.mxu0 %v4543
    %6980 = vmatprep.subr.bf16.mxu0 %v4548
    %6981 = vmatpush1.bf16.msra.mxu0 %v4547
    %6982 = vmatprep.subr.bf16.mxu0 %v4552
    %6983 = vmatpush1.bf16.msra.mxu0 %v4551
    %6984 = vmatprep.subr.bf16.mxu0 %v4556
    %6985 = vmatpush1.bf16.msra.mxu0 %v4555
    %6986 = vmatprep.subr.bf16.mxu0 %v4560
    %6987 = vmatpush1.bf16.msra.mxu0 %v4559
    %6988 = vmatprep.subr.bf16.mxu0 %v4564
    %6989 = vmatpush1.bf16.msra.mxu0 %v4563
    %6990 = vmatprep.subr.bf16.mxu0 %v4568
    %6991 = vmatpush1.bf16.msra.mxu0 %v4567
    %6992 = vmatprep.subr.bf16.mxu0 %v4572
    %6993 = vmatpush1.bf16.msra.mxu0 %v4571
    %6994 = vmatprep.subr.bf16.mxu0 %v4576
    %6995 = vmatpush1.bf16.msra.mxu0 %v4575
    %6996 = vmatprep.subr.bf16.mxu0 %v4580
    %6997 = vmatpush1.bf16.msra.mxu0 %v4579
    %6998 = vmatprep.subr.bf16.mxu0 %v4584
    %6999 = vmatpush1.bf16.msra.mxu0 %v4583
    %7000 = vmatprep.subr.bf16.mxu0 %v4588
    %7001 = vmatpush1.bf16.msra.mxu0 %v4587
    %7002 = vmatprep.subr.bf16.mxu0 %v4592
    %7003 = vmatpush1.bf16.msra.mxu0 %v4591
    %7004 = vmatprep.mubr.bf16.mxu0 %v1119
    %7005 = vmatmul.mubr.bf16.gmra.mrb[0].mxu0 %v1118
    %v7006 = vpop.f32.mrb[0].mxu0
    %v7007 = vadd.f32 %v6966, %v7006
    %v7008 = vpop.f32.mrb[0].mxu0
    %v7009 = vadd.f32 %v6968, %v7008
    %v7010 = vpop.f32.mrb[0].mxu0
    %v7011 = vpop.f32.mrb[0].mxu0
    %7012 = vdwg.mxu0
    %7013 = vmatprep.subr.bf16.mxu0 %v4596
    %7014 = vmatpush1.bf16.msra.mxu0 %v4595
    %7015 = vmatprep.subr.bf16.mxu0 %v4600
    %7016 = vmatpush1.bf16.msra.mxu0 %v4599
    %7017 = vmatprep.subr.bf16.mxu0 %v4604
    %7018 = vmatpush1.bf16.msra.mxu0 %v4603
    %7019 = vmatprep.subr.bf16.mxu0 %v4608
    %7020 = vmatpush1.bf16.msra.mxu0 %v4607
    %7021 = vmatprep.subr.bf16.mxu0 %v4612
    %7022 = vmatpush1.bf16.msra.mxu0 %v4611
    %7023 = vmatprep.subr.bf16.mxu0 %v4616
    %7024 = vmatpush1.bf16.msra.mxu0 %v4615
    %7025 = vmatprep.subr.bf16.mxu0 %v4620
    %7026 = vmatpush1.bf16.msra.mxu0 %v4619
    %7027 = vmatprep.subr.bf16.mxu0 %v4624
    %7028 = vmatpush1.bf16.msra.mxu0 %v4623
    %7029 = vmatprep.subr.bf16.mxu0 %v4628
    %7030 = vmatpush1.bf16.msra.mxu0 %v4627
    %7031 = vmatprep.subr.bf16.mxu0 %v4632
    %7032 = vmatpush1.bf16.msra.mxu0 %v4631
    %7033 = vmatprep.subr.bf16.mxu0 %v4636
    %7034 = vmatpush1.bf16.msra.mxu0 %v4635
    %7035 = vmatprep.subr.bf16.mxu0 %v4640
    %7036 = vmatpush1.bf16.msra.mxu0 %v4639
    %7037 = vmatprep.subr.bf16.mxu0 %v4644
    %7038 = vmatpush1.bf16.msra.mxu0 %v4643
    %7039 = vmatprep.subr.bf16.mxu0 %v4648
    %7040 = vmatpush1.bf16.msra.mxu0 %v4647
    %7041 = vmatprep.subr.bf16.mxu0 %v4652
    %7042 = vmatpush1.bf16.msra.mxu0 %v4651
    %7043 = vmatprep.subr.bf16.mxu0 %v4656
    %7044 = vmatpush1.bf16.msra.mxu0 %v4655
    %7045 = vmatprep.mubr.bf16.mxu0 %v1121
    %7046 = vmatmul.mubr.bf16.gmra.mrb[0].mxu0 %v1120
    %v7047 = vpop.f32.mrb[0].mxu0
    %v7048 = vadd.f32 %v7007, %v7047
    %v7049 = vpop.f32.mrb[0].mxu0
    %v7050 = vadd.f32 %v7009, %v7049
    %v7051 = vpop.f32.mrb[0].mxu0
    %v7052 = vpop.f32.mrb[0].mxu0
    %7053 = vdwg.mxu0
    %7054 = vmatprep.subr.bf16.mxu0 %v4660
    %7055 = vmatpush1.bf16.msra.mxu0 %v4659
    %7056 = vmatprep.subr.bf16.mxu0 %v4664
    %7057 = vmatpush1.bf16.msra.mxu0 %v4663
    %7058 = vmatprep.subr.bf16.mxu0 %v4668
    %7059 = vmatpush1.bf16.msra.mxu0 %v4667
    %7060 = vmatprep.subr.bf16.mxu0 %v4672
    %7061 = vmatpush1.bf16.msra.mxu0 %v4671
    %7062 = vmatprep.subr.bf16.mxu0 %v4676
    %7063 = vmatpush1.bf16.msra.mxu0 %v4675
    %7064 = vmatprep.subr.bf16.mxu0 %v4680
    %7065 = vmatpush1.bf16.msra.mxu0 %v4679
    %7066 = vmatprep.subr.bf16.mxu0 %v4684
    %7067 = vmatpush1.bf16.msra.mxu0 %v4683
    %7068 = vmatprep.subr.bf16.mxu0 %v4688
    %7069 = vmatpush1.bf16.msra.mxu0 %v4687
    %7070 = vmatprep.subr.bf16.mxu0 %v4692
    %7071 = vmatpush1.bf16.msra.mxu0 %v4691
    %7072 = vmatprep.subr.bf16.mxu0 %v4696
    %7073 = vmatpush1.bf16.msra.mxu0 %v4695
    %7074 = vmatprep.subr.bf16.mxu0 %v4700
    %7075 = vmatpush1.bf16.msra.mxu0 %v4699
    %7076 = vmatprep.subr.bf16.mxu0 %v4704
    %7077 = vmatpush1.bf16.msra.mxu0 %v4703
    %7078 = vmatprep.subr.bf16.mxu0 %v4708
    %7079 = vmatpush1.bf16.msra.mxu0 %v4707
    %7080 = vmatprep.subr.bf16.mxu0 %v4712
    %7081 = vmatpush1.bf16.msra.mxu0 %v4711
    %7082 = vmatprep.subr.bf16.mxu0 %v4716
    %7083 = vmatpush1.bf16.msra.mxu0 %v4715
    %7084 = vmatprep.subr.bf16.mxu0 %v4720
    %7085 = vmatpush1.bf16.msra.mxu0 %v4719
    %7086 = vmatprep.mubr.bf16.mxu0 %v1123
    %7087 = vmatmul.mubr.bf16.gmra.mrb[0].mxu0 %v1122
    %v7088 = vpop.f32.mrb[0].mxu0
    %v7089 = vadd.f32 %v7048, %v7088
    %v7090 = vpop.f32.mrb[0].mxu0
    %v7091 = vadd.f32 %v7050, %v7090
    %v7092 = vpop.f32.mrb[0].mxu0
    %v7093 = vpop.f32.mrb[0].mxu0
    %7094 = vdwg.mxu0
    %7095 = vmatprep.subr.bf16.mxu0 %v4724
    %7096 = vmatpush1.bf16.msra.mxu0 %v4723
    %7097 = vmatprep.subr.bf16.mxu0 %v4728
    %7098 = vmatpush1.bf16.msra.mxu0 %v4727
    %7099 = vmatprep.subr.bf16.mxu0 %v4732
    %7100 = vmatpush1.bf16.msra.mxu0 %v4731
    %7101 = vmatprep.subr.bf16.mxu0 %v4736
    %7102 = vmatpush1.bf16.msra.mxu0 %v4735
    %7103 = vmatprep.subr.bf16.mxu0 %v4740
    %7104 = vmatpush1.bf16.msra.mxu0 %v4739
    %7105 = vmatprep.subr.bf16.mxu0 %v4744
    %7106 = vmatpush1.bf16.msra.mxu0 %v4743
    %7107 = vmatprep.subr.bf16.mxu0 %v4748
    %7108 = vmatpush1.bf16.msra.mxu0 %v4747
    %7109 = vmatprep.subr.bf16.mxu0 %v4752
    %7110 = vmatpush1.bf16.msra.mxu0 %v4751
    %7111 = vmatprep.subr.bf16.mxu0 %v4756
    %7112 = vmatpush1.bf16.msra.mxu0 %v4755
    %7113 = vmatprep.subr.bf16.mxu0 %v4760
    %7114 = vmatpush1.bf16.msra.mxu0 %v4759
    %7115 = vmatprep.subr.bf16.mxu0 %v4764
    %7116 = vmatpush1.bf16.msra.mxu0 %v4763
    %7117 = vmatprep.subr.bf16.mxu0 %v4768
    %7118 = vmatpush1.bf16.msra.mxu0 %v4767
    %7119 = vmatprep.subr.bf16.mxu0 %v4772
    %7120 = vmatpush1.bf16.msra.mxu0 %v4771
    %7121 = vmatprep.subr.bf16.mxu0 %v4776
    %7122 = vmatpush1.bf16.msra.mxu0 %v4775
    %7123 = vmatprep.subr.bf16.mxu0 %v4780
    %7124 = vmatpush1.bf16.msra.mxu0 %v4779
    %7125 = vmatprep.subr.bf16.mxu0 %v4784
    %7126 = vmatpush1.bf16.msra.mxu0 %v4783
    %7127 = vmatprep.mubr.bf16.mxu0 %v1125
    %7128 = vmatmul.mubr.bf16.gmra.mrb[0].mxu0 %v1124
    %v7129 = vpop.f32.mrb[0].mxu0
    %v7130 = vadd.f32 %v7089, %v7129
    %v7131 = vpop.f32.mrb[0].mxu0
    %v7132 = vadd.f32 %v7091, %v7131
    %v7133 = vpop.f32.mrb[0].mxu0
    %v7134 = vpop.f32.mrb[0].mxu0
    %7135 = vdwg.mxu0
    %7136 = vmatprep.subr.bf16.mxu0 %v4788
    %7137 = vmatpush1.bf16.msra.mxu0 %v4787
    %7138 = vmatprep.subr.bf16.mxu0 %v4792
    %7139 = vmatpush1.bf16.msra.mxu0 %v4791
    %7140 = vmatprep.subr.bf16.mxu0 %v4796
    %7141 = vmatpush1.bf16.msra.mxu0 %v4795
    %7142 = vmatprep.subr.bf16.mxu0 %v4800
    %7143 = vmatpush1.bf16.msra.mxu0 %v4799
    %7144 = vmatprep.subr.bf16.mxu0 %v4804
    %7145 = vmatpush1.bf16.msra.mxu0 %v4803
    %7146 = vmatprep.subr.bf16.mxu0 %v4808
    %7147 = vmatpush1.bf16.msra.mxu0 %v4807
    %7148 = vmatprep.subr.bf16.mxu0 %v4812
    %7149 = vmatpush1.bf16.msra.mxu0 %v4811
    %7150 = vmatprep.subr.bf16.mxu0 %v4816
    %7151 = vmatpush1.bf16.msra.mxu0 %v4815
    %7152 = vmatprep.subr.bf16.mxu0 %v4820
    %7153 = vmatpush1.bf16.msra.mxu0 %v4819
    %7154 = vmatprep.subr.bf16.mxu0 %v4824
    %7155 = vmatpush1.bf16.msra.mxu0 %v4823
    %7156 = vmatprep.subr.bf16.mxu0 %v4828
    %7157 = vmatpush1.bf16.msra.mxu0 %v4827
    %7158 = vmatprep.subr.bf16.mxu0 %v4832
    %7159 = vmatpush1.bf16.msra.mxu0 %v4831
    %7160 = vmatprep.subr.bf16.mxu0 %v4836
    %7161 = vmatpush1.bf16.msra.mxu0 %v4835
    %7162 = vmatprep.subr.bf16.mxu0 %v4840
    %7163 = vmatpush1.bf16.msra.mxu0 %v4839
    %7164 = vmatprep.subr.bf16.mxu0 %v4844
    %7165 = vmatpush1.bf16.msra.mxu0 %v4843
    %7166 = vmatprep.subr.bf16.mxu0 %v4848
    %7167 = vmatpush1.bf16.msra.mxu0 %v4847
    %7168 = vmatprep.mubr.bf16.mxu0 %v1127
    %7169 = vmatmul.mubr.bf16.gmra.mrb[0].mxu0 %v1126
    %v7170 = vpop.f32.mrb[0].mxu0
    %v7171 = vadd.f32 %v7130, %v7170
    %v7172 = vpop.f32.mrb[0].mxu0
    %v7173 = vadd.f32 %v7132, %v7172
    %v7174 = vpop.f32.mrb[0].mxu0
    %v7175 = vpop.f32.mrb[0].mxu0
    %7176 = vdwg.mxu0
    %7177 = vmatprep.subr.bf16.mxu0 %v4852
    %7178 = vmatpush1.bf16.msra.mxu0 %v4851
    %7179 = vmatprep.subr.bf16.mxu0 %v4856
    %7180 = vmatpush1.bf16.msra.mxu0 %v4855
    %7181 = vmatprep.subr.bf16.mxu0 %v4860
    %7182 = vmatpush1.bf16.msra.mxu0 %v4859
    %7183 = vmatprep.subr.bf16.mxu0 %v4864
    %7184 = vmatpush1.bf16.msra.mxu0 %v4863
    %7185 = vmatprep.subr.bf16.mxu0 %v4868
    %7186 = vmatpush1.bf16.msra.mxu0 %v4867
    %7187 = vmatprep.subr.bf16.mxu0 %v4872
    %7188 = vmatpush1.bf16.msra.mxu0 %v4871
    %7189 = vmatprep.subr.bf16.mxu0 %v4876
    %7190 = vmatpush1.bf16.msra.mxu0 %v4875
    %7191 = vmatprep.subr.bf16.mxu0 %v4880
    %7192 = vmatpush1.bf16.msra.mxu0 %v4879
    %7193 = vmatprep.subr.bf16.mxu0 %v4884
    %7194 = vmatpush1.bf16.msra.mxu0 %v4883
    %7195 = vmatprep.subr.bf16.mxu0 %v4888
    %7196 = vmatpush1.bf16.msra.mxu0 %v4887
    %7197 = vmatprep.subr.bf16.mxu0 %v4892
    %7198 = vmatpush1.bf16.msra.mxu0 %v4891
    %7199 = vmatprep.subr.bf16.mxu0 %v4896
    %7200 = vmatpush1.bf16.msra.mxu0 %v4895
    %7201 = vmatprep.subr.bf16.mxu0 %v4900
    %7202 = vmatpush1.bf16.msra.mxu0 %v4899
    %7203 = vmatprep.subr.bf16.mxu0 %v4904
    %7204 = vmatpush1.bf16.msra.mxu0 %v4903
    %7205 = vmatprep.subr.bf16.mxu0 %v4908
    %7206 = vmatpush1.bf16.msra.mxu0 %v4907
    %7207 = vmatprep.subr.bf16.mxu0 %v4912
    %7208 = vmatpush1.bf16.msra.mxu0 %v4911
    %7209 = vmatprep.mubr.bf16.mxu0 %v1129
    %7210 = vmatmul.mubr.bf16.gmra.mrb[0].mxu0 %v1128
    %v7211 = vpop.f32.mrb[0].mxu0
    %v7212 = vadd.f32 %v7171, %v7211
    %v7213 = vpop.f32.mrb[0].mxu0
    %v7214 = vadd.f32 %v7173, %v7213
    %v7215 = vpop.f32.mrb[0].mxu0
    %v7216 = vpop.f32.mrb[0].mxu0
    %7217 = vdwg.mxu0
    %7218 = vmatprep.subr.bf16.mxu0 %v4916
    %7219 = vmatpush1.bf16.msra.mxu0 %v4915
    %7220 = vmatprep.subr.bf16.mxu0 %v4920
    %7221 = vmatpush1.bf16.msra.mxu0 %v4919
    %7222 = vmatprep.subr.bf16.mxu0 %v4924
    %7223 = vmatpush1.bf16.msra.mxu0 %v4923
    %7224 = vmatprep.subr.bf16.mxu0 %v4928
    %7225 = vmatpush1.bf16.msra.mxu0 %v4927
    %7226 = vmatprep.subr.bf16.mxu0 %v4932
    %7227 = vmatpush1.bf16.msra.mxu0 %v4931
    %7228 = vmatprep.subr.bf16.mxu0 %v4936
    %7229 = vmatpush1.bf16.msra.mxu0 %v4935
    %7230 = vmatprep.subr.bf16.mxu0 %v4940
    %7231 = vmatpush1.bf16.msra.mxu0 %v4939
    %7232 = vmatprep.subr.bf16.mxu0 %v4944
    %7233 = vmatpush1.bf16.msra.mxu0 %v4943
    %7234 = vmatprep.subr.bf16.mxu0 %v4948
    %7235 = vmatpush1.bf16.msra.mxu0 %v4947
    %7236 = vmatprep.subr.bf16.mxu0 %v4952
    %7237 = vmatpush1.bf16.msra.mxu0 %v4951
    %7238 = vmatprep.subr.bf16.mxu0 %v4956
    %7239 = vmatpush1.bf16.msra.mxu0 %v4955
    %7240 = vmatprep.subr.bf16.mxu0 %v4960
    %7241 = vmatpush1.bf16.msra.mxu0 %v4959
    %7242 = vmatprep.subr.bf16.mxu0 %v4964
    %7243 = vmatpush1.bf16.msra.mxu0 %v4963
    %7244 = vmatprep.subr.bf16.mxu0 %v4968
    %7245 = vmatpush1.bf16.msra.mxu0 %v4967
    %7246 = vmatprep.subr.bf16.mxu0 %v4972
    %7247 = vmatpush1.bf16.msra.mxu0 %v4971
    %7248 = vmatprep.subr.bf16.mxu0 %v4976
    %7249 = vmatpush1.bf16.msra.mxu0 %v4975
    %7250 = vmatprep.mubr.bf16.mxu0 %v1131
    %7251 = vmatmul.mubr.bf16.gmra.mrb[0].mxu0 %v1130
    %v7252 = vpop.f32.mrb[0].mxu0
    %v7253 = vadd.f32 %v7212, %v7252
    %v7254 = vpop.f32.mrb[0].mxu0
    %v7255 = vadd.f32 %v7214, %v7254
    %v7256 = vpop.f32.mrb[0].mxu0
    %v7257 = vpop.f32.mrb[0].mxu0
    %7258 = vdwg.mxu0
    %7259 = vmatprep.subr.bf16.mxu0 %v4980
    %7260 = vmatpush1.bf16.msra.mxu0 %v4979
    %7261 = vmatprep.subr.bf16.mxu0 %v4984
    %7262 = vmatpush1.bf16.msra.mxu0 %v4983
    %7263 = vmatprep.subr.bf16.mxu0 %v4988
    %7264 = vmatpush1.bf16.msra.mxu0 %v4987
    %7265 = vmatprep.subr.bf16.mxu0 %v4992
    %7266 = vmatpush1.bf16.msra.mxu0 %v4991
    %7267 = vmatprep.subr.bf16.mxu0 %v4996
    %7268 = vmatpush1.bf16.msra.mxu0 %v4995
    %7269 = vmatprep.subr.bf16.mxu0 %v5000
    %7270 = vmatpush1.bf16.msra.mxu0 %v4999
    %7271 = vmatprep.subr.bf16.mxu0 %v5004
    %7272 = vmatpush1.bf16.msra.mxu0 %v5003
    %7273 = vmatprep.subr.bf16.mxu0 %v5008
    %7274 = vmatpush1.bf16.msra.mxu0 %v5007
    %7275 = vmatprep.subr.bf16.mxu0 %v5012
    %7276 = vmatpush1.bf16.msra.mxu0 %v5011
    %7277 = vmatprep.subr.bf16.mxu0 %v5016
    %7278 = vmatpush1.bf16.msra.mxu0 %v5015
    %7279 = vmatprep.subr.bf16.mxu0 %v5020
    %7280 = vmatpush1.bf16.msra.mxu0 %v5019
    %7281 = vmatprep.subr.bf16.mxu0 %v5024
    %7282 = vmatpush1.bf16.msra.mxu0 %v5023
    %7283 = vmatprep.subr.bf16.mxu0 %v5028
    %7284 = vmatpush1.bf16.msra.mxu0 %v5027
    %7285 = vmatprep.subr.bf16.mxu0 %v5032
    %7286 = vmatpush1.bf16.msra.mxu0 %v5031
    %7287 = vmatprep.subr.bf16.mxu0 %v5036
    %7288 = vmatpush1.bf16.msra.mxu0 %v5035
    %7289 = vmatprep.subr.bf16.mxu0 %v5040
    %7290 = vmatpush1.bf16.msra.mxu0 %v5039
    %7291 = vmatprep.mubr.bf16.mxu0 %v1133
    %7292 = vmatmul.mubr.bf16.gmra.mrb[0].mxu0 %v1132
    %v7293 = vpop.f32.mrb[0].mxu0
    %v7294 = vadd.f32 %v7253, %v7293
    %v7295 = vpop.f32.mrb[0].mxu0
    %v7296 = vadd.f32 %v7255, %v7295
    %v7297 = vpop.f32.mrb[0].mxu0
    %v7298 = vpop.f32.mrb[0].mxu0
    %7299 = vdwg.mxu0
    %7300 = vmatprep.subr.bf16.mxu0 %v5044
    %7301 = vmatpush1.bf16.msra.mxu0 %v5043
    %7302 = vmatprep.subr.bf16.mxu0 %v5048
    %7303 = vmatpush1.bf16.msra.mxu0 %v5047
    %7304 = vmatprep.subr.bf16.mxu0 %v5052
    %7305 = vmatpush1.bf16.msra.mxu0 %v5051
    %7306 = vmatprep.subr.bf16.mxu0 0
    %7307 = vmatpush1.bf16.msra.mxu0 0
    %7308 = vmatprep.subr.bf16.mxu0 0
    %7309 = vmatpush1.bf16.msra.mxu0 0
    %7310 = vmatprep.subr.bf16.mxu0 0
    %7311 = vmatpush1.bf16.msra.mxu0 0
    %7312 = vmatprep.subr.bf16.mxu0 0
    %7313 = vmatpush1.bf16.msra.mxu0 0
    %7314 = vmatprep.subr.bf16.mxu0 0
    %7315 = vmatpush1.bf16.msra.mxu0 0
    %7316 = vmatprep.subr.bf16.mxu0 0
    %7317 = vmatpush1.bf16.msra.mxu0 0
    %7318 = vmatprep.subr.bf16.mxu0 0
    %7319 = vmatpush1.bf16.msra.mxu0 0
    %7320 = vmatprep.subr.bf16.mxu0 0
    %7321 = vmatpush1.bf16.msra.mxu0 0
    %7322 = vmatprep.subr.bf16.mxu0 0
    %7323 = vmatpush1.bf16.msra.mxu0 0
    %7324 = vmatprep.subr.bf16.mxu0 0
    %7325 = vmatpush1.bf16.msra.mxu0 0
    %7326 = vmatprep.subr.bf16.mxu0 0
    %7327 = vmatpush1.bf16.msra.mxu0 0
    %7328 = vmatprep.subr.bf16.mxu0 0
    %7329 = vmatpush1.bf16.msra.mxu0 0
    %7330 = vmatprep.subr.bf16.mxu0 0
    %7331 = vmatpush1.bf16.msra.mxu0 0
    %7332 = vmatprep.mubr.bf16.mxu0 0
    %7333 = vmatmul.mubr.bf16.gmra.mrb[0].mxu0 %v6027
    %v7334 = vpop.f32.mrb[0].mxu0
    %v7335 = vadd.f32 %v7294, %v7334
    %v7336 = vpop.f32.mrb[0].mxu0
    %v7337 = vadd.f32 %v7296, %v7336
    %v7338 = vpop.f32.mrb[0].mxu0
    %v7339 = vpop.f32.mrb[0].mxu0
    %7340 = vdwg.mxu0
    %v7341 = vmax.f32 %v6679, 0.0
    %v7342 = vmax.f32 %v6681, 0.0
    %v7343 = vmax.f32 %v7335, 0.0
    %v7344 = vmax.f32 %v7337, 0.0
    %v7345 = vpack.c.bf16 %v7341, %v7341
    %v7346 = vpack.c.bf16 %v7342, %v7342
    %v7347 = vpack.c.bf16 %v7343, %v7343
    %v7348 = vpack.c.bf16 %v7344, %v7344
    %v7349 = vld [vmem:[%s5] sm:$0xff]
    %v7350 = vld [vmem:[%s5 + $0x8] sm:$0xff]
    %v7351 = vld [vmem:[%s5 + $0x10] sm:$0xff]
    %v7352 = vld [vmem:[%s5 + $0x18] sm:$0xff]
    %v7353 = vld [vmem:[%s5 + $0x20] sm:$0xff]
    %v7354 = vld [vmem:[%s5 + $0x28] sm:$0xff]
    %v7355 = vld [vmem:[%s5 + $0x30] sm:$0xff]
    %v7356 = vld [vmem:[%s5 + $0x38] sm:$0xff]
    %v7357 = vld [vmem:[%s5 + $0x40] sm:$0xff]
    %v7358 = vld [vmem:[%s5 + $0x48] sm:$0xff]
    %v7359 = vld [vmem:[%s5 + $0x50] sm:$0xff]
    %v7360 = vld [vmem:[%s5 + $0x58] sm:$0xff]
    %v7361 = vld [vmem:[%s5 + $0x60] sm:$0xff]
    %v7362 = vld [vmem:[%s5 + $0x68] sm:$0xff]
    %v7363 = vld [vmem:[%s5 + $0x70] sm:$0xff]
    %v7364 = vld [vmem:[%s5 + $0x78] sm:$0xff]
    %v7365 = vld [vmem:[%s5 + $0x80] sm:$0xff]
    %v7366 = vld [vmem:[%s5 + $0x88] sm:$0xff]
    %v7367 = vld [vmem:[%s5 + $0x90] sm:$0xff]
    %v7368 = vld [vmem:[%s5 + $0x98] sm:$0xff]
    %v7369 = vld [vmem:[%s5 + $0xa0] sm:$0xff]
    %v7370 = vld [vmem:[%s5 + $0xa8] sm:$0xff]
    %v7371 = vld [vmem:[%s5 + $0xb0] sm:$0xff]
    %v7372 = vld [vmem:[%s5 + $0xb8] sm:$0xff]
    %v7373 = vld [vmem:[%s5 + $0xc0] sm:$0xff]
    %v7374 = vld [vmem:[%s5 + $0xc8] sm:$0xff]
    %v7375 = vld [vmem:[%s5 + $0xd0] sm:$0xff]
    %v7376 = vld [vmem:[%s5 + $0xd8] sm:$0xff]
    %v7377 = vld [vmem:[%s5 + $0xe0] sm:$0xff]
    %v7378 = vld [vmem:[%s5 + $0xe8] sm:$0xff]
    %v7379 = vld [vmem:[%s5 + $0xf0] sm:$0xff]
    %v7380 = vld [vmem:[%s5 + $0xf8] sm:$0xff]
    %v7381 = vld [vmem:[%s5 + $0x100] sm:$0xff]
    %v7382 = vld [vmem:[%s5 + $0x108] sm:$0xff]
    %v7383 = vld [vmem:[%s5 + $0x110] sm:$0xff]
    %v7384 = vld [vmem:[%s5 + $0x118] sm:$0xff]
    %v7385 = vld [vmem:[%s5 + $0x120] sm:$0xff]
    %v7386 = vld [vmem:[%s5 + $0x128] sm:$0xff]
    %v7387 = vld [vmem:[%s5 + $0x130] sm:$0xff]
    %v7388 = vld [vmem:[%s5 + $0x138] sm:$0xff]
    %v7389 = vld [vmem:[%s5 + $0x140] sm:$0xff]
    %v7390 = vld [vmem:[%s5 + $0x148] sm:$0xff]
    %v7391 = vld [vmem:[%s5 + $0x150] sm:$0xff]
    %v7392 = vld [vmem:[%s5 + $0x158] sm:$0xff]
    %v7393 = vld [vmem:[%s5 + $0x160] sm:$0xff]
    %v7394 = vld [vmem:[%s5 + $0x168] sm:$0xff]
    %v7395 = vld [vmem:[%s5 + $0x170] sm:$0xff]
    %v7396 = vld [vmem:[%s5 + $0x178] sm:$0xff]
    %v7397 = vld [vmem:[%s5 + $0x180] sm:$0xff]
    %v7398 = vld [vmem:[%s5 + $0x188] sm:$0xff]
    %v7399 = vld [vmem:[%s5 + $0x190] sm:$0xff]
    %v7400 = vld [vmem:[%s5 + $0x198] sm:$0xff]
    %v7401 = vld [vmem:[%s5 + $0x1a0] sm:$0xff]
    %v7402 = vld [vmem:[%s5 + $0x1a8] sm:$0xff]
    %v7403 = vld [vmem:[%s5 + $0x1b0] sm:$0xff]
    %v7404 = vld [vmem:[%s5 + $0x1b8] sm:$0xff]
    %v7405 = vld [vmem:[%s5 + $0x1c0] sm:$0xff]
    %v7406 = vld [vmem:[%s5 + $0x1c8] sm:$0xff]
    %v7407 = vld [vmem:[%s5 + $0x1d0] sm:$0xff]
    %v7408 = vld [vmem:[%s5 + $0x1d8] sm:$0xff]
    %v7409 = vld [vmem:[%s5 + $0x1e0] sm:$0xff]
    %v7410 = vld [vmem:[%s5 + $0x1e8] sm:$0xff]
    %v7411 = vld [vmem:[%s5 + $0x1f0] sm:$0xff]
    %v7412 = vld [vmem:[%s5 + $0x1f8] sm:$0xff]
    %v7413 = vld [vmem:[%s5 + $0x200] sm:$0xff]
    %v7414 = vld [vmem:[%s5 + $0x208] sm:$0xff]
    %v7415 = vld [vmem:[%s5 + $0x210] sm:$0xff]
    %v7416 = vld [vmem:[%s5 + $0x218] sm:$0xff]
    %v7417 = vld [vmem:[%s5 + $0x220] sm:$0xff]
    %v7418 = vld [vmem:[%s5 + $0x228] sm:$0xff]
    %v7419 = vld [vmem:[%s5 + $0x230] sm:$0xff]
    %v7420 = vld [vmem:[%s5 + $0x238] sm:$0xff]
    %v7421 = vld [vmem:[%s5 + $0x240] sm:$0xff]
    %v7422 = vld [vmem:[%s5 + $0x248] sm:$0xff]
    %v7423 = vld [vmem:[%s5 + $0x250] sm:$0xff]
    %v7424 = vld [vmem:[%s5 + $0x258] sm:$0xff]
    %v7425 = vld [vmem:[%s5 + $0x260] sm:$0xff]
    %v7426 = vld [vmem:[%s5 + $0x268] sm:$0xff]
    %v7427 = vld [vmem:[%s5 + $0x270] sm:$0xff]
    %v7428 = vld [vmem:[%s5 + $0x278] sm:$0xff]
    %v7429 = vld [vmem:[%s5 + $0x280] sm:$0xff]
    %v7430 = vld [vmem:[%s5 + $0x288] sm:$0xff]
    %v7431 = vld [vmem:[%s5 + $0x290] sm:$0xff]
    %v7432 = vld [vmem:[%s5 + $0x298] sm:$0xff]
    %v7433 = vld [vmem:[%s5 + $0x2a0] sm:$0xff]
    %v7434 = vld [vmem:[%s5 + $0x2a8] sm:$0xff]
    %v7435 = vld [vmem:[%s5 + $0x2b0] sm:$0xff]
    %v7436 = vld [vmem:[%s5 + $0x2b8] sm:$0xff]
    %v7437 = vld [vmem:[%s5 + $0x2c0] sm:$0xff]
    %v7438 = vld [vmem:[%s5 + $0x2c8] sm:$0xff]
    %v7439 = vld [vmem:[%s5 + $0x2d0] sm:$0xff]
    %v7440 = vld [vmem:[%s5 + $0x2d8] sm:$0xff]
    %v7441 = vld [vmem:[%s5 + $0x2e0] sm:$0xff]
    %v7442 = vld [vmem:[%s5 + $0x2e8] sm:$0xff]
    %v7443 = vld [vmem:[%s5 + $0x2f0] sm:$0xff]
    %v7444 = vld [vmem:[%s5 + $0x2f8] sm:$0xff]
    %v7445 = vld [vmem:[%s5 + $0x300] sm:$0xff]
    %v7446 = vld [vmem:[%s5 + $0x308] sm:$0xff]
    %v7447 = vld [vmem:[%s5 + $0x310] sm:$0xff]
    %v7448 = vld [vmem:[%s5 + $0x318] sm:$0xff]
    %v7449 = vld [vmem:[%s5 + $0x320] sm:$0xff]
    %v7450 = vld [vmem:[%s5 + $0x328] sm:$0xff]
    %v7451 = vld [vmem:[%s5 + $0x330] sm:$0xff]
    %v7452 = vld [vmem:[%s5 + $0x338] sm:$0xff]
    %v7453 = vld [vmem:[%s5 + $0x340] sm:$0xff]
    %v7454 = vld [vmem:[%s5 + $0x348] sm:$0xff]
    %v7455 = vld [vmem:[%s5 + $0x350] sm:$0xff]
    %v7456 = vld [vmem:[%s5 + $0x358] sm:$0xff]
    %v7457 = vld [vmem:[%s5 + $0x360] sm:$0xff]
    %v7458 = vld [vmem:[%s5 + $0x368] sm:$0xff]
    %v7459 = vld [vmem:[%s5 + $0x370] sm:$0xff]
    %v7460 = vld [vmem:[%s5 + $0x378] sm:$0xff]
    %v7461 = vld [vmem:[%s5 + $0x380] sm:$0xff]
    %v7462 = vld [vmem:[%s5 + $0x388] sm:$0xff]
    %v7463 = vld [vmem:[%s5 + $0x390] sm:$0xff]
    %v7464 = vld [vmem:[%s5 + $0x398] sm:$0xff]
    %v7465 = vld [vmem:[%s5 + $0x3a0] sm:$0xff]
    %v7466 = vld [vmem:[%s5 + $0x3a8] sm:$0xff]
    %v7467 = vld [vmem:[%s5 + $0x3b0] sm:$0xff]
    %v7468 = vld [vmem:[%s5 + $0x3b8] sm:$0xff]
    %v7469 = vld [vmem:[%s5 + $0x3c0] sm:$0xff]
    %v7470 = vld [vmem:[%s5 + $0x3c8] sm:$0xff]
    %v7471 = vld [vmem:[%s5 + $0x3d0] sm:$0xff]
    %v7472 = vld [vmem:[%s5 + $0x3d8] sm:$0xff]
    %v7473 = vld [vmem:[%s5 + $0x3e0] sm:$0xff]
    %v7474 = vld [vmem:[%s5 + $0x3e8] sm:$0xff]
    %v7475 = vld [vmem:[%s5 + $0x3f0] sm:$0xff]
    %v7476 = vld [vmem:[%s5 + $0x3f8] sm:$0xff]
    %v7477 = vld [vmem:[%s7] sm:$0xf]
    %v7479 = vlaneseq
    %v7480 = vshrl.u32 %v7479, 7
    %v7481 = vsub.s32 0, %v7480
    %v7482 = vrot.slane %v7477, %v7481
    %v7483 = vlaneseq
    %v7484 = vshrl.u32 %v7483, 7
    %v7485 = vsub.s32 1, %v7484
    %v7486 = vrot.slane %v7477, %v7485
    %v7487 = vlaneseq
    %v7488 = vshrl.u32 %v7487, 7
    %v7489 = vsub.s32 2, %v7488
    %v7490 = vrot.slane %v7477, %v7489
    %v7491 = vlaneseq
    %v7492 = vshrl.u32 %v7491, 7
    %v7493 = vsub.s32 3, %v7492
    %v7494 = vrot.slane %v7477, %v7493
    %v7627 = vunpack.c.l.b16 %v7349
    %v7628 = vunpack.c.h.b16 %v7349
    %v7629 = vunpack.c.l.b16 %v7350
    %v7630 = vunpack.c.h.b16 %v7350
    %v7631 = vunpack.c.l.b16 %v7351
    %v7632 = vunpack.c.h.b16 %v7351
    %v7633 = vunpack.c.l.b16 %v7352
    %v7634 = vunpack.c.h.b16 %v7352
    %v7635 = vunpack.c.l.b16 %v7353
    %v7636 = vunpack.c.h.b16 %v7353
    %v7637 = vunpack.c.l.b16 %v7354
    %v7638 = vunpack.c.h.b16 %v7354
    %v7639 = vunpack.c.l.b16 %v7355
    %v7640 = vunpack.c.h.b16 %v7355
    %v7641 = vunpack.c.l.b16 %v7356
    %v7642 = vunpack.c.h.b16 %v7356
    %v7643 = vunpack.c.l.b16 %v7357
    %v7644 = vunpack.c.h.b16 %v7357
    %v7645 = vunpack.c.l.b16 %v7358
    %v7646 = vunpack.c.h.b16 %v7358
    %v7647 = vunpack.c.l.b16 %v7359
    %v7648 = vunpack.c.h.b16 %v7359
    %v7649 = vunpack.c.l.b16 %v7360
    %v7650 = vunpack.c.h.b16 %v7360
    %v7651 = vunpack.c.l.b16 %v7361
    %v7652 = vunpack.c.h.b16 %v7361
    %v7653 = vunpack.c.l.b16 %v7362
    %v7654 = vunpack.c.h.b16 %v7362
    %v7655 = vunpack.c.l.b16 %v7363
    %v7656 = vunpack.c.h.b16 %v7363
    %v7657 = vunpack.c.l.b16 %v7364
    %v7658 = vunpack.c.h.b16 %v7364
    %v7659 = vunpack.c.l.b16 %v7365
    %v7660 = vunpack.c.h.b16 %v7365
    %v7661 = vunpack.c.l.b16 %v7366
    %v7662 = vunpack.c.h.b16 %v7366
    %v7663 = vunpack.c.l.b16 %v7367
    %v7664 = vunpack.c.h.b16 %v7367
    %v7665 = vunpack.c.l.b16 %v7368
    %v7666 = vunpack.c.h.b16 %v7368
    %v7667 = vunpack.c.l.b16 %v7369
    %v7668 = vunpack.c.h.b16 %v7369
    %v7669 = vunpack.c.l.b16 %v7370
    %v7670 = vunpack.c.h.b16 %v7370
    %v7671 = vunpack.c.l.b16 %v7371
    %v7672 = vunpack.c.h.b16 %v7371
    %v7673 = vunpack.c.l.b16 %v7372
    %v7674 = vunpack.c.h.b16 %v7372
    %v7675 = vunpack.c.l.b16 %v7373
    %v7676 = vunpack.c.h.b16 %v7373
    %v7677 = vunpack.c.l.b16 %v7374
    %v7678 = vunpack.c.h.b16 %v7374
    %v7679 = vunpack.c.l.b16 %v7375
    %v7680 = vunpack.c.h.b16 %v7375
    %v7681 = vunpack.c.l.b16 %v7376
    %v7682 = vunpack.c.h.b16 %v7376
    %v7683 = vunpack.c.l.b16 %v7377
    %v7684 = vunpack.c.h.b16 %v7377
    %v7685 = vunpack.c.l.b16 %v7378
    %v7686 = vunpack.c.h.b16 %v7378
    %v7687 = vunpack.c.l.b16 %v7379
    %v7688 = vunpack.c.h.b16 %v7379
    %v7689 = vunpack.c.l.b16 %v7380
    %v7690 = vunpack.c.h.b16 %v7380
    %v7691 = vunpack.c.l.b16 %v7381
    %v7692 = vunpack.c.h.b16 %v7381
    %v7693 = vunpack.c.l.b16 %v7382
    %v7694 = vunpack.c.h.b16 %v7382
    %v7695 = vunpack.c.l.b16 %v7383
    %v7696 = vunpack.c.h.b16 %v7383
    %v7697 = vunpack.c.l.b16 %v7384
    %v7698 = vunpack.c.h.b16 %v7384
    %v7699 = vunpack.c.l.b16 %v7385
    %v7700 = vunpack.c.h.b16 %v7385
    %v7701 = vunpack.c.l.b16 %v7386
    %v7702 = vunpack.c.h.b16 %v7386
    %v7703 = vunpack.c.l.b16 %v7387
    %v7704 = vunpack.c.h.b16 %v7387
    %v7705 = vunpack.c.l.b16 %v7388
    %v7706 = vunpack.c.h.b16 %v7388
    %v7707 = vunpack.c.l.b16 %v7389
    %v7708 = vunpack.c.h.b16 %v7389
    %v7709 = vunpack.c.l.b16 %v7390
    %v7710 = vunpack.c.h.b16 %v7390
    %v7711 = vunpack.c.l.b16 %v7391
    %v7712 = vunpack.c.h.b16 %v7391
    %v7713 = vunpack.c.l.b16 %v7392
    %v7714 = vunpack.c.h.b16 %v7392
    %v7715 = vunpack.c.l.b16 %v7393
    %v7716 = vunpack.c.h.b16 %v7393
    %v7717 = vunpack.c.l.b16 %v7394
    %v7718 = vunpack.c.h.b16 %v7394
    %v7719 = vunpack.c.l.b16 %v7395
    %v7720 = vunpack.c.h.b16 %v7395
    %v7721 = vunpack.c.l.b16 %v7396
    %v7722 = vunpack.c.h.b16 %v7396
    %v7723 = vunpack.c.l.b16 %v7397
    %v7724 = vunpack.c.h.b16 %v7397
    %v7725 = vunpack.c.l.b16 %v7398
    %v7726 = vunpack.c.h.b16 %v7398
    %v7727 = vunpack.c.l.b16 %v7399
    %v7728 = vunpack.c.h.b16 %v7399
    %v7729 = vunpack.c.l.b16 %v7400
    %v7730 = vunpack.c.h.b16 %v7400
    %v7731 = vunpack.c.l.b16 %v7401
    %v7732 = vunpack.c.h.b16 %v7401
    %v7733 = vunpack.c.l.b16 %v7402
    %v7734 = vunpack.c.h.b16 %v7402
    %v7735 = vunpack.c.l.b16 %v7403
    %v7736 = vunpack.c.h.b16 %v7403
    %v7737 = vunpack.c.l.b16 %v7404
    %v7738 = vunpack.c.h.b16 %v7404
    %v7739 = vunpack.c.l.b16 %v7405
    %v7740 = vunpack.c.h.b16 %v7405
    %v7741 = vunpack.c.l.b16 %v7406
    %v7742 = vunpack.c.h.b16 %v7406
    %v7743 = vunpack.c.l.b16 %v7407
    %v7744 = vunpack.c.h.b16 %v7407
    %v7745 = vunpack.c.l.b16 %v7408
    %v7746 = vunpack.c.h.b16 %v7408
    %v7747 = vunpack.c.l.b16 %v7409
    %v7748 = vunpack.c.h.b16 %v7409
    %v7749 = vunpack.c.l.b16 %v7410
    %v7750 = vunpack.c.h.b16 %v7410
    %v7751 = vunpack.c.l.b16 %v7411
    %v7752 = vunpack.c.h.b16 %v7411
    %v7753 = vunpack.c.l.b16 %v7412
    %v7754 = vunpack.c.h.b16 %v7412
    %v7755 = vunpack.c.l.b16 %v7413
    %v7756 = vunpack.c.h.b16 %v7413
    %v7757 = vunpack.c.l.b16 %v7414
    %v7758 = vunpack.c.h.b16 %v7414
    %v7759 = vunpack.c.l.b16 %v7415
    %v7760 = vunpack.c.h.b16 %v7415
    %v7761 = vunpack.c.l.b16 %v7416
    %v7762 = vunpack.c.h.b16 %v7416
    %v7763 = vunpack.c.l.b16 %v7417
    %v7764 = vunpack.c.h.b16 %v7417
    %v7765 = vunpack.c.l.b16 %v7418
    %v7766 = vunpack.c.h.b16 %v7418
    %v7767 = vunpack.c.l.b16 %v7419
    %v7768 = vunpack.c.h.b16 %v7419
    %v7769 = vunpack.c.l.b16 %v7420
    %v7770 = vunpack.c.h.b16 %v7420
    %v7771 = vunpack.c.l.b16 %v7421
    %v7772 = vunpack.c.h.b16 %v7421
    %v7773 = vunpack.c.l.b16 %v7422
    %v7774 = vunpack.c.h.b16 %v7422
    %v7775 = vunpack.c.l.b16 %v7423
    %v7776 = vunpack.c.h.b16 %v7423
    %v7777 = vunpack.c.l.b16 %v7424
    %v7778 = vunpack.c.h.b16 %v7424
    %v7779 = vunpack.c.l.b16 %v7425
    %v7780 = vunpack.c.h.b16 %v7425
    %v7781 = vunpack.c.l.b16 %v7426
    %v7782 = vunpack.c.h.b16 %v7426
    %v7783 = vunpack.c.l.b16 %v7427
    %v7784 = vunpack.c.h.b16 %v7427
    %v7785 = vunpack.c.l.b16 %v7428
    %v7786 = vunpack.c.h.b16 %v7428
    %v7787 = vunpack.c.l.b16 %v7429
    %v7788 = vunpack.c.h.b16 %v7429
    %v7789 = vunpack.c.l.b16 %v7430
    %v7790 = vunpack.c.h.b16 %v7430
    %v7791 = vunpack.c.l.b16 %v7431
    %v7792 = vunpack.c.h.b16 %v7431
    %v7793 = vunpack.c.l.b16 %v7432
    %v7794 = vunpack.c.h.b16 %v7432
    %v7795 = vunpack.c.l.b16 %v7433
    %v7796 = vunpack.c.h.b16 %v7433
    %v7797 = vunpack.c.l.b16 %v7434
    %v7798 = vunpack.c.h.b16 %v7434
    %v7799 = vunpack.c.l.b16 %v7435
    %v7800 = vunpack.c.h.b16 %v7435
    %v7801 = vunpack.c.l.b16 %v7436
    %v7802 = vunpack.c.h.b16 %v7436
    %v7803 = vunpack.c.l.b16 %v7437
    %v7804 = vunpack.c.h.b16 %v7437
    %v7805 = vunpack.c.l.b16 %v7438
    %v7806 = vunpack.c.h.b16 %v7438
    %v7807 = vunpack.c.l.b16 %v7439
    %v7808 = vunpack.c.h.b16 %v7439
    %v7809 = vunpack.c.l.b16 %v7440
    %v7810 = vunpack.c.h.b16 %v7440
    %v7811 = vunpack.c.l.b16 %v7441
    %v7812 = vunpack.c.h.b16 %v7441
    %v7813 = vunpack.c.l.b16 %v7442
    %v7814 = vunpack.c.h.b16 %v7442
    %v7815 = vunpack.c.l.b16 %v7443
    %v7816 = vunpack.c.h.b16 %v7443
    %v7817 = vunpack.c.l.b16 %v7444
    %v7818 = vunpack.c.h.b16 %v7444
    %v7819 = vunpack.c.l.b16 %v7445
    %v7820 = vunpack.c.h.b16 %v7445
    %v7821 = vunpack.c.l.b16 %v7446
    %v7822 = vunpack.c.h.b16 %v7446
    %v7823 = vunpack.c.l.b16 %v7447
    %v7824 = vunpack.c.h.b16 %v7447
    %v7825 = vunpack.c.l.b16 %v7448
    %v7826 = vunpack.c.h.b16 %v7448
    %v7827 = vunpack.c.l.b16 %v7449
    %v7828 = vunpack.c.h.b16 %v7449
    %v7829 = vunpack.c.l.b16 %v7450
    %v7830 = vunpack.c.h.b16 %v7450
    %v7831 = vunpack.c.l.b16 %v7451
    %v7832 = vunpack.c.h.b16 %v7451
    %v7833 = vunpack.c.l.b16 %v7452
    %v7834 = vunpack.c.h.b16 %v7452
    %v7835 = vunpack.c.l.b16 %v7453
    %v7836 = vunpack.c.h.b16 %v7453
    %v7837 = vunpack.c.l.b16 %v7454
    %v7838 = vunpack.c.h.b16 %v7454
    %v7839 = vunpack.c.l.b16 %v7455
    %v7840 = vunpack.c.h.b16 %v7455
    %v7841 = vunpack.c.l.b16 %v7456
    %v7842 = vunpack.c.h.b16 %v7456
    %v7843 = vunpack.c.l.b16 %v7457
    %v7844 = vunpack.c.h.b16 %v7457
    %v7845 = vunpack.c.l.b16 %v7458
    %v7846 = vunpack.c.h.b16 %v7458
    %v7847 = vunpack.c.l.b16 %v7459
    %v7848 = vunpack.c.h.b16 %v7459
    %v7849 = vunpack.c.l.b16 %v7460
    %v7850 = vunpack.c.h.b16 %v7460
    %v7851 = vunpack.c.l.b16 %v7461
    %v7852 = vunpack.c.h.b16 %v7461
    %v7853 = vunpack.c.l.b16 %v7462
    %v7854 = vunpack.c.h.b16 %v7462
    %v7855 = vunpack.c.l.b16 %v7463
    %v7856 = vunpack.c.h.b16 %v7463
    %v7857 = vunpack.c.l.b16 %v7464
    %v7858 = vunpack.c.h.b16 %v7464
    %v7859 = vunpack.c.l.b16 %v7465
    %v7860 = vunpack.c.h.b16 %v7465
    %v7861 = vunpack.c.l.b16 %v7466
    %v7862 = vunpack.c.h.b16 %v7466
    %v7863 = vunpack.c.l.b16 %v7467
    %v7864 = vunpack.c.h.b16 %v7467
    %v7865 = vunpack.c.l.b16 %v7468
    %v7866 = vunpack.c.h.b16 %v7468
    %v7867 = vunpack.c.l.b16 %v7469
    %v7868 = vunpack.c.h.b16 %v7469
    %v7869 = vunpack.c.l.b16 %v7470
    %v7870 = vunpack.c.h.b16 %v7470
    %v7871 = vunpack.c.l.b16 %v7471
    %v7872 = vunpack.c.h.b16 %v7471
    %v7873 = vunpack.c.l.b16 %v7472
    %v7874 = vunpack.c.h.b16 %v7472
    %v7875 = vunpack.c.l.b16 %v7473
    %v7876 = vunpack.c.h.b16 %v7473
    %v7877 = vunpack.c.l.b16 %v7474
    %v7878 = vunpack.c.h.b16 %v7474
    %v7879 = vunpack.c.l.b16 %v7475
    %v7880 = vunpack.c.h.b16 %v7475
    %v7881 = vunpack.c.l.b16 %v7476
    %v7882 = vunpack.c.h.b16 %v7476
    %v7883 = vpack.c.b16 %v7631, %v7627
    %v7884 = vpack.c.b16 %v7632, %v7628
    %v7885 = vpack.c.b16 %v7633, %v7629
    %v7886 = vpack.c.b16 %v7634, %v7630
    %v7887 = vpack.c.b16 %v7639, %v7635
    %v7888 = vpack.c.b16 %v7640, %v7636
    %v7889 = vpack.c.b16 %v7641, %v7637
    %v7890 = vpack.c.b16 %v7642, %v7638
    %v7891 = vpack.c.b16 %v7647, %v7643
    %v7892 = vpack.c.b16 %v7648, %v7644
    %v7893 = vpack.c.b16 %v7649, %v7645
    %v7894 = vpack.c.b16 %v7650, %v7646
    %v7895 = vpack.c.b16 %v7655, %v7651
    %v7896 = vpack.c.b16 %v7656, %v7652
    %v7897 = vpack.c.b16 %v7657, %v7653
    %v7898 = vpack.c.b16 %v7658, %v7654
    %v7899 = vpack.c.b16 %v7663, %v7659
    %v7900 = vpack.c.b16 %v7664, %v7660
    %v7901 = vpack.c.b16 %v7665, %v7661
    %v7902 = vpack.c.b16 %v7666, %v7662
    %v7903 = vpack.c.b16 %v7671, %v7667
    %v7904 = vpack.c.b16 %v7672, %v7668
    %v7905 = vpack.c.b16 %v7673, %v7669
    %v7906 = vpack.c.b16 %v7674, %v7670
    %v7907 = vpack.c.b16 %v7679, %v7675
    %v7908 = vpack.c.b16 %v7680, %v7676
    %v7909 = vpack.c.b16 %v7681, %v7677
    %v7910 = vpack.c.b16 %v7682, %v7678
    %v7911 = vpack.c.b16 %v7687, %v7683
    %v7912 = vpack.c.b16 %v7688, %v7684
    %v7913 = vpack.c.b16 %v7689, %v7685
    %v7914 = vpack.c.b16 %v7690, %v7686
    %v7915 = vpack.c.b16 %v7695, %v7691
    %v7916 = vpack.c.b16 %v7696, %v7692
    %v7917 = vpack.c.b16 %v7697, %v7693
    %v7918 = vpack.c.b16 %v7698, %v7694
    %v7919 = vpack.c.b16 %v7703, %v7699
    %v7920 = vpack.c.b16 %v7704, %v7700
    %v7921 = vpack.c.b16 %v7705, %v7701
    %v7922 = vpack.c.b16 %v7706, %v7702
    %v7923 = vpack.c.b16 %v7711, %v7707
    %v7924 = vpack.c.b16 %v7712, %v7708
    %v7925 = vpack.c.b16 %v7713, %v7709
    %v7926 = vpack.c.b16 %v7714, %v7710
    %v7927 = vpack.c.b16 %v7719, %v7715
    %v7928 = vpack.c.b16 %v7720, %v7716
    %v7929 = vpack.c.b16 %v7721, %v7717
    %v7930 = vpack.c.b16 %v7722, %v7718
    %v7931 = vpack.c.b16 %v7727, %v7723
    %v7932 = vpack.c.b16 %v7728, %v7724
    %v7933 = vpack.c.b16 %v7729, %v7725
    %v7934 = vpack.c.b16 %v7730, %v7726
    %v7935 = vpack.c.b16 %v7735, %v7731
    %v7936 = vpack.c.b16 %v7736, %v7732
    %v7937 = vpack.c.b16 %v7737, %v7733
    %v7938 = vpack.c.b16 %v7738, %v7734
    %v7939 = vpack.c.b16 %v7743, %v7739
    %v7940 = vpack.c.b16 %v7744, %v7740
    %v7941 = vpack.c.b16 %v7745, %v7741
    %v7942 = vpack.c.b16 %v7746, %v7742
    %v7943 = vpack.c.b16 %v7751, %v7747
    %v7944 = vpack.c.b16 %v7752, %v7748
    %v7945 = vpack.c.b16 %v7753, %v7749
    %v7946 = vpack.c.b16 %v7754, %v7750
    %v7947 = vpack.c.b16 %v7759, %v7755
    %v7948 = vpack.c.b16 %v7760, %v7756
    %v7949 = vpack.c.b16 %v7761, %v7757
    %v7950 = vpack.c.b16 %v7762, %v7758
    %v7951 = vpack.c.b16 %v7767, %v7763
    %v7952 = vpack.c.b16 %v7768, %v7764
    %v7953 = vpack.c.b16 %v7769, %v7765
    %v7954 = vpack.c.b16 %v7770, %v7766
    %v7955 = vpack.c.b16 %v7775, %v7771
    %v7956 = vpack.c.b16 %v7776, %v7772
    %v7957 = vpack.c.b16 %v7777, %v7773
    %v7958 = vpack.c.b16 %v7778, %v7774
    %v7959 = vpack.c.b16 %v7783, %v7779
    %v7960 = vpack.c.b16 %v7784, %v7780
    %v7961 = vpack.c.b16 %v7785, %v7781
    %v7962 = vpack.c.b16 %v7786, %v7782
    %v7963 = vpack.c.b16 %v7791, %v7787
    %v7964 = vpack.c.b16 %v7792, %v7788
    %v7965 = vpack.c.b16 %v7793, %v7789
    %v7966 = vpack.c.b16 %v7794, %v7790
    %v7967 = vpack.c.b16 %v7799, %v7795
    %v7968 = vpack.c.b16 %v7800, %v7796
    %v7969 = vpack.c.b16 %v7801, %v7797
    %v7970 = vpack.c.b16 %v7802, %v7798
    %v7971 = vpack.c.b16 %v7807, %v7803
    %v7972 = vpack.c.b16 %v7808, %v7804
    %v7973 = vpack.c.b16 %v7809, %v7805
    %v7974 = vpack.c.b16 %v7810, %v7806
    %v7975 = vpack.c.b16 %v7815, %v7811
    %v7976 = vpack.c.b16 %v7816, %v7812
    %v7977 = vpack.c.b16 %v7817, %v7813
    %v7978 = vpack.c.b16 %v7818, %v7814
    %v7979 = vpack.c.b16 %v7823, %v7819
    %v7980 = vpack.c.b16 %v7824, %v7820
    %v7981 = vpack.c.b16 %v7825, %v7821
    %v7982 = vpack.c.b16 %v7826, %v7822
    %v7983 = vpack.c.b16 %v7831, %v7827
    %v7984 = vpack.c.b16 %v7832, %v7828
    %v7985 = vpack.c.b16 %v7833, %v7829
    %v7986 = vpack.c.b16 %v7834, %v7830
    %v7987 = vpack.c.b16 %v7839, %v7835
    %v7988 = vpack.c.b16 %v7840, %v7836
    %v7989 = vpack.c.b16 %v7841, %v7837
    %v7990 = vpack.c.b16 %v7842, %v7838
    %v7991 = vpack.c.b16 %v7847, %v7843
    %v7992 = vpack.c.b16 %v7848, %v7844
    %v7993 = vpack.c.b16 %v7849, %v7845
    %v7994 = vpack.c.b16 %v7850, %v7846
    %v7995 = vpack.c.b16 %v7855, %v7851
    %v7996 = vpack.c.b16 %v7856, %v7852
    %v7997 = vpack.c.b16 %v7857, %v7853
    %v7998 = vpack.c.b16 %v7858, %v7854
    %v7999 = vpack.c.b16 %v7863, %v7859
    %v8000 = vpack.c.b16 %v7864, %v7860
    %v8001 = vpack.c.b16 %v7865, %v7861
    %v8002 = vpack.c.b16 %v7866, %v7862
    %v8003 = vpack.c.b16 %v7871, %v7867
    %v8004 = vpack.c.b16 %v7872, %v7868
    %v8005 = vpack.c.b16 %v7873, %v7869
    %v8006 = vpack.c.b16 %v7874, %v7870
    %v8007 = vpack.c.b16 %v7879, %v7875
    %v8008 = vpack.c.b16 %v7880, %v7876
    %v8009 = vpack.c.b16 %v7881, %v7877
    %v8010 = vpack.c.b16 %v7882, %v7878
    %8139 = vmatprep.subr.bf16.mxu0 %v7884
    %8140 = vmatpush1.bf16.msra.mxu0 %v7883
    %8141 = vmatprep.subr.bf16.mxu0 %v7888
    %8142 = vmatpush1.bf16.msra.mxu0 %v7887
    %8143 = vmatprep.subr.bf16.mxu0 %v7892
    %8144 = vmatpush1.bf16.msra.mxu0 %v7891
    %8145 = vmatprep.subr.bf16.mxu0 %v7896
    %8146 = vmatpush1.bf16.msra.mxu0 %v7895
    %8147 = vmatprep.subr.bf16.mxu0 %v7900
    %8148 = vmatpush1.bf16.msra.mxu0 %v7899
    %8149 = vmatprep.subr.bf16.mxu0 %v7904
    %8150 = vmatpush1.bf16.msra.mxu0 %v7903
    %8151 = vmatprep.subr.bf16.mxu0 %v7908
    %8152 = vmatpush1.bf16.msra.mxu0 %v7907
    %8153 = vmatprep.subr.bf16.mxu0 %v7912
    %8154 = vmatpush1.bf16.msra.mxu0 %v7911
    %8155 = vmatprep.subr.bf16.mxu0 %v7916
    %8156 = vmatpush1.bf16.msra.mxu0 %v7915
    %8157 = vmatprep.subr.bf16.mxu0 %v7920
    %8158 = vmatpush1.bf16.msra.mxu0 %v7919
    %8159 = vmatprep.subr.bf16.mxu0 %v7924
    %8160 = vmatpush1.bf16.msra.mxu0 %v7923
    %8161 = vmatprep.subr.bf16.mxu0 %v7928
    %8162 = vmatpush1.bf16.msra.mxu0 %v7927
    %8163 = vmatprep.subr.bf16.mxu0 %v7932
    %8164 = vmatpush1.bf16.msra.mxu0 %v7931
    %8165 = vmatprep.subr.bf16.mxu0 %v7936
    %8166 = vmatpush1.bf16.msra.mxu0 %v7935
    %8167 = vmatprep.subr.bf16.mxu0 %v7940
    %8168 = vmatpush1.bf16.msra.mxu0 %v7939
    %8169 = vmatprep.subr.bf16.mxu0 %v7944
    %8170 = vmatpush1.bf16.msra.mxu0 %v7943
    %8171 = vmatprep.mubr.bf16.mxu0 %v7346
    %8172 = vmatmul.mubr.bf16.gmra.mrb[0].mxu0 %v7345
    %v8173 = vpop.f32.mrb[0].mxu0
    %v8174 = vadd.f32 %v7482, %v8173
    %v8175 = vpop.f32.mrb[0].mxu0
    %v8176 = vadd.f32 %v7486, %v8175
    %v8177 = vpop.f32.mrb[0].mxu0
    %v8178 = vpop.f32.mrb[0].mxu0
    %8179 = vdwg.mxu0
    %8180 = vmatprep.subr.bf16.mxu0 %v7948
    %8181 = vmatpush1.bf16.msra.mxu0 %v7947
    %8182 = vmatprep.subr.bf16.mxu0 %v7952
    %8183 = vmatpush1.bf16.msra.mxu0 %v7951
    %8184 = vmatprep.subr.bf16.mxu0 %v7956
    %8185 = vmatpush1.bf16.msra.mxu0 %v7955
    %8186 = vmatprep.subr.bf16.mxu0 %v7960
    %8187 = vmatpush1.bf16.msra.mxu0 %v7959
    %8188 = vmatprep.subr.bf16.mxu0 %v7964
    %8189 = vmatpush1.bf16.msra.mxu0 %v7963
    %8190 = vmatprep.subr.bf16.mxu0 %v7968
    %8191 = vmatpush1.bf16.msra.mxu0 %v7967
    %8192 = vmatprep.subr.bf16.mxu0 %v7972
    %8193 = vmatpush1.bf16.msra.mxu0 %v7971
    %8194 = vmatprep.subr.bf16.mxu0 %v7976
    %8195 = vmatpush1.bf16.msra.mxu0 %v7975
    %8196 = vmatprep.subr.bf16.mxu0 %v7980
    %8197 = vmatpush1.bf16.msra.mxu0 %v7979
    %8198 = vmatprep.subr.bf16.mxu0 %v7984
    %8199 = vmatpush1.bf16.msra.mxu0 %v7983
    %8200 = vmatprep.subr.bf16.mxu0 %v7988
    %8201 = vmatpush1.bf16.msra.mxu0 %v7987
    %8202 = vmatprep.subr.bf16.mxu0 %v7992
    %8203 = vmatpush1.bf16.msra.mxu0 %v7991
    %8204 = vmatprep.subr.bf16.mxu0 %v7996
    %8205 = vmatpush1.bf16.msra.mxu0 %v7995
    %8206 = vmatprep.subr.bf16.mxu0 %v8000
    %8207 = vmatpush1.bf16.msra.mxu0 %v7999
    %8208 = vmatprep.subr.bf16.mxu0 %v8004
    %8209 = vmatpush1.bf16.msra.mxu0 %v8003
    %8210 = vmatprep.subr.bf16.mxu0 %v8008
    %8211 = vmatpush1.bf16.msra.mxu0 %v8007
    %8212 = vmatprep.mubr.bf16.mxu0 %v7348
    %8213 = vmatmul.mubr.bf16.gmra.mrb[0].mxu0 %v7347
    %v8214 = vpop.f32.mrb[0].mxu0
    %v8215 = vadd.f32 %v8174, %v8214
    %v8216 = vpop.f32.mrb[0].mxu0
    %v8217 = vadd.f32 %v8176, %v8216
    %v8218 = vpop.f32.mrb[0].mxu0
    %v8219 = vpop.f32.mrb[0].mxu0
    %8220 = vdwg.mxu0
    %8221 = vmatprep.subr.bf16.mxu0 %v7886
    %8222 = vmatpush1.bf16.msra.mxu0 %v7885
    %8223 = vmatprep.subr.bf16.mxu0 %v7890
    %8224 = vmatpush1.bf16.msra.mxu0 %v7889
    %8225 = vmatprep.subr.bf16.mxu0 %v7894
    %8226 = vmatpush1.bf16.msra.mxu0 %v7893
    %8227 = vmatprep.subr.bf16.mxu0 %v7898
    %8228 = vmatpush1.bf16.msra.mxu0 %v7897
    %8229 = vmatprep.subr.bf16.mxu0 %v7902
    %8230 = vmatpush1.bf16.msra.mxu0 %v7901
    %8231 = vmatprep.subr.bf16.mxu0 %v7906
    %8232 = vmatpush1.bf16.msra.mxu0 %v7905
    %8233 = vmatprep.subr.bf16.mxu0 %v7910
    %8234 = vmatpush1.bf16.msra.mxu0 %v7909
    %8235 = vmatprep.subr.bf16.mxu0 %v7914
    %8236 = vmatpush1.bf16.msra.mxu0 %v7913
    %8237 = vmatprep.subr.bf16.mxu0 %v7918
    %8238 = vmatpush1.bf16.msra.mxu0 %v7917
    %8239 = vmatprep.subr.bf16.mxu0 %v7922
    %8240 = vmatpush1.bf16.msra.mxu0 %v7921
    %8241 = vmatprep.subr.bf16.mxu0 %v7926
    %8242 = vmatpush1.bf16.msra.mxu0 %v7925
    %8243 = vmatprep.subr.bf16.mxu0 %v7930
    %8244 = vmatpush1.bf16.msra.mxu0 %v7929
    %8245 = vmatprep.subr.bf16.mxu0 %v7934
    %8246 = vmatpush1.bf16.msra.mxu0 %v7933
    %8247 = vmatprep.subr.bf16.mxu0 %v7938
    %8248 = vmatpush1.bf16.msra.mxu0 %v7937
    %8249 = vmatprep.subr.bf16.mxu0 %v7942
    %8250 = vmatpush1.bf16.msra.mxu0 %v7941
    %8251 = vmatprep.subr.bf16.mxu0 %v7946
    %8252 = vmatpush1.bf16.msra.mxu0 %v7945
    %8253 = vmatprep.mubr.bf16.mxu0 %v7346
    %8254 = vmatmul.mubr.bf16.gmra.mrb[0].mxu0 %v7345
    %v8255 = vpop.f32.mrb[0].mxu0
    %v8256 = vadd.f32 %v7490, %v8255
    %v8257 = vpop.f32.mrb[0].mxu0
    %v8258 = vadd.f32 %v7494, %v8257
    %v8259 = vpop.f32.mrb[0].mxu0
    %v8260 = vpop.f32.mrb[0].mxu0
    %8261 = vdwg.mxu0
    %8262 = vmatprep.subr.bf16.mxu0 %v7950
    %8263 = vmatpush1.bf16.msra.mxu0 %v7949
    %8264 = vmatprep.subr.bf16.mxu0 %v7954
    %8265 = vmatpush1.bf16.msra.mxu0 %v7953
    %8266 = vmatprep.subr.bf16.mxu0 %v7958
    %8267 = vmatpush1.bf16.msra.mxu0 %v7957
    %8268 = vmatprep.subr.bf16.mxu0 %v7962
    %8269 = vmatpush1.bf16.msra.mxu0 %v7961
    %8270 = vmatprep.subr.bf16.mxu0 %v7966
    %8271 = vmatpush1.bf16.msra.mxu0 %v7965
    %8272 = vmatprep.subr.bf16.mxu0 %v7970
    %8273 = vmatpush1.bf16.msra.mxu0 %v7969
    %8274 = vmatprep.subr.bf16.mxu0 %v7974
    %8275 = vmatpush1.bf16.msra.mxu0 %v7973
    %8276 = vmatprep.subr.bf16.mxu0 %v7978
    %8277 = vmatpush1.bf16.msra.mxu0 %v7977
    %8278 = vmatprep.subr.bf16.mxu0 %v7982
    %8279 = vmatpush1.bf16.msra.mxu0 %v7981
    %8280 = vmatprep.subr.bf16.mxu0 %v7986
    %8281 = vmatpush1.bf16.msra.mxu0 %v7985
    %8282 = vmatprep.subr.bf16.mxu0 %v7990
    %8283 = vmatpush1.bf16.msra.mxu0 %v7989
    %8284 = vmatprep.subr.bf16.mxu0 %v7994
    %8285 = vmatpush1.bf16.msra.mxu0 %v7993
    %8286 = vmatprep.subr.bf16.mxu0 %v7998
    %8287 = vmatpush1.bf16.msra.mxu0 %v7997
    %8288 = vmatprep.subr.bf16.mxu0 %v8002
    %8289 = vmatpush1.bf16.msra.mxu0 %v8001
    %8290 = vmatprep.subr.bf16.mxu0 %v8006
    %8291 = vmatpush1.bf16.msra.mxu0 %v8005
    %8292 = vmatprep.subr.bf16.mxu0 %v8010
    %8293 = vmatpush1.bf16.msra.mxu0 %v8009
    %8294 = vmatprep.mubr.bf16.mxu0 %v7348
    %8295 = vmatmul.mubr.bf16.gmra.mrb[0].mxu0 %v7347
    %v8296 = vpop.f32.mrb[0].mxu0
    %v8297 = vadd.f32 %v8256, %v8296
    %v8298 = vpop.f32.mrb[0].mxu0
    %v8299 = vadd.f32 %v8258, %v8298
    %v8300 = vpop.f32.mrb[0].mxu0
    %v8301 = vpop.f32.mrb[0].mxu0
    %8302 = vdwg.mxu0
    %v8307 = vcombine.low %v8215, %v8217
    %v8308 = vcombine.high %v8215, %v8217
    %v8309 = vcombine.low %v8297, %v8299
    %v8310 = vcombine.high %v8297, %v8299
    %v8312 = vunpack.c.l.s4 1983009808
    %v8313 = vunpack.c.0.s8 %v8312
    %v8314 = vlaneseq
    %v8315 = vshrl.u32 %v8314, 7
    %v8316 = vsub.s32 %v8313, %v8315
    %v8317 = vrot.slane %v8307, %v8316
    %v8319 = vunpack.c.l.s4 1983009808
    %v8320 = vunpack.c.0.s8 %v8319
    %v8321 = vlaneseq
    %v8322 = vshrl.u32 %v8321, 7
    %v8323 = vsub.s32 %v8320, %v8322
    %v8324 = vrot.slane %v8308, %v8323
    %v8326 = vunpack.c.l.s4 1983009808
    %v8327 = vunpack.c.0.s8 %v8326
    %v8328 = vlaneseq
    %v8329 = vshrl.u32 %v8328, 7
    %v8330 = vsub.s32 %v8327, %v8329
    %v8331 = vrot.slane %v8309, %v8330
    %v8333 = vunpack.c.l.s4 1983009808
    %v8334 = vunpack.c.0.s8 %v8333
    %v8335 = vlaneseq
    %v8336 = vshrl.u32 %v8335, 7
    %v8337 = vsub.s32 %v8334, %v8336
    %v8338 = vrot.slane %v8310, %v8337
    %v8339 = vcombine.low %v8317, %v8331
    %v8340 = vcombine.high %v8317, %v8331
    %v8341 = vcombine.low %v8324, %v8338
    %v8342 = vcombine.high %v8324, %v8338
    %8347 = vst [vmem:[#allocation2] sm:$0xff] %v8339
    %8348 = vst [vmem:[#allocation2 + $0x8] sm:$0xff] %v8340
    %8349 = vst [vmem:[#allocation2 + $0x10] sm:$0xff] %v8341
    %8350 = vst [vmem:[#allocation2 + $0x18] sm:$0xff] %v8342
    %v8351 = vld [vmem:[%s6] sm:$0xff]
    %v8352 = vld [vmem:[%s6 + $0x8] sm:$0xff]
    %v8353 = vld [vmem:[%s6 + $0x10] sm:$0xff]
    %v8354 = vld [vmem:[%s6 + $0x18] sm:$0xff]
    %v8355 = vld [vmem:[%s6 + $0x20] sm:$0xff]
    %v8356 = vld [vmem:[%s6 + $0x28] sm:$0xff]
    %v8357 = vld [vmem:[%s6 + $0x30] sm:$0xff]
    %v8358 = vld [vmem:[%s6 + $0x38] sm:$0xff]
    %v8359 = vld [vmem:[%s6 + $0x40] sm:$0xff]
    %v8360 = vld [vmem:[%s6 + $0x48] sm:$0xff]
    %v8361 = vld [vmem:[%s6 + $0x50] sm:$0xff]
    %v8362 = vld [vmem:[%s6 + $0x58] sm:$0xff]
    %v8363 = vld [vmem:[%s6 + $0x60] sm:$0xff]
    %v8364 = vld [vmem:[%s6 + $0x68] sm:$0xff]
    %v8365 = vld [vmem:[%s6 + $0x70] sm:$0xff]
    %v8366 = vld [vmem:[%s6 + $0x78] sm:$0xff]
    %v8367 = vld [vmem:[%s6 + $0x80] sm:$0xff]
    %v8368 = vld [vmem:[%s6 + $0x88] sm:$0xff]
    %v8369 = vld [vmem:[%s6 + $0x90] sm:$0xff]
    %v8370 = vld [vmem:[%s6 + $0x98] sm:$0xff]
    %v8371 = vld [vmem:[%s6 + $0xa0] sm:$0xff]
    %v8372 = vld [vmem:[%s6 + $0xa8] sm:$0xff]
    %v8373 = vld [vmem:[%s6 + $0xb0] sm:$0xff]
    %v8374 = vld [vmem:[%s6 + $0xb8] sm:$0xff]
    %v8375 = vld [vmem:[%s6 + $0xc0] sm:$0xff]
    %v8376 = vld [vmem:[%s6 + $0xc8] sm:$0xff]
    %v8377 = vld [vmem:[%s6 + $0xd0] sm:$0xff]
    %v8378 = vld [vmem:[%s6 + $0xd8] sm:$0xff]
    %v8379 = vld [vmem:[%s6 + $0xe0] sm:$0xff]
    %v8380 = vld [vmem:[%s6 + $0xe8] sm:$0xff]
    %v8381 = vld [vmem:[%s6 + $0xf0] sm:$0xff]
    %v8382 = vld [vmem:[%s6 + $0xf8] sm:$0xff]
    %v8383 = vld [vmem:[%s1] sm:$0x3]
    %v8384 = vld [vmem:[%s2] sm:$0x3]
    %v8385 = vld [vmem:[#allocation2] sm:$0xff]
    %v8386 = vpack.c.bf16 %v8383, %v8383
    %v8419 = vunpack.c.l.b16 %v8351
    %v8420 = vunpack.c.h.b16 %v8351
    %v8421 = vunpack.c.l.b16 %v8352
    %v8422 = vunpack.c.h.b16 %v8352
    %v8423 = vunpack.c.l.b16 %v8353
    %v8424 = vunpack.c.h.b16 %v8353
    %v8425 = vunpack.c.l.b16 %v8354
    %v8426 = vunpack.c.h.b16 %v8354
    %v8427 = vunpack.c.l.b16 %v8355
    %v8428 = vunpack.c.h.b16 %v8355
    %v8429 = vunpack.c.l.b16 %v8356
    %v8430 = vunpack.c.h.b16 %v8356
    %v8431 = vunpack.c.l.b16 %v8357
    %v8432 = vunpack.c.h.b16 %v8357
    %v8433 = vunpack.c.l.b16 %v8358
    %v8434 = vunpack.c.h.b16 %v8358
    %v8435 = vunpack.c.l.b16 %v8359
    %v8436 = vunpack.c.h.b16 %v8359
    %v8437 = vunpack.c.l.b16 %v8360
    %v8438 = vunpack.c.h.b16 %v8360
    %v8439 = vunpack.c.l.b16 %v8361
    %v8440 = vunpack.c.h.b16 %v8361
    %v8441 = vunpack.c.l.b16 %v8362
    %v8442 = vunpack.c.h.b16 %v8362
    %v8443 = vunpack.c.l.b16 %v8363
    %v8444 = vunpack.c.h.b16 %v8363
    %v8445 = vunpack.c.l.b16 %v8364
    %v8446 = vunpack.c.h.b16 %v8364
    %v8447 = vunpack.c.l.b16 %v8365
    %v8448 = vunpack.c.h.b16 %v8365
    %v8449 = vunpack.c.l.b16 %v8366
    %v8450 = vunpack.c.h.b16 %v8366
    %v8451 = vunpack.c.l.b16 %v8367
    %v8452 = vunpack.c.h.b16 %v8367
    %v8453 = vunpack.c.l.b16 %v8368
    %v8454 = vunpack.c.h.b16 %v8368
    %v8455 = vunpack.c.l.b16 %v8369
    %v8456 = vunpack.c.h.b16 %v8369
    %v8457 = vunpack.c.l.b16 %v8370
    %v8458 = vunpack.c.h.b16 %v8370
    %v8459 = vunpack.c.l.b16 %v8371
    %v8460 = vunpack.c.h.b16 %v8371
    %v8461 = vunpack.c.l.b16 %v8372
    %v8462 = vunpack.c.h.b16 %v8372
    %v8463 = vunpack.c.l.b16 %v8373
    %v8464 = vunpack.c.h.b16 %v8373
    %v8465 = vunpack.c.l.b16 %v8374
    %v8466 = vunpack.c.h.b16 %v8374
    %v8467 = vunpack.c.l.b16 %v8375
    %v8468 = vunpack.c.h.b16 %v8375
    %v8469 = vunpack.c.l.b16 %v8376
    %v8470 = vunpack.c.h.b16 %v8376
    %v8471 = vunpack.c.l.b16 %v8377
    %v8472 = vunpack.c.h.b16 %v8377
    %v8473 = vunpack.c.l.b16 %v8378
    %v8474 = vunpack.c.h.b16 %v8378
    %v8475 = vunpack.c.l.b16 %v8379
    %v8476 = vunpack.c.h.b16 %v8379
    %v8477 = vunpack.c.l.b16 %v8380
    %v8478 = vunpack.c.h.b16 %v8380
    %v8479 = vunpack.c.l.b16 %v8381
    %v8480 = vunpack.c.h.b16 %v8381
    %v8481 = vunpack.c.l.b16 %v8382
    %v8482 = vunpack.c.h.b16 %v8382
    %v8483 = vpack.c.b16 %v8423, %v8419
    %v8484 = vpack.c.b16 %v8424, %v8420
    %v8485 = vpack.c.b16 %v8425, %v8421
    %v8486 = vpack.c.b16 %v8426, %v8422
    %v8487 = vpack.c.b16 %v8431, %v8427
    %v8488 = vpack.c.b16 %v8432, %v8428
    %v8489 = vpack.c.b16 %v8433, %v8429
    %v8490 = vpack.c.b16 %v8434, %v8430
    %v8491 = vpack.c.b16 %v8439, %v8435
    %v8492 = vpack.c.b16 %v8440, %v8436
    %v8493 = vpack.c.b16 %v8441, %v8437
    %v8494 = vpack.c.b16 %v8442, %v8438
    %v8495 = vpack.c.b16 %v8447, %v8443
    %v8496 = vpack.c.b16 %v8448, %v8444
    %v8497 = vpack.c.b16 %v8449, %v8445
    %v8498 = vpack.c.b16 %v8450, %v8446
    %v8499 = vpack.c.b16 %v8455, %v8451
    %v8500 = vpack.c.b16 %v8456, %v8452
    %v8501 = vpack.c.b16 %v8457, %v8453
    %v8502 = vpack.c.b16 %v8458, %v8454
    %v8503 = vpack.c.b16 %v8463, %v8459
    %v8504 = vpack.c.b16 %v8464, %v8460
    %v8505 = vpack.c.b16 %v8465, %v8461
    %v8506 = vpack.c.b16 %v8466, %v8462
    %v8507 = vpack.c.b16 %v8471, %v8467
    %v8508 = vpack.c.b16 %v8472, %v8468
    %v8509 = vpack.c.b16 %v8473, %v8469
    %v8510 = vpack.c.b16 %v8474, %v8470
    %v8511 = vpack.c.b16 %v8479, %v8475
    %v8512 = vpack.c.b16 %v8480, %v8476
    %v8513 = vpack.c.b16 %v8481, %v8477
    %v8514 = vpack.c.b16 %v8482, %v8478
    %8547 = vmatprep.subr.bf16.mxu0 %v8484
    %8548 = vmatpush1.bf16.msra.mxu0 %v8483
    %8549 = vmatprep.subr.bf16.mxu0 %v8488
    %8550 = vmatpush1.bf16.msra.mxu0 %v8487
    %8551 = vmatprep.subr.bf16.mxu0 %v8492
    %8552 = vmatpush1.bf16.msra.mxu0 %v8491
    %8553 = vmatprep.subr.bf16.mxu0 %v8496
    %8554 = vmatpush1.bf16.msra.mxu0 %v8495
    %8555 = vmatprep.subr.bf16.mxu0 %v8500
    %8556 = vmatpush1.bf16.msra.mxu0 %v8499
    %8557 = vmatprep.subr.bf16.mxu0 %v8504
    %8558 = vmatpush1.bf16.msra.mxu0 %v8503
    %8559 = vmatprep.subr.bf16.mxu0 %v8508
    %8560 = vmatpush1.bf16.msra.mxu0 %v8507
    %8561 = vmatprep.subr.bf16.mxu0 %v8512
    %8562 = vmatpush1.bf16.msra.mxu0 %v8511
    %8563 = vmatprep.subr.bf16.mxu0 0
    %8564 = vmatpush1.bf16.msra.mxu0 0
    %8565 = vmatprep.subr.bf16.mxu0 0
    %8566 = vmatpush1.bf16.msra.mxu0 0
    %8567 = vmatprep.subr.bf16.mxu0 0
    %8568 = vmatpush1.bf16.msra.mxu0 0
    %8569 = vmatprep.subr.bf16.mxu0 0
    %8570 = vmatpush1.bf16.msra.mxu0 0
    %8571 = vmatprep.subr.bf16.mxu0 0
    %8572 = vmatpush1.bf16.msra.mxu0 0
    %8573 = vmatprep.subr.bf16.mxu0 0
    %8574 = vmatpush1.bf16.msra.mxu0 0
    %8575 = vmatprep.subr.bf16.mxu0 0
    %8576 = vmatpush1.bf16.msra.mxu0 0
    %8577 = vmatprep.subr.bf16.mxu0 0
    %8578 = vmatpush1.bf16.msra.mxu0 0
    %8579 = vmatprep.mubr.bf16.mxu0 0
    %8580 = vmatmul.mubr.bf16.gmra.mrb[0].mxu0 %v8386
    %v8581 = vpop.f32.mrb[0].mxu0
    %v8582 = vadd.f32 0.0, %v8581
    %v8583 = vpop.f32.mrb[0].mxu0
    %v8584 = vadd.f32 0.0, %v8583
    %v8585 = vpop.f32.mrb[0].mxu0
    %v8586 = vpop.f32.mrb[0].mxu0
    %8587 = vdwg.mxu0
    %8588 = vmatprep.subr.bf16.mxu0 %v8486
    %8589 = vmatpush1.bf16.msra.mxu0 %v8485
    %8590 = vmatprep.subr.bf16.mxu0 %v8490
    %8591 = vmatpush1.bf16.msra.mxu0 %v8489
    %8592 = vmatprep.subr.bf16.mxu0 %v8494
    %8593 = vmatpush1.bf16.msra.mxu0 %v8493
    %8594 = vmatprep.subr.bf16.mxu0 %v8498
    %8595 = vmatpush1.bf16.msra.mxu0 %v8497
    %8596 = vmatprep.subr.bf16.mxu0 %v8502
    %8597 = vmatpush1.bf16.msra.mxu0 %v8501
    %8598 = vmatprep.subr.bf16.mxu0 %v8506
    %8599 = vmatpush1.bf16.msra.mxu0 %v8505
    %8600 = vmatprep.subr.bf16.mxu0 %v8510
    %8601 = vmatpush1.bf16.msra.mxu0 %v8509
    %8602 = vmatprep.subr.bf16.mxu0 %v8514
    %8603 = vmatpush1.bf16.msra.mxu0 %v8513
    %8604 = vmatprep.subr.bf16.mxu0 0
    %8605 = vmatpush1.bf16.msra.mxu0 0
    %8606 = vmatprep.subr.bf16.mxu0 0
    %8607 = vmatpush1.bf16.msra.mxu0 0
    %8608 = vmatprep.subr.bf16.mxu0 0
    %8609 = vmatpush1.bf16.msra.mxu0 0
    %8610 = vmatprep.subr.bf16.mxu0 0
    %8611 = vmatpush1.bf16.msra.mxu0 0
    %8612 = vmatprep.subr.bf16.mxu0 0
    %8613 = vmatpush1.bf16.msra.mxu0 0
    %8614 = vmatprep.subr.bf16.mxu0 0
    %8615 = vmatpush1.bf16.msra.mxu0 0
    %8616 = vmatprep.subr.bf16.mxu0 0
    %8617 = vmatpush1.bf16.msra.mxu0 0
    %8618 = vmatprep.subr.bf16.mxu0 0
    %8619 = vmatpush1.bf16.msra.mxu0 0
    %8620 = vmatprep.mubr.bf16.mxu0 0
    %8621 = vmatmul.mubr.bf16.gmra.mrb[0].mxu0 %v8386
    %v8622 = vpop.f32.mrb[0].mxu0
    %v8623 = vadd.f32 0.0, %v8622
    %v8624 = vpop.f32.mrb[0].mxu0
    %v8625 = vadd.f32 0.0, %v8624
    %v8626 = vpop.f32.mrb[0].mxu0
    %v8627 = vpop.f32.mrb[0].mxu0
    %8628 = vdwg.mxu0
    %v8633 = vcombine.low %v8582, %v8584
    %v8634 = vcombine.low %v8623, %v8625
    %v8636 = vunpack.c.l.s4 1983009808
    %v8637 = vunpack.c.0.s8 %v8636
    %v8638 = vlaneseq
    %v8639 = vshrl.u32 %v8638, 7
    %v8640 = vsub.s32 %v8637, %v8639
    %v8641 = vrot.slane %v8633, %v8640
    %v8643 = vunpack.c.l.s4 1983009808
    %v8644 = vunpack.c.0.s8 %v8643
    %v8645 = vlaneseq
    %v8646 = vshrl.u32 %v8645, 7
    %v8647 = vsub.s32 %v8644, %v8646
    %v8648 = vrot.slane %v8634, %v8647
    %v8649 = vcombine.low %v8641, %v8648
    %v8651 = vadd.f32 %v8385, %v8649
    %v8652 = vxor.u32 %v8651, 2147483648
    %v8653 = vmul.f32 %v8652, 1.442695
    %v8654 = vpow.pop %v8653
    %v8655 = vadd.f32 %v8654, 1.0
    %v8656 = vrcp.pop %v8655
    %v8657 = vmul.f32 1.0, %v8656
    %v8659 = vrot.slane %v8651, 6
    %v8661 = vtanh.pop %v8659
    %v8663 = vrot.slane %v8657, 2
    %v8665 = vmul.f32 %v8663, %v8384
    %v8666 = vmul.f32 %v8657, %v8661
    %v8667 = vadd.f32 %v8665, %v8666
    %v8668 = vtanh.pop %v8667
    %v8669 = vrot.slane %v8657, 4
    %v8671 = vmul.f32 %v8669, %v8668
    %8672 = vst [vmem:[#allocation3] sm:$0x3] %v8671
    %s8673 = scalar_lea.vmem [#allocation2], 8
    %v8674 = vld [vmem:[%s8673] sm:$0xff]
    %v8675 = vpack.c.bf16 %v8671, %v8671
    %8676 = vmatprep.subr.bf16.mxu0 %v8484
    %8677 = vmatpush1.bf16.msra.mxu0 %v8483
    %8678 = vmatprep.subr.bf16.mxu0 %v8488
    %8679 = vmatpush1.bf16.msra.mxu0 %v8487
    %8680 = vmatprep.subr.bf16.mxu0 %v8492
    %8681 = vmatpush1.bf16.msra.mxu0 %v8491
    %8682 = vmatprep.subr.bf16.mxu0 %v8496
    %8683 = vmatpush1.bf16.msra.mxu0 %v8495
    %8684 = vmatprep.subr.bf16.mxu0 %v8500
    %8685 = vmatpush1.bf16.msra.mxu0 %v8499
    %8686 = vmatprep.subr.bf16.mxu0 %v8504
    %8687 = vmatpush1.bf16.msra.mxu0 %v8503
    %8688 = vmatprep.subr.bf16.mxu0 %v8508
    %8689 = vmatpush1.bf16.msra.mxu0 %v8507
    %8690 = vmatprep.subr.bf16.mxu0 %v8512
    %8691 = vmatpush1.bf16.msra.mxu0 %v8511
    %8692 = vmatprep.subr.bf16.mxu0 0
    %8693 = vmatpush1.bf16.msra.mxu0 0
    %8694 = vmatprep.subr.bf16.mxu0 0
    %8695 = vmatpush1.bf16.msra.mxu0 0
    %8696 = vmatprep.subr.bf16.mxu0 0
    %8697 = vmatpush1.bf16.msra.mxu0 0
    %8698 = vmatprep.subr.bf16.mxu0 0
    %8699 = vmatpush1.bf16.msra.mxu0 0
    %8700 = vmatprep.subr.bf16.mxu0 0
    %8701 = vmatpush1.bf16.msra.mxu0 0
    %8702 = vmatprep.subr.bf16.mxu0 0
    %8703 = vmatpush1.bf16.msra.mxu0 0
    %8704 = vmatprep.subr.bf16.mxu0 0
    %8705 = vmatpush1.bf16.msra.mxu0 0
    %8706 = vmatprep.subr.bf16.mxu0 0
    %8707 = vmatpush1.bf16.msra.mxu0 0
    %8708 = vmatprep.mubr.bf16.mxu0 0
    %8709 = vmatmul.mubr.bf16.gmra.mrb[0].mxu0 %v8675
    %v8710 = vpop.f32.mrb[0].mxu0
    %v8711 = vadd.f32 0.0, %v8710
    %v8712 = vpop.f32.mrb[0].mxu0
    %v8713 = vadd.f32 0.0, %v8712
    %v8714 = vpop.f32.mrb[0].mxu0
    %v8715 = vpop.f32.mrb[0].mxu0
    %8716 = vdwg.mxu0
    %8717 = vmatprep.subr.bf16.mxu0 %v8486
    %8718 = vmatpush1.bf16.msra.mxu0 %v8485
    %8719 = vmatprep.subr.bf16.mxu0 %v8490
    %8720 = vmatpush1.bf16.msra.mxu0 %v8489
    %8721 = vmatprep.subr.bf16.mxu0 %v8494
    %8722 = vmatpush1.bf16.msra.mxu0 %v8493
    %8723 = vmatprep.subr.bf16.mxu0 %v8498
    %8724 = vmatpush1.bf16.msra.mxu0 %v8497
    %8725 = vmatprep.subr.bf16.mxu0 %v8502
    %8726 = vmatpush1.bf16.msra.mxu0 %v8501
    %8727 = vmatprep.subr.bf16.mxu0 %v8506
    %8728 = vmatpush1.bf16.msra.mxu0 %v8505
    %8729 = vmatprep.subr.bf16.mxu0 %v8510
    %8730 = vmatpush1.bf16.msra.mxu0 %v8509
    %8731 = vmatprep.subr.bf16.mxu0 %v8514
    %8732 = vmatpush1.bf16.msra.mxu0 %v8513
    %8733 = vmatprep.subr.bf16.mxu0 0
    %8734 = vmatpush1.bf16.msra.mxu0 0
    %8735 = vmatprep.subr.bf16.mxu0 0
    %8736 = vmatpush1.bf16.msra.mxu0 0
    %8737 = vmatprep.subr.bf16.mxu0 0
    %8738 = vmatpush1.bf16.msra.mxu0 0
    %8739 = vmatprep.subr.bf16.mxu0 0
    %8740 = vmatpush1.bf16.msra.mxu0 0
    %8741 = vmatprep.subr.bf16.mxu0 0
    %8742 = vmatpush1.bf16.msra.mxu0 0
    %8743 = vmatprep.subr.bf16.mxu0 0
    %8744 = vmatpush1.bf16.msra.mxu0 0
    %8745 = vmatprep.subr.bf16.mxu0 0
    %8746 = vmatpush1.bf16.msra.mxu0 0
    %8747 = vmatprep.subr.bf16.mxu0 0
    %8748 = vmatpush1.bf16.msra.mxu0 0
    %8749 = vmatprep.mubr.bf16.mxu0 0
    %8750 = vmatmul.mubr.bf16.gmra.mrb[0].mxu0 %v8675
    %v8751 = vpop.f32.mrb[0].mxu0
    %v8752 = vadd.f32 0.0, %v8751
    %v8753 = vpop.f32.mrb[0].mxu0
    %v8754 = vadd.f32 0.0, %v8753
    %v8755 = vpop.f32.mrb[0].mxu0
    %v8756 = vpop.f32.mrb[0].mxu0
    %8757 = vdwg.mxu0
    %v8762 = vcombine.low %v8711, %v8713
    %v8763 = vcombine.low %v8752, %v8754
    %v8765 = vunpack.c.l.s4 1983009808
    %v8766 = vunpack.c.0.s8 %v8765
    %v8767 = vlaneseq
    %v8768 = vshrl.u32 %v8767, 7
    %v8769 = vsub.s32 %v8766, %v8768
    %v8770 = vrot.slane %v8762, %v8769
    %v8772 = vunpack.c.l.s4 1983009808
    %v8773 = vunpack.c.0.s8 %v8772
    %v8774 = vlaneseq
    %v8775 = vshrl.u32 %v8774, 7
    %v8776 = vsub.s32 %v8773, %v8775
    %v8777 = vrot.slane %v8763, %v8776
    %v8778 = vcombine.low %v8770, %v8777
    %v8780 = vadd.f32 %v8674, %v8778
    %v8781 = vxor.u32 %v8780, 2147483648
    %v8782 = vmul.f32 %v8781, 1.442695
    %v8783 = vpow.pop %v8782
    %v8784 = vadd.f32 %v8783, 1.0
    %v8785 = vrcp.pop %v8784
    %v8786 = vmul.f32 1.0, %v8785
    %v8788 = vrot.slane %v8780, 6
    %v8790 = vtanh.pop %v8788
    %v8792 = vrot.slane %v8786, 2
    %v8794 = vmul.f32 %v8792, %v8667
    %v8795 = vmul.f32 %v8786, %v8790
    %v8796 = vadd.f32 %v8794, %v8795
    %v8797 = vtanh.pop %v8796
    %v8798 = vrot.slane %v8786, 4
    %v8800 = vmul.f32 %v8798, %v8797
    %s8801 = scalar_lea.vmem [#allocation3], 2
    %8802 = vst [vmem:[%s8801] sm:$0x3] %v8800
    %s8803 = scalar_lea.vmem [#allocation2], 16
    %v8804 = vld [vmem:[%s8803] sm:$0xff]
    %v8805 = vpack.c.bf16 %v8800, %v8800
    %8806 = vmatprep.subr.bf16.mxu0 %v8484
    %8807 = vmatpush1.bf16.msra.mxu0 %v8483
    %8808 = vmatprep.subr.bf16.mxu0 %v8488
    %8809 = vmatpush1.bf16.msra.mxu0 %v8487
    %8810 = vmatprep.subr.bf16.mxu0 %v8492
    %8811 = vmatpush1.bf16.msra.mxu0 %v8491
    %8812 = vmatprep.subr.bf16.mxu0 %v8496
    %8813 = vmatpush1.bf16.msra.mxu0 %v8495
    %8814 = vmatprep.subr.bf16.mxu0 %v8500
    %8815 = vmatpush1.bf16.msra.mxu0 %v8499
    %8816 = vmatprep.subr.bf16.mxu0 %v8504
    %8817 = vmatpush1.bf16.msra.mxu0 %v8503
    %8818 = vmatprep.subr.bf16.mxu0 %v8508
    %8819 = vmatpush1.bf16.msra.mxu0 %v8507
    %8820 = vmatprep.subr.bf16.mxu0 %v8512
    %8821 = vmatpush1.bf16.msra.mxu0 %v8511
    %8822 = vmatprep.subr.bf16.mxu0 0
    %8823 = vmatpush1.bf16.msra.mxu0 0
    %8824 = vmatprep.subr.bf16.mxu0 0
    %8825 = vmatpush1.bf16.msra.mxu0 0
    %8826 = vmatprep.subr.bf16.mxu0 0
    %8827 = vmatpush1.bf16.msra.mxu0 0
    %8828 = vmatprep.subr.bf16.mxu0 0
    %8829 = vmatpush1.bf16.msra.mxu0 0
    %8830 = vmatprep.subr.bf16.mxu0 0
    %8831 = vmatpush1.bf16.msra.mxu0 0
    %8832 = vmatprep.subr.bf16.mxu0 0
    %8833 = vmatpush1.bf16.msra.mxu0 0
    %8834 = vmatprep.subr.bf16.mxu0 0
    %8835 = vmatpush1.bf16.msra.mxu0 0
    %8836 = vmatprep.subr.bf16.mxu0 0
    %8837 = vmatpush1.bf16.msra.mxu0 0
    %8838 = vmatprep.mubr.bf16.mxu0 0
    %8839 = vmatmul.mubr.bf16.gmra.mrb[0].mxu0 %v8805
    %v8840 = vpop.f32.mrb[0].mxu0
    %v8841 = vadd.f32 0.0, %v8840
    %v8842 = vpop.f32.mrb[0].mxu0
    %v8843 = vadd.f32 0.0, %v8842
    %v8844 = vpop.f32.mrb[0].mxu0
    %v8845 = vpop.f32.mrb[0].mxu0
    %8846 = vdwg.mxu0
    %8847 = vmatprep.subr.bf16.mxu0 %v8486
    %8848 = vmatpush1.bf16.msra.mxu0 %v8485
    %8849 = vmatprep.subr.bf16.mxu0 %v8490
    %8850 = vmatpush1.bf16.msra.mxu0 %v8489
    %8851 = vmatprep.subr.bf16.mxu0 %v8494
    %8852 = vmatpush1.bf16.msra.mxu0 %v8493
    %8853 = vmatprep.subr.bf16.mxu0 %v8498
    %8854 = vmatpush1.bf16.msra.mxu0 %v8497
    %8855 = vmatprep.subr.bf16.mxu0 %v8502
    %8856 = vmatpush1.bf16.msra.mxu0 %v8501
    %8857 = vmatprep.subr.bf16.mxu0 %v8506
    %8858 = vmatpush1.bf16.msra.mxu0 %v8505
    %8859 = vmatprep.subr.bf16.mxu0 %v8510
    %8860 = vmatpush1.bf16.msra.mxu0 %v8509
    %8861 = vmatprep.subr.bf16.mxu0 %v8514
    %8862 = vmatpush1.bf16.msra.mxu0 %v8513
    %8863 = vmatprep.subr.bf16.mxu0 0
    %8864 = vmatpush1.bf16.msra.mxu0 0
    %8865 = vmatprep.subr.bf16.mxu0 0
    %8866 = vmatpush1.bf16.msra.mxu0 0
    %8867 = vmatprep.subr.bf16.mxu0 0
    %8868 = vmatpush1.bf16.msra.mxu0 0
    %8869 = vmatprep.subr.bf16.mxu0 0
    %8870 = vmatpush1.bf16.msra.mxu0 0
    %8871 = vmatprep.subr.bf16.mxu0 0
    %8872 = vmatpush1.bf16.msra.mxu0 0
    %8873 = vmatprep.subr.bf16.mxu0 0
    %8874 = vmatpush1.bf16.msra.mxu0 0
    %8875 = vmatprep.subr.bf16.mxu0 0
    %8876 = vmatpush1.bf16.msra.mxu0 0
    %8877 = vmatprep.subr.bf16.mxu0 0
    %8878 = vmatpush1.bf16.msra.mxu0 0
    %8879 = vmatprep.mubr.bf16.mxu0 0
    %8880 = vmatmul.mubr.bf16.gmra.mrb[0].mxu0 %v8805
    %v8881 = vpop.f32.mrb[0].mxu0
    %v8882 = vadd.f32 0.0, %v8881
    %v8883 = vpop.f32.mrb[0].mxu0
    %v8884 = vadd.f32 0.0, %v8883
    %v8885 = vpop.f32.mrb[0].mxu0
    %v8886 = vpop.f32.mrb[0].mxu0
    %8887 = vdwg.mxu0
    %v8892 = vcombine.low %v8841, %v8843
    %v8893 = vcombine.low %v8882, %v8884
    %v8895 = vunpack.c.l.s4 1983009808
    %v8896 = vunpack.c.0.s8 %v8895
    %v8897 = vlaneseq
    %v8898 = vshrl.u32 %v8897, 7
    %v8899 = vsub.s32 %v8896, %v8898
    %v8900 = vrot.slane %v8892, %v8899
    %v8902 = vunpack.c.l.s4 1983009808
    %v8903 = vunpack.c.0.s8 %v8902
    %v8904 = vlaneseq
    %v8905 = vshrl.u32 %v8904, 7
    %v8906 = vsub.s32 %v8903, %v8905
    %v8907 = vrot.slane %v8893, %v8906
    %v8908 = vcombine.low %v8900, %v8907
    %v8910 = vadd.f32 %v8804, %v8908
    %v8911 = vxor.u32 %v8910, 2147483648
    %v8912 = vmul.f32 %v8911, 1.442695
    %v8913 = vpow.pop %v8912
    %v8914 = vadd.f32 %v8913, 1.0
    %v8915 = vrcp.pop %v8914
    %v8916 = vmul.f32 1.0, %v8915
    %v8918 = vrot.slane %v8910, 6
    %v8920 = vtanh.pop %v8918
    %v8922 = vrot.slane %v8916, 2
    %v8924 = vmul.f32 %v8922, %v8796
    %v8925 = vmul.f32 %v8916, %v8920
    %v8926 = vadd.f32 %v8924, %v8925
    %v8927 = vtanh.pop %v8926
    %v8928 = vrot.slane %v8916, 4
    %v8930 = vmul.f32 %v8928, %v8927
    %s8931 = scalar_lea.vmem [#allocation3], 4
    %8932 = vst [vmem:[%s8931] sm:$0x3] %v8930
    %s8933 = scalar_lea.vmem [#allocation2], 24
    %v8934 = vld [vmem:[%s8933] sm:$0xff]
    %v8935 = vpack.c.bf16 %v8930, %v8930
    %8936 = vmatprep.subr.bf16.mxu0 %v8484
    %8937 = vmatpush1.bf16.msra.mxu0 %v8483
    %8938 = vmatprep.subr.bf16.mxu0 %v8488
    %8939 = vmatpush1.bf16.msra.mxu0 %v8487
    %8940 = vmatprep.subr.bf16.mxu0 %v8492
    %8941 = vmatpush1.bf16.msra.mxu0 %v8491
    %8942 = vmatprep.subr.bf16.mxu0 %v8496
    %8943 = vmatpush1.bf16.msra.mxu0 %v8495
    %8944 = vmatprep.subr.bf16.mxu0 %v8500
    %8945 = vmatpush1.bf16.msra.mxu0 %v8499
    %8946 = vmatprep.subr.bf16.mxu0 %v8504
    %8947 = vmatpush1.bf16.msra.mxu0 %v8503
    %8948 = vmatprep.subr.bf16.mxu0 %v8508
    %8949 = vmatpush1.bf16.msra.mxu0 %v8507
    %8950 = vmatprep.subr.bf16.mxu0 %v8512
    %8951 = vmatpush1.bf16.msra.mxu0 %v8511
    %8952 = vmatprep.subr.bf16.mxu0 0
    %8953 = vmatpush1.bf16.msra.mxu0 0
    %8954 = vmatprep.subr.bf16.mxu0 0
    %8955 = vmatpush1.bf16.msra.mxu0 0
    %8956 = vmatprep.subr.bf16.mxu0 0
    %8957 = vmatpush1.bf16.msra.mxu0 0
    %8958 = vmatprep.subr.bf16.mxu0 0
    %8959 = vmatpush1.bf16.msra.mxu0 0
    %8960 = vmatprep.subr.bf16.mxu0 0
    %8961 = vmatpush1.bf16.msra.mxu0 0
    %8962 = vmatprep.subr.bf16.mxu0 0
    %8963 = vmatpush1.bf16.msra.mxu0 0
    %8964 = vmatprep.subr.bf16.mxu0 0
    %8965 = vmatpush1.bf16.msra.mxu0 0
    %8966 = vmatprep.subr.bf16.mxu0 0
    %8967 = vmatpush1.bf16.msra.mxu0 0
    %8968 = vmatprep.mubr.bf16.mxu0 0
    %8969 = vmatmul.mubr.bf16.gmra.mrb[0].mxu0 %v8935
    %v8970 = vpop.f32.mrb[0].mxu0
    %v8971 = vadd.f32 0.0, %v8970
    %v8972 = vpop.f32.mrb[0].mxu0
    %v8973 = vadd.f32 0.0, %v8972
    %v8974 = vpop.f32.mrb[0].mxu0
    %v8975 = vpop.f32.mrb[0].mxu0
    %8976 = vdwg.mxu0
    %8977 = vmatprep.subr.bf16.mxu0 %v8486
    %8978 = vmatpush1.bf16.msra.mxu0 %v8485
    %8979 = vmatprep.subr.bf16.mxu0 %v8490
    %8980 = vmatpush1.bf16.msra.mxu0 %v8489
    %8981 = vmatprep.subr.bf16.mxu0 %v8494
    %8982 = vmatpush1.bf16.msra.mxu0 %v8493
    %8983 = vmatprep.subr.bf16.mxu0 %v8498
    %8984 = vmatpush1.bf16.msra.mxu0 %v8497
    %8985 = vmatprep.subr.bf16.mxu0 %v8502
    %8986 = vmatpush1.bf16.msra.mxu0 %v8501
    %8987 = vmatprep.subr.bf16.mxu0 %v8506
    %8988 = vmatpush1.bf16.msra.mxu0 %v8505
    %8989 = vmatprep.subr.bf16.mxu0 %v8510
    %8990 = vmatpush1.bf16.msra.mxu0 %v8509
    %8991 = vmatprep.subr.bf16.mxu0 %v8514
    %8992 = vmatpush1.bf16.msra.mxu0 %v8513
    %8993 = vmatprep.subr.bf16.mxu0 0
    %8994 = vmatpush1.bf16.msra.mxu0 0
    %8995 = vmatprep.subr.bf16.mxu0 0
    %8996 = vmatpush1.bf16.msra.mxu0 0
    %8997 = vmatprep.subr.bf16.mxu0 0
    %8998 = vmatpush1.bf16.msra.mxu0 0
    %8999 = vmatprep.subr.bf16.mxu0 0
    %9000 = vmatpush1.bf16.msra.mxu0 0
    %9001 = vmatprep.subr.bf16.mxu0 0
    %9002 = vmatpush1.bf16.msra.mxu0 0
    %9003 = vmatprep.subr.bf16.mxu0 0
    %9004 = vmatpush1.bf16.msra.mxu0 0
    %9005 = vmatprep.subr.bf16.mxu0 0
    %9006 = vmatpush1.bf16.msra.mxu0 0
    %9007 = vmatprep.subr.bf16.mxu0 0
    %9008 = vmatpush1.bf16.msra.mxu0 0
    %9009 = vmatprep.mubr.bf16.mxu0 0
    %9010 = vmatmul.mubr.bf16.gmra.mrb[0].mxu0 %v8935
    %v9011 = vpop.f32.mrb[0].mxu0
    %v9012 = vadd.f32 0.0, %v9011
    %v9013 = vpop.f32.mrb[0].mxu0
    %v9014 = vadd.f32 0.0, %v9013
    %v9015 = vpop.f32.mrb[0].mxu0
    %v9016 = vpop.f32.mrb[0].mxu0
    %9017 = vdwg.mxu0
    %v9022 = vcombine.low %v8971, %v8973
    %v9023 = vcombine.low %v9012, %v9014
    %v9025 = vunpack.c.l.s4 1983009808
    %v9026 = vunpack.c.0.s8 %v9025
    %v9027 = vlaneseq
    %v9028 = vshrl.u32 %v9027, 7
    %v9029 = vsub.s32 %v9026, %v9028
    %v9030 = vrot.slane %v9022, %v9029
    %v9032 = vunpack.c.l.s4 1983009808
    %v9033 = vunpack.c.0.s8 %v9032
    %v9034 = vlaneseq
    %v9035 = vshrl.u32 %v9034, 7
    %v9036 = vsub.s32 %v9033, %v9035
    %v9037 = vrot.slane %v9023, %v9036
    %v9038 = vcombine.low %v9030, %v9037
    %v9040 = vadd.f32 %v8934, %v9038
    %v9041 = vxor.u32 %v9040, 2147483648
    %v9042 = vmul.f32 %v9041, 1.442695
    %v9043 = vpow.pop %v9042
    %v9044 = vadd.f32 %v9043, 1.0
    %v9045 = vrcp.pop %v9044
    %v9046 = vmul.f32 1.0, %v9045
    %v9048 = vrot.slane %v9040, 6
    %v9050 = vtanh.pop %v9048
    %v9052 = vrot.slane %v9046, 2
    %v9054 = vmul.f32 %v9052, %v8926
    %v9055 = vmul.f32 %v9046, %v9050
    %v9056 = vadd.f32 %v9054, %v9055
    %v9057 = vtanh.pop %v9056
    %v9058 = vrot.slane %v9046, 4
    %v9060 = vmul.f32 %v9058, %v9057
    %s9061 = scalar_lea.vmem [#allocation3], 6
    %9062 = vst [vmem:[%s9061] sm:$0x3] %v9060
    %9063 = vst [vmem:[#allocation6] sm:$0x3] %v9060
    %9064 = vst [vmem:[#allocation8] sm:$0x3] %v9056
    %v9065 = vld [vmem:[#allocation3] sm:$0x3]
    %v9066 = vld [vmem:[#allocation3 + $0x2] sm:$0x3]
    %v9067 = vld [vmem:[#allocation3 + $0x4] sm:$0x3]
    %v9068 = vld [vmem:[#allocation3 + $0x6] sm:$0x3]
    %v9073 = vcombine.low %v9065, %v9066
    %v9074 = vcombine.low %v9067, %v9068
    %v9076 = vunpack.c.l.s4 1983009808
    %v9077 = vunpack.c.0.s8 %v9076
    %v9078 = vlaneseq
    %v9079 = vshrl.u32 %v9078, 7
    %v9080 = vsub.s32 %v9077, %v9079
    %v9081 = vrot.slane %v9073, %v9080
    %v9083 = vunpack.c.l.s4 1983009808
    %v9084 = vunpack.c.0.s8 %v9083
    %v9085 = vlaneseq
    %v9086 = vshrl.u32 %v9085, 7
    %v9087 = vsub.s32 %v9084, %v9086
    %v9088 = vrot.slane %v9074, %v9087
    %v9089 = vcombine.low %v9081, %v9088
    %v9091 = vpack.c.bf16 %v9089, %v9089
    %v9092 = vld [vmem:[%s8] sm:$0xf]
    %v9093 = vld [vmem:[%s8 + $0x4] sm:$0xf]
    %v9094 = vld [vmem:[%s8 + $0x8] sm:$0xf]
    %v9095 = vld [vmem:[%s8 + $0xc] sm:$0xf]
    %v9096 = vld [vmem:[%s8 + $0x10] sm:$0xf]
    %v9097 = vld [vmem:[%s8 + $0x14] sm:$0xf]
    %v9098 = vld [vmem:[%s8 + $0x18] sm:$0xf]
    %v9099 = vld [vmem:[%s8 + $0x1c] sm:$0xf]
    %v9100 = vld [vmem:[%s8 + $0x20] sm:$0xf]
    %v9101 = vld [vmem:[%s8 + $0x24] sm:$0xf]
    %v9102 = vld [vmem:[%s8 + $0x28] sm:$0xf]
    %v9103 = vld [vmem:[%s8 + $0x2c] sm:$0xf]
    %v9104 = vld [vmem:[%s8 + $0x30] sm:$0xf]
    %v9105 = vld [vmem:[%s8 + $0x34] sm:$0xf]
    %v9106 = vld [vmem:[%s8 + $0x38] sm:$0xf]
    %v9107 = vld [vmem:[%s8 + $0x3c] sm:$0xf]
    %v9108 = vld [vmem:[%s9] sm:$0x1]
    %v9110 = vlaneseq
    %v9111 = vshrl.u32 %v9110, 7
    %v9112 = vsub.s32 0, %v9111
    %v9113 = vrot.slane %v9108, %v9112
    %v9131 = vunpack.c.l.b16 %v9092
    %v9132 = vunpack.c.l.b16 %v9093
    %v9133 = vunpack.c.l.b16 %v9094
    %v9134 = vunpack.c.l.b16 %v9095
    %v9135 = vunpack.c.l.b16 %v9096
    %v9136 = vunpack.c.l.b16 %v9097
    %v9137 = vunpack.c.l.b16 %v9098
    %v9138 = vunpack.c.l.b16 %v9099
    %v9139 = vunpack.c.l.b16 %v9100
    %v9140 = vunpack.c.l.b16 %v9101
    %v9141 = vunpack.c.l.b16 %v9102
    %v9142 = vunpack.c.l.b16 %v9103
    %v9143 = vunpack.c.l.b16 %v9104
    %v9144 = vunpack.c.l.b16 %v9105
    %v9145 = vunpack.c.l.b16 %v9106
    %v9146 = vunpack.c.l.b16 %v9107
    %v9147 = vpack.c.b16 %v9132, %v9131
    %v9148 = vpack.c.b16 %v9134, %v9133
    %v9149 = vpack.c.b16 %v9136, %v9135
    %v9150 = vpack.c.b16 %v9138, %v9137
    %v9151 = vpack.c.b16 %v9140, %v9139
    %v9152 = vpack.c.b16 %v9142, %v9141
    %v9153 = vpack.c.b16 %v9144, %v9143
    %v9154 = vpack.c.b16 %v9146, %v9145
    %9163 = vmatprep.subr.bf16.mxu0 0
    %9164 = vmatpush1.bf16.msra.mxu0 %v9147
    %9165 = vmatprep.subr.bf16.mxu0 0
    %9166 = vmatpush1.bf16.msra.mxu0 %v9148
    %9167 = vmatprep.subr.bf16.mxu0 0
    %9168 = vmatpush1.bf16.msra.mxu0 %v9149
    %9169 = vmatprep.subr.bf16.mxu0 0
    %9170 = vmatpush1.bf16.msra.mxu0 %v9150
    %9171 = vmatprep.subr.bf16.mxu0 0
    %9172 = vmatpush1.bf16.msra.mxu0 %v9151
    %9173 = vmatprep.subr.bf16.mxu0 0
    %9174 = vmatpush1.bf16.msra.mxu0 %v9152
    %9175 = vmatprep.subr.bf16.mxu0 0
    %9176 = vmatpush1.bf16.msra.mxu0 %v9153
    %9177 = vmatprep.subr.bf16.mxu0 0
    %9178 = vmatpush1.bf16.msra.mxu0 %v9154
    %9179 = vmatprep.subr.bf16.mxu0 0
    %9180 = vmatpush1.bf16.msra.mxu0 0
    %9181 = vmatprep.subr.bf16.mxu0 0
    %9182 = vmatpush1.bf16.msra.mxu0 0
    %9183 = vmatprep.subr.bf16.mxu0 0
    %9184 = vmatpush1.bf16.msra.mxu0 0
    %9185 = vmatprep.subr.bf16.mxu0 0
    %9186 = vmatpush1.bf16.msra.mxu0 0
    %9187 = vmatprep.subr.bf16.mxu0 0
    %9188 = vmatpush1.bf16.msra.mxu0 0
    %9189 = vmatprep.subr.bf16.mxu0 0
    %9190 = vmatpush1.bf16.msra.mxu0 0
    %9191 = vmatprep.subr.bf16.mxu0 0
    %9192 = vmatpush1.bf16.msra.mxu0 0
    %9193 = vmatprep.subr.bf16.mxu0 0
    %9194 = vmatpush1.bf16.msra.mxu0 0
    %9195 = vmatprep.mubr.bf16.mxu0 0
    %9196 = vmatmul.mubr.bf16.gmra.mrb[0].mxu0 %v9091
    %v9197 = vpop.f32.mrb[0].mxu0
    %v9198 = vadd.f32 %v9113, %v9197
    %v9199 = vpop.f32.mrb[0].mxu0
    %v9200 = vpop.f32.mrb[0].mxu0
    %v9201 = vpop.f32.mrb[0].mxu0
    %9202 = vdwg.mxu0
    %v9203 = vmax.f32 %v9198, 0.0
    %v9204 = vpack.c.bf16 %v9203, %v9203
    %v9205 = vld [vmem:[%s10] sm:$0xf]
    %v9206 = vld [vmem:[%s10 + $0x4] sm:$0xf]
    %v9207 = vld [vmem:[%s10 + $0x8] sm:$0xf]
    %v9208 = vld [vmem:[%s10 + $0xc] sm:$0xf]
    %v9209 = vld [vmem:[%s10 + $0x10] sm:$0xf]
    %v9210 = vld [vmem:[%s10 + $0x14] sm:$0xf]
    %v9211 = vld [vmem:[%s10 + $0x18] sm:$0xf]
    %v9212 = vld [vmem:[%s10 + $0x1c] sm:$0xf]
    %v9213 = vld [vmem:[%s11] sm:$0x1]
    %v9215 = vlaneseq
    %v9216 = vshrl.u32 %v9215, 7
    %v9217 = vsub.s32 0, %v9216
    %v9218 = vrot.slane %v9213, %v9217
    %v9228 = vunpack.c.l.b16 %v9205
    %v9229 = vunpack.c.l.b16 %v9206
    %v9230 = vunpack.c.l.b16 %v9207
    %v9231 = vunpack.c.l.b16 %v9208
    %v9232 = vunpack.c.l.b16 %v9209
    %v9233 = vunpack.c.l.b16 %v9210
    %v9234 = vunpack.c.l.b16 %v9211
    %v9235 = vunpack.c.l.b16 %v9212
    %v9236 = vpack.c.b16 %v9229, %v9228
    %v9237 = vpack.c.b16 %v9231, %v9230
    %v9238 = vpack.c.b16 %v9233, %v9232
    %v9239 = vpack.c.b16 %v9235, %v9234
    %vm9244 = vcmask 523264
    %v9246 = vsel %vm9244, %v9204, 0
    %9248 = vmatprep.subr.bf16.mxu0 0
    %9249 = vmatpush1.bf16.msra.mxu0 %v9236
    %9250 = vmatprep.subr.bf16.mxu0 0
    %9251 = vmatpush1.bf16.msra.mxu0 %v9237
    %9252 = vmatprep.subr.bf16.mxu0 0
    %9253 = vmatpush1.bf16.msra.mxu0 %v9238
    %9254 = vmatprep.subr.bf16.mxu0 0
    %9255 = vmatpush1.bf16.msra.mxu0 %v9239
    %9256 = vmatprep.subr.bf16.mxu0 0
    %9257 = vmatpush1.bf16.msra.mxu0 0
    %9258 = vmatprep.subr.bf16.mxu0 0
    %9259 = vmatpush1.bf16.msra.mxu0 0
    %9260 = vmatprep.subr.bf16.mxu0 0
    %9261 = vmatpush1.bf16.msra.mxu0 0
    %9262 = vmatprep.subr.bf16.mxu0 0
    %9263 = vmatpush1.bf16.msra.mxu0 0
    %9264 = vmatprep.subr.bf16.mxu0 0
    %9265 = vmatpush1.bf16.msra.mxu0 0
    %9266 = vmatprep.subr.bf16.mxu0 0
    %9267 = vmatpush1.bf16.msra.mxu0 0
    %9268 = vmatprep.subr.bf16.mxu0 0
    %9269 = vmatpush1.bf16.msra.mxu0 0
    %9270 = vmatprep.subr.bf16.mxu0 0
    %9271 = vmatpush1.bf16.msra.mxu0 0
    %9272 = vmatprep.subr.bf16.mxu0 0
    %9273 = vmatpush1.bf16.msra.mxu0 0
    %9274 = vmatprep.subr.bf16.mxu0 0
    %9275 = vmatpush1.bf16.msra.mxu0 0
    %9276 = vmatprep.subr.bf16.mxu0 0
    %9277 = vmatpush1.bf16.msra.mxu0 0
    %9278 = vmatprep.subr.bf16.mxu0 0
    %9279 = vmatpush1.bf16.msra.mxu0 0
    %9280 = vmatprep.mubr.bf16.mxu0 0
    %9281 = vmatmul.mubr.bf16.gmra.mrb[0].mxu0 %v9246
    %v9282 = vpop.f32.mrb[0].mxu0
    %v9283 = vadd.f32 %v9218, %v9282
    %v9284 = vpop.f32.mrb[0].mxu0
    %v9285 = vpop.f32.mrb[0].mxu0
    %v9286 = vpop.f32.mrb[0].mxu0
    %9287 = vdwg.mxu0
    %v9289 = vcombine.high %v9283, %v9283
    %v9291 = vunpack.c.l.s4 1983009808
    %v9292 = vunpack.c.0.s8 %v9291
    %v9293 = vlaneseq
    %v9294 = vshrl.u32 %v9293, 7
    %v9295 = vsub.s32 %v9292, %v9294
    %v9296 = vrot.slane %v9283, %v9295
    %v9298 = vunpack.c.l.s4 1983009808
    %v9299 = vunpack.c.0.s8 %v9298
    %v9300 = vlaneseq
    %v9301 = vshrl.u32 %v9300, 7
    %v9302 = vsub.s32 %v9299, %v9301
    %v9303 = vrot.slane %v9289, %v9302
    %v9304 = vcombine.high %v9296, %v9296
    %v9305 = vcombine.high %v9303, %v9303
    %vm9310 = vcmask 41984
    %9311 = vst.msk [vmem:[#allocation4] sm:$0x3] %vm9310, %v9296
    %9312 = vst.msk [vmem:[#allocation4 + $0x2] sm:$0x3] %vm9310, %v9304
    %9313 = vst.msk [vmem:[#allocation4 + $0x4] sm:$0x3] %vm9310, %v9303
    %9314 = vst.msk [vmem:[#allocation4 + $0x6] sm:$0x3] %vm9310, %v9305
    // Predicated region
    $region50: #{forward.3} parent=1 // pred_check
      _
    $region51: #{forward.3} parent=1 // pred_check_branch
      %9316 = sbr.rel (0) target = $region53
    $region52: #{forward.3} parent=1 // pred_region
      %s9318 = ssub.s32 128, 128
      %9319 = vsyncadd [#allocation5], %s9318
      %s9320 = sshll.u32 [#allocation4], 4
      %s9321 = int_to_ptr.vmem [resolvable:$true] %s9320
      %9326 = dma.vmem_to_hbm [thread:$0]  %s9321, 128, %s12, [#allocation5], 32, 32, 2
    $region53: #{forward.3} parent=1 // pred_fallthru
      _
    // Predicated region
    $region54: #{forward.3} parent=1 // pred_check
      _
    $region55: #{forward.3} parent=1 // pred_check_branch
      %9328 = sbr.rel (0) target = $region57
    $region56: #{forward.3} parent=1 // pred_region
      %s9330 = ssub.s32 32, 32
      %9331 = vsyncadd [#allocation7], %s9330
      %s9333 = sshll.u32 [#allocation6], 4
      %s9334 = int_to_ptr.vmem [resolvable:$true] %s9333
      %9336 = dma.vmem_to_hbm [thread:$0]  %s9334, 32, %s13, [#allocation7]
    $region57: #{forward.3} parent=1 // pred_fallthru
      _
    // Predicated region
    $region58: #{forward.3} parent=1 // pred_check
      _
    $region59: #{forward.3} parent=1 // pred_check_branch
      %9338 = sbr.rel (0) target = $region61
    $region60: #{forward.3} parent=1 // pred_region
      %s9340 = ssub.s32 32, 32
      %9341 = vsyncadd [#allocation7], %s9340
      %s9343 = sshll.u32 [#allocation8], 4
      %s9344 = int_to_ptr.vmem [resolvable:$true] %s9343
      %9346 = dma.vmem_to_hbm [thread:$0]  %s9344, 32, %s14, [#allocation7]
    $region61: #{forward.3} parent=1 // pred_fallthru
      _
    // Predicated region
    $region62: #{forward.3} parent=1 // pred_check
      _
    $region63: #{forward.3} parent=1 // pred_check_branch
      %9348 = sbr.rel (0) target = $region65
    $region64: #{forward.3} parent=1 // pred_region
      %9349 = dma.done [#allocation5], 128
    $region65: #{forward.3} parent=1 // pred_fallthru
      _
    // Predicated region
    $region66: #{forward.3} parent=1 // pred_check
      _
    $region67: #{forward.3} parent=1 // pred_check_branch
      %9351 = sbr.rel (0) target = $region69
    $region68: #{forward.3} parent=1 // pred_region
      %9352 = dma.done [#allocation7], 32
    $region69: #{forward.3} parent=1 // pred_fallthru
      _
    // Predicated region
    $region70: #{forward.3} parent=1 // pred_check
      _
    $region71: #{forward.3} parent=1 // pred_check_branch
      %9354 = sbr.rel (0) target = $region73
    $region72: #{forward.3} parent=1 // pred_region
      %9355 = dma.done [#allocation7], 32
    $region73: #{forward.3} parent=1 // pred_fallthru
      _
    %9356 = vsyncpa [#allocation5], 1
    %9357 = vsyncpa [#allocation7], 1

</llo_original>
